<compile_context>
chip_gen: v5e
topology: v5e:2x2
jax: 0.10.0
libtpu: 0.0.40
codegen_flags: <defaults>
</compile_context>

<pallas_src>
import jax
import jax.numpy as jnp
from jax.experimental import pallas as pl
from jax.experimental.pallas import tpu as pltpu


# ----------------------------------------------------------------------------
# Fused kernel: halo-pad -> conv1+ReLU -> halo-pad -> conv2+ReLU -> global avg pool
# ----------------------------------------------------------------------------
def _fused_encoder_kernel(x_ref, w1_ref, b1_ref, w2_ref, b2_ref,
                          o_ref, xpad_ref, fpad_ref):
    # x_ref   : (nb, H, W, C0)       input batch block in VMEM
    # w1_ref  : (9*C0, C1)           conv1 weights, tap-major / cin-minor rows
    # b1_ref  : (1, C1)
    # w2_ref  : (9*C1, C2)           conv2 weights
    # b2_ref  : (1, C2)
    # o_ref   : (nb, C2)             flattened pooled output block
    # xpad_ref: (nb, H+2, W+2, C0)   VMEM scratch: halo-padded input
    # fpad_ref: (nb, H+2, W+2, C1)   VMEM scratch: halo-padded feat1
    nb, H, W, C0 = x_ref.shape
    C1 = b1_ref.shape[-1]
    C2 = o_ref.shape[-1]
    M = nb * H * W

    def fill_padded(pad_ref, interior, cin):
        # Zero only the 1-pixel halo strips (4 edge bands), then copy the interior
        # once -> roughly halves pre-conv store traffic vs full zero fill + rewrite.
        zrow = jnp.zeros((nb, 1, W + 2, cin), jnp.float32)
        zcol = jnp.zeros((nb, H + 2, 1, cin), jnp.float32)
        pad_ref[:, 0:1, :, :] = zrow
        pad_ref[:, H + 1:H + 2, :, :] = zrow
        pad_ref[:, :, 0:1, :] = zcol
        pad_ref[:, :, W + 1:W + 2, :] = zcol
        pad_ref[:, 1:H + 1, 1:W + 1, :] = interior

    def conv3x3_relu(pad_ref, w_ref, b_ref, cin, cout):
        # Nine tap-accumulating matmuls (K = cin) into an f32 accumulator.  MXU is
        # far from saturated at these sizes, so this costs ~nothing vs one K=9*cin
        # matmul while avoiding the concat relayouts and the 9x im2col buffer.
        acc = jnp.zeros((M, cout), jnp.float32)
        t = 0
        for kh in range(3):
            for kw in range(3):
                col = pad_ref[:, kh:kh + H, kw:kw + W, :].reshape(M, cin)
                w_tap = w_ref[t * cin:(t + 1) * cin, :]
                acc = acc + jnp.dot(col, w_tap,
                                    preferred_element_type=jnp.float32)
                t += 1
        return jnp.maximum(acc + b_ref[...], 0.0)

    # ---- conv1 + ReLU ----
    fill_padded(xpad_ref, x_ref[...], C0)
    f1 = conv3x3_relu(xpad_ref, w1_ref, b1_ref, C0, C1)          # (M, C1)

    # ---- conv2 + ReLU (feat1 never leaves VMEM) ----
    fill_padded(fpad_ref, f1.reshape(nb, H, W, C1), C1)
    f2 = conv3x3_relu(fpad_ref, w2_ref, b2_ref, C1, C2)          # (M, C2)

    # ---- reduce (global avg pool over H*W) + flatten(start_dim=1) ----
    inv_hw = 1.0 / float(H * W)
    o_ref[...] = jnp.sum(f2.reshape(nb, H * W, C2), axis=1) * inv_hw


# ----------------------------------------------------------------------------
# Wrapper: batch-parallel grid, double-buffered input DMA, VMEM-budgeted blocks.
# ----------------------------------------------------------------------------
def _step_vmem_bytes(nb, H, W, C0, C1, C2):
    """Rough per-grid-step VMEM working set (f32)."""
    f32 = 4
    xpad = nb * (H + 2) * (W + 2) * C0 * f32
    fpad = nb * (H + 2) * (W + 2) * C1 * f32
    x_in = 2 * nb * H * W * C0 * f32                 # double-buffered input block
    feat = nb * H * W * (2 * C1 + 2 * C2) * f32      # accumulators + activations
    wgt = (9 * C0 * C1 + 9 * C1 * C2 + C1 + C2) * f32
    out = 2 * nb * C2 * f32
    return xpad + fpad + x_in + feat + wgt + out


def visual_encoder_forward(x_nchw, params, *, vmem_budget_bytes=24 << 20):
    """x_nchw: (N, C0, H, W) float32 (PyTorch layout).  Returns (N, 32) float32.

    params = (w1, b1, w2, b2); conv weights in HWIO layout (3, 3, Cin, Cout).
    (PyTorch OIHW weights must be transposed with .transpose(2, 3, 1, 0) first.)
    """
    w1, b1, w2, b2 = params
    assert w1.ndim == 4 and w1.shape[:2] == (3, 3), "w1 must be HWIO (3,3,Cin,Cout)"
    assert w2.ndim == 4 and w2.shape[:2] == (3, 3), "w2 must be HWIO (3,3,Cin,Cout)"

    x = jnp.transpose(x_nchw, (0, 2, 3, 1)).astype(jnp.float32)   # NCHW -> NHWC (glue)
    N, H, W, C0 = x.shape
    C1 = w1.shape[-1]
    C2 = w2.shape[-1]

    # (3, 3, Cin, Cout) -> (9*Cin, Cout): row = (kh*3 + kw)*Cin + cin, matching the
    # tap-major / channel-minor slicing inside the kernel.
    w1c = w1.reshape(9 * C0, C1).astype(jnp.float32)
    w2c = w2.reshape(9 * C1, C2).astype(jnp.float32)
    b1c = b1.reshape(1, C1).astype(jnp.float32)
    b2c = b2.reshape(1, C2).astype(jnp.float32)

    # Pick the largest batch block dividing N that fits the per-step VMEM budget.
    # Blocks smaller than N must be multiples of 8 so the (nb, C2) output block
    # keeps its second-to-last dim sublane-aligned.
    nb = None
    for cand in range(N, 0, -1):
        if N % cand != 0:
            continue
        if cand != N and cand % 8 != 0:
            continue
        if _step_vmem_bytes(cand, H, W, C0, C1, C2) <= vmem_budget_bytes:
            nb = cand
            break
    if nb is None:
        nb = 8 if N % 8 == 0 else N
    grid = (N // nb,)

    vmem_limit = int(min(max(2 * _step_vmem_bytes(nb, H, W, C0, C1, C2),
                             16 * 1024 * 1024),
                         100 * 1024 * 1024))

    # TODO(synk): lane-folded (N*H, W*C) layout with pltpu.roll for kw shifts would
    # further cut vld/vst traffic at C0=4; left out to keep the proven layout.
    return pl.pallas_call(
        _fused_encoder_kernel,
        out_shape=jax.ShapeDtypeStruct((N, C2), jnp.float32),
        grid=grid,
        in_specs=[
            pl.BlockSpec((nb, H, W, C0), lambda i: (i, 0, 0, 0)),
            pl.BlockSpec((9 * C0, C1), lambda i: (0, 0)),
            pl.BlockSpec((1, C1), lambda i: (0, 0)),
            pl.BlockSpec((9 * C1, C2), lambda i: (0, 0)),
            pl.BlockSpec((1, C2), lambda i: (0, 0)),
        ],
        out_specs=pl.BlockSpec((nb, C2), lambda i: (i, 0)),
        scratch_shapes=[
            pltpu.VMEM((nb, H + 2, W + 2, C0), jnp.float32),   # halo-padded input
            pltpu.VMEM((nb, H + 2, W + 2, C1), jnp.float32),   # halo-padded feat1
        ],
        compiler_params=pltpu.CompilerParams(
            dimension_semantics=("parallel",),   # batch shards across v7x's 2 TCs
            vmem_limit_bytes=vmem_limit),
    )(x, w1c, b1c, w2c, b2c)


# ----------------------------------------------------------------------------
# Synthetic params + pure-JAX reference for a correctness gate.
# ----------------------------------------------------------------------------
def make_params(key):
    k1, k2, k3, k4 = jax.random.split(key, 4)
    w1 = 0.1 * jax.random.normal(k1, (3, 3, 4, 16), jnp.float32)    # HWIO
    b1 = 0.1 * jax.random.normal(k2, (16,), jnp.float32)
    w2 = 0.1 * jax.random.normal(k3, (3, 3, 16, 32), jnp.float32)   # HWIO
    b2 = 0.1 * jax.random.normal(k4, (32,), jnp.float32)
    return w1, b1, w2, b2


def _reference(x_nchw, params):
    w1, b1, w2, b2 = params
    dn = ("NHWC", "HWIO", "NHWC")
    x = jnp.transpose(x_nchw, (0, 2, 3, 1))
    f1 = jax.nn.relu(jax.lax.conv_general_dilated(
        x, w1, (1, 1), "SAME", dimension_numbers=dn) + b1.reshape(1, 1, 1, -1))
    f2 = jax.nn.relu(jax.lax.conv_general_dilated(
        f1, w2, (1, 1), "SAME", dimension_numbers=dn) + b2.reshape(1, 1, 1, -1))
    return jnp.mean(f2, axis=(1, 2))                 # == flatten(avg_pool(.))


if __name__ == "__main__":
    key = jax.random.PRNGKey(0)
    kx, kp = jax.random.split(key)
    x = jax.random.normal(kx, (2, 4, 16, 16), jnp.float32)   # NCHW like PyTorch
    params = make_params(kp)

    out = visual_encoder_forward(x, params)
    out = jax.block_until_ready(out)

    assert out.shape == (2, 32), out.shape
    assert out.dtype == jnp.float32
    assert bool(jnp.all(jnp.isfinite(out)))

    ref = jax.block_until_ready(_reference(x, params))
    assert bool(jnp.allclose(out, ref, atol=2e-2, rtol=2e-2)), (
        float(jnp.max(jnp.abs(out - ref))))

    print("KERNEL_OK")
</pallas_src>

<mosaic_0001>
module attributes {stable_mosaic.version = 11 : i64} {
  func.func @_fused_encoder_kernel(%arg0: i32, %arg1: memref<2x16x16x4xf32, #tpu.memory_space<vmem>>, %arg2: memref<36x16xf32, #tpu.memory_space<vmem>>, %arg3: memref<1x16xf32, #tpu.memory_space<vmem>>, %arg4: memref<144x32xf32, #tpu.memory_space<vmem>>, %arg5: memref<1x32xf32, #tpu.memory_space<vmem>>, %arg6: memref<2x32xf32, #tpu.memory_space<vmem>>, %arg7: memref<2x18x18x4xf32, #tpu.memory_space<vmem>>, %arg8: memref<2x18x18x16xf32, #tpu.memory_space<vmem>>) attributes {dimension_semantics = [#tpu.dimension_semantics<parallel>], iteration_bounds = array<i64: 1>, scalar_prefetch = 0 : i64, scratch_operands = 2 : i64, tpu.core_type = #tpu.core_type<tc>, window_params = [{transform_indices = @transform_0, window_bounds = array<i64: 2, 16, 16, 4>}, {pipeline_mode = #tpu.pipeline_mode<synchronous>, transform_indices = @transform_1, window_bounds = array<i64: 36, 16>}, {pipeline_mode = #tpu.pipeline_mode<synchronous>, transform_indices = @transform_2, window_bounds = array<i64: 1, 16>}, {pipeline_mode = #tpu.pipeline_mode<synchronous>, transform_indices = @transform_3, window_bounds = array<i64: 144, 32>}, {pipeline_mode = #tpu.pipeline_mode<synchronous>, transform_indices = @transform_4, window_bounds = array<i64: 1, 32>}, {transform_indices = @transform_5, window_bounds = array<i64: 2, 32>}]} {
    %c0 = arith.constant 0 : index
    %c0_0 = arith.constant 0 : index
    %c0_1 = arith.constant 0 : index
    %c0_2 = arith.constant 0 : index
    %0 = vector.load %arg1[%c0, %c0_0, %c0_1, %c0_2] : memref<2x16x16x4xf32, #tpu.memory_space<vmem>>, vector<2x16x16x4xf32>
    %cst = arith.constant 0.000000e+00 : f32
    %1 = vector.broadcast %cst : f32 to vector<2x1x18x4xf32>
    %cst_3 = arith.constant 0.000000e+00 : f32
    %2 = vector.broadcast %cst_3 : f32 to vector<2x18x1x4xf32>
    %c0_4 = arith.constant 0 : index
    %c0_5 = arith.constant 0 : index
    %c0_6 = arith.constant 0 : index
    %c0_7 = arith.constant 0 : index
    %3 = vector.load %arg7[%c0_4, %c0_5, %c0_6, %c0_7] : memref<2x18x18x4xf32, #tpu.memory_space<vmem>>, vector<2x1x18x4xf32>
    tpu.vector_store %arg7[%c0_4, %c0_5, %c0_6, %c0_7], %1 {strides = array<i32>} : memref<2x18x18x4xf32, #tpu.memory_space<vmem>>, vector<2x1x18x4xf32>,
    %c0_8 = arith.constant 0 : index
    %c17 = arith.constant 17 : index
    %c0_9 = arith.constant 0 : index
    %c0_10 = arith.constant 0 : index
    %4 = vector.load %arg7[%c0_8, %c17, %c0_9, %c0_10] : memref<2x18x18x4xf32, #tpu.memory_space<vmem>>, vector<2x1x18x4xf32>
    tpu.vector_store %arg7[%c0_8, %c17, %c0_9, %c0_10], %1 {strides = array<i32>} : memref<2x18x18x4xf32, #tpu.memory_space<vmem>>, vector<2x1x18x4xf32>,
    %c0_11 = arith.constant 0 : index
    %c0_12 = arith.constant 0 : index
    %c0_13 = arith.constant 0 : index
    %c0_14 = arith.constant 0 : index
    %5 = vector.load %arg7[%c0_11, %c0_12, %c0_13, %c0_14] : memref<2x18x18x4xf32, #tpu.memory_space<vmem>>, vector<2x18x1x4xf32>
    tpu.vector_store %arg7[%c0_11, %c0_12, %c0_13, %c0_14], %2 {strides = array<i32>} : memref<2x18x18x4xf32, #tpu.memory_space<vmem>>, vector<2x18x1x4xf32>,
    %c0_15 = arith.constant 0 : index
    %c0_16 = arith.constant 0 : index
    %c17_17 = arith.constant 17 : index
    %c0_18 = arith.constant 0 : index
    %6 = vector.load %arg7[%c0_15, %c0_16, %c17_17, %c0_18] : memref<2x18x18x4xf32, #tpu.memory_space<vmem>>, vector<2x18x1x4xf32>
    tpu.vector_store %arg7[%c0_15, %c0_16, %c17_17, %c0_18], %2 {strides = array<i32>} : memref<2x18x18x4xf32, #tpu.memory_space<vmem>>, vector<2x18x1x4xf32>,
    %c0_19 = arith.constant 0 : index
    %c1 = arith.constant 1 : index
    %c1_20 = arith.constant 1 : index
    %c0_21 = arith.constant 0 : index
    %7 = vector.load %arg7[%c0_19, %c1, %c1_20, %c0_21] : memref<2x18x18x4xf32, #tpu.memory_space<vmem>>, vector<2x16x16x4xf32>
    tpu.vector_store %arg7[%c0_19, %c1, %c1_20, %c0_21], %0 {strides = array<i32>} : memref<2x18x18x4xf32, #tpu.memory_space<vmem>>, vector<2x16x16x4xf32>,
    %cst_22 = arith.constant 0.000000e+00 : f32
    %8 = vector.broadcast %cst_22 : f32 to vector<512x16xf32>
    %c0_23 = arith.constant 0 : index
    %c0_24 = arith.constant 0 : index
    %c0_25 = arith.constant 0 : index
    %c0_26 = arith.constant 0 : index
    %9 = vector.load %arg7[%c0_23, %c0_24, %c0_25, %c0_26] : memref<2x18x18x4xf32, #tpu.memory_space<vmem>>, vector<2x16x16x4xf32>
    %10 = vector.shape_cast %9 : vector<2x16x16x4xf32> to vector<512x4xf32>
    %c0_27 = arith.constant 0 : index
    %c0_28 = arith.constant 0 : index
    %11 = vector.load %arg2[%c0_27, %c0_28] : memref<36x16xf32, #tpu.memory_space<vmem>>, vector<4x16xf32>
    %cst_29 = arith.constant dense<0.000000e+00> : vector<512x16xf32>
    %12 = tpu.matmul %10, %11, %cst_29 {dimension_numbers = #tpu.dot_dimension_numbers<[1], [0], [0], [1], [0, 0, 1, 1], [], []>} : vector<512x4xf32>, vector<4x16xf32>, vector<512x16xf32> -> vector<512x16xf32>
    %13 = arith.addf %8, %12 : vector<512x16xf32>
    %c0_30 = arith.constant 0 : index
    %c0_31 = arith.constant 0 : index
    %c1_32 = arith.constant 1 : index
    %c0_33 = arith.constant 0 : index
    %14 = vector.load %arg7[%c0_30, %c0_31, %c1_32, %c0_33] : memref<2x18x18x4xf32, #tpu.memory_space<vmem>>, vector<2x16x16x4xf32>
    %15 = vector.shape_cast %14 : vector<2x16x16x4xf32> to vector<512x4xf32>
    %c4 = arith.constant 4 : index
    %c0_34 = arith.constant 0 : index
    %16 = vector.load %arg2[%c4, %c0_34] : memref<36x16xf32, #tpu.memory_space<vmem>>, vector<4x16xf32>
    %cst_35 = arith.constant dense<0.000000e+00> : vector<512x16xf32>
    %17 = tpu.matmul %15, %16, %cst_35 {dimension_numbers = #tpu.dot_dimension_numbers<[1], [0], [0], [1], [0, 0, 1, 1], [], []>} : vector<512x4xf32>, vector<4x16xf32>, vector<512x16xf32> -> vector<512x16xf32>
    %18 = arith.addf %13, %17 : vector<512x16xf32>
    %c0_36 = arith.constant 0 : index
    %c0_37 = arith.constant 0 : index
    %c2 = arith.constant 2 : index
    %c0_38 = arith.constant 0 : index
    %19 = vector.load %arg7[%c0_36, %c0_37, %c2, %c0_38] : memref<2x18x18x4xf32, #tpu.memory_space<vmem>>, vector<2x16x16x4xf32>
    %20 = vector.shape_cast %19 : vector<2x16x16x4xf32> to vector<512x4xf32>
    %c8 = arith.constant 8 : index
    %c0_39 = arith.constant 0 : index
    %21 = vector.load %arg2[%c8, %c0_39] : memref<36x16xf32, #tpu.memory_space<vmem>>, vector<4x16xf32>
    %cst_40 = arith.constant dense<0.000000e+00> : vector<512x16xf32>
    %22 = tpu.matmul %20, %21, %cst_40 {dimension_numbers = #tpu.dot_dimension_numbers<[1], [0], [0], [1], [0, 0, 1, 1], [], []>} : vector<512x4xf32>, vector<4x16xf32>, vector<512x16xf32> -> vector<512x16xf32>
    %23 = arith.addf %18, %22 : vector<512x16xf32>
    %c0_41 = arith.constant 0 : index
    %c1_42 = arith.constant 1 : index
    %c0_43 = arith.constant 0 : index
    %c0_44 = arith.constant 0 : index
    %24 = vector.load %arg7[%c0_41, %c1_42, %c0_43, %c0_44] : memref<2x18x18x4xf32, #tpu.memory_space<vmem>>, vector<2x16x16x4xf32>
    %25 = vector.shape_cast %24 : vector<2x16x16x4xf32> to vector<512x4xf32>
    %c12 = arith.constant 12 : index
    %c0_45 = arith.constant 0 : index
    %26 = vector.load %arg2[%c12, %c0_45] : memref<36x16xf32, #tpu.memory_space<vmem>>, vector<4x16xf32>
    %cst_46 = arith.constant dense<0.000000e+00> : vector<512x16xf32>
    %27 = tpu.matmul %25, %26, %cst_46 {dimension_numbers = #tpu.dot_dimension_numbers<[1], [0], [0], [1], [0, 0, 1, 1], [], []>} : vector<512x4xf32>, vector<4x16xf32>, vector<512x16xf32> -> vector<512x16xf32>
    %28 = arith.addf %23, %27 : vector<512x16xf32>
    %c0_47 = arith.constant 0 : index
    %c1_48 = arith.constant 1 : index
    %c1_49 = arith.constant 1 : index
    %c0_50 = arith.constant 0 : index
    %29 = vector.load %arg7[%c0_47, %c1_48, %c1_49, %c0_50] : memref<2x18x18x4xf32, #tpu.memory_space<vmem>>, vector<2x16x16x4xf32>
    %30 = vector.shape_cast %29 : vector<2x16x16x4xf32> to vector<512x4xf32>
    %c16 = arith.constant 16 : index
    %c0_51 = arith.constant 0 : index
    %31 = vector.load %arg2[%c16, %c0_51] : memref<36x16xf32, #tpu.memory_space<vmem>>, vector<4x16xf32>
    %cst_52 = arith.constant dense<0.000000e+00> : vector<512x16xf32>
    %32 = tpu.matmul %30, %31, %cst_52 {dimension_numbers = #tpu.dot_dimension_numbers<[1], [0], [0], [1], [0, 0, 1, 1], [], []>} : vector<512x4xf32>, vector<4x16xf32>, vector<512x16xf32> -> vector<512x16xf32>
    %33 = arith.addf %28, %32 : vector<512x16xf32>
    %c0_53 = arith.constant 0 : index
    %c1_54 = arith.constant 1 : index
    %c2_55 = arith.constant 2 : index
    %c0_56 = arith.constant 0 : index
    %34 = vector.load %arg7[%c0_53, %c1_54, %c2_55, %c0_56] : memref<2x18x18x4xf32, #tpu.memory_space<vmem>>, vector<2x16x16x4xf32>
    %35 = vector.shape_cast %34 : vector<2x16x16x4xf32> to vector<512x4xf32>
    %c20 = arith.constant 20 : index
    %c0_57 = arith.constant 0 : index
    %36 = vector.load %arg2[%c20, %c0_57] : memref<36x16xf32, #tpu.memory_space<vmem>>, vector<4x16xf32>
    %cst_58 = arith.constant dense<0.000000e+00> : vector<512x16xf32>
    %37 = tpu.matmul %35, %36, %cst_58 {dimension_numbers = #tpu.dot_dimension_numbers<[1], [0], [0], [1], [0, 0, 1, 1], [], []>} : vector<512x4xf32>, vector<4x16xf32>, vector<512x16xf32> -> vector<512x16xf32>
    %38 = arith.addf %33, %37 : vector<512x16xf32>
    %c0_59 = arith.constant 0 : index
    %c2_60 = arith.constant 2 : index
    %c0_61 = arith.constant 0 : index
    %c0_62 = arith.constant 0 : index
    %39 = vector.load %arg7[%c0_59, %c2_60, %c0_61, %c0_62] : memref<2x18x18x4xf32, #tpu.memory_space<vmem>>, vector<2x16x16x4xf32>
    %40 = vector.shape_cast %39 : vector<2x16x16x4xf32> to vector<512x4xf32>
    %c24 = arith.constant 24 : index
    %c0_63 = arith.constant 0 : index
    %41 = vector.load %arg2[%c24, %c0_63] : memref<36x16xf32, #tpu.memory_space<vmem>>, vector<4x16xf32>
    %cst_64 = arith.constant dense<0.000000e+00> : vector<512x16xf32>
    %42 = tpu.matmul %40, %41, %cst_64 {dimension_numbers = #tpu.dot_dimension_numbers<[1], [0], [0], [1], [0, 0, 1, 1], [], []>} : vector<512x4xf32>, vector<4x16xf32>, vector<512x16xf32> -> vector<512x16xf32>
    %43 = arith.addf %38, %42 : vector<512x16xf32>
    %c0_65 = arith.constant 0 : index
    %c2_66 = arith.constant 2 : index
    %c1_67 = arith.constant 1 : index
    %c0_68 = arith.constant 0 : index
    %44 = vector.load %arg7[%c0_65, %c2_66, %c1_67, %c0_68] : memref<2x18x18x4xf32, #tpu.memory_space<vmem>>, vector<2x16x16x4xf32>
    %45 = vector.shape_cast %44 : vector<2x16x16x4xf32> to vector<512x4xf32>
    %c28 = arith.constant 28 : index
    %c0_69 = arith.constant 0 : index
    %46 = vector.load %arg2[%c28, %c0_69] : memref<36x16xf32, #tpu.memory_space<vmem>>, vector<4x16xf32>
    %cst_70 = arith.constant dense<0.000000e+00> : vector<512x16xf32>
    %47 = tpu.matmul %45, %46, %cst_70 {dimension_numbers = #tpu.dot_dimension_numbers<[1], [0], [0], [1], [0, 0, 1, 1], [], []>} : vector<512x4xf32>, vector<4x16xf32>, vector<512x16xf32> -> vector<512x16xf32>
    %48 = arith.addf %43, %47 : vector<512x16xf32>
    %c0_71 = arith.constant 0 : index
    %c2_72 = arith.constant 2 : index
    %c2_73 = arith.constant 2 : index
    %c0_74 = arith.constant 0 : index
    %49 = vector.load %arg7[%c0_71, %c2_72, %c2_73, %c0_74] : memref<2x18x18x4xf32, #tpu.memory_space<vmem>>, vector<2x16x16x4xf32>
    %50 = vector.shape_cast %49 : vector<2x16x16x4xf32> to vector<512x4xf32>
    %c32 = arith.constant 32 : index
    %c0_75 = arith.constant 0 : index
    %51 = vector.load %arg2[%c32, %c0_75] : memref<36x16xf32, #tpu.memory_space<vmem>>, vector<4x16xf32>
    %cst_76 = arith.constant dense<0.000000e+00> : vector<512x16xf32>
    %52 = tpu.matmul %50, %51, %cst_76 {dimension_numbers = #tpu.dot_dimension_numbers<[1], [0], [0], [1], [0, 0, 1, 1], [], []>} : vector<512x4xf32>, vector<4x16xf32>, vector<512x16xf32> -> vector<512x16xf32>
    %53 = arith.addf %48, %52 : vector<512x16xf32>
    %c0_77 = arith.constant 0 : index
    %c0_78 = arith.constant 0 : index
    %54 = vector.load %arg3[%c0_77, %c0_78] : memref<1x16xf32, #tpu.memory_space<vmem>>, vector<1x16xf32>
    %55 = vector.broadcast %54 : vector<1x16xf32> to vector<512x16xf32>
    %56 = arith.addf %53, %55 : vector<512x16xf32>
    %cst_79 = arith.constant 0.000000e+00 : f32
    %57 = vector.broadcast %cst_79 : f32 to vector<512x16xf32>
    %58 = arith.maximumf %56, %57 : vector<512x16xf32>
    %59 = vector.shape_cast %58 : vector<512x16xf32> to vector<2x16x16x16xf32>
    %cst_80 = arith.constant 0.000000e+00 : f32
    %60 = vector.broadcast %cst_80 : f32 to vector<2x1x18x16xf32>
    %cst_81 = arith.constant 0.000000e+00 : f32
    %61 = vector.broadcast %cst_81 : f32 to vector<2x18x1x16xf32>
    %c0_82 = arith.constant 0 : index
    %c0_83 = arith.constant 0 : index
    %c0_84 = arith.constant 0 : index
    %c0_85 = arith.constant 0 : index
    %62 = vector.load %arg8[%c0_82, %c0_83, %c0_84, %c0_85] : memref<2x18x18x16xf32, #tpu.memory_space<vmem>>, vector<2x1x18x16xf32>
    tpu.vector_store %arg8[%c0_82, %c0_83, %c0_84, %c0_85], %60 {strides = array<i32>} : memref<2x18x18x16xf32, #tpu.memory_space<vmem>>, vector<2x1x18x16xf32>,
    %c0_86 = arith.constant 0 : index
    %c17_87 = arith.constant 17 : index
    %c0_88 = arith.constant 0 : index
    %c0_89 = arith.constant 0 : index
    %63 = vector.load %arg8[%c0_86, %c17_87, %c0_88, %c0_89] : memref<2x18x18x16xf32, #tpu.memory_space<vmem>>, vector<2x1x18x16xf32>
    tpu.vector_store %arg8[%c0_86, %c17_87, %c0_88, %c0_89], %60 {strides = array<i32>} : memref<2x18x18x16xf32, #tpu.memory_space<vmem>>, vector<2x1x18x16xf32>,
    %c0_90 = arith.constant 0 : index
    %c0_91 = arith.constant 0 : index
    %c0_92 = arith.constant 0 : index
    %c0_93 = arith.constant 0 : index
    %64 = vector.load %arg8[%c0_90, %c0_91, %c0_92, %c0_93] : memref<2x18x18x16xf32, #tpu.memory_space<vmem>>, vector<2x18x1x16xf32>
    tpu.vector_store %arg8[%c0_90, %c0_91, %c0_92, %c0_93], %61 {strides = array<i32>} : memref<2x18x18x16xf32, #tpu.memory_space<vmem>>, vector<2x18x1x16xf32>,
    %c0_94 = arith.constant 0 : index
    %c0_95 = arith.constant 0 : index
    %c17_96 = arith.constant 17 : index
    %c0_97 = arith.constant 0 : index
    %65 = vector.load %arg8[%c0_94, %c0_95, %c17_96, %c0_97] : memref<2x18x18x16xf32, #tpu.memory_space<vmem>>, vector<2x18x1x16xf32>
    tpu.vector_store %arg8[%c0_94, %c0_95, %c17_96, %c0_97], %61 {strides = array<i32>} : memref<2x18x18x16xf32, #tpu.memory_space<vmem>>, vector<2x18x1x16xf32>,
    %c0_98 = arith.constant 0 : index
    %c1_99 = arith.constant 1 : index
    %c1_100 = arith.constant 1 : index
    %c0_101 = arith.constant 0 : index
    %66 = vector.load %arg8[%c0_98, %c1_99, %c1_100, %c0_101] : memref<2x18x18x16xf32, #tpu.memory_space<vmem>>, vector<2x16x16x16xf32>
    tpu.vector_store %arg8[%c0_98, %c1_99, %c1_100, %c0_101], %59 {strides = array<i32>} : memref<2x18x18x16xf32, #tpu.memory_space<vmem>>, vector<2x16x16x16xf32>,
    %cst_102 = arith.constant 0.000000e+00 : f32
    %67 = vector.broadcast %cst_102 : f32 to vector<512x32xf32>
    %c0_103 = arith.constant 0 : index
    %c0_104 = arith.constant 0 : index
    %c0_105 = arith.constant 0 : index
    %c0_106 = arith.constant 0 : index
    %68 = vector.load %arg8[%c0_103, %c0_104, %c0_105, %c0_106] : memref<2x18x18x16xf32, #tpu.memory_space<vmem>>, vector<2x16x16x16xf32>
    %69 = vector.shape_cast %68 : vector<2x16x16x16xf32> to vector<512x16xf32>
    %c0_107 = arith.constant 0 : index
    %c0_108 = arith.constant 0 : index
    %70 = vector.load %arg4[%c0_107, %c0_108] : memref<144x32xf32, #tpu.memory_space<vmem>>, vector<16x32xf32>
    %cst_109 = arith.constant dense<0.000000e+00> : vector<512x32xf32>
    %71 = tpu.matmul %69, %70, %cst_109 {dimension_numbers = #tpu.dot_dimension_numbers<[1], [0], [0], [1], [0, 0, 1, 1], [], []>} : vector<512x16xf32>, vector<16x32xf32>, vector<512x32xf32> -> vector<512x32xf32>
    %72 = arith.addf %67, %71 : vector<512x32xf32>
    %c0_110 = arith.constant 0 : index
    %c0_111 = arith.constant 0 : index
    %c1_112 = arith.constant 1 : index
    %c0_113 = arith.constant 0 : index
    %73 = vector.load %arg8[%c0_110, %c0_111, %c1_112, %c0_113] : memref<2x18x18x16xf32, #tpu.memory_space<vmem>>, vector<2x16x16x16xf32>
    %74 = vector.shape_cast %73 : vector<2x16x16x16xf32> to vector<512x16xf32>
    %c16_114 = arith.constant 16 : index
    %c0_115 = arith.constant 0 : index
    %75 = vector.load %arg4[%c16_114, %c0_115] : memref<144x32xf32, #tpu.memory_space<vmem>>, vector<16x32xf32>
    %cst_116 = arith.constant dense<0.000000e+00> : vector<512x32xf32>
    %76 = tpu.matmul %74, %75, %cst_116 {dimension_numbers = #tpu.dot_dimension_numbers<[1], [0], [0], [1], [0, 0, 1, 1], [], []>} : vector<512x16xf32>, vector<16x32xf32>, vector<512x32xf32> -> vector<512x32xf32>
    %77 = arith.addf %72, %76 : vector<512x32xf32>
    %c0_117 = arith.constant 0 : index
    %c0_118 = arith.constant 0 : index
    %c2_119 = arith.constant 2 : index
    %c0_120 = arith.constant 0 : index
    %78 = vector.load %arg8[%c0_117, %c0_118, %c2_119, %c0_120] : memref<2x18x18x16xf32, #tpu.memory_space<vmem>>, vector<2x16x16x16xf32>
    %79 = vector.shape_cast %78 : vector<2x16x16x16xf32> to vector<512x16xf32>
    %c32_121 = arith.constant 32 : index
    %c0_122 = arith.constant 0 : index
    %80 = vector.load %arg4[%c32_121, %c0_122] : memref<144x32xf32, #tpu.memory_space<vmem>>, vector<16x32xf32>
    %cst_123 = arith.constant dense<0.000000e+00> : vector<512x32xf32>
    %81 = tpu.matmul %79, %80, %cst_123 {dimension_numbers = #tpu.dot_dimension_numbers<[1], [0], [0], [1], [0, 0, 1, 1], [], []>} : vector<512x16xf32>, vector<16x32xf32>, vector<512x32xf32> -> vector<512x32xf32>
    %82 = arith.addf %77, %81 : vector<512x32xf32>
    %c0_124 = arith.constant 0 : index
    %c1_125 = arith.constant 1 : index
    %c0_126 = arith.constant 0 : index
    %c0_127 = arith.constant 0 : index
    %83 = vector.load %arg8[%c0_124, %c1_125, %c0_126, %c0_127] : memref<2x18x18x16xf32, #tpu.memory_space<vmem>>, vector<2x16x16x16xf32>
    %84 = vector.shape_cast %83 : vector<2x16x16x16xf32> to vector<512x16xf32>
    %c48 = arith.constant 48 : index
    %c0_128 = arith.constant 0 : index
    %85 = vector.load %arg4[%c48, %c0_128] : memref<144x32xf32, #tpu.memory_space<vmem>>, vector<16x32xf32>
    %cst_129 = arith.constant dense<0.000000e+00> : vector<512x32xf32>
    %86 = tpu.matmul %84, %85, %cst_129 {dimension_numbers = #tpu.dot_dimension_numbers<[1], [0], [0], [1], [0, 0, 1, 1], [], []>} : vector<512x16xf32>, vector<16x32xf32>, vector<512x32xf32> -> vector<512x32xf32>
    %87 = arith.addf %82, %86 : vector<512x32xf32>
    %c0_130 = arith.constant 0 : index
    %c1_131 = arith.constant 1 : index
    %c1_132 = arith.constant 1 : index
    %c0_133 = arith.constant 0 : index
    %88 = vector.load %arg8[%c0_130, %c1_131, %c1_132, %c0_133] : memref<2x18x18x16xf32, #tpu.memory_space<vmem>>, vector<2x16x16x16xf32>
    %89 = vector.shape_cast %88 : vector<2x16x16x16xf32> to vector<512x16xf32>
    %c64 = arith.constant 64 : index
    %c0_134 = arith.constant 0 : index
    %90 = vector.load %arg4[%c64, %c0_134] : memref<144x32xf32, #tpu.memory_space<vmem>>, vector<16x32xf32>
    %cst_135 = arith.constant dense<0.000000e+00> : vector<512x32xf32>
    %91 = tpu.matmul %89, %90, %cst_135 {dimension_numbers = #tpu.dot_dimension_numbers<[1], [0], [0], [1], [0, 0, 1, 1], [], []>} : vector<512x16xf32>, vector<16x32xf32>, vector<512x32xf32> -> vector<512x32xf32>
    %92 = arith.addf %87, %91 : vector<512x32xf32>
    %c0_136 = arith.constant 0 : index
    %c1_137 = arith.constant 1 : index
    %c2_138 = arith.constant 2 : index
    %c0_139 = arith.constant 0 : index
    %93 = vector.load %arg8[%c0_136, %c1_137, %c2_138, %c0_139] : memref<2x18x18x16xf32, #tpu.memory_space<vmem>>, vector<2x16x16x16xf32>
    %94 = vector.shape_cast %93 : vector<2x16x16x16xf32> to vector<512x16xf32>
    %c80 = arith.constant 80 : index
    %c0_140 = arith.constant 0 : index
    %95 = vector.load %arg4[%c80, %c0_140] : memref<144x32xf32, #tpu.memory_space<vmem>>, vector<16x32xf32>
    %cst_141 = arith.constant dense<0.000000e+00> : vector<512x32xf32>
    %96 = tpu.matmul %94, %95, %cst_141 {dimension_numbers = #tpu.dot_dimension_numbers<[1], [0], [0], [1], [0, 0, 1, 1], [], []>} : vector<512x16xf32>, vector<16x32xf32>, vector<512x32xf32> -> vector<512x32xf32>
    %97 = arith.addf %92, %96 : vector<512x32xf32>
    %c0_142 = arith.constant 0 : index
    %c2_143 = arith.constant 2 : index
    %c0_144 = arith.constant 0 : index
    %c0_145 = arith.constant 0 : index
    %98 = vector.load %arg8[%c0_142, %c2_143, %c0_144, %c0_145] : memref<2x18x18x16xf32, #tpu.memory_space<vmem>>, vector<2x16x16x16xf32>
    %99 = vector.shape_cast %98 : vector<2x16x16x16xf32> to vector<512x16xf32>
    %c96 = arith.constant 96 : index
    %c0_146 = arith.constant 0 : index
    %100 = vector.load %arg4[%c96, %c0_146] : memref<144x32xf32, #tpu.memory_space<vmem>>, vector<16x32xf32>
    %cst_147 = arith.constant dense<0.000000e+00> : vector<512x32xf32>
    %101 = tpu.matmul %99, %100, %cst_147 {dimension_numbers = #tpu.dot_dimension_numbers<[1], [0], [0], [1], [0, 0, 1, 1], [], []>} : vector<512x16xf32>, vector<16x32xf32>, vector<512x32xf32> -> vector<512x32xf32>
    %102 = arith.addf %97, %101 : vector<512x32xf32>
    %c0_148 = arith.constant 0 : index
    %c2_149 = arith.constant 2 : index
    %c1_150 = arith.constant 1 : index
    %c0_151 = arith.constant 0 : index
    %103 = vector.load %arg8[%c0_148, %c2_149, %c1_150, %c0_151] : memref<2x18x18x16xf32, #tpu.memory_space<vmem>>, vector<2x16x16x16xf32>
    %104 = vector.shape_cast %103 : vector<2x16x16x16xf32> to vector<512x16xf32>
    %c112 = arith.constant 112 : index
    %c0_152 = arith.constant 0 : index
    %105 = vector.load %arg4[%c112, %c0_152] : memref<144x32xf32, #tpu.memory_space<vmem>>, vector<16x32xf32>
    %cst_153 = arith.constant dense<0.000000e+00> : vector<512x32xf32>
    %106 = tpu.matmul %104, %105, %cst_153 {dimension_numbers = #tpu.dot_dimension_numbers<[1], [0], [0], [1], [0, 0, 1, 1], [], []>} : vector<512x16xf32>, vector<16x32xf32>, vector<512x32xf32> -> vector<512x32xf32>
    %107 = arith.addf %102, %106 : vector<512x32xf32>
    %c0_154 = arith.constant 0 : index
    %c2_155 = arith.constant 2 : index
    %c2_156 = arith.constant 2 : index
    %c0_157 = arith.constant 0 : index
    %108 = vector.load %arg8[%c0_154, %c2_155, %c2_156, %c0_157] : memref<2x18x18x16xf32, #tpu.memory_space<vmem>>, vector<2x16x16x16xf32>
    %109 = vector.shape_cast %108 : vector<2x16x16x16xf32> to vector<512x16xf32>
    %c128 = arith.constant 128 : index
    %c0_158 = arith.constant 0 : index
    %110 = vector.load %arg4[%c128, %c0_158] : memref<144x32xf32, #tpu.memory_space<vmem>>, vector<16x32xf32>
    %cst_159 = arith.constant dense<0.000000e+00> : vector<512x32xf32>
    %111 = tpu.matmul %109, %110, %cst_159 {dimension_numbers = #tpu.dot_dimension_numbers<[1], [0], [0], [1], [0, 0, 1, 1], [], []>} : vector<512x16xf32>, vector<16x32xf32>, vector<512x32xf32> -> vector<512x32xf32>
    %112 = arith.addf %107, %111 : vector<512x32xf32>
    %c0_160 = arith.constant 0 : index
    %c0_161 = arith.constant 0 : index
    %113 = vector.load %arg5[%c0_160, %c0_161] : memref<1x32xf32, #tpu.memory_space<vmem>>, vector<1x32xf32>
    %114 = vector.broadcast %113 : vector<1x32xf32> to vector<512x32xf32>
    %115 = arith.addf %112, %114 : vector<512x32xf32>
    %cst_162 = arith.constant 0.000000e+00 : f32
    %116 = vector.broadcast %cst_162 : f32 to vector<512x32xf32>
    %117 = arith.maximumf %115, %116 : vector<512x32xf32>
    %118 = vector.shape_cast %117 : vector<512x32xf32> to vector<2x256x32xf32>
    %cst_163 = arith.constant dense<0.000000e+00> : vector<2x32xf32>
    %119 = vector.multi_reduction <add>, %118, %cst_163 [1] : vector<2x256x32xf32> to vector<2x32xf32>
    %cst_164 = arith.constant 3.906250e-03 : f32
    %120 = vector.broadcast %cst_164 : f32 to vector<2x32xf32>
    %121 = arith.mulf %119, %120 : vector<2x32xf32>
    %c0_165 = arith.constant 0 : index
    %c0_166 = arith.constant 0 : index
    %122 = vector.load %arg6[%c0_165, %c0_166] : memref<2x32xf32, #tpu.memory_space<vmem>>, vector<2x32xf32>
    tpu.vector_store %arg6[%c0_165, %c0_166], %121 {strides = array<i32>} : memref<2x32xf32, #tpu.memory_space<vmem>>, vector<2x32xf32>,
    return
  }
  func.func @transform_0(%arg0: i32) -> (i32, i32, i32, i32) {
    %c0_i32 = arith.constant 0 : i32
    %c0_i32_0 = arith.constant 0 : i32
    %c0_i32_1 = arith.constant 0 : i32
    %c0_i32_2 = arith.constant 0 : i32
    return %arg0, %c0_i32, %c0_i32_0, %c0_i32_1 : i32, i32, i32, i32
  }
  func.func @transform_1(%arg0: i32) -> (i32, i32) {
    %c0_i32 = arith.constant 0 : i32
    %c0_i32_0 = arith.constant 0 : i32
    %c0_i32_1 = arith.constant 0 : i32
    return %c0_i32, %c0_i32_0 : i32, i32
  }
  func.func @transform_2(%arg0: i32) -> (i32, i32) {
    %c0_i32 = arith.constant 0 : i32
    %c0_i32_0 = arith.constant 0 : i32
    %c0_i32_1 = arith.constant 0 : i32
    return %c0_i32, %c0_i32_0 : i32, i32
  }
  func.func @transform_3(%arg0: i32) -> (i32, i32) {
    %c0_i32 = arith.constant 0 : i32
    %c0_i32_0 = arith.constant 0 : i32
    %c0_i32_1 = arith.constant 0 : i32
    return %c0_i32, %c0_i32_0 : i32, i32
  }
  func.func @transform_4(%arg0: i32) -> (i32, i32) {
    %c0_i32 = arith.constant 0 : i32
    %c0_i32_0 = arith.constant 0 : i32
    %c0_i32_1 = arith.constant 0 : i32
    return %c0_i32, %c0_i32_0 : i32, i32
  }
  func.func @transform_5(%arg0: i32) -> (i32, i32) {
    %c0_i32 = arith.constant 0 : i32
    %c0_i32_0 = arith.constant 0 : i32
    return %arg0, %c0_i32 : i32, i32
  }
}

</mosaic_0001>

<llo_original>
// kernel: tpu_custom_call.1
$region0: #{tpu_custom_call.1}
  #allocation0 [shape = 'u32[]', space=smem, size = 0x4, offset = 0x4, fixed_abs, tag = 'smem constant byte address 0x4 - core index']
  #allocation1 [shape = 'u32[72,128]{1,0:T(1,128)}', space=vmem, size = 0x9000, scoped, tag = 'internal scratch']
  #allocation2 [shape = 'f32[2,18,18,4]{3,2,1,0:T(8,128)}', space=vmem, size = 0x6c000, scoped, tag = 'scratch operand']
  #allocation3 [shape = 'f32[2,18,18,16]{3,2,1,0:T(8,128)}', space=vmem, size = 0x6c000, scoped, tag = 'scratch operand']
  %s0 = inlined_call_operand.vmem [shape: f32[2,16,16,4], index: 0, kind: input, shape index: {}]
  %s1 = inlined_call_operand.vmem [shape: f32[36,16], index: 1, kind: input, shape index: {}]
  %s2 = inlined_call_operand.vmem [shape: f32[1,16], index: 2, kind: input, shape index: {}]
  %s3 = inlined_call_operand.vmem [shape: f32[144,32], index: 3, kind: input, shape index: {}]
  %s4 = inlined_call_operand.vmem [shape: f32[1,32], index: 4, kind: input, shape index: {}]
  %s5 = inlined_call_operand.hbm [shape: f32[2,32], index: 5, kind: output, shape index: {}]
  %s6 = sld [smem:[#allocation0]]
  $region30: #{tpu_custom_call.1} parent=0
    _
  %s8 = ssub.s32 1, %s6
  %s9 = scalar_select 0, %s8, %s6
  $region1: #{tpu_custom_call.1} parent=0
    #allocation4 [shape = 'u8[1024]{0}', space=vmem, size = 0x400, scoped, tag = 'output window, operand 0, single buffered']
    #allocation5 [shape = 's32[1]{0}', space=sflag, size = 0x4, scoped, tag = 'scoped memory for tpu_custom_call.1']
    %10 = vsyncpa [#allocation5], 0
    // Predicated region
    $region2: #{tpu_custom_call.1} parent=1 // pred_check
      _
    $region3: #{tpu_custom_call.1} parent=1 // pred_check_branch
      %12 = sbr.rel (0) target = $region5
    $region4: #{tpu_custom_call.1} parent=1 // pred_region
      _
    $region5: #{tpu_custom_call.1} parent=1 // pred_fallthru
      _
    // Predicated region
    $region6: #{tpu_custom_call.1} parent=1 // pred_check
      _
    $region7: #{tpu_custom_call.1} parent=1 // pred_check_branch
      %14 = sbr.rel (0) target = $region9
    $region8: #{tpu_custom_call.1} parent=1 // pred_region
      _
    $region9: #{tpu_custom_call.1} parent=1 // pred_fallthru
      _
    // Predicated region
    $region10: #{tpu_custom_call.1} parent=1 // pred_check
      _
    $region11: #{tpu_custom_call.1} parent=1 // pred_check_branch
      %16 = sbr.rel (0) target = $region13
    $region12: #{tpu_custom_call.1} parent=1 // pred_region
      _
    $region13: #{tpu_custom_call.1} parent=1 // pred_fallthru
      _
    // Predicated region
    $region14: #{tpu_custom_call.1} parent=1 // pred_check
      _
    $region15: #{tpu_custom_call.1} parent=1 // pred_check_branch
      %18 = sbr.rel (0) target = $region17
    $region16: #{tpu_custom_call.1} parent=1 // pred_region
      _
    $region17: #{tpu_custom_call.1} parent=1 // pred_fallthru
      _
    // Predicated region
    $region18: #{tpu_custom_call.1} parent=1 // pred_check
      _
    $region19: #{tpu_custom_call.1} parent=1 // pred_check_branch
      %20 = sbr.rel (0) target = $region21
    $region20: #{tpu_custom_call.1} parent=1 // pred_region
      _
    $region21: #{tpu_custom_call.1} parent=1 // pred_fallthru
      _
    %v21 = vld [vmem:[%s0] sm:$0xff]
    %v22 = vld [vmem:[%s0 + $0x8] sm:$0xff]
    %v23 = vld [vmem:[%s0 + $0x10] sm:$0xff]
    %v24 = vld [vmem:[%s0 + $0x18] sm:$0xff]
    %v25 = vld [vmem:[%s0 + $0x20] sm:$0xff]
    %v26 = vld [vmem:[%s0 + $0x28] sm:$0xff]
    %v27 = vld [vmem:[%s0 + $0x30] sm:$0xff]
    %v28 = vld [vmem:[%s0 + $0x38] sm:$0xff]
    %v29 = vld [vmem:[%s0 + $0x40] sm:$0xff]
    %v30 = vld [vmem:[%s0 + $0x48] sm:$0xff]
    %v31 = vld [vmem:[%s0 + $0x50] sm:$0xff]
    %v32 = vld [vmem:[%s0 + $0x58] sm:$0xff]
    %v33 = vld [vmem:[%s0 + $0x60] sm:$0xff]
    %v34 = vld [vmem:[%s0 + $0x68] sm:$0xff]
    %v35 = vld [vmem:[%s0 + $0x70] sm:$0xff]
    %v36 = vld [vmem:[%s0 + $0x78] sm:$0xff]
    %v37 = vld [vmem:[%s0 + $0x80] sm:$0xff]
    %v38 = vld [vmem:[%s0 + $0x88] sm:$0xff]
    %v39 = vld [vmem:[%s0 + $0x90] sm:$0xff]
    %v40 = vld [vmem:[%s0 + $0x98] sm:$0xff]
    %v41 = vld [vmem:[%s0 + $0xa0] sm:$0xff]
    %v42 = vld [vmem:[%s0 + $0xa8] sm:$0xff]
    %v43 = vld [vmem:[%s0 + $0xb0] sm:$0xff]
    %v44 = vld [vmem:[%s0 + $0xb8] sm:$0xff]
    %v45 = vld [vmem:[%s0 + $0xc0] sm:$0xff]
    %v46 = vld [vmem:[%s0 + $0xc8] sm:$0xff]
    %v47 = vld [vmem:[%s0 + $0xd0] sm:$0xff]
    %v48 = vld [vmem:[%s0 + $0xd8] sm:$0xff]
    %v49 = vld [vmem:[%s0 + $0xe0] sm:$0xff]
    %v50 = vld [vmem:[%s0 + $0xe8] sm:$0xff]
    %v51 = vld [vmem:[%s0 + $0xf0] sm:$0xff]
    %v52 = vld [vmem:[%s0 + $0xf8] sm:$0xff]
    %v53 = vld [vmem:[%s0 + $0x100] sm:$0xff]
    %v54 = vld [vmem:[%s0 + $0x108] sm:$0xff]
    %v55 = vld [vmem:[%s0 + $0x110] sm:$0xff]
    %v56 = vld [vmem:[%s0 + $0x118] sm:$0xff]
    %v57 = vld [vmem:[%s0 + $0x120] sm:$0xff]
    %v58 = vld [vmem:[%s0 + $0x128] sm:$0xff]
    %v59 = vld [vmem:[%s0 + $0x130] sm:$0xff]
    %v60 = vld [vmem:[%s0 + $0x138] sm:$0xff]
    %v61 = vld [vmem:[%s0 + $0x140] sm:$0xff]
    %v62 = vld [vmem:[%s0 + $0x148] sm:$0xff]
    %v63 = vld [vmem:[%s0 + $0x150] sm:$0xff]
    %v64 = vld [vmem:[%s0 + $0x158] sm:$0xff]
    %v65 = vld [vmem:[%s0 + $0x160] sm:$0xff]
    %v66 = vld [vmem:[%s0 + $0x168] sm:$0xff]
    %v67 = vld [vmem:[%s0 + $0x170] sm:$0xff]
    %v68 = vld [vmem:[%s0 + $0x178] sm:$0xff]
    %v69 = vld [vmem:[%s0 + $0x180] sm:$0xff]
    %v70 = vld [vmem:[%s0 + $0x188] sm:$0xff]
    %v71 = vld [vmem:[%s0 + $0x190] sm:$0xff]
    %v72 = vld [vmem:[%s0 + $0x198] sm:$0xff]
    %v73 = vld [vmem:[%s0 + $0x1a0] sm:$0xff]
    %v74 = vld [vmem:[%s0 + $0x1a8] sm:$0xff]
    %v75 = vld [vmem:[%s0 + $0x1b0] sm:$0xff]
    %v76 = vld [vmem:[%s0 + $0x1b8] sm:$0xff]
    %v77 = vld [vmem:[%s0 + $0x1c0] sm:$0xff]
    %v78 = vld [vmem:[%s0 + $0x1c8] sm:$0xff]
    %v79 = vld [vmem:[%s0 + $0x1d0] sm:$0xff]
    %v80 = vld [vmem:[%s0 + $0x1d8] sm:$0xff]
    %v81 = vld [vmem:[%s0 + $0x1e0] sm:$0xff]
    %v82 = vld [vmem:[%s0 + $0x1e8] sm:$0xff]
    %v83 = vld [vmem:[%s0 + $0x1f0] sm:$0xff]
    %v84 = vld [vmem:[%s0 + $0x1f8] sm:$0xff]
    %vm85 = vcmask 31744
    %86 = vst.msk [vmem:[#allocation2] sm:$0xff] %vm85, 0.0
    %87 = vst.msk [vmem:[#allocation2 + $0x8] sm:$0xff] %vm85, 0.0
    %vm88 = vcmask 25600
    %89 = vst.msk [vmem:[#allocation2 + $0x10] sm:$0x3] %vm88, 0.0
    %90 = vst.msk [vmem:[#allocation2 + $0x1b0] sm:$0xff] %vm85, 0.0
    %91 = vst.msk [vmem:[#allocation2 + $0x1b8] sm:$0xff] %vm85, 0.0
    %92 = vst.msk [vmem:[#allocation2 + $0x1c0] sm:$0x3] %vm88, 0.0
    %s93 = scalar_lea.vmem [#allocation2], 408
    %94 = vst.msk [vmem:[%s93] sm:$0xff] %vm85, 0.0
    %95 = vst.msk [vmem:[%s93 + $0x8] sm:$0xff] %vm85, 0.0
    %96 = vst.msk [vmem:[%s93 + $0x10] sm:$0x3] %vm88, 0.0
    %97 = vst.msk [vmem:[%s93 + $0x1b0] sm:$0xff] %vm85, 0.0
    %98 = vst.msk [vmem:[%s93 + $0x1b8] sm:$0xff] %vm85, 0.0
    %99 = vst.msk [vmem:[%s93 + $0x1c0] sm:$0x3] %vm88, 0.0
    %vm100 = vcmask 24576
    %101 = vst.msk [vmem:[#allocation2] sm:$0x1] %vm100, 0.0
    %102 = vst.msk [vmem:[#allocation2 + $0x18] sm:$0x1] %vm100, 0.0
    %103 = vst.msk [vmem:[#allocation2 + $0x30] sm:$0x1] %vm100, 0.0
    %104 = vst.msk [vmem:[#allocation2 + $0x48] sm:$0x1] %vm100, 0.0
    %105 = vst.msk [vmem:[#allocation2 + $0x60] sm:$0x1] %vm100, 0.0
    %106 = vst.msk [vmem:[#allocation2 + $0x78] sm:$0x1] %vm100, 0.0
    %107 = vst.msk [vmem:[#allocation2 + $0x90] sm:$0x1] %vm100, 0.0
    %108 = vst.msk [vmem:[#allocation2 + $0xa8] sm:$0x1] %vm100, 0.0
    %109 = vst.msk [vmem:[#allocation2 + $0xc0] sm:$0x1] %vm100, 0.0
    %110 = vst.msk [vmem:[#allocation2 + $0xd8] sm:$0x1] %vm100, 0.0
    %111 = vst.msk [vmem:[#allocation2 + $0xf0] sm:$0x1] %vm100, 0.0
    %112 = vst.msk [vmem:[#allocation2 + $0x108] sm:$0x1] %vm100, 0.0
    %113 = vst.msk [vmem:[#allocation2 + $0x120] sm:$0x1] %vm100, 0.0
    %114 = vst.msk [vmem:[#allocation2 + $0x138] sm:$0x1] %vm100, 0.0
    %115 = vst.msk [vmem:[#allocation2 + $0x150] sm:$0x1] %vm100, 0.0
    %116 = vst.msk [vmem:[#allocation2 + $0x168] sm:$0x1] %vm100, 0.0
    %117 = vst.msk [vmem:[#allocation2 + $0x180] sm:$0x1] %vm100, 0.0
    %118 = vst.msk [vmem:[#allocation2 + $0x198] sm:$0x1] %vm100, 0.0
    %119 = vst.msk [vmem:[#allocation2 + $0x1b0] sm:$0x1] %vm100, 0.0
    %120 = vst.msk [vmem:[#allocation2 + $0x1c8] sm:$0x1] %vm100, 0.0
    %121 = vst.msk [vmem:[#allocation2 + $0x1e0] sm:$0x1] %vm100, 0.0
    %122 = vst.msk [vmem:[#allocation2 + $0x1f8] sm:$0x1] %vm100, 0.0
    %123 = vst.msk [vmem:[#allocation2 + $0x210] sm:$0x1] %vm100, 0.0
    %124 = vst.msk [vmem:[#allocation2 + $0x228] sm:$0x1] %vm100, 0.0
    %125 = vst.msk [vmem:[#allocation2 + $0x240] sm:$0x1] %vm100, 0.0
    %126 = vst.msk [vmem:[#allocation2 + $0x258] sm:$0x1] %vm100, 0.0
    %127 = vst.msk [vmem:[#allocation2 + $0x270] sm:$0x1] %vm100, 0.0
    %128 = vst.msk [vmem:[#allocation2 + $0x288] sm:$0x1] %vm100, 0.0
    %129 = vst.msk [vmem:[#allocation2 + $0x2a0] sm:$0x1] %vm100, 0.0
    %130 = vst.msk [vmem:[#allocation2 + $0x2b8] sm:$0x1] %vm100, 0.0
    %131 = vst.msk [vmem:[#allocation2 + $0x2d0] sm:$0x1] %vm100, 0.0
    %132 = vst.msk [vmem:[#allocation2 + $0x2e8] sm:$0x1] %vm100, 0.0
    %133 = vst.msk [vmem:[#allocation2 + $0x300] sm:$0x1] %vm100, 0.0
    %134 = vst.msk [vmem:[#allocation2 + $0x318] sm:$0x1] %vm100, 0.0
    %135 = vst.msk [vmem:[#allocation2 + $0x330] sm:$0x1] %vm100, 0.0
    %136 = vst.msk [vmem:[#allocation2 + $0x348] sm:$0x1] %vm100, 0.0
    %137 = vst.msk [vmem:[#allocation2 + $0x11] sm:$0x1] %vm100, 0.0
    %138 = vst.msk [vmem:[#allocation2 + $0x29] sm:$0x1] %vm100, 0.0
    %139 = vst.msk [vmem:[#allocation2 + $0x41] sm:$0x1] %vm100, 0.0
    %140 = vst.msk [vmem:[#allocation2 + $0x59] sm:$0x1] %vm100, 0.0
    %141 = vst.msk [vmem:[#allocation2 + $0x71] sm:$0x1] %vm100, 0.0
    %142 = vst.msk [vmem:[#allocation2 + $0x89] sm:$0x1] %vm100, 0.0
    %143 = vst.msk [vmem:[#allocation2 + $0xa1] sm:$0x1] %vm100, 0.0
    %144 = vst.msk [vmem:[#allocation2 + $0xb9] sm:$0x1] %vm100, 0.0
    %145 = vst.msk [vmem:[#allocation2 + $0xd1] sm:$0x1] %vm100, 0.0
    %146 = vst.msk [vmem:[#allocation2 + $0xe9] sm:$0x1] %vm100, 0.0
    %147 = vst.msk [vmem:[#allocation2 + $0x101] sm:$0x1] %vm100, 0.0
    %148 = vst.msk [vmem:[#allocation2 + $0x119] sm:$0x1] %vm100, 0.0
    %149 = vst.msk [vmem:[#allocation2 + $0x131] sm:$0x1] %vm100, 0.0
    %150 = vst.msk [vmem:[#allocation2 + $0x149] sm:$0x1] %vm100, 0.0
    %151 = vst.msk [vmem:[#allocation2 + $0x161] sm:$0x1] %vm100, 0.0
    %152 = vst.msk [vmem:[#allocation2 + $0x179] sm:$0x1] %vm100, 0.0
    %153 = vst.msk [vmem:[#allocation2 + $0x191] sm:$0x1] %vm100, 0.0
    %154 = vst.msk [vmem:[#allocation2 + $0x1a9] sm:$0x1] %vm100, 0.0
    %155 = vst.msk [vmem:[#allocation2 + $0x1c1] sm:$0x1] %vm100, 0.0
    %156 = vst.msk [vmem:[#allocation2 + $0x1d9] sm:$0x1] %vm100, 0.0
    %157 = vst.msk [vmem:[#allocation2 + $0x1f1] sm:$0x1] %vm100, 0.0
    %158 = vst.msk [vmem:[#allocation2 + $0x209] sm:$0x1] %vm100, 0.0
    %159 = vst.msk [vmem:[#allocation2 + $0x221] sm:$0x1] %vm100, 0.0
    %160 = vst.msk [vmem:[#allocation2 + $0x239] sm:$0x1] %vm100, 0.0
    %161 = vst.msk [vmem:[#allocation2 + $0x251] sm:$0x1] %vm100, 0.0
    %162 = vst.msk [vmem:[#allocation2 + $0x269] sm:$0x1] %vm100, 0.0
    %163 = vst.msk [vmem:[#allocation2 + $0x281] sm:$0x1] %vm100, 0.0
    %164 = vst.msk [vmem:[#allocation2 + $0x299] sm:$0x1] %vm100, 0.0
    %165 = vst.msk [vmem:[#allocation2 + $0x2b1] sm:$0x1] %vm100, 0.0
    %166 = vst.msk [vmem:[#allocation2 + $0x2c9] sm:$0x1] %vm100, 0.0
    %167 = vst.msk [vmem:[#allocation2 + $0x2e1] sm:$0x1] %vm100, 0.0
    %168 = vst.msk [vmem:[#allocation2 + $0x2f9] sm:$0x1] %vm100, 0.0
    %169 = vst.msk [vmem:[#allocation2 + $0x311] sm:$0x1] %vm100, 0.0
    %170 = vst.msk [vmem:[#allocation2 + $0x329] sm:$0x1] %vm100, 0.0
    %171 = vst.msk [vmem:[#allocation2 + $0x341] sm:$0x1] %vm100, 0.0
    %172 = vst.msk [vmem:[#allocation2 + $0x359] sm:$0x1] %vm100, 0.0
    %s173 = scalar_lea.vmem [#allocation2], 24
    %174 = vst.msk [vmem:[%s173 + $0x1] sm:$0xff] %vm85, %v21
    %175 = vst.msk [vmem:[%s173 + $0x9] sm:$0xff] %vm85, %v22
    %176 = vst.msk [vmem:[%s173 + $0x19] sm:$0xff] %vm85, %v23
    %177 = vst.msk [vmem:[%s173 + $0x21] sm:$0xff] %vm85, %v24
    %178 = vst.msk [vmem:[%s173 + $0x31] sm:$0xff] %vm85, %v25
    %179 = vst.msk [vmem:[%s173 + $0x39] sm:$0xff] %vm85, %v26
    %180 = vst.msk [vmem:[%s173 + $0x49] sm:$0xff] %vm85, %v27
    %181 = vst.msk [vmem:[%s173 + $0x51] sm:$0xff] %vm85, %v28
    %182 = vst.msk [vmem:[%s173 + $0x61] sm:$0xff] %vm85, %v29
    %183 = vst.msk [vmem:[%s173 + $0x69] sm:$0xff] %vm85, %v30
    %184 = vst.msk [vmem:[%s173 + $0x79] sm:$0xff] %vm85, %v31
    %185 = vst.msk [vmem:[%s173 + $0x81] sm:$0xff] %vm85, %v32
    %186 = vst.msk [vmem:[%s173 + $0x91] sm:$0xff] %vm85, %v33
    %187 = vst.msk [vmem:[%s173 + $0x99] sm:$0xff] %vm85, %v34
    %188 = vst.msk [vmem:[%s173 + $0xa9] sm:$0xff] %vm85, %v35
    %189 = vst.msk [vmem:[%s173 + $0xb1] sm:$0xff] %vm85, %v36
    %190 = vst.msk [vmem:[%s173 + $0xc1] sm:$0xff] %vm85, %v37
    %191 = vst.msk [vmem:[%s173 + $0xc9] sm:$0xff] %vm85, %v38
    %192 = vst.msk [vmem:[%s173 + $0xd9] sm:$0xff] %vm85, %v39
    %193 = vst.msk [vmem:[%s173 + $0xe1] sm:$0xff] %vm85, %v40
    %194 = vst.msk [vmem:[%s173 + $0xf1] sm:$0xff] %vm85, %v41
    %195 = vst.msk [vmem:[%s173 + $0xf9] sm:$0xff] %vm85, %v42
    %196 = vst.msk [vmem:[%s173 + $0x109] sm:$0xff] %vm85, %v43
    %197 = vst.msk [vmem:[%s173 + $0x111] sm:$0xff] %vm85, %v44
    %198 = vst.msk [vmem:[%s173 + $0x121] sm:$0xff] %vm85, %v45
    %199 = vst.msk [vmem:[%s173 + $0x129] sm:$0xff] %vm85, %v46
    %200 = vst.msk [vmem:[%s173 + $0x139] sm:$0xff] %vm85, %v47
    %201 = vst.msk [vmem:[%s173 + $0x141] sm:$0xff] %vm85, %v48
    %202 = vst.msk [vmem:[%s173 + $0x151] sm:$0xff] %vm85, %v49
    %203 = vst.msk [vmem:[%s173 + $0x159] sm:$0xff] %vm85, %v50
    %204 = vst.msk [vmem:[%s173 + $0x169] sm:$0xff] %vm85, %v51
    %205 = vst.msk [vmem:[%s173 + $0x171] sm:$0xff] %vm85, %v52
    %206 = vst.msk [vmem:[%s173 + $0x1b1] sm:$0xff] %vm85, %v53
    %207 = vst.msk [vmem:[%s173 + $0x1b9] sm:$0xff] %vm85, %v54
    %208 = vst.msk [vmem:[%s173 + $0x1c9] sm:$0xff] %vm85, %v55
    %209 = vst.msk [vmem:[%s173 + $0x1d1] sm:$0xff] %vm85, %v56
    %210 = vst.msk [vmem:[%s173 + $0x1e1] sm:$0xff] %vm85, %v57
    %211 = vst.msk [vmem:[%s173 + $0x1e9] sm:$0xff] %vm85, %v58
    %212 = vst.msk [vmem:[%s173 + $0x1f9] sm:$0xff] %vm85, %v59
    %213 = vst.msk [vmem:[%s173 + $0x201] sm:$0xff] %vm85, %v60
    %214 = vst.msk [vmem:[%s173 + $0x211] sm:$0xff] %vm85, %v61
    %215 = vst.msk [vmem:[%s173 + $0x219] sm:$0xff] %vm85, %v62
    %216 = vst.msk [vmem:[%s173 + $0x229] sm:$0xff] %vm85, %v63
    %217 = vst.msk [vmem:[%s173 + $0x231] sm:$0xff] %vm85, %v64
    %218 = vst.msk [vmem:[%s173 + $0x241] sm:$0xff] %vm85, %v65
    %219 = vst.msk [vmem:[%s173 + $0x249] sm:$0xff] %vm85, %v66
    %220 = vst.msk [vmem:[%s173 + $0x259] sm:$0xff] %vm85, %v67
    %221 = vst.msk [vmem:[%s173 + $0x261] sm:$0xff] %vm85, %v68
    %222 = vst.msk [vmem:[%s173 + $0x271] sm:$0xff] %vm85, %v69
    %223 = vst.msk [vmem:[%s173 + $0x279] sm:$0xff] %vm85, %v70
    %224 = vst.msk [vmem:[%s173 + $0x289] sm:$0xff] %vm85, %v71
    %225 = vst.msk [vmem:[%s173 + $0x291] sm:$0xff] %vm85, %v72
    %226 = vst.msk [vmem:[%s173 + $0x2a1] sm:$0xff] %vm85, %v73
    %227 = vst.msk [vmem:[%s173 + $0x2a9] sm:$0xff] %vm85, %v74
    %228 = vst.msk [vmem:[%s173 + $0x2b9] sm:$0xff] %vm85, %v75
    %229 = vst.msk [vmem:[%s173 + $0x2c1] sm:$0xff] %vm85, %v76
    %230 = vst.msk [vmem:[%s173 + $0x2d1] sm:$0xff] %vm85, %v77
    %231 = vst.msk [vmem:[%s173 + $0x2d9] sm:$0xff] %vm85, %v78
    %232 = vst.msk [vmem:[%s173 + $0x2e9] sm:$0xff] %vm85, %v79
    %233 = vst.msk [vmem:[%s173 + $0x2f1] sm:$0xff] %vm85, %v80
    %234 = vst.msk [vmem:[%s173 + $0x301] sm:$0xff] %vm85, %v81
    %235 = vst.msk [vmem:[%s173 + $0x309] sm:$0xff] %vm85, %v82
    %236 = vst.msk [vmem:[%s173 + $0x319] sm:$0xff] %vm85, %v83
    %237 = vst.msk [vmem:[%s173 + $0x321] sm:$0xff] %vm85, %v84
    %v238 = vld [vmem:[#allocation2] sm:$0xff]
    %v239 = vld [vmem:[#allocation2 + $0x8] sm:$0xff]
    %v240 = vld [vmem:[#allocation2 + $0x18] sm:$0xff]
    %v241 = vld [vmem:[#allocation2 + $0x20] sm:$0xff]
    %v242 = vld [vmem:[#allocation2 + $0x30] sm:$0xff]
    %v243 = vld [vmem:[#allocation2 + $0x38] sm:$0xff]
    %v244 = vld [vmem:[#allocation2 + $0x48] sm:$0xff]
    %v245 = vld [vmem:[#allocation2 + $0x50] sm:$0xff]
    %v246 = vld [vmem:[#allocation2 + $0x60] sm:$0xff]
    %v247 = vld [vmem:[#allocation2 + $0x68] sm:$0xff]
    %v248 = vld [vmem:[#allocation2 + $0x78] sm:$0xff]
    %v249 = vld [vmem:[#allocation2 + $0x80] sm:$0xff]
    %v250 = vld [vmem:[#allocation2 + $0x90] sm:$0xff]
    %v251 = vld [vmem:[#allocation2 + $0x98] sm:$0xff]
    %v252 = vld [vmem:[#allocation2 + $0xa8] sm:$0xff]
    %v253 = vld [vmem:[#allocation2 + $0xb0] sm:$0xff]
    %v254 = vld [vmem:[#allocation2 + $0xc0] sm:$0xff]
    %v255 = vld [vmem:[#allocation2 + $0xc8] sm:$0xff]
    %v256 = vld [vmem:[#allocation2 + $0xd8] sm:$0xff]
    %v257 = vld [vmem:[#allocation2 + $0xe0] sm:$0xff]
    %v258 = vld [vmem:[#allocation2 + $0xf0] sm:$0xff]
    %v259 = vld [vmem:[#allocation2 + $0xf8] sm:$0xff]
    %v260 = vld [vmem:[#allocation2 + $0x108] sm:$0xff]
    %v261 = vld [vmem:[#allocation2 + $0x110] sm:$0xff]
    %v262 = vld [vmem:[#allocation2 + $0x120] sm:$0xff]
    %v263 = vld [vmem:[#allocation2 + $0x128] sm:$0xff]
    %v264 = vld [vmem:[#allocation2 + $0x138] sm:$0xff]
    %v265 = vld [vmem:[#allocation2 + $0x140] sm:$0xff]
    %v266 = vld [vmem:[#allocation2 + $0x150] sm:$0xff]
    %v267 = vld [vmem:[#allocation2 + $0x158] sm:$0xff]
    %v268 = vld [vmem:[#allocation2 + $0x168] sm:$0xff]
    %v269 = vld [vmem:[#allocation2 + $0x170] sm:$0xff]
    %v270 = vld [vmem:[#allocation2 + $0x1b0] sm:$0xff]
    %v271 = vld [vmem:[#allocation2 + $0x1b8] sm:$0xff]
    %v272 = vld [vmem:[#allocation2 + $0x1c8] sm:$0xff]
    %v273 = vld [vmem:[#allocation2 + $0x1d0] sm:$0xff]
    %v274 = vld [vmem:[#allocation2 + $0x1e0] sm:$0xff]
    %v275 = vld [vmem:[#allocation2 + $0x1e8] sm:$0xff]
    %v276 = vld [vmem:[#allocation2 + $0x1f8] sm:$0xff]
    %v277 = vld [vmem:[#allocation2 + $0x200] sm:$0xff]
    %v278 = vld [vmem:[#allocation2 + $0x210] sm:$0xff]
    %v279 = vld [vmem:[#allocation2 + $0x218] sm:$0xff]
    %v280 = vld [vmem:[#allocation2 + $0x228] sm:$0xff]
    %v281 = vld [vmem:[#allocation2 + $0x230] sm:$0xff]
    %v282 = vld [vmem:[#allocation2 + $0x240] sm:$0xff]
    %v283 = vld [vmem:[#allocation2 + $0x248] sm:$0xff]
    %v284 = vld [vmem:[#allocation2 + $0x258] sm:$0xff]
    %v285 = vld [vmem:[#allocation2 + $0x260] sm:$0xff]
    %v286 = vld [vmem:[#allocation2 + $0x270] sm:$0xff]
    %v287 = vld [vmem:[#allocation2 + $0x278] sm:$0xff]
    %v288 = vld [vmem:[#allocation2 + $0x288] sm:$0xff]
    %v289 = vld [vmem:[#allocation2 + $0x290] sm:$0xff]
    %v290 = vld [vmem:[#allocation2 + $0x2a0] sm:$0xff]
    %v291 = vld [vmem:[#allocation2 + $0x2a8] sm:$0xff]
    %v292 = vld [vmem:[#allocation2 + $0x2b8] sm:$0xff]
    %v293 = vld [vmem:[#allocation2 + $0x2c0] sm:$0xff]
    %v294 = vld [vmem:[#allocation2 + $0x2d0] sm:$0xff]
    %v295 = vld [vmem:[#allocation2 + $0x2d8] sm:$0xff]
    %v296 = vld [vmem:[#allocation2 + $0x2e8] sm:$0xff]
    %v297 = vld [vmem:[#allocation2 + $0x2f0] sm:$0xff]
    %v298 = vld [vmem:[#allocation2 + $0x300] sm:$0xff]
    %v299 = vld [vmem:[#allocation2 + $0x308] sm:$0xff]
    %v300 = vld [vmem:[#allocation2 + $0x318] sm:$0xff]
    %v301 = vld [vmem:[#allocation2 + $0x320] sm:$0xff]
    %v302 = vld [vmem:[%s1] sm:$0xf]
    %v303 = vld [vmem:[#allocation2 + $0x1] sm:$0xff]
    %v304 = vld [vmem:[#allocation2 + $0x9] sm:$0xff]
    %v305 = vld [vmem:[#allocation2 + $0x19] sm:$0xff]
    %v306 = vld [vmem:[#allocation2 + $0x21] sm:$0xff]
    %v307 = vld [vmem:[#allocation2 + $0x31] sm:$0xff]
    %v308 = vld [vmem:[#allocation2 + $0x39] sm:$0xff]
    %v309 = vld [vmem:[#allocation2 + $0x49] sm:$0xff]
    %v310 = vld [vmem:[#allocation2 + $0x51] sm:$0xff]
    %v311 = vld [vmem:[#allocation2 + $0x61] sm:$0xff]
    %v312 = vld [vmem:[#allocation2 + $0x69] sm:$0xff]
    %v313 = vld [vmem:[#allocation2 + $0x79] sm:$0xff]
    %v314 = vld [vmem:[#allocation2 + $0x81] sm:$0xff]
    %v315 = vld [vmem:[#allocation2 + $0x91] sm:$0xff]
    %v316 = vld [vmem:[#allocation2 + $0x99] sm:$0xff]
    %v317 = vld [vmem:[#allocation2 + $0xa9] sm:$0xff]
    %v318 = vld [vmem:[#allocation2 + $0xb1] sm:$0xff]
    %v319 = vld [vmem:[#allocation2 + $0xc1] sm:$0xff]
    %v320 = vld [vmem:[#allocation2 + $0xc9] sm:$0xff]
    %v321 = vld [vmem:[#allocation2 + $0xd9] sm:$0xff]
    %v322 = vld [vmem:[#allocation2 + $0xe1] sm:$0xff]
    %v323 = vld [vmem:[#allocation2 + $0xf1] sm:$0xff]
    %v324 = vld [vmem:[#allocation2 + $0xf9] sm:$0xff]
    %v325 = vld [vmem:[#allocation2 + $0x109] sm:$0xff]
    %v326 = vld [vmem:[#allocation2 + $0x111] sm:$0xff]
    %v327 = vld [vmem:[#allocation2 + $0x121] sm:$0xff]
    %v328 = vld [vmem:[#allocation2 + $0x129] sm:$0xff]
    %v329 = vld [vmem:[#allocation2 + $0x139] sm:$0xff]
    %v330 = vld [vmem:[#allocation2 + $0x141] sm:$0xff]
    %v331 = vld [vmem:[#allocation2 + $0x151] sm:$0xff]
    %v332 = vld [vmem:[#allocation2 + $0x159] sm:$0xff]
    %v333 = vld [vmem:[#allocation2 + $0x169] sm:$0xff]
    %v334 = vld [vmem:[#allocation2 + $0x171] sm:$0xff]
    %v335 = vld [vmem:[#allocation2 + $0x1b1] sm:$0xff]
    %v336 = vld [vmem:[#allocation2 + $0x1b9] sm:$0xff]
    %v337 = vld [vmem:[#allocation2 + $0x1c9] sm:$0xff]
    %v338 = vld [vmem:[#allocation2 + $0x1d1] sm:$0xff]
    %v339 = vld [vmem:[#allocation2 + $0x1e1] sm:$0xff]
    %v340 = vld [vmem:[#allocation2 + $0x1e9] sm:$0xff]
    %v341 = vld [vmem:[#allocation2 + $0x1f9] sm:$0xff]
    %v342 = vld [vmem:[#allocation2 + $0x201] sm:$0xff]
    %v343 = vld [vmem:[#allocation2 + $0x211] sm:$0xff]
    %v344 = vld [vmem:[#allocation2 + $0x219] sm:$0xff]
    %v345 = vld [vmem:[#allocation2 + $0x229] sm:$0xff]
    %v346 = vld [vmem:[#allocation2 + $0x231] sm:$0xff]
    %v347 = vld [vmem:[#allocation2 + $0x241] sm:$0xff]
    %v348 = vld [vmem:[#allocation2 + $0x249] sm:$0xff]
    %v349 = vld [vmem:[#allocation2 + $0x259] sm:$0xff]
    %v350 = vld [vmem:[#allocation2 + $0x261] sm:$0xff]
    %v351 = vld [vmem:[#allocation2 + $0x271] sm:$0xff]
    %v352 = vld [vmem:[#allocation2 + $0x279] sm:$0xff]
    %v353 = vld [vmem:[#allocation2 + $0x289] sm:$0xff]
    %v354 = vld [vmem:[#allocation2 + $0x291] sm:$0xff]
    %v355 = vld [vmem:[#allocation2 + $0x2a1] sm:$0xff]
    %v356 = vld [vmem:[#allocation2 + $0x2a9] sm:$0xff]
    %v357 = vld [vmem:[#allocation2 + $0x2b9] sm:$0xff]
    %v358 = vld [vmem:[#allocation2 + $0x2c1] sm:$0xff]
    %v359 = vld [vmem:[#allocation2 + $0x2d1] sm:$0xff]
    %v360 = vld [vmem:[#allocation2 + $0x2d9] sm:$0xff]
    %v361 = vld [vmem:[#allocation2 + $0x2e9] sm:$0xff]
    %v362 = vld [vmem:[#allocation2 + $0x2f1] sm:$0xff]
    %v363 = vld [vmem:[#allocation2 + $0x301] sm:$0xff]
    %v364 = vld [vmem:[#allocation2 + $0x309] sm:$0xff]
    %v365 = vld [vmem:[#allocation2 + $0x319] sm:$0xff]
    %v366 = vld [vmem:[#allocation2 + $0x321] sm:$0xff]
    %v367 = vld [vmem:[%s1 + $0x4] sm:$0xf]
    %v369 = vsel %vm85, %v303, 0
    %v372 = vsel %vm85, %v304, 0
    %v375 = vsel %vm85, %v305, 0
    %v378 = vsel %vm85, %v306, 0
    %v381 = vsel %vm85, %v307, 0
    %v384 = vsel %vm85, %v308, 0
    %v387 = vsel %vm85, %v309, 0
    %v390 = vsel %vm85, %v310, 0
    %v393 = vsel %vm85, %v311, 0
    %v396 = vsel %vm85, %v312, 0
    %v399 = vsel %vm85, %v313, 0
    %v402 = vsel %vm85, %v314, 0
    %v405 = vsel %vm85, %v315, 0
    %v408 = vsel %vm85, %v316, 0
    %v411 = vsel %vm85, %v317, 0
    %v414 = vsel %vm85, %v318, 0
    %v417 = vsel %vm85, %v319, 0
    %v420 = vsel %vm85, %v320, 0
    %v423 = vsel %vm85, %v321, 0
    %v426 = vsel %vm85, %v322, 0
    %v429 = vsel %vm85, %v323, 0
    %v432 = vsel %vm85, %v324, 0
    %v435 = vsel %vm85, %v325, 0
    %v438 = vsel %vm85, %v326, 0
    %v441 = vsel %vm85, %v327, 0
    %v444 = vsel %vm85, %v328, 0
    %v447 = vsel %vm85, %v329, 0
    %v450 = vsel %vm85, %v330, 0
    %v453 = vsel %vm85, %v331, 0
    %v456 = vsel %vm85, %v332, 0
    %v459 = vsel %vm85, %v333, 0
    %v462 = vsel %vm85, %v334, 0
    %v465 = vsel %vm85, %v335, 0
    %v468 = vsel %vm85, %v336, 0
    %v471 = vsel %vm85, %v337, 0
    %v474 = vsel %vm85, %v338, 0
    %v477 = vsel %vm85, %v339, 0
    %v480 = vsel %vm85, %v340, 0
    %v483 = vsel %vm85, %v341, 0
    %v486 = vsel %vm85, %v342, 0
    %v489 = vsel %vm85, %v343, 0
    %v492 = vsel %vm85, %v344, 0
    %v495 = vsel %vm85, %v345, 0
    %v498 = vsel %vm85, %v346, 0
    %v501 = vsel %vm85, %v347, 0
    %v504 = vsel %vm85, %v348, 0
    %v507 = vsel %vm85, %v349, 0
    %v510 = vsel %vm85, %v350, 0
    %v513 = vsel %vm85, %v351, 0
    %v516 = vsel %vm85, %v352, 0
    %v519 = vsel %vm85, %v353, 0
    %v522 = vsel %vm85, %v354, 0
    %v525 = vsel %vm85, %v355, 0
    %v528 = vsel %vm85, %v356, 0
    %v531 = vsel %vm85, %v357, 0
    %v534 = vsel %vm85, %v358, 0
    %v537 = vsel %vm85, %v359, 0
    %v540 = vsel %vm85, %v360, 0
    %v543 = vsel %vm85, %v361, 0
    %v546 = vsel %vm85, %v362, 0
    %v549 = vsel %vm85, %v363, 0
    %v552 = vsel %vm85, %v364, 0
    %v555 = vsel %vm85, %v365, 0
    %v558 = vsel %vm85, %v366, 0
    %vm560 = vcmask 1043456
    %v562 = vsel %vm560, %v367, 0
    %564 = vmatpush.msra.mxu0 0.0
    %565 = vmatpush.msra.mxu0 0.0
    %566 = vmatpush.msra.mxu0 0.0
    %567 = vmatpush.msra.mxu0 0.0
    %568 = vmatpush.msra.mxu0 0.0
    %569 = vmatpush.msra.mxu0 0.0
    %570 = vmatpush.msra.mxu0 0.0
    %571 = vmatpush.msra.mxu0 0.0
    %572 = vmatpush.msra.mxu0 0.0
    %573 = vmatpush.msra.mxu0 0.0
    %574 = vmatpush.msra.mxu0 0.0
    %575 = vmatpush.msra.mxu0 0.0
    %576 = vmatpush.msra.mxu0 0.0
    %577 = vmatpush.msra.mxu0 0.0
    %578 = vmatpush.msra.mxu0 0.0
    %579 = vmatpush.msra.mxu0 %v562
    %580 = vmatmul.f32.gmra.mxu0 %v369
    %v581 = vpop.f32.mrf.mxu0
    %v582 = vadd.f32 0.0, %v581
    %583 = vmatmul.f32.gmra.mxu0 %v372
    %v584 = vpop.f32.mrf.mxu0
    %v585 = vadd.f32 0.0, %v584
    %586 = vmatmul.f32.gmra.mxu0 %v375
    %v587 = vpop.f32.mrf.mxu0
    %v588 = vadd.f32 0.0, %v587
    %589 = vmatmul.f32.gmra.mxu0 %v378
    %v590 = vpop.f32.mrf.mxu0
    %v591 = vadd.f32 0.0, %v590
    %592 = vmatmul.f32.gmra.mxu0 %v381
    %v593 = vpop.f32.mrf.mxu0
    %v594 = vadd.f32 0.0, %v593
    %595 = vmatmul.f32.gmra.mxu0 %v384
    %v596 = vpop.f32.mrf.mxu0
    %v597 = vadd.f32 0.0, %v596
    %598 = vmatmul.f32.gmra.mxu0 %v387
    %v599 = vpop.f32.mrf.mxu0
    %v600 = vadd.f32 0.0, %v599
    %601 = vmatmul.f32.gmra.mxu0 %v390
    %v602 = vpop.f32.mrf.mxu0
    %v603 = vadd.f32 0.0, %v602
    %604 = vmatmul.f32.gmra.mxu0 %v393
    %v605 = vpop.f32.mrf.mxu0
    %v606 = vadd.f32 0.0, %v605
    %607 = vmatmul.f32.gmra.mxu0 %v396
    %v608 = vpop.f32.mrf.mxu0
    %v609 = vadd.f32 0.0, %v608
    %610 = vmatmul.f32.gmra.mxu0 %v399
    %v611 = vpop.f32.mrf.mxu0
    %v612 = vadd.f32 0.0, %v611
    %613 = vmatmul.f32.gmra.mxu0 %v402
    %v614 = vpop.f32.mrf.mxu0
    %v615 = vadd.f32 0.0, %v614
    %616 = vmatmul.f32.gmra.mxu0 %v405
    %v617 = vpop.f32.mrf.mxu0
    %v618 = vadd.f32 0.0, %v617
    %619 = vmatmul.f32.gmra.mxu0 %v408
    %v620 = vpop.f32.mrf.mxu0
    %v621 = vadd.f32 0.0, %v620
    %622 = vmatmul.f32.gmra.mxu0 %v411
    %v623 = vpop.f32.mrf.mxu0
    %v624 = vadd.f32 0.0, %v623
    %625 = vmatmul.f32.gmra.mxu0 %v414
    %v626 = vpop.f32.mrf.mxu0
    %v627 = vadd.f32 0.0, %v626
    %628 = vmatmul.f32.gmra.mxu0 %v417
    %v629 = vpop.f32.mrf.mxu0
    %v630 = vadd.f32 0.0, %v629
    %631 = vmatmul.f32.gmra.mxu0 %v420
    %v632 = vpop.f32.mrf.mxu0
    %v633 = vadd.f32 0.0, %v632
    %634 = vmatmul.f32.gmra.mxu0 %v423
    %v635 = vpop.f32.mrf.mxu0
    %v636 = vadd.f32 0.0, %v635
    %637 = vmatmul.f32.gmra.mxu0 %v426
    %v638 = vpop.f32.mrf.mxu0
    %v639 = vadd.f32 0.0, %v638
    %640 = vmatmul.f32.gmra.mxu0 %v429
    %v641 = vpop.f32.mrf.mxu0
    %v642 = vadd.f32 0.0, %v641
    %643 = vmatmul.f32.gmra.mxu0 %v432
    %v644 = vpop.f32.mrf.mxu0
    %v645 = vadd.f32 0.0, %v644
    %646 = vmatmul.f32.gmra.mxu0 %v435
    %v647 = vpop.f32.mrf.mxu0
    %v648 = vadd.f32 0.0, %v647
    %649 = vmatmul.f32.gmra.mxu0 %v438
    %v650 = vpop.f32.mrf.mxu0
    %v651 = vadd.f32 0.0, %v650
    %652 = vmatmul.f32.gmra.mxu0 %v441
    %v653 = vpop.f32.mrf.mxu0
    %v654 = vadd.f32 0.0, %v653
    %655 = vmatmul.f32.gmra.mxu0 %v444
    %v656 = vpop.f32.mrf.mxu0
    %v657 = vadd.f32 0.0, %v656
    %658 = vmatmul.f32.gmra.mxu0 %v447
    %v659 = vpop.f32.mrf.mxu0
    %v660 = vadd.f32 0.0, %v659
    %661 = vmatmul.f32.gmra.mxu0 %v450
    %v662 = vpop.f32.mrf.mxu0
    %v663 = vadd.f32 0.0, %v662
    %664 = vmatmul.f32.gmra.mxu0 %v453
    %v665 = vpop.f32.mrf.mxu0
    %v666 = vadd.f32 0.0, %v665
    %667 = vmatmul.f32.gmra.mxu0 %v456
    %v668 = vpop.f32.mrf.mxu0
    %v669 = vadd.f32 0.0, %v668
    %670 = vmatmul.f32.gmra.mxu0 %v459
    %v671 = vpop.f32.mrf.mxu0
    %v672 = vadd.f32 0.0, %v671
    %673 = vmatmul.f32.gmra.mxu0 %v462
    %v674 = vpop.f32.mrf.mxu0
    %v675 = vadd.f32 0.0, %v674
    %676 = vmatmul.f32.gmra.mxu0 %v465
    %v677 = vpop.f32.mrf.mxu0
    %v678 = vadd.f32 0.0, %v677
    %679 = vmatmul.f32.gmra.mxu0 %v468
    %v680 = vpop.f32.mrf.mxu0
    %v681 = vadd.f32 0.0, %v680
    %682 = vmatmul.f32.gmra.mxu0 %v471
    %v683 = vpop.f32.mrf.mxu0
    %v684 = vadd.f32 0.0, %v683
    %685 = vmatmul.f32.gmra.mxu0 %v474
    %v686 = vpop.f32.mrf.mxu0
    %v687 = vadd.f32 0.0, %v686
    %688 = vmatmul.f32.gmra.mxu0 %v477
    %v689 = vpop.f32.mrf.mxu0
    %v690 = vadd.f32 0.0, %v689
    %691 = vmatmul.f32.gmra.mxu0 %v480
    %v692 = vpop.f32.mrf.mxu0
    %v693 = vadd.f32 0.0, %v692
    %694 = vmatmul.f32.gmra.mxu0 %v483
    %v695 = vpop.f32.mrf.mxu0
    %v696 = vadd.f32 0.0, %v695
    %697 = vmatmul.f32.gmra.mxu0 %v486
    %v698 = vpop.f32.mrf.mxu0
    %v699 = vadd.f32 0.0, %v698
    %700 = vmatmul.f32.gmra.mxu0 %v489
    %v701 = vpop.f32.mrf.mxu0
    %v702 = vadd.f32 0.0, %v701
    %703 = vmatmul.f32.gmra.mxu0 %v492
    %v704 = vpop.f32.mrf.mxu0
    %v705 = vadd.f32 0.0, %v704
    %706 = vmatmul.f32.gmra.mxu0 %v495
    %v707 = vpop.f32.mrf.mxu0
    %v708 = vadd.f32 0.0, %v707
    %709 = vmatmul.f32.gmra.mxu0 %v498
    %v710 = vpop.f32.mrf.mxu0
    %v711 = vadd.f32 0.0, %v710
    %712 = vmatmul.f32.gmra.mxu0 %v501
    %v713 = vpop.f32.mrf.mxu0
    %v714 = vadd.f32 0.0, %v713
    %715 = vmatmul.f32.gmra.mxu0 %v504
    %v716 = vpop.f32.mrf.mxu0
    %v717 = vadd.f32 0.0, %v716
    %718 = vmatmul.f32.gmra.mxu0 %v507
    %v719 = vpop.f32.mrf.mxu0
    %v720 = vadd.f32 0.0, %v719
    %721 = vmatmul.f32.gmra.mxu0 %v510
    %v722 = vpop.f32.mrf.mxu0
    %v723 = vadd.f32 0.0, %v722
    %724 = vmatmul.f32.gmra.mxu0 %v513
    %v725 = vpop.f32.mrf.mxu0
    %v726 = vadd.f32 0.0, %v725
    %727 = vmatmul.f32.gmra.mxu0 %v516
    %v728 = vpop.f32.mrf.mxu0
    %v729 = vadd.f32 0.0, %v728
    %730 = vmatmul.f32.gmra.mxu0 %v519
    %v731 = vpop.f32.mrf.mxu0
    %v732 = vadd.f32 0.0, %v731
    %733 = vmatmul.f32.gmra.mxu0 %v522
    %v734 = vpop.f32.mrf.mxu0
    %v735 = vadd.f32 0.0, %v734
    %736 = vmatmul.f32.gmra.mxu0 %v525
    %v737 = vpop.f32.mrf.mxu0
    %v738 = vadd.f32 0.0, %v737
    %739 = vmatmul.f32.gmra.mxu0 %v528
    %v740 = vpop.f32.mrf.mxu0
    %v741 = vadd.f32 0.0, %v740
    %742 = vmatmul.f32.gmra.mxu0 %v531
    %v743 = vpop.f32.mrf.mxu0
    %v744 = vadd.f32 0.0, %v743
    %745 = vmatmul.f32.gmra.mxu0 %v534
    %v746 = vpop.f32.mrf.mxu0
    %v747 = vadd.f32 0.0, %v746
    %748 = vmatmul.f32.gmra.mxu0 %v537
    %v749 = vpop.f32.mrf.mxu0
    %v750 = vadd.f32 0.0, %v749
    %751 = vmatmul.f32.gmra.mxu0 %v540
    %v752 = vpop.f32.mrf.mxu0
    %v753 = vadd.f32 0.0, %v752
    %754 = vmatmul.f32.gmra.mxu0 %v543
    %v755 = vpop.f32.mrf.mxu0
    %v756 = vadd.f32 0.0, %v755
    %757 = vmatmul.f32.gmra.mxu0 %v546
    %v758 = vpop.f32.mrf.mxu0
    %v759 = vadd.f32 0.0, %v758
    %760 = vmatmul.f32.gmra.mxu0 %v549
    %v761 = vpop.f32.mrf.mxu0
    %v762 = vadd.f32 0.0, %v761
    %763 = vmatmul.f32.gmra.mxu0 %v552
    %v764 = vpop.f32.mrf.mxu0
    %v765 = vadd.f32 0.0, %v764
    %766 = vmatmul.f32.gmra.mxu0 %v555
    %v767 = vpop.f32.mrf.mxu0
    %v768 = vadd.f32 0.0, %v767
    %769 = vmatmul.f32.gmra.mxu0 %v558
    %v770 = vpop.f32.mrf.mxu0
    %v771 = vadd.f32 0.0, %v770
    %772 = vdwg.mxu0
    %v774 = vsel %vm85, %v238, 0
    %v777 = vsel %vm85, %v239, 0
    %v780 = vsel %vm85, %v240, 0
    %v783 = vsel %vm85, %v241, 0
    %v786 = vsel %vm85, %v242, 0
    %v789 = vsel %vm85, %v243, 0
    %v792 = vsel %vm85, %v244, 0
    %v795 = vsel %vm85, %v245, 0
    %v798 = vsel %vm85, %v246, 0
    %v801 = vsel %vm85, %v247, 0
    %v804 = vsel %vm85, %v248, 0
    %v807 = vsel %vm85, %v249, 0
    %v810 = vsel %vm85, %v250, 0
    %v813 = vsel %vm85, %v251, 0
    %v816 = vsel %vm85, %v252, 0
    %v819 = vsel %vm85, %v253, 0
    %v822 = vsel %vm85, %v254, 0
    %v825 = vsel %vm85, %v255, 0
    %v828 = vsel %vm85, %v256, 0
    %v831 = vsel %vm85, %v257, 0
    %v834 = vsel %vm85, %v258, 0
    %v837 = vsel %vm85, %v259, 0
    %v840 = vsel %vm85, %v260, 0
    %v843 = vsel %vm85, %v261, 0
    %v846 = vsel %vm85, %v262, 0
    %v849 = vsel %vm85, %v263, 0
    %v852 = vsel %vm85, %v264, 0
    %v855 = vsel %vm85, %v265, 0
    %v858 = vsel %vm85, %v266, 0
    %v861 = vsel %vm85, %v267, 0
    %v864 = vsel %vm85, %v268, 0
    %v867 = vsel %vm85, %v269, 0
    %v870 = vsel %vm85, %v270, 0
    %v873 = vsel %vm85, %v271, 0
    %v876 = vsel %vm85, %v272, 0
    %v879 = vsel %vm85, %v273, 0
    %v882 = vsel %vm85, %v274, 0
    %v885 = vsel %vm85, %v275, 0
    %v888 = vsel %vm85, %v276, 0
    %v891 = vsel %vm85, %v277, 0
    %v894 = vsel %vm85, %v278, 0
    %v897 = vsel %vm85, %v279, 0
    %v900 = vsel %vm85, %v280, 0
    %v903 = vsel %vm85, %v281, 0
    %v906 = vsel %vm85, %v282, 0
    %v909 = vsel %vm85, %v283, 0
    %v912 = vsel %vm85, %v284, 0
    %v915 = vsel %vm85, %v285, 0
    %v918 = vsel %vm85, %v286, 0
    %v921 = vsel %vm85, %v287, 0
    %v924 = vsel %vm85, %v288, 0
    %v927 = vsel %vm85, %v289, 0
    %v930 = vsel %vm85, %v290, 0
    %v933 = vsel %vm85, %v291, 0
    %v936 = vsel %vm85, %v292, 0
    %v939 = vsel %vm85, %v293, 0
    %v942 = vsel %vm85, %v294, 0
    %v945 = vsel %vm85, %v295, 0
    %v948 = vsel %vm85, %v296, 0
    %v951 = vsel %vm85, %v297, 0
    %v954 = vsel %vm85, %v298, 0
    %v957 = vsel %vm85, %v299, 0
    %v960 = vsel %vm85, %v300, 0
    %v963 = vsel %vm85, %v301, 0
    %v966 = vsel %vm560, %v302, 0
    %968 = vmatpush.msra.mxu0 0.0
    %969 = vmatpush.msra.mxu0 0.0
    %970 = vmatpush.msra.mxu0 0.0
    %971 = vmatpush.msra.mxu0 0.0
    %972 = vmatpush.msra.mxu0 0.0
    %973 = vmatpush.msra.mxu0 0.0
    %974 = vmatpush.msra.mxu0 0.0
    %975 = vmatpush.msra.mxu0 0.0
    %976 = vmatpush.msra.mxu0 0.0
    %977 = vmatpush.msra.mxu0 0.0
    %978 = vmatpush.msra.mxu0 0.0
    %979 = vmatpush.msra.mxu0 0.0
    %980 = vmatpush.msra.mxu0 0.0
    %981 = vmatpush.msra.mxu0 0.0
    %982 = vmatpush.msra.mxu0 0.0
    %983 = vmatpush.msra.mxu0 %v966
    %984 = vmatmul.f32.gmra.mxu0 %v774
    %v985 = vpop.f32.mrf.mxu0
    %v986 = vadd.f32 %v582, %v985
    %987 = vmatmul.f32.gmra.mxu0 %v777
    %v988 = vpop.f32.mrf.mxu0
    %v989 = vadd.f32 %v585, %v988
    %990 = vmatmul.f32.gmra.mxu0 %v780
    %v991 = vpop.f32.mrf.mxu0
    %v992 = vadd.f32 %v588, %v991
    %993 = vmatmul.f32.gmra.mxu0 %v783
    %v994 = vpop.f32.mrf.mxu0
    %v995 = vadd.f32 %v591, %v994
    %996 = vmatmul.f32.gmra.mxu0 %v786
    %v997 = vpop.f32.mrf.mxu0
    %v998 = vadd.f32 %v594, %v997
    %999 = vmatmul.f32.gmra.mxu0 %v789
    %v1000 = vpop.f32.mrf.mxu0
    %v1001 = vadd.f32 %v597, %v1000
    %1002 = vmatmul.f32.gmra.mxu0 %v792
    %v1003 = vpop.f32.mrf.mxu0
    %v1004 = vadd.f32 %v600, %v1003
    %1005 = vmatmul.f32.gmra.mxu0 %v795
    %v1006 = vpop.f32.mrf.mxu0
    %v1007 = vadd.f32 %v603, %v1006
    %1008 = vmatmul.f32.gmra.mxu0 %v798
    %v1009 = vpop.f32.mrf.mxu0
    %v1010 = vadd.f32 %v606, %v1009
    %1011 = vmatmul.f32.gmra.mxu0 %v801
    %v1012 = vpop.f32.mrf.mxu0
    %v1013 = vadd.f32 %v609, %v1012
    %1014 = vmatmul.f32.gmra.mxu0 %v804
    %v1015 = vpop.f32.mrf.mxu0
    %v1016 = vadd.f32 %v612, %v1015
    %1017 = vmatmul.f32.gmra.mxu0 %v807
    %v1018 = vpop.f32.mrf.mxu0
    %v1019 = vadd.f32 %v615, %v1018
    %1020 = vmatmul.f32.gmra.mxu0 %v810
    %v1021 = vpop.f32.mrf.mxu0
    %v1022 = vadd.f32 %v618, %v1021
    %1023 = vmatmul.f32.gmra.mxu0 %v813
    %v1024 = vpop.f32.mrf.mxu0
    %v1025 = vadd.f32 %v621, %v1024
    %1026 = vmatmul.f32.gmra.mxu0 %v816
    %v1027 = vpop.f32.mrf.mxu0
    %v1028 = vadd.f32 %v624, %v1027
    %1029 = vmatmul.f32.gmra.mxu0 %v819
    %v1030 = vpop.f32.mrf.mxu0
    %v1031 = vadd.f32 %v627, %v1030
    %1032 = vmatmul.f32.gmra.mxu0 %v822
    %v1033 = vpop.f32.mrf.mxu0
    %v1034 = vadd.f32 %v630, %v1033
    %1035 = vmatmul.f32.gmra.mxu0 %v825
    %v1036 = vpop.f32.mrf.mxu0
    %v1037 = vadd.f32 %v633, %v1036
    %1038 = vmatmul.f32.gmra.mxu0 %v828
    %v1039 = vpop.f32.mrf.mxu0
    %v1040 = vadd.f32 %v636, %v1039
    %1041 = vmatmul.f32.gmra.mxu0 %v831
    %v1042 = vpop.f32.mrf.mxu0
    %v1043 = vadd.f32 %v639, %v1042
    %1044 = vmatmul.f32.gmra.mxu0 %v834
    %v1045 = vpop.f32.mrf.mxu0
    %v1046 = vadd.f32 %v642, %v1045
    %1047 = vmatmul.f32.gmra.mxu0 %v837
    %v1048 = vpop.f32.mrf.mxu0
    %v1049 = vadd.f32 %v645, %v1048
    %1050 = vmatmul.f32.gmra.mxu0 %v840
    %v1051 = vpop.f32.mrf.mxu0
    %v1052 = vadd.f32 %v648, %v1051
    %1053 = vmatmul.f32.gmra.mxu0 %v843
    %v1054 = vpop.f32.mrf.mxu0
    %v1055 = vadd.f32 %v651, %v1054
    %1056 = vmatmul.f32.gmra.mxu0 %v846
    %v1057 = vpop.f32.mrf.mxu0
    %v1058 = vadd.f32 %v654, %v1057
    %1059 = vmatmul.f32.gmra.mxu0 %v849
    %v1060 = vpop.f32.mrf.mxu0
    %v1061 = vadd.f32 %v657, %v1060
    %1062 = vmatmul.f32.gmra.mxu0 %v852
    %v1063 = vpop.f32.mrf.mxu0
    %v1064 = vadd.f32 %v660, %v1063
    %1065 = vmatmul.f32.gmra.mxu0 %v855
    %v1066 = vpop.f32.mrf.mxu0
    %v1067 = vadd.f32 %v663, %v1066
    %1068 = vmatmul.f32.gmra.mxu0 %v858
    %v1069 = vpop.f32.mrf.mxu0
    %v1070 = vadd.f32 %v666, %v1069
    %1071 = vmatmul.f32.gmra.mxu0 %v861
    %v1072 = vpop.f32.mrf.mxu0
    %v1073 = vadd.f32 %v669, %v1072
    %1074 = vmatmul.f32.gmra.mxu0 %v864
    %v1075 = vpop.f32.mrf.mxu0
    %v1076 = vadd.f32 %v672, %v1075
    %1077 = vmatmul.f32.gmra.mxu0 %v867
    %v1078 = vpop.f32.mrf.mxu0
    %v1079 = vadd.f32 %v675, %v1078
    %1080 = vmatmul.f32.gmra.mxu0 %v870
    %v1081 = vpop.f32.mrf.mxu0
    %v1082 = vadd.f32 %v678, %v1081
    %1083 = vmatmul.f32.gmra.mxu0 %v873
    %v1084 = vpop.f32.mrf.mxu0
    %v1085 = vadd.f32 %v681, %v1084
    %1086 = vmatmul.f32.gmra.mxu0 %v876
    %v1087 = vpop.f32.mrf.mxu0
    %v1088 = vadd.f32 %v684, %v1087
    %1089 = vmatmul.f32.gmra.mxu0 %v879
    %v1090 = vpop.f32.mrf.mxu0
    %v1091 = vadd.f32 %v687, %v1090
    %1092 = vmatmul.f32.gmra.mxu0 %v882
    %v1093 = vpop.f32.mrf.mxu0
    %v1094 = vadd.f32 %v690, %v1093
    %1095 = vmatmul.f32.gmra.mxu0 %v885
    %v1096 = vpop.f32.mrf.mxu0
    %v1097 = vadd.f32 %v693, %v1096
    %1098 = vmatmul.f32.gmra.mxu0 %v888
    %v1099 = vpop.f32.mrf.mxu0
    %v1100 = vadd.f32 %v696, %v1099
    %1101 = vmatmul.f32.gmra.mxu0 %v891
    %v1102 = vpop.f32.mrf.mxu0
    %v1103 = vadd.f32 %v699, %v1102
    %1104 = vmatmul.f32.gmra.mxu0 %v894
    %v1105 = vpop.f32.mrf.mxu0
    %v1106 = vadd.f32 %v702, %v1105
    %1107 = vmatmul.f32.gmra.mxu0 %v897
    %v1108 = vpop.f32.mrf.mxu0
    %v1109 = vadd.f32 %v705, %v1108
    %1110 = vmatmul.f32.gmra.mxu0 %v900
    %v1111 = vpop.f32.mrf.mxu0
    %v1112 = vadd.f32 %v708, %v1111
    %1113 = vmatmul.f32.gmra.mxu0 %v903
    %v1114 = vpop.f32.mrf.mxu0
    %v1115 = vadd.f32 %v711, %v1114
    %1116 = vmatmul.f32.gmra.mxu0 %v906
    %v1117 = vpop.f32.mrf.mxu0
    %v1118 = vadd.f32 %v714, %v1117
    %1119 = vmatmul.f32.gmra.mxu0 %v909
    %v1120 = vpop.f32.mrf.mxu0
    %v1121 = vadd.f32 %v717, %v1120
    %1122 = vmatmul.f32.gmra.mxu0 %v912
    %v1123 = vpop.f32.mrf.mxu0
    %v1124 = vadd.f32 %v720, %v1123
    %1125 = vmatmul.f32.gmra.mxu0 %v915
    %v1126 = vpop.f32.mrf.mxu0
    %v1127 = vadd.f32 %v723, %v1126
    %1128 = vmatmul.f32.gmra.mxu0 %v918
    %v1129 = vpop.f32.mrf.mxu0
    %v1130 = vadd.f32 %v726, %v1129
    %1131 = vmatmul.f32.gmra.mxu0 %v921
    %v1132 = vpop.f32.mrf.mxu0
    %v1133 = vadd.f32 %v729, %v1132
    %1134 = vmatmul.f32.gmra.mxu0 %v924
    %v1135 = vpop.f32.mrf.mxu0
    %v1136 = vadd.f32 %v732, %v1135
    %1137 = vmatmul.f32.gmra.mxu0 %v927
    %v1138 = vpop.f32.mrf.mxu0
    %v1139 = vadd.f32 %v735, %v1138
    %1140 = vmatmul.f32.gmra.mxu0 %v930
    %v1141 = vpop.f32.mrf.mxu0
    %v1142 = vadd.f32 %v738, %v1141
    %1143 = vmatmul.f32.gmra.mxu0 %v933
    %v1144 = vpop.f32.mrf.mxu0
    %v1145 = vadd.f32 %v741, %v1144
    %1146 = vmatmul.f32.gmra.mxu0 %v936
    %v1147 = vpop.f32.mrf.mxu0
    %v1148 = vadd.f32 %v744, %v1147
    %1149 = vmatmul.f32.gmra.mxu0 %v939
    %v1150 = vpop.f32.mrf.mxu0
    %v1151 = vadd.f32 %v747, %v1150
    %1152 = vmatmul.f32.gmra.mxu0 %v942
    %v1153 = vpop.f32.mrf.mxu0
    %v1154 = vadd.f32 %v750, %v1153
    %1155 = vmatmul.f32.gmra.mxu0 %v945
    %v1156 = vpop.f32.mrf.mxu0
    %v1157 = vadd.f32 %v753, %v1156
    %1158 = vmatmul.f32.gmra.mxu0 %v948
    %v1159 = vpop.f32.mrf.mxu0
    %v1160 = vadd.f32 %v756, %v1159
    %1161 = vmatmul.f32.gmra.mxu0 %v951
    %v1162 = vpop.f32.mrf.mxu0
    %v1163 = vadd.f32 %v759, %v1162
    %1164 = vmatmul.f32.gmra.mxu0 %v954
    %v1165 = vpop.f32.mrf.mxu0
    %v1166 = vadd.f32 %v762, %v1165
    %1167 = vmatmul.f32.gmra.mxu0 %v957
    %v1168 = vpop.f32.mrf.mxu0
    %v1169 = vadd.f32 %v765, %v1168
    %1170 = vmatmul.f32.gmra.mxu0 %v960
    %v1171 = vpop.f32.mrf.mxu0
    %v1172 = vadd.f32 %v768, %v1171
    %1173 = vmatmul.f32.gmra.mxu0 %v963
    %v1174 = vpop.f32.mrf.mxu0
    %v1175 = vadd.f32 %v771, %v1174
    %1176 = vdwg.mxu0
    %v1177 = vld [vmem:[#allocation2 + $0x2] sm:$0xff]
    %v1178 = vld [vmem:[#allocation2 + $0xa] sm:$0xff]
    %v1179 = vld [vmem:[#allocation2 + $0x1a] sm:$0xff]
    %v1180 = vld [vmem:[#allocation2 + $0x22] sm:$0xff]
    %v1181 = vld [vmem:[#allocation2 + $0x32] sm:$0xff]
    %v1182 = vld [vmem:[#allocation2 + $0x3a] sm:$0xff]
    %v1183 = vld [vmem:[#allocation2 + $0x4a] sm:$0xff]
    %v1184 = vld [vmem:[#allocation2 + $0x52] sm:$0xff]
    %v1185 = vld [vmem:[#allocation2 + $0x62] sm:$0xff]
    %v1186 = vld [vmem:[#allocation2 + $0x6a] sm:$0xff]
    %v1187 = vld [vmem:[#allocation2 + $0x7a] sm:$0xff]
    %v1188 = vld [vmem:[#allocation2 + $0x82] sm:$0xff]
    %v1189 = vld [vmem:[#allocation2 + $0x92] sm:$0xff]
    %v1190 = vld [vmem:[#allocation2 + $0x9a] sm:$0xff]
    %v1191 = vld [vmem:[#allocation2 + $0xaa] sm:$0xff]
    %v1192 = vld [vmem:[#allocation2 + $0xb2] sm:$0xff]
    %v1193 = vld [vmem:[#allocation2 + $0xc2] sm:$0xff]
    %v1194 = vld [vmem:[#allocation2 + $0xca] sm:$0xff]
    %v1195 = vld [vmem:[#allocation2 + $0xda] sm:$0xff]
    %v1196 = vld [vmem:[#allocation2 + $0xe2] sm:$0xff]
    %v1197 = vld [vmem:[#allocation2 + $0xf2] sm:$0xff]
    %v1198 = vld [vmem:[#allocation2 + $0xfa] sm:$0xff]
    %v1199 = vld [vmem:[#allocation2 + $0x10a] sm:$0xff]
    %v1200 = vld [vmem:[#allocation2 + $0x112] sm:$0xff]
    %v1201 = vld [vmem:[#allocation2 + $0x122] sm:$0xff]
    %v1202 = vld [vmem:[#allocation2 + $0x12a] sm:$0xff]
    %v1203 = vld [vmem:[#allocation2 + $0x13a] sm:$0xff]
    %v1204 = vld [vmem:[#allocation2 + $0x142] sm:$0xff]
    %v1205 = vld [vmem:[#allocation2 + $0x152] sm:$0xff]
    %v1206 = vld [vmem:[#allocation2 + $0x15a] sm:$0xff]
    %v1207 = vld [vmem:[#allocation2 + $0x16a] sm:$0xff]
    %v1208 = vld [vmem:[#allocation2 + $0x172] sm:$0xff]
    %v1209 = vld [vmem:[#allocation2 + $0x1b2] sm:$0xff]
    %v1210 = vld [vmem:[#allocation2 + $0x1ba] sm:$0xff]
    %v1211 = vld [vmem:[#allocation2 + $0x1ca] sm:$0xff]
    %v1212 = vld [vmem:[#allocation2 + $0x1d2] sm:$0xff]
    %v1213 = vld [vmem:[#allocation2 + $0x1e2] sm:$0xff]
    %v1214 = vld [vmem:[#allocation2 + $0x1ea] sm:$0xff]
    %v1215 = vld [vmem:[#allocation2 + $0x1fa] sm:$0xff]
    %v1216 = vld [vmem:[#allocation2 + $0x202] sm:$0xff]
    %v1217 = vld [vmem:[#allocation2 + $0x212] sm:$0xff]
    %v1218 = vld [vmem:[#allocation2 + $0x21a] sm:$0xff]
    %v1219 = vld [vmem:[#allocation2 + $0x22a] sm:$0xff]
    %v1220 = vld [vmem:[#allocation2 + $0x232] sm:$0xff]
    %v1221 = vld [vmem:[#allocation2 + $0x242] sm:$0xff]
    %v1222 = vld [vmem:[#allocation2 + $0x24a] sm:$0xff]
    %v1223 = vld [vmem:[#allocation2 + $0x25a] sm:$0xff]
    %v1224 = vld [vmem:[#allocation2 + $0x262] sm:$0xff]
    %v1225 = vld [vmem:[#allocation2 + $0x272] sm:$0xff]
    %v1226 = vld [vmem:[#allocation2 + $0x27a] sm:$0xff]
    %v1227 = vld [vmem:[#allocation2 + $0x28a] sm:$0xff]
    %v1228 = vld [vmem:[#allocation2 + $0x292] sm:$0xff]
    %v1229 = vld [vmem:[#allocation2 + $0x2a2] sm:$0xff]
    %v1230 = vld [vmem:[#allocation2 + $0x2aa] sm:$0xff]
    %v1231 = vld [vmem:[#allocation2 + $0x2ba] sm:$0xff]
    %v1232 = vld [vmem:[#allocation2 + $0x2c2] sm:$0xff]
    %v1233 = vld [vmem:[#allocation2 + $0x2d2] sm:$0xff]
    %v1234 = vld [vmem:[#allocation2 + $0x2da] sm:$0xff]
    %v1235 = vld [vmem:[#allocation2 + $0x2ea] sm:$0xff]
    %v1236 = vld [vmem:[#allocation2 + $0x2f2] sm:$0xff]
    %v1237 = vld [vmem:[#allocation2 + $0x302] sm:$0xff]
    %v1238 = vld [vmem:[#allocation2 + $0x30a] sm:$0xff]
    %v1239 = vld [vmem:[#allocation2 + $0x31a] sm:$0xff]
    %v1240 = vld [vmem:[#allocation2 + $0x322] sm:$0xff]
    %v1241 = vld [vmem:[%s1 + $0x8] sm:$0xf]
    %v1243 = vsel %vm85, %v1177, 0
    %v1246 = vsel %vm85, %v1178, 0
    %v1249 = vsel %vm85, %v1179, 0
    %v1252 = vsel %vm85, %v1180, 0
    %v1255 = vsel %vm85, %v1181, 0
    %v1258 = vsel %vm85, %v1182, 0
    %v1261 = vsel %vm85, %v1183, 0
    %v1264 = vsel %vm85, %v1184, 0
    %v1267 = vsel %vm85, %v1185, 0
    %v1270 = vsel %vm85, %v1186, 0
    %v1273 = vsel %vm85, %v1187, 0
    %v1276 = vsel %vm85, %v1188, 0
    %v1279 = vsel %vm85, %v1189, 0
    %v1282 = vsel %vm85, %v1190, 0
    %v1285 = vsel %vm85, %v1191, 0
    %v1288 = vsel %vm85, %v1192, 0
    %v1291 = vsel %vm85, %v1193, 0
    %v1294 = vsel %vm85, %v1194, 0
    %v1297 = vsel %vm85, %v1195, 0
    %v1300 = vsel %vm85, %v1196, 0
    %v1303 = vsel %vm85, %v1197, 0
    %v1306 = vsel %vm85, %v1198, 0
    %v1309 = vsel %vm85, %v1199, 0
    %v1312 = vsel %vm85, %v1200, 0
    %v1315 = vsel %vm85, %v1201, 0
    %v1318 = vsel %vm85, %v1202, 0
    %v1321 = vsel %vm85, %v1203, 0
    %v1324 = vsel %vm85, %v1204, 0
    %v1327 = vsel %vm85, %v1205, 0
    %v1330 = vsel %vm85, %v1206, 0
    %v1333 = vsel %vm85, %v1207, 0
    %v1336 = vsel %vm85, %v1208, 0
    %v1339 = vsel %vm85, %v1209, 0
    %v1342 = vsel %vm85, %v1210, 0
    %v1345 = vsel %vm85, %v1211, 0
    %v1348 = vsel %vm85, %v1212, 0
    %v1351 = vsel %vm85, %v1213, 0
    %v1354 = vsel %vm85, %v1214, 0
    %v1357 = vsel %vm85, %v1215, 0
    %v1360 = vsel %vm85, %v1216, 0
    %v1363 = vsel %vm85, %v1217, 0
    %v1366 = vsel %vm85, %v1218, 0
    %v1369 = vsel %vm85, %v1219, 0
    %v1372 = vsel %vm85, %v1220, 0
    %v1375 = vsel %vm85, %v1221, 0
    %v1378 = vsel %vm85, %v1222, 0
    %v1381 = vsel %vm85, %v1223, 0
    %v1384 = vsel %vm85, %v1224, 0
    %v1387 = vsel %vm85, %v1225, 0
    %v1390 = vsel %vm85, %v1226, 0
    %v1393 = vsel %vm85, %v1227, 0
    %v1396 = vsel %vm85, %v1228, 0
    %v1399 = vsel %vm85, %v1229, 0
    %v1402 = vsel %vm85, %v1230, 0
    %v1405 = vsel %vm85, %v1231, 0
    %v1408 = vsel %vm85, %v1232, 0
    %v1411 = vsel %vm85, %v1233, 0
    %v1414 = vsel %vm85, %v1234, 0
    %v1417 = vsel %vm85, %v1235, 0
    %v1420 = vsel %vm85, %v1236, 0
    %v1423 = vsel %vm85, %v1237, 0
    %v1426 = vsel %vm85, %v1238, 0
    %v1429 = vsel %vm85, %v1239, 0
    %v1432 = vsel %vm85, %v1240, 0
    %v1435 = vsel %vm560, %v1241, 0
    %1437 = vmatpush.msra.mxu0 0.0
    %1438 = vmatpush.msra.mxu0 0.0
    %1439 = vmatpush.msra.mxu0 0.0
    %1440 = vmatpush.msra.mxu0 0.0
    %1441 = vmatpush.msra.mxu0 0.0
    %1442 = vmatpush.msra.mxu0 0.0
    %1443 = vmatpush.msra.mxu0 0.0
    %1444 = vmatpush.msra.mxu0 0.0
    %1445 = vmatpush.msra.mxu0 0.0
    %1446 = vmatpush.msra.mxu0 0.0
    %1447 = vmatpush.msra.mxu0 0.0
    %1448 = vmatpush.msra.mxu0 0.0
    %1449 = vmatpush.msra.mxu0 0.0
    %1450 = vmatpush.msra.mxu0 0.0
    %1451 = vmatpush.msra.mxu0 0.0
    %1452 = vmatpush.msra.mxu0 %v1435
    %1453 = vmatmul.f32.gmra.mxu0 %v1243
    %v1454 = vpop.f32.mrf.mxu0
    %v1455 = vadd.f32 0.0, %v1454
    %1456 = vmatmul.f32.gmra.mxu0 %v1246
    %v1457 = vpop.f32.mrf.mxu0
    %v1458 = vadd.f32 0.0, %v1457
    %1459 = vmatmul.f32.gmra.mxu0 %v1249
    %v1460 = vpop.f32.mrf.mxu0
    %v1461 = vadd.f32 0.0, %v1460
    %1462 = vmatmul.f32.gmra.mxu0 %v1252
    %v1463 = vpop.f32.mrf.mxu0
    %v1464 = vadd.f32 0.0, %v1463
    %1465 = vmatmul.f32.gmra.mxu0 %v1255
    %v1466 = vpop.f32.mrf.mxu0
    %v1467 = vadd.f32 0.0, %v1466
    %1468 = vmatmul.f32.gmra.mxu0 %v1258
    %v1469 = vpop.f32.mrf.mxu0
    %v1470 = vadd.f32 0.0, %v1469
    %1471 = vmatmul.f32.gmra.mxu0 %v1261
    %v1472 = vpop.f32.mrf.mxu0
    %v1473 = vadd.f32 0.0, %v1472
    %1474 = vmatmul.f32.gmra.mxu0 %v1264
    %v1475 = vpop.f32.mrf.mxu0
    %v1476 = vadd.f32 0.0, %v1475
    %1477 = vmatmul.f32.gmra.mxu0 %v1267
    %v1478 = vpop.f32.mrf.mxu0
    %v1479 = vadd.f32 0.0, %v1478
    %1480 = vmatmul.f32.gmra.mxu0 %v1270
    %v1481 = vpop.f32.mrf.mxu0
    %v1482 = vadd.f32 0.0, %v1481
    %1483 = vmatmul.f32.gmra.mxu0 %v1273
    %v1484 = vpop.f32.mrf.mxu0
    %v1485 = vadd.f32 0.0, %v1484
    %1486 = vmatmul.f32.gmra.mxu0 %v1276
    %v1487 = vpop.f32.mrf.mxu0
    %v1488 = vadd.f32 0.0, %v1487
    %1489 = vmatmul.f32.gmra.mxu0 %v1279
    %v1490 = vpop.f32.mrf.mxu0
    %v1491 = vadd.f32 0.0, %v1490
    %1492 = vmatmul.f32.gmra.mxu0 %v1282
    %v1493 = vpop.f32.mrf.mxu0
    %v1494 = vadd.f32 0.0, %v1493
    %1495 = vmatmul.f32.gmra.mxu0 %v1285
    %v1496 = vpop.f32.mrf.mxu0
    %v1497 = vadd.f32 0.0, %v1496
    %1498 = vmatmul.f32.gmra.mxu0 %v1288
    %v1499 = vpop.f32.mrf.mxu0
    %v1500 = vadd.f32 0.0, %v1499
    %1501 = vmatmul.f32.gmra.mxu0 %v1291
    %v1502 = vpop.f32.mrf.mxu0
    %v1503 = vadd.f32 0.0, %v1502
    %1504 = vmatmul.f32.gmra.mxu0 %v1294
    %v1505 = vpop.f32.mrf.mxu0
    %v1506 = vadd.f32 0.0, %v1505
    %1507 = vmatmul.f32.gmra.mxu0 %v1297
    %v1508 = vpop.f32.mrf.mxu0
    %v1509 = vadd.f32 0.0, %v1508
    %1510 = vmatmul.f32.gmra.mxu0 %v1300
    %v1511 = vpop.f32.mrf.mxu0
    %v1512 = vadd.f32 0.0, %v1511
    %1513 = vmatmul.f32.gmra.mxu0 %v1303
    %v1514 = vpop.f32.mrf.mxu0
    %v1515 = vadd.f32 0.0, %v1514
    %1516 = vmatmul.f32.gmra.mxu0 %v1306
    %v1517 = vpop.f32.mrf.mxu0
    %v1518 = vadd.f32 0.0, %v1517
    %1519 = vmatmul.f32.gmra.mxu0 %v1309
    %v1520 = vpop.f32.mrf.mxu0
    %v1521 = vadd.f32 0.0, %v1520
    %1522 = vmatmul.f32.gmra.mxu0 %v1312
    %v1523 = vpop.f32.mrf.mxu0
    %v1524 = vadd.f32 0.0, %v1523
    %1525 = vmatmul.f32.gmra.mxu0 %v1315
    %v1526 = vpop.f32.mrf.mxu0
    %v1527 = vadd.f32 0.0, %v1526
    %1528 = vmatmul.f32.gmra.mxu0 %v1318
    %v1529 = vpop.f32.mrf.mxu0
    %v1530 = vadd.f32 0.0, %v1529
    %1531 = vmatmul.f32.gmra.mxu0 %v1321
    %v1532 = vpop.f32.mrf.mxu0
    %v1533 = vadd.f32 0.0, %v1532
    %1534 = vmatmul.f32.gmra.mxu0 %v1324
    %v1535 = vpop.f32.mrf.mxu0
    %v1536 = vadd.f32 0.0, %v1535
    %1537 = vmatmul.f32.gmra.mxu0 %v1327
    %v1538 = vpop.f32.mrf.mxu0
    %v1539 = vadd.f32 0.0, %v1538
    %1540 = vmatmul.f32.gmra.mxu0 %v1330
    %v1541 = vpop.f32.mrf.mxu0
    %v1542 = vadd.f32 0.0, %v1541
    %1543 = vmatmul.f32.gmra.mxu0 %v1333
    %v1544 = vpop.f32.mrf.mxu0
    %v1545 = vadd.f32 0.0, %v1544
    %1546 = vmatmul.f32.gmra.mxu0 %v1336
    %v1547 = vpop.f32.mrf.mxu0
    %v1548 = vadd.f32 0.0, %v1547
    %1549 = vmatmul.f32.gmra.mxu0 %v1339
    %v1550 = vpop.f32.mrf.mxu0
    %v1551 = vadd.f32 0.0, %v1550
    %1552 = vmatmul.f32.gmra.mxu0 %v1342
    %v1553 = vpop.f32.mrf.mxu0
    %v1554 = vadd.f32 0.0, %v1553
    %1555 = vmatmul.f32.gmra.mxu0 %v1345
    %v1556 = vpop.f32.mrf.mxu0
    %v1557 = vadd.f32 0.0, %v1556
    %1558 = vmatmul.f32.gmra.mxu0 %v1348
    %v1559 = vpop.f32.mrf.mxu0
    %v1560 = vadd.f32 0.0, %v1559
    %1561 = vmatmul.f32.gmra.mxu0 %v1351
    %v1562 = vpop.f32.mrf.mxu0
    %v1563 = vadd.f32 0.0, %v1562
    %1564 = vmatmul.f32.gmra.mxu0 %v1354
    %v1565 = vpop.f32.mrf.mxu0
    %v1566 = vadd.f32 0.0, %v1565
    %1567 = vmatmul.f32.gmra.mxu0 %v1357
    %v1568 = vpop.f32.mrf.mxu0
    %v1569 = vadd.f32 0.0, %v1568
    %1570 = vmatmul.f32.gmra.mxu0 %v1360
    %v1571 = vpop.f32.mrf.mxu0
    %v1572 = vadd.f32 0.0, %v1571
    %1573 = vmatmul.f32.gmra.mxu0 %v1363
    %v1574 = vpop.f32.mrf.mxu0
    %v1575 = vadd.f32 0.0, %v1574
    %1576 = vmatmul.f32.gmra.mxu0 %v1366
    %v1577 = vpop.f32.mrf.mxu0
    %v1578 = vadd.f32 0.0, %v1577
    %1579 = vmatmul.f32.gmra.mxu0 %v1369
    %v1580 = vpop.f32.mrf.mxu0
    %v1581 = vadd.f32 0.0, %v1580
    %1582 = vmatmul.f32.gmra.mxu0 %v1372
    %v1583 = vpop.f32.mrf.mxu0
    %v1584 = vadd.f32 0.0, %v1583
    %1585 = vmatmul.f32.gmra.mxu0 %v1375
    %v1586 = vpop.f32.mrf.mxu0
    %v1587 = vadd.f32 0.0, %v1586
    %1588 = vmatmul.f32.gmra.mxu0 %v1378
    %v1589 = vpop.f32.mrf.mxu0
    %v1590 = vadd.f32 0.0, %v1589
    %1591 = vmatmul.f32.gmra.mxu0 %v1381
    %v1592 = vpop.f32.mrf.mxu0
    %v1593 = vadd.f32 0.0, %v1592
    %1594 = vmatmul.f32.gmra.mxu0 %v1384
    %v1595 = vpop.f32.mrf.mxu0
    %v1596 = vadd.f32 0.0, %v1595
    %1597 = vmatmul.f32.gmra.mxu0 %v1387
    %v1598 = vpop.f32.mrf.mxu0
    %v1599 = vadd.f32 0.0, %v1598
    %1600 = vmatmul.f32.gmra.mxu0 %v1390
    %v1601 = vpop.f32.mrf.mxu0
    %v1602 = vadd.f32 0.0, %v1601
    %1603 = vmatmul.f32.gmra.mxu0 %v1393
    %v1604 = vpop.f32.mrf.mxu0
    %v1605 = vadd.f32 0.0, %v1604
    %1606 = vmatmul.f32.gmra.mxu0 %v1396
    %v1607 = vpop.f32.mrf.mxu0
    %v1608 = vadd.f32 0.0, %v1607
    %1609 = vmatmul.f32.gmra.mxu0 %v1399
    %v1610 = vpop.f32.mrf.mxu0
    %v1611 = vadd.f32 0.0, %v1610
    %1612 = vmatmul.f32.gmra.mxu0 %v1402
    %v1613 = vpop.f32.mrf.mxu0
    %v1614 = vadd.f32 0.0, %v1613
    %1615 = vmatmul.f32.gmra.mxu0 %v1405
    %v1616 = vpop.f32.mrf.mxu0
    %v1617 = vadd.f32 0.0, %v1616
    %1618 = vmatmul.f32.gmra.mxu0 %v1408
    %v1619 = vpop.f32.mrf.mxu0
    %v1620 = vadd.f32 0.0, %v1619
    %1621 = vmatmul.f32.gmra.mxu0 %v1411
    %v1622 = vpop.f32.mrf.mxu0
    %v1623 = vadd.f32 0.0, %v1622
    %1624 = vmatmul.f32.gmra.mxu0 %v1414
    %v1625 = vpop.f32.mrf.mxu0
    %v1626 = vadd.f32 0.0, %v1625
    %1627 = vmatmul.f32.gmra.mxu0 %v1417
    %v1628 = vpop.f32.mrf.mxu0
    %v1629 = vadd.f32 0.0, %v1628
    %1630 = vmatmul.f32.gmra.mxu0 %v1420
    %v1631 = vpop.f32.mrf.mxu0
    %v1632 = vadd.f32 0.0, %v1631
    %1633 = vmatmul.f32.gmra.mxu0 %v1423
    %v1634 = vpop.f32.mrf.mxu0
    %v1635 = vadd.f32 0.0, %v1634
    %1636 = vmatmul.f32.gmra.mxu0 %v1426
    %v1637 = vpop.f32.mrf.mxu0
    %v1638 = vadd.f32 0.0, %v1637
    %1639 = vmatmul.f32.gmra.mxu0 %v1429
    %v1640 = vpop.f32.mrf.mxu0
    %v1641 = vadd.f32 0.0, %v1640
    %1642 = vmatmul.f32.gmra.mxu0 %v1432
    %v1643 = vpop.f32.mrf.mxu0
    %v1644 = vadd.f32 0.0, %v1643
    %1645 = vdwg.mxu0
    %v1646 = vadd.f32 %v986, %v1455
    %v1647 = vadd.f32 %v989, %v1458
    %v1648 = vadd.f32 %v992, %v1461
    %v1649 = vadd.f32 %v995, %v1464
    %v1650 = vadd.f32 %v998, %v1467
    %v1651 = vadd.f32 %v1001, %v1470
    %v1652 = vadd.f32 %v1004, %v1473
    %v1653 = vadd.f32 %v1007, %v1476
    %v1654 = vadd.f32 %v1010, %v1479
    %v1655 = vadd.f32 %v1013, %v1482
    %v1656 = vadd.f32 %v1016, %v1485
    %v1657 = vadd.f32 %v1019, %v1488
    %v1658 = vadd.f32 %v1022, %v1491
    %v1659 = vadd.f32 %v1025, %v1494
    %v1660 = vadd.f32 %v1028, %v1497
    %v1661 = vadd.f32 %v1031, %v1500
    %v1662 = vadd.f32 %v1034, %v1503
    %v1663 = vadd.f32 %v1037, %v1506
    %v1664 = vadd.f32 %v1040, %v1509
    %v1665 = vadd.f32 %v1043, %v1512
    %v1666 = vadd.f32 %v1046, %v1515
    %v1667 = vadd.f32 %v1049, %v1518
    %v1668 = vadd.f32 %v1052, %v1521
    %v1669 = vadd.f32 %v1055, %v1524
    %v1670 = vadd.f32 %v1058, %v1527
    %v1671 = vadd.f32 %v1061, %v1530
    %v1672 = vadd.f32 %v1064, %v1533
    %v1673 = vadd.f32 %v1067, %v1536
    %v1674 = vadd.f32 %v1070, %v1539
    %v1675 = vadd.f32 %v1073, %v1542
    %v1676 = vadd.f32 %v1076, %v1545
    %v1677 = vadd.f32 %v1079, %v1548
    %v1678 = vadd.f32 %v1082, %v1551
    %v1679 = vadd.f32 %v1085, %v1554
    %v1680 = vadd.f32 %v1088, %v1557
    %v1681 = vadd.f32 %v1091, %v1560
    %v1682 = vadd.f32 %v1094, %v1563
    %v1683 = vadd.f32 %v1097, %v1566
    %v1684 = vadd.f32 %v1100, %v1569
    %v1685 = vadd.f32 %v1103, %v1572
    %v1686 = vadd.f32 %v1106, %v1575
    %v1687 = vadd.f32 %v1109, %v1578
    %v1688 = vadd.f32 %v1112, %v1581
    %v1689 = vadd.f32 %v1115, %v1584
    %v1690 = vadd.f32 %v1118, %v1587
    %v1691 = vadd.f32 %v1121, %v1590
    %v1692 = vadd.f32 %v1124, %v1593
    %v1693 = vadd.f32 %v1127, %v1596
    %v1694 = vadd.f32 %v1130, %v1599
    %v1695 = vadd.f32 %v1133, %v1602
    %v1696 = vadd.f32 %v1136, %v1605
    %v1697 = vadd.f32 %v1139, %v1608
    %v1698 = vadd.f32 %v1142, %v1611
    %v1699 = vadd.f32 %v1145, %v1614
    %v1700 = vadd.f32 %v1148, %v1617
    %v1701 = vadd.f32 %v1151, %v1620
    %v1702 = vadd.f32 %v1154, %v1623
    %v1703 = vadd.f32 %v1157, %v1626
    %v1704 = vadd.f32 %v1160, %v1629
    %v1705 = vadd.f32 %v1163, %v1632
    %v1706 = vadd.f32 %v1166, %v1635
    %v1707 = vadd.f32 %v1169, %v1638
    %v1708 = vadd.f32 %v1172, %v1641
    %v1709 = vadd.f32 %v1175, %v1644
    %v1710 = vld [vmem:[%s173] sm:$0xff]
    %v1711 = vld [vmem:[%s173 + $0x8] sm:$0xff]
    %v1712 = vld [vmem:[%s173 + $0x18] sm:$0xff]
    %v1713 = vld [vmem:[%s173 + $0x20] sm:$0xff]
    %v1714 = vld [vmem:[%s173 + $0x30] sm:$0xff]
    %v1715 = vld [vmem:[%s173 + $0x38] sm:$0xff]
    %v1716 = vld [vmem:[%s173 + $0x48] sm:$0xff]
    %v1717 = vld [vmem:[%s173 + $0x50] sm:$0xff]
    %v1718 = vld [vmem:[%s173 + $0x60] sm:$0xff]
    %v1719 = vld [vmem:[%s173 + $0x68] sm:$0xff]
    %v1720 = vld [vmem:[%s173 + $0x78] sm:$0xff]
    %v1721 = vld [vmem:[%s173 + $0x80] sm:$0xff]
    %v1722 = vld [vmem:[%s173 + $0x90] sm:$0xff]
    %v1723 = vld [vmem:[%s173 + $0x98] sm:$0xff]
    %v1724 = vld [vmem:[%s173 + $0xa8] sm:$0xff]
    %v1725 = vld [vmem:[%s173 + $0xb0] sm:$0xff]
    %v1726 = vld [vmem:[%s173 + $0xc0] sm:$0xff]
    %v1727 = vld [vmem:[%s173 + $0xc8] sm:$0xff]
    %v1728 = vld [vmem:[%s173 + $0xd8] sm:$0xff]
    %v1729 = vld [vmem:[%s173 + $0xe0] sm:$0xff]
    %v1730 = vld [vmem:[%s173 + $0xf0] sm:$0xff]
    %v1731 = vld [vmem:[%s173 + $0xf8] sm:$0xff]
    %v1732 = vld [vmem:[%s173 + $0x108] sm:$0xff]
    %v1733 = vld [vmem:[%s173 + $0x110] sm:$0xff]
    %v1734 = vld [vmem:[%s173 + $0x120] sm:$0xff]
    %v1735 = vld [vmem:[%s173 + $0x128] sm:$0xff]
    %v1736 = vld [vmem:[%s173 + $0x138] sm:$0xff]
    %v1737 = vld [vmem:[%s173 + $0x140] sm:$0xff]
    %v1738 = vld [vmem:[%s173 + $0x150] sm:$0xff]
    %v1739 = vld [vmem:[%s173 + $0x158] sm:$0xff]
    %v1740 = vld [vmem:[%s173 + $0x168] sm:$0xff]
    %v1741 = vld [vmem:[%s173 + $0x170] sm:$0xff]
    %v1742 = vld [vmem:[%s173 + $0x1b0] sm:$0xff]
    %v1743 = vld [vmem:[%s173 + $0x1b8] sm:$0xff]
    %v1744 = vld [vmem:[%s173 + $0x1c8] sm:$0xff]
    %v1745 = vld [vmem:[%s173 + $0x1d0] sm:$0xff]
    %v1746 = vld [vmem:[%s173 + $0x1e0] sm:$0xff]
    %v1747 = vld [vmem:[%s173 + $0x1e8] sm:$0xff]
    %v1748 = vld [vmem:[%s173 + $0x1f8] sm:$0xff]
    %v1749 = vld [vmem:[%s173 + $0x200] sm:$0xff]
    %v1750 = vld [vmem:[%s173 + $0x210] sm:$0xff]
    %v1751 = vld [vmem:[%s173 + $0x218] sm:$0xff]
    %v1752 = vld [vmem:[%s173 + $0x228] sm:$0xff]
    %v1753 = vld [vmem:[%s173 + $0x230] sm:$0xff]
    %v1754 = vld [vmem:[%s173 + $0x240] sm:$0xff]
    %v1755 = vld [vmem:[%s173 + $0x248] sm:$0xff]
    %v1756 = vld [vmem:[%s173 + $0x258] sm:$0xff]
    %v1757 = vld [vmem:[%s173 + $0x260] sm:$0xff]
    %v1758 = vld [vmem:[%s173 + $0x270] sm:$0xff]
    %v1759 = vld [vmem:[%s173 + $0x278] sm:$0xff]
    %v1760 = vld [vmem:[%s173 + $0x288] sm:$0xff]
    %v1761 = vld [vmem:[%s173 + $0x290] sm:$0xff]
    %v1762 = vld [vmem:[%s173 + $0x2a0] sm:$0xff]
    %v1763 = vld [vmem:[%s173 + $0x2a8] sm:$0xff]
    %v1764 = vld [vmem:[%s173 + $0x2b8] sm:$0xff]
    %v1765 = vld [vmem:[%s173 + $0x2c0] sm:$0xff]
    %v1766 = vld [vmem:[%s173 + $0x2d0] sm:$0xff]
    %v1767 = vld [vmem:[%s173 + $0x2d8] sm:$0xff]
    %v1768 = vld [vmem:[%s173 + $0x2e8] sm:$0xff]
    %v1769 = vld [vmem:[%s173 + $0x2f0] sm:$0xff]
    %v1770 = vld [vmem:[%s173 + $0x300] sm:$0xff]
    %v1771 = vld [vmem:[%s173 + $0x308] sm:$0xff]
    %v1772 = vld [vmem:[%s173 + $0x318] sm:$0xff]
    %v1773 = vld [vmem:[%s173 + $0x320] sm:$0xff]
    %v1774 = vld [vmem:[%s1 + $0xc] sm:$0xf]
    %v1776 = vsel %vm85, %v1710, 0
    %v1779 = vsel %vm85, %v1711, 0
    %v1782 = vsel %vm85, %v1712, 0
    %v1785 = vsel %vm85, %v1713, 0
    %v1788 = vsel %vm85, %v1714, 0
    %v1791 = vsel %vm85, %v1715, 0
    %v1794 = vsel %vm85, %v1716, 0
    %v1797 = vsel %vm85, %v1717, 0
    %v1800 = vsel %vm85, %v1718, 0
    %v1803 = vsel %vm85, %v1719, 0
    %v1806 = vsel %vm85, %v1720, 0
    %v1809 = vsel %vm85, %v1721, 0
    %v1812 = vsel %vm85, %v1722, 0
    %v1815 = vsel %vm85, %v1723, 0
    %v1818 = vsel %vm85, %v1724, 0
    %v1821 = vsel %vm85, %v1725, 0
    %v1824 = vsel %vm85, %v1726, 0
    %v1827 = vsel %vm85, %v1727, 0
    %v1830 = vsel %vm85, %v1728, 0
    %v1833 = vsel %vm85, %v1729, 0
    %v1836 = vsel %vm85, %v1730, 0
    %v1839 = vsel %vm85, %v1731, 0
    %v1842 = vsel %vm85, %v1732, 0
    %v1845 = vsel %vm85, %v1733, 0
    %v1848 = vsel %vm85, %v1734, 0
    %v1851 = vsel %vm85, %v1735, 0
    %v1854 = vsel %vm85, %v1736, 0
    %v1857 = vsel %vm85, %v1737, 0
    %v1860 = vsel %vm85, %v1738, 0
    %v1863 = vsel %vm85, %v1739, 0
    %v1866 = vsel %vm85, %v1740, 0
    %v1869 = vsel %vm85, %v1741, 0
    %v1872 = vsel %vm85, %v1742, 0
    %v1875 = vsel %vm85, %v1743, 0
    %v1878 = vsel %vm85, %v1744, 0
    %v1881 = vsel %vm85, %v1745, 0
    %v1884 = vsel %vm85, %v1746, 0
    %v1887 = vsel %vm85, %v1747, 0
    %v1890 = vsel %vm85, %v1748, 0
    %v1893 = vsel %vm85, %v1749, 0
    %v1896 = vsel %vm85, %v1750, 0
    %v1899 = vsel %vm85, %v1751, 0
    %v1902 = vsel %vm85, %v1752, 0
    %v1905 = vsel %vm85, %v1753, 0
    %v1908 = vsel %vm85, %v1754, 0
    %v1911 = vsel %vm85, %v1755, 0
    %v1914 = vsel %vm85, %v1756, 0
    %v1917 = vsel %vm85, %v1757, 0
    %v1920 = vsel %vm85, %v1758, 0
    %v1923 = vsel %vm85, %v1759, 0
    %v1926 = vsel %vm85, %v1760, 0
    %v1929 = vsel %vm85, %v1761, 0
    %v1932 = vsel %vm85, %v1762, 0
    %v1935 = vsel %vm85, %v1763, 0
    %v1938 = vsel %vm85, %v1764, 0
    %v1941 = vsel %vm85, %v1765, 0
    %v1944 = vsel %vm85, %v1766, 0
    %v1947 = vsel %vm85, %v1767, 0
    %v1950 = vsel %vm85, %v1768, 0
    %v1953 = vsel %vm85, %v1769, 0
    %v1956 = vsel %vm85, %v1770, 0
    %v1959 = vsel %vm85, %v1771, 0
    %v1962 = vsel %vm85, %v1772, 0
    %v1965 = vsel %vm85, %v1773, 0
    %v1968 = vsel %vm560, %v1774, 0
    %1970 = vmatpush.msra.mxu0 0.0
    %1971 = vmatpush.msra.mxu0 0.0
    %1972 = vmatpush.msra.mxu0 0.0
    %1973 = vmatpush.msra.mxu0 0.0
    %1974 = vmatpush.msra.mxu0 0.0
    %1975 = vmatpush.msra.mxu0 0.0
    %1976 = vmatpush.msra.mxu0 0.0
    %1977 = vmatpush.msra.mxu0 0.0
    %1978 = vmatpush.msra.mxu0 0.0
    %1979 = vmatpush.msra.mxu0 0.0
    %1980 = vmatpush.msra.mxu0 0.0
    %1981 = vmatpush.msra.mxu0 0.0
    %1982 = vmatpush.msra.mxu0 0.0
    %1983 = vmatpush.msra.mxu0 0.0
    %1984 = vmatpush.msra.mxu0 0.0
    %1985 = vmatpush.msra.mxu0 %v1968
    %1986 = vmatmul.f32.gmra.mxu0 %v1776
    %v1987 = vpop.f32.mrf.mxu0
    %v1988 = vadd.f32 0.0, %v1987
    %1989 = vmatmul.f32.gmra.mxu0 %v1779
    %v1990 = vpop.f32.mrf.mxu0
    %v1991 = vadd.f32 0.0, %v1990
    %1992 = vmatmul.f32.gmra.mxu0 %v1782
    %v1993 = vpop.f32.mrf.mxu0
    %v1994 = vadd.f32 0.0, %v1993
    %1995 = vmatmul.f32.gmra.mxu0 %v1785
    %v1996 = vpop.f32.mrf.mxu0
    %v1997 = vadd.f32 0.0, %v1996
    %1998 = vmatmul.f32.gmra.mxu0 %v1788
    %v1999 = vpop.f32.mrf.mxu0
    %v2000 = vadd.f32 0.0, %v1999
    %2001 = vmatmul.f32.gmra.mxu0 %v1791
    %v2002 = vpop.f32.mrf.mxu0
    %v2003 = vadd.f32 0.0, %v2002
    %2004 = vmatmul.f32.gmra.mxu0 %v1794
    %v2005 = vpop.f32.mrf.mxu0
    %v2006 = vadd.f32 0.0, %v2005
    %2007 = vmatmul.f32.gmra.mxu0 %v1797
    %v2008 = vpop.f32.mrf.mxu0
    %v2009 = vadd.f32 0.0, %v2008
    %2010 = vmatmul.f32.gmra.mxu0 %v1800
    %v2011 = vpop.f32.mrf.mxu0
    %v2012 = vadd.f32 0.0, %v2011
    %2013 = vmatmul.f32.gmra.mxu0 %v1803
    %v2014 = vpop.f32.mrf.mxu0
    %v2015 = vadd.f32 0.0, %v2014
    %2016 = vmatmul.f32.gmra.mxu0 %v1806
    %v2017 = vpop.f32.mrf.mxu0
    %v2018 = vadd.f32 0.0, %v2017
    %2019 = vmatmul.f32.gmra.mxu0 %v1809
    %v2020 = vpop.f32.mrf.mxu0
    %v2021 = vadd.f32 0.0, %v2020
    %2022 = vmatmul.f32.gmra.mxu0 %v1812
    %v2023 = vpop.f32.mrf.mxu0
    %v2024 = vadd.f32 0.0, %v2023
    %2025 = vmatmul.f32.gmra.mxu0 %v1815
    %v2026 = vpop.f32.mrf.mxu0
    %v2027 = vadd.f32 0.0, %v2026
    %2028 = vmatmul.f32.gmra.mxu0 %v1818
    %v2029 = vpop.f32.mrf.mxu0
    %v2030 = vadd.f32 0.0, %v2029
    %2031 = vmatmul.f32.gmra.mxu0 %v1821
    %v2032 = vpop.f32.mrf.mxu0
    %v2033 = vadd.f32 0.0, %v2032
    %2034 = vmatmul.f32.gmra.mxu0 %v1824
    %v2035 = vpop.f32.mrf.mxu0
    %v2036 = vadd.f32 0.0, %v2035
    %2037 = vmatmul.f32.gmra.mxu0 %v1827
    %v2038 = vpop.f32.mrf.mxu0
    %v2039 = vadd.f32 0.0, %v2038
    %2040 = vmatmul.f32.gmra.mxu0 %v1830
    %v2041 = vpop.f32.mrf.mxu0
    %v2042 = vadd.f32 0.0, %v2041
    %2043 = vmatmul.f32.gmra.mxu0 %v1833
    %v2044 = vpop.f32.mrf.mxu0
    %v2045 = vadd.f32 0.0, %v2044
    %2046 = vmatmul.f32.gmra.mxu0 %v1836
    %v2047 = vpop.f32.mrf.mxu0
    %v2048 = vadd.f32 0.0, %v2047
    %2049 = vmatmul.f32.gmra.mxu0 %v1839
    %v2050 = vpop.f32.mrf.mxu0
    %v2051 = vadd.f32 0.0, %v2050
    %2052 = vmatmul.f32.gmra.mxu0 %v1842
    %v2053 = vpop.f32.mrf.mxu0
    %v2054 = vadd.f32 0.0, %v2053
    %2055 = vmatmul.f32.gmra.mxu0 %v1845
    %v2056 = vpop.f32.mrf.mxu0
    %v2057 = vadd.f32 0.0, %v2056
    %2058 = vmatmul.f32.gmra.mxu0 %v1848
    %v2059 = vpop.f32.mrf.mxu0
    %v2060 = vadd.f32 0.0, %v2059
    %2061 = vmatmul.f32.gmra.mxu0 %v1851
    %v2062 = vpop.f32.mrf.mxu0
    %v2063 = vadd.f32 0.0, %v2062
    %2064 = vmatmul.f32.gmra.mxu0 %v1854
    %v2065 = vpop.f32.mrf.mxu0
    %v2066 = vadd.f32 0.0, %v2065
    %2067 = vmatmul.f32.gmra.mxu0 %v1857
    %v2068 = vpop.f32.mrf.mxu0
    %v2069 = vadd.f32 0.0, %v2068
    %2070 = vmatmul.f32.gmra.mxu0 %v1860
    %v2071 = vpop.f32.mrf.mxu0
    %v2072 = vadd.f32 0.0, %v2071
    %2073 = vmatmul.f32.gmra.mxu0 %v1863
    %v2074 = vpop.f32.mrf.mxu0
    %v2075 = vadd.f32 0.0, %v2074
    %2076 = vmatmul.f32.gmra.mxu0 %v1866
    %v2077 = vpop.f32.mrf.mxu0
    %v2078 = vadd.f32 0.0, %v2077
    %2079 = vmatmul.f32.gmra.mxu0 %v1869
    %v2080 = vpop.f32.mrf.mxu0
    %v2081 = vadd.f32 0.0, %v2080
    %2082 = vmatmul.f32.gmra.mxu0 %v1872
    %v2083 = vpop.f32.mrf.mxu0
    %v2084 = vadd.f32 0.0, %v2083
    %2085 = vmatmul.f32.gmra.mxu0 %v1875
    %v2086 = vpop.f32.mrf.mxu0
    %v2087 = vadd.f32 0.0, %v2086
    %2088 = vmatmul.f32.gmra.mxu0 %v1878
    %v2089 = vpop.f32.mrf.mxu0
    %v2090 = vadd.f32 0.0, %v2089
    %2091 = vmatmul.f32.gmra.mxu0 %v1881
    %v2092 = vpop.f32.mrf.mxu0
    %v2093 = vadd.f32 0.0, %v2092
    %2094 = vmatmul.f32.gmra.mxu0 %v1884
    %v2095 = vpop.f32.mrf.mxu0
    %v2096 = vadd.f32 0.0, %v2095
    %2097 = vmatmul.f32.gmra.mxu0 %v1887
    %v2098 = vpop.f32.mrf.mxu0
    %v2099 = vadd.f32 0.0, %v2098
    %2100 = vmatmul.f32.gmra.mxu0 %v1890
    %v2101 = vpop.f32.mrf.mxu0
    %v2102 = vadd.f32 0.0, %v2101
    %2103 = vmatmul.f32.gmra.mxu0 %v1893
    %v2104 = vpop.f32.mrf.mxu0
    %v2105 = vadd.f32 0.0, %v2104
    %2106 = vmatmul.f32.gmra.mxu0 %v1896
    %v2107 = vpop.f32.mrf.mxu0
    %v2108 = vadd.f32 0.0, %v2107
    %2109 = vmatmul.f32.gmra.mxu0 %v1899
    %v2110 = vpop.f32.mrf.mxu0
    %v2111 = vadd.f32 0.0, %v2110
    %2112 = vmatmul.f32.gmra.mxu0 %v1902
    %v2113 = vpop.f32.mrf.mxu0
    %v2114 = vadd.f32 0.0, %v2113
    %2115 = vmatmul.f32.gmra.mxu0 %v1905
    %v2116 = vpop.f32.mrf.mxu0
    %v2117 = vadd.f32 0.0, %v2116
    %2118 = vmatmul.f32.gmra.mxu0 %v1908
    %v2119 = vpop.f32.mrf.mxu0
    %v2120 = vadd.f32 0.0, %v2119
    %2121 = vmatmul.f32.gmra.mxu0 %v1911
    %v2122 = vpop.f32.mrf.mxu0
    %v2123 = vadd.f32 0.0, %v2122
    %2124 = vmatmul.f32.gmra.mxu0 %v1914
    %v2125 = vpop.f32.mrf.mxu0
    %v2126 = vadd.f32 0.0, %v2125
    %2127 = vmatmul.f32.gmra.mxu0 %v1917
    %v2128 = vpop.f32.mrf.mxu0
    %v2129 = vadd.f32 0.0, %v2128
    %2130 = vmatmul.f32.gmra.mxu0 %v1920
    %v2131 = vpop.f32.mrf.mxu0
    %v2132 = vadd.f32 0.0, %v2131
    %2133 = vmatmul.f32.gmra.mxu0 %v1923
    %v2134 = vpop.f32.mrf.mxu0
    %v2135 = vadd.f32 0.0, %v2134
    %2136 = vmatmul.f32.gmra.mxu0 %v1926
    %v2137 = vpop.f32.mrf.mxu0
    %v2138 = vadd.f32 0.0, %v2137
    %2139 = vmatmul.f32.gmra.mxu0 %v1929
    %v2140 = vpop.f32.mrf.mxu0
    %v2141 = vadd.f32 0.0, %v2140
    %2142 = vmatmul.f32.gmra.mxu0 %v1932
    %v2143 = vpop.f32.mrf.mxu0
    %v2144 = vadd.f32 0.0, %v2143
    %2145 = vmatmul.f32.gmra.mxu0 %v1935
    %v2146 = vpop.f32.mrf.mxu0
    %v2147 = vadd.f32 0.0, %v2146
    %2148 = vmatmul.f32.gmra.mxu0 %v1938
    %v2149 = vpop.f32.mrf.mxu0
    %v2150 = vadd.f32 0.0, %v2149
    %2151 = vmatmul.f32.gmra.mxu0 %v1941
    %v2152 = vpop.f32.mrf.mxu0
    %v2153 = vadd.f32 0.0, %v2152
    %2154 = vmatmul.f32.gmra.mxu0 %v1944
    %v2155 = vpop.f32.mrf.mxu0
    %v2156 = vadd.f32 0.0, %v2155
    %2157 = vmatmul.f32.gmra.mxu0 %v1947
    %v2158 = vpop.f32.mrf.mxu0
    %v2159 = vadd.f32 0.0, %v2158
    %2160 = vmatmul.f32.gmra.mxu0 %v1950
    %v2161 = vpop.f32.mrf.mxu0
    %v2162 = vadd.f32 0.0, %v2161
    %2163 = vmatmul.f32.gmra.mxu0 %v1953
    %v2164 = vpop.f32.mrf.mxu0
    %v2165 = vadd.f32 0.0, %v2164
    %2166 = vmatmul.f32.gmra.mxu0 %v1956
    %v2167 = vpop.f32.mrf.mxu0
    %v2168 = vadd.f32 0.0, %v2167
    %2169 = vmatmul.f32.gmra.mxu0 %v1959
    %v2170 = vpop.f32.mrf.mxu0
    %v2171 = vadd.f32 0.0, %v2170
    %2172 = vmatmul.f32.gmra.mxu0 %v1962
    %v2173 = vpop.f32.mrf.mxu0
    %v2174 = vadd.f32 0.0, %v2173
    %2175 = vmatmul.f32.gmra.mxu0 %v1965
    %v2176 = vpop.f32.mrf.mxu0
    %v2177 = vadd.f32 0.0, %v2176
    %2178 = vdwg.mxu0
    %v2179 = vadd.f32 %v1646, %v1988
    %v2180 = vadd.f32 %v1647, %v1991
    %v2181 = vadd.f32 %v1648, %v1994
    %v2182 = vadd.f32 %v1649, %v1997
    %v2183 = vadd.f32 %v1650, %v2000
    %v2184 = vadd.f32 %v1651, %v2003
    %v2185 = vadd.f32 %v1652, %v2006
    %v2186 = vadd.f32 %v1653, %v2009
    %v2187 = vadd.f32 %v1654, %v2012
    %v2188 = vadd.f32 %v1655, %v2015
    %v2189 = vadd.f32 %v1656, %v2018
    %v2190 = vadd.f32 %v1657, %v2021
    %v2191 = vadd.f32 %v1658, %v2024
    %v2192 = vadd.f32 %v1659, %v2027
    %v2193 = vadd.f32 %v1660, %v2030
    %v2194 = vadd.f32 %v1661, %v2033
    %v2195 = vadd.f32 %v1662, %v2036
    %v2196 = vadd.f32 %v1663, %v2039
    %v2197 = vadd.f32 %v1664, %v2042
    %v2198 = vadd.f32 %v1665, %v2045
    %v2199 = vadd.f32 %v1666, %v2048
    %v2200 = vadd.f32 %v1667, %v2051
    %v2201 = vadd.f32 %v1668, %v2054
    %v2202 = vadd.f32 %v1669, %v2057
    %v2203 = vadd.f32 %v1670, %v2060
    %v2204 = vadd.f32 %v1671, %v2063
    %v2205 = vadd.f32 %v1672, %v2066
    %v2206 = vadd.f32 %v1673, %v2069
    %v2207 = vadd.f32 %v1674, %v2072
    %v2208 = vadd.f32 %v1675, %v2075
    %v2209 = vadd.f32 %v1676, %v2078
    %v2210 = vadd.f32 %v1677, %v2081
    %v2211 = vadd.f32 %v1678, %v2084
    %v2212 = vadd.f32 %v1679, %v2087
    %v2213 = vadd.f32 %v1680, %v2090
    %v2214 = vadd.f32 %v1681, %v2093
    %v2215 = vadd.f32 %v1682, %v2096
    %v2216 = vadd.f32 %v1683, %v2099
    %v2217 = vadd.f32 %v1684, %v2102
    %v2218 = vadd.f32 %v1685, %v2105
    %v2219 = vadd.f32 %v1686, %v2108
    %v2220 = vadd.f32 %v1687, %v2111
    %v2221 = vadd.f32 %v1688, %v2114
    %v2222 = vadd.f32 %v1689, %v2117
    %v2223 = vadd.f32 %v1690, %v2120
    %v2224 = vadd.f32 %v1691, %v2123
    %v2225 = vadd.f32 %v1692, %v2126
    %v2226 = vadd.f32 %v1693, %v2129
    %v2227 = vadd.f32 %v1694, %v2132
    %v2228 = vadd.f32 %v1695, %v2135
    %v2229 = vadd.f32 %v1696, %v2138
    %v2230 = vadd.f32 %v1697, %v2141
    %v2231 = vadd.f32 %v1698, %v2144
    %v2232 = vadd.f32 %v1699, %v2147
    %v2233 = vadd.f32 %v1700, %v2150
    %v2234 = vadd.f32 %v1701, %v2153
    %v2235 = vadd.f32 %v1702, %v2156
    %v2236 = vadd.f32 %v1703, %v2159
    %v2237 = vadd.f32 %v1704, %v2162
    %v2238 = vadd.f32 %v1705, %v2165
    %v2239 = vadd.f32 %v1706, %v2168
    %v2240 = vadd.f32 %v1707, %v2171
    %v2241 = vadd.f32 %v1708, %v2174
    %v2242 = vadd.f32 %v1709, %v2177
    %v2243 = vld [vmem:[%s173 + $0x1] sm:$0xff]
    %v2244 = vld [vmem:[%s173 + $0x9] sm:$0xff]
    %v2245 = vld [vmem:[%s173 + $0x19] sm:$0xff]
    %v2246 = vld [vmem:[%s173 + $0x21] sm:$0xff]
    %v2247 = vld [vmem:[%s173 + $0x31] sm:$0xff]
    %v2248 = vld [vmem:[%s173 + $0x39] sm:$0xff]
    %v2249 = vld [vmem:[%s173 + $0x49] sm:$0xff]
    %v2250 = vld [vmem:[%s173 + $0x51] sm:$0xff]
    %v2251 = vld [vmem:[%s173 + $0x61] sm:$0xff]
    %v2252 = vld [vmem:[%s173 + $0x69] sm:$0xff]
    %v2253 = vld [vmem:[%s173 + $0x79] sm:$0xff]
    %v2254 = vld [vmem:[%s173 + $0x81] sm:$0xff]
    %v2255 = vld [vmem:[%s173 + $0x91] sm:$0xff]
    %v2256 = vld [vmem:[%s173 + $0x99] sm:$0xff]
    %v2257 = vld [vmem:[%s173 + $0xa9] sm:$0xff]
    %v2258 = vld [vmem:[%s173 + $0xb1] sm:$0xff]
    %v2259 = vld [vmem:[%s173 + $0xc1] sm:$0xff]
    %v2260 = vld [vmem:[%s173 + $0xc9] sm:$0xff]
    %v2261 = vld [vmem:[%s173 + $0xd9] sm:$0xff]
    %v2262 = vld [vmem:[%s173 + $0xe1] sm:$0xff]
    %v2263 = vld [vmem:[%s173 + $0xf1] sm:$0xff]
    %v2264 = vld [vmem:[%s173 + $0xf9] sm:$0xff]
    %v2265 = vld [vmem:[%s173 + $0x109] sm:$0xff]
    %v2266 = vld [vmem:[%s173 + $0x111] sm:$0xff]
    %v2267 = vld [vmem:[%s173 + $0x121] sm:$0xff]
    %v2268 = vld [vmem:[%s173 + $0x129] sm:$0xff]
    %v2269 = vld [vmem:[%s173 + $0x139] sm:$0xff]
    %v2270 = vld [vmem:[%s173 + $0x141] sm:$0xff]
    %v2271 = vld [vmem:[%s173 + $0x151] sm:$0xff]
    %v2272 = vld [vmem:[%s173 + $0x159] sm:$0xff]
    %v2273 = vld [vmem:[%s173 + $0x169] sm:$0xff]
    %v2274 = vld [vmem:[%s173 + $0x171] sm:$0xff]
    %v2275 = vld [vmem:[%s173 + $0x1b1] sm:$0xff]
    %v2276 = vld [vmem:[%s173 + $0x1b9] sm:$0xff]
    %v2277 = vld [vmem:[%s173 + $0x1c9] sm:$0xff]
    %v2278 = vld [vmem:[%s173 + $0x1d1] sm:$0xff]
    %v2279 = vld [vmem:[%s173 + $0x1e1] sm:$0xff]
    %v2280 = vld [vmem:[%s173 + $0x1e9] sm:$0xff]
    %v2281 = vld [vmem:[%s173 + $0x1f9] sm:$0xff]
    %v2282 = vld [vmem:[%s173 + $0x201] sm:$0xff]
    %v2283 = vld [vmem:[%s173 + $0x211] sm:$0xff]
    %v2284 = vld [vmem:[%s173 + $0x219] sm:$0xff]
    %v2285 = vld [vmem:[%s173 + $0x229] sm:$0xff]
    %v2286 = vld [vmem:[%s173 + $0x231] sm:$0xff]
    %v2287 = vld [vmem:[%s173 + $0x241] sm:$0xff]
    %v2288 = vld [vmem:[%s173 + $0x249] sm:$0xff]
    %v2289 = vld [vmem:[%s173 + $0x259] sm:$0xff]
    %v2290 = vld [vmem:[%s173 + $0x261] sm:$0xff]
    %v2291 = vld [vmem:[%s173 + $0x271] sm:$0xff]
    %v2292 = vld [vmem:[%s173 + $0x279] sm:$0xff]
    %v2293 = vld [vmem:[%s173 + $0x289] sm:$0xff]
    %v2294 = vld [vmem:[%s173 + $0x291] sm:$0xff]
    %v2295 = vld [vmem:[%s173 + $0x2a1] sm:$0xff]
    %v2296 = vld [vmem:[%s173 + $0x2a9] sm:$0xff]
    %v2297 = vld [vmem:[%s173 + $0x2b9] sm:$0xff]
    %v2298 = vld [vmem:[%s173 + $0x2c1] sm:$0xff]
    %v2299 = vld [vmem:[%s173 + $0x2d1] sm:$0xff]
    %v2300 = vld [vmem:[%s173 + $0x2d9] sm:$0xff]
    %v2301 = vld [vmem:[%s173 + $0x2e9] sm:$0xff]
    %v2302 = vld [vmem:[%s173 + $0x2f1] sm:$0xff]
    %v2303 = vld [vmem:[%s173 + $0x301] sm:$0xff]
    %v2304 = vld [vmem:[%s173 + $0x309] sm:$0xff]
    %v2305 = vld [vmem:[%s173 + $0x319] sm:$0xff]
    %v2306 = vld [vmem:[%s173 + $0x321] sm:$0xff]
    %v2307 = vld [vmem:[%s1 + $0x10] sm:$0xf]
    %v2309 = vsel %vm85, %v2243, 0
    %v2312 = vsel %vm85, %v2244, 0
    %v2315 = vsel %vm85, %v2245, 0
    %v2318 = vsel %vm85, %v2246, 0
    %v2321 = vsel %vm85, %v2247, 0
    %v2324 = vsel %vm85, %v2248, 0
    %v2327 = vsel %vm85, %v2249, 0
    %v2330 = vsel %vm85, %v2250, 0
    %v2333 = vsel %vm85, %v2251, 0
    %v2336 = vsel %vm85, %v2252, 0
    %v2339 = vsel %vm85, %v2253, 0
    %v2342 = vsel %vm85, %v2254, 0
    %v2345 = vsel %vm85, %v2255, 0
    %v2348 = vsel %vm85, %v2256, 0
    %v2351 = vsel %vm85, %v2257, 0
    %v2354 = vsel %vm85, %v2258, 0
    %v2357 = vsel %vm85, %v2259, 0
    %v2360 = vsel %vm85, %v2260, 0
    %v2363 = vsel %vm85, %v2261, 0
    %v2366 = vsel %vm85, %v2262, 0
    %v2369 = vsel %vm85, %v2263, 0
    %v2372 = vsel %vm85, %v2264, 0
    %v2375 = vsel %vm85, %v2265, 0
    %v2378 = vsel %vm85, %v2266, 0
    %v2381 = vsel %vm85, %v2267, 0
    %v2384 = vsel %vm85, %v2268, 0
    %v2387 = vsel %vm85, %v2269, 0
    %v2390 = vsel %vm85, %v2270, 0
    %v2393 = vsel %vm85, %v2271, 0
    %v2396 = vsel %vm85, %v2272, 0
    %v2399 = vsel %vm85, %v2273, 0
    %v2402 = vsel %vm85, %v2274, 0
    %v2405 = vsel %vm85, %v2275, 0
    %v2408 = vsel %vm85, %v2276, 0
    %v2411 = vsel %vm85, %v2277, 0
    %v2414 = vsel %vm85, %v2278, 0
    %v2417 = vsel %vm85, %v2279, 0
    %v2420 = vsel %vm85, %v2280, 0
    %v2423 = vsel %vm85, %v2281, 0
    %v2426 = vsel %vm85, %v2282, 0
    %v2429 = vsel %vm85, %v2283, 0
    %v2432 = vsel %vm85, %v2284, 0
    %v2435 = vsel %vm85, %v2285, 0
    %v2438 = vsel %vm85, %v2286, 0
    %v2441 = vsel %vm85, %v2287, 0
    %v2444 = vsel %vm85, %v2288, 0
    %v2447 = vsel %vm85, %v2289, 0
    %v2450 = vsel %vm85, %v2290, 0
    %v2453 = vsel %vm85, %v2291, 0
    %v2456 = vsel %vm85, %v2292, 0
    %v2459 = vsel %vm85, %v2293, 0
    %v2462 = vsel %vm85, %v2294, 0
    %v2465 = vsel %vm85, %v2295, 0
    %v2468 = vsel %vm85, %v2296, 0
    %v2471 = vsel %vm85, %v2297, 0
    %v2474 = vsel %vm85, %v2298, 0
    %v2477 = vsel %vm85, %v2299, 0
    %v2480 = vsel %vm85, %v2300, 0
    %v2483 = vsel %vm85, %v2301, 0
    %v2486 = vsel %vm85, %v2302, 0
    %v2489 = vsel %vm85, %v2303, 0
    %v2492 = vsel %vm85, %v2304, 0
    %v2495 = vsel %vm85, %v2305, 0
    %v2498 = vsel %vm85, %v2306, 0
    %v2501 = vsel %vm560, %v2307, 0
    %2503 = vmatpush.msra.mxu0 0.0
    %2504 = vmatpush.msra.mxu0 0.0
    %2505 = vmatpush.msra.mxu0 0.0
    %2506 = vmatpush.msra.mxu0 0.0
    %2507 = vmatpush.msra.mxu0 0.0
    %2508 = vmatpush.msra.mxu0 0.0
    %2509 = vmatpush.msra.mxu0 0.0
    %2510 = vmatpush.msra.mxu0 0.0
    %2511 = vmatpush.msra.mxu0 0.0
    %2512 = vmatpush.msra.mxu0 0.0
    %2513 = vmatpush.msra.mxu0 0.0
    %2514 = vmatpush.msra.mxu0 0.0
    %2515 = vmatpush.msra.mxu0 0.0
    %2516 = vmatpush.msra.mxu0 0.0
    %2517 = vmatpush.msra.mxu0 0.0
    %2518 = vmatpush.msra.mxu0 %v2501
    %2519 = vmatmul.f32.gmra.mxu0 %v2309
    %v2520 = vpop.f32.mrf.mxu0
    %v2521 = vadd.f32 0.0, %v2520
    %2522 = vmatmul.f32.gmra.mxu0 %v2312
    %v2523 = vpop.f32.mrf.mxu0
    %v2524 = vadd.f32 0.0, %v2523
    %2525 = vmatmul.f32.gmra.mxu0 %v2315
    %v2526 = vpop.f32.mrf.mxu0
    %v2527 = vadd.f32 0.0, %v2526
    %2528 = vmatmul.f32.gmra.mxu0 %v2318
    %v2529 = vpop.f32.mrf.mxu0
    %v2530 = vadd.f32 0.0, %v2529
    %2531 = vmatmul.f32.gmra.mxu0 %v2321
    %v2532 = vpop.f32.mrf.mxu0
    %v2533 = vadd.f32 0.0, %v2532
    %2534 = vmatmul.f32.gmra.mxu0 %v2324
    %v2535 = vpop.f32.mrf.mxu0
    %v2536 = vadd.f32 0.0, %v2535
    %2537 = vmatmul.f32.gmra.mxu0 %v2327
    %v2538 = vpop.f32.mrf.mxu0
    %v2539 = vadd.f32 0.0, %v2538
    %2540 = vmatmul.f32.gmra.mxu0 %v2330
    %v2541 = vpop.f32.mrf.mxu0
    %v2542 = vadd.f32 0.0, %v2541
    %2543 = vmatmul.f32.gmra.mxu0 %v2333
    %v2544 = vpop.f32.mrf.mxu0
    %v2545 = vadd.f32 0.0, %v2544
    %2546 = vmatmul.f32.gmra.mxu0 %v2336
    %v2547 = vpop.f32.mrf.mxu0
    %v2548 = vadd.f32 0.0, %v2547
    %2549 = vmatmul.f32.gmra.mxu0 %v2339
    %v2550 = vpop.f32.mrf.mxu0
    %v2551 = vadd.f32 0.0, %v2550
    %2552 = vmatmul.f32.gmra.mxu0 %v2342
    %v2553 = vpop.f32.mrf.mxu0
    %v2554 = vadd.f32 0.0, %v2553
    %2555 = vmatmul.f32.gmra.mxu0 %v2345
    %v2556 = vpop.f32.mrf.mxu0
    %v2557 = vadd.f32 0.0, %v2556
    %2558 = vmatmul.f32.gmra.mxu0 %v2348
    %v2559 = vpop.f32.mrf.mxu0
    %v2560 = vadd.f32 0.0, %v2559
    %2561 = vmatmul.f32.gmra.mxu0 %v2351
    %v2562 = vpop.f32.mrf.mxu0
    %v2563 = vadd.f32 0.0, %v2562
    %2564 = vmatmul.f32.gmra.mxu0 %v2354
    %v2565 = vpop.f32.mrf.mxu0
    %v2566 = vadd.f32 0.0, %v2565
    %2567 = vmatmul.f32.gmra.mxu0 %v2357
    %v2568 = vpop.f32.mrf.mxu0
    %v2569 = vadd.f32 0.0, %v2568
    %2570 = vmatmul.f32.gmra.mxu0 %v2360
    %v2571 = vpop.f32.mrf.mxu0
    %v2572 = vadd.f32 0.0, %v2571
    %2573 = vmatmul.f32.gmra.mxu0 %v2363
    %v2574 = vpop.f32.mrf.mxu0
    %v2575 = vadd.f32 0.0, %v2574
    %2576 = vmatmul.f32.gmra.mxu0 %v2366
    %v2577 = vpop.f32.mrf.mxu0
    %v2578 = vadd.f32 0.0, %v2577
    %2579 = vmatmul.f32.gmra.mxu0 %v2369
    %v2580 = vpop.f32.mrf.mxu0
    %v2581 = vadd.f32 0.0, %v2580
    %2582 = vmatmul.f32.gmra.mxu0 %v2372
    %v2583 = vpop.f32.mrf.mxu0
    %v2584 = vadd.f32 0.0, %v2583
    %2585 = vmatmul.f32.gmra.mxu0 %v2375
    %v2586 = vpop.f32.mrf.mxu0
    %v2587 = vadd.f32 0.0, %v2586
    %2588 = vmatmul.f32.gmra.mxu0 %v2378
    %v2589 = vpop.f32.mrf.mxu0
    %v2590 = vadd.f32 0.0, %v2589
    %2591 = vmatmul.f32.gmra.mxu0 %v2381
    %v2592 = vpop.f32.mrf.mxu0
    %v2593 = vadd.f32 0.0, %v2592
    %2594 = vmatmul.f32.gmra.mxu0 %v2384
    %v2595 = vpop.f32.mrf.mxu0
    %v2596 = vadd.f32 0.0, %v2595
    %2597 = vmatmul.f32.gmra.mxu0 %v2387
    %v2598 = vpop.f32.mrf.mxu0
    %v2599 = vadd.f32 0.0, %v2598
    %2600 = vmatmul.f32.gmra.mxu0 %v2390
    %v2601 = vpop.f32.mrf.mxu0
    %v2602 = vadd.f32 0.0, %v2601
    %2603 = vmatmul.f32.gmra.mxu0 %v2393
    %v2604 = vpop.f32.mrf.mxu0
    %v2605 = vadd.f32 0.0, %v2604
    %2606 = vmatmul.f32.gmra.mxu0 %v2396
    %v2607 = vpop.f32.mrf.mxu0
    %v2608 = vadd.f32 0.0, %v2607
    %2609 = vmatmul.f32.gmra.mxu0 %v2399
    %v2610 = vpop.f32.mrf.mxu0
    %v2611 = vadd.f32 0.0, %v2610
    %2612 = vmatmul.f32.gmra.mxu0 %v2402
    %v2613 = vpop.f32.mrf.mxu0
    %v2614 = vadd.f32 0.0, %v2613
    %2615 = vmatmul.f32.gmra.mxu0 %v2405
    %v2616 = vpop.f32.mrf.mxu0
    %v2617 = vadd.f32 0.0, %v2616
    %2618 = vmatmul.f32.gmra.mxu0 %v2408
    %v2619 = vpop.f32.mrf.mxu0
    %v2620 = vadd.f32 0.0, %v2619
    %2621 = vmatmul.f32.gmra.mxu0 %v2411
    %v2622 = vpop.f32.mrf.mxu0
    %v2623 = vadd.f32 0.0, %v2622
    %2624 = vmatmul.f32.gmra.mxu0 %v2414
    %v2625 = vpop.f32.mrf.mxu0
    %v2626 = vadd.f32 0.0, %v2625
    %2627 = vmatmul.f32.gmra.mxu0 %v2417
    %v2628 = vpop.f32.mrf.mxu0
    %v2629 = vadd.f32 0.0, %v2628
    %2630 = vmatmul.f32.gmra.mxu0 %v2420
    %v2631 = vpop.f32.mrf.mxu0
    %v2632 = vadd.f32 0.0, %v2631
    %2633 = vmatmul.f32.gmra.mxu0 %v2423
    %v2634 = vpop.f32.mrf.mxu0
    %v2635 = vadd.f32 0.0, %v2634
    %2636 = vmatmul.f32.gmra.mxu0 %v2426
    %v2637 = vpop.f32.mrf.mxu0
    %v2638 = vadd.f32 0.0, %v2637
    %2639 = vmatmul.f32.gmra.mxu0 %v2429
    %v2640 = vpop.f32.mrf.mxu0
    %v2641 = vadd.f32 0.0, %v2640
    %2642 = vmatmul.f32.gmra.mxu0 %v2432
    %v2643 = vpop.f32.mrf.mxu0
    %v2644 = vadd.f32 0.0, %v2643
    %2645 = vmatmul.f32.gmra.mxu0 %v2435
    %v2646 = vpop.f32.mrf.mxu0
    %v2647 = vadd.f32 0.0, %v2646
    %2648 = vmatmul.f32.gmra.mxu0 %v2438
    %v2649 = vpop.f32.mrf.mxu0
    %v2650 = vadd.f32 0.0, %v2649
    %2651 = vmatmul.f32.gmra.mxu0 %v2441
    %v2652 = vpop.f32.mrf.mxu0
    %v2653 = vadd.f32 0.0, %v2652
    %2654 = vmatmul.f32.gmra.mxu0 %v2444
    %v2655 = vpop.f32.mrf.mxu0
    %v2656 = vadd.f32 0.0, %v2655
    %2657 = vmatmul.f32.gmra.mxu0 %v2447
    %v2658 = vpop.f32.mrf.mxu0
    %v2659 = vadd.f32 0.0, %v2658
    %2660 = vmatmul.f32.gmra.mxu0 %v2450
    %v2661 = vpop.f32.mrf.mxu0
    %v2662 = vadd.f32 0.0, %v2661
    %2663 = vmatmul.f32.gmra.mxu0 %v2453
    %v2664 = vpop.f32.mrf.mxu0
    %v2665 = vadd.f32 0.0, %v2664
    %2666 = vmatmul.f32.gmra.mxu0 %v2456
    %v2667 = vpop.f32.mrf.mxu0
    %v2668 = vadd.f32 0.0, %v2667
    %2669 = vmatmul.f32.gmra.mxu0 %v2459
    %v2670 = vpop.f32.mrf.mxu0
    %v2671 = vadd.f32 0.0, %v2670
    %2672 = vmatmul.f32.gmra.mxu0 %v2462
    %v2673 = vpop.f32.mrf.mxu0
    %v2674 = vadd.f32 0.0, %v2673
    %2675 = vmatmul.f32.gmra.mxu0 %v2465
    %v2676 = vpop.f32.mrf.mxu0
    %v2677 = vadd.f32 0.0, %v2676
    %2678 = vmatmul.f32.gmra.mxu0 %v2468
    %v2679 = vpop.f32.mrf.mxu0
    %v2680 = vadd.f32 0.0, %v2679
    %2681 = vmatmul.f32.gmra.mxu0 %v2471
    %v2682 = vpop.f32.mrf.mxu0
    %v2683 = vadd.f32 0.0, %v2682
    %2684 = vmatmul.f32.gmra.mxu0 %v2474
    %v2685 = vpop.f32.mrf.mxu0
    %v2686 = vadd.f32 0.0, %v2685
    %2687 = vmatmul.f32.gmra.mxu0 %v2477
    %v2688 = vpop.f32.mrf.mxu0
    %v2689 = vadd.f32 0.0, %v2688
    %2690 = vmatmul.f32.gmra.mxu0 %v2480
    %v2691 = vpop.f32.mrf.mxu0
    %v2692 = vadd.f32 0.0, %v2691
    %2693 = vmatmul.f32.gmra.mxu0 %v2483
    %v2694 = vpop.f32.mrf.mxu0
    %v2695 = vadd.f32 0.0, %v2694
    %2696 = vmatmul.f32.gmra.mxu0 %v2486
    %v2697 = vpop.f32.mrf.mxu0
    %v2698 = vadd.f32 0.0, %v2697
    %2699 = vmatmul.f32.gmra.mxu0 %v2489
    %v2700 = vpop.f32.mrf.mxu0
    %v2701 = vadd.f32 0.0, %v2700
    %2702 = vmatmul.f32.gmra.mxu0 %v2492
    %v2703 = vpop.f32.mrf.mxu0
    %v2704 = vadd.f32 0.0, %v2703
    %2705 = vmatmul.f32.gmra.mxu0 %v2495
    %v2706 = vpop.f32.mrf.mxu0
    %v2707 = vadd.f32 0.0, %v2706
    %2708 = vmatmul.f32.gmra.mxu0 %v2498
    %v2709 = vpop.f32.mrf.mxu0
    %v2710 = vadd.f32 0.0, %v2709
    %2711 = vdwg.mxu0
    %v2712 = vadd.f32 %v2179, %v2521
    %v2713 = vadd.f32 %v2180, %v2524
    %v2714 = vadd.f32 %v2181, %v2527
    %v2715 = vadd.f32 %v2182, %v2530
    %v2716 = vadd.f32 %v2183, %v2533
    %v2717 = vadd.f32 %v2184, %v2536
    %v2718 = vadd.f32 %v2185, %v2539
    %v2719 = vadd.f32 %v2186, %v2542
    %v2720 = vadd.f32 %v2187, %v2545
    %v2721 = vadd.f32 %v2188, %v2548
    %v2722 = vadd.f32 %v2189, %v2551
    %v2723 = vadd.f32 %v2190, %v2554
    %v2724 = vadd.f32 %v2191, %v2557
    %v2725 = vadd.f32 %v2192, %v2560
    %v2726 = vadd.f32 %v2193, %v2563
    %v2727 = vadd.f32 %v2194, %v2566
    %v2728 = vadd.f32 %v2195, %v2569
    %v2729 = vadd.f32 %v2196, %v2572
    %v2730 = vadd.f32 %v2197, %v2575
    %v2731 = vadd.f32 %v2198, %v2578
    %v2732 = vadd.f32 %v2199, %v2581
    %v2733 = vadd.f32 %v2200, %v2584
    %v2734 = vadd.f32 %v2201, %v2587
    %v2735 = vadd.f32 %v2202, %v2590
    %v2736 = vadd.f32 %v2203, %v2593
    %v2737 = vadd.f32 %v2204, %v2596
    %v2738 = vadd.f32 %v2205, %v2599
    %v2739 = vadd.f32 %v2206, %v2602
    %v2740 = vadd.f32 %v2207, %v2605
    %v2741 = vadd.f32 %v2208, %v2608
    %v2742 = vadd.f32 %v2209, %v2611
    %v2743 = vadd.f32 %v2210, %v2614
    %v2744 = vadd.f32 %v2211, %v2617
    %v2745 = vadd.f32 %v2212, %v2620
    %v2746 = vadd.f32 %v2213, %v2623
    %v2747 = vadd.f32 %v2214, %v2626
    %v2748 = vadd.f32 %v2215, %v2629
    %v2749 = vadd.f32 %v2216, %v2632
    %v2750 = vadd.f32 %v2217, %v2635
    %v2751 = vadd.f32 %v2218, %v2638
    %v2752 = vadd.f32 %v2219, %v2641
    %v2753 = vadd.f32 %v2220, %v2644
    %v2754 = vadd.f32 %v2221, %v2647
    %v2755 = vadd.f32 %v2222, %v2650
    %v2756 = vadd.f32 %v2223, %v2653
    %v2757 = vadd.f32 %v2224, %v2656
    %v2758 = vadd.f32 %v2225, %v2659
    %v2759 = vadd.f32 %v2226, %v2662
    %v2760 = vadd.f32 %v2227, %v2665
    %v2761 = vadd.f32 %v2228, %v2668
    %v2762 = vadd.f32 %v2229, %v2671
    %v2763 = vadd.f32 %v2230, %v2674
    %v2764 = vadd.f32 %v2231, %v2677
    %v2765 = vadd.f32 %v2232, %v2680
    %v2766 = vadd.f32 %v2233, %v2683
    %v2767 = vadd.f32 %v2234, %v2686
    %v2768 = vadd.f32 %v2235, %v2689
    %v2769 = vadd.f32 %v2236, %v2692
    %v2770 = vadd.f32 %v2237, %v2695
    %v2771 = vadd.f32 %v2238, %v2698
    %v2772 = vadd.f32 %v2239, %v2701
    %v2773 = vadd.f32 %v2240, %v2704
    %v2774 = vadd.f32 %v2241, %v2707
    %v2775 = vadd.f32 %v2242, %v2710
    %v2776 = vld [vmem:[%s173 + $0x2] sm:$0xff]
    %v2777 = vld [vmem:[%s173 + $0xa] sm:$0xff]
    %v2778 = vld [vmem:[%s173 + $0x1a] sm:$0xff]
    %v2779 = vld [vmem:[%s173 + $0x22] sm:$0xff]
    %v2780 = vld [vmem:[%s173 + $0x32] sm:$0xff]
    %v2781 = vld [vmem:[%s173 + $0x3a] sm:$0xff]
    %v2782 = vld [vmem:[%s173 + $0x4a] sm:$0xff]
    %v2783 = vld [vmem:[%s173 + $0x52] sm:$0xff]
    %v2784 = vld [vmem:[%s173 + $0x62] sm:$0xff]
    %v2785 = vld [vmem:[%s173 + $0x6a] sm:$0xff]
    %v2786 = vld [vmem:[%s173 + $0x7a] sm:$0xff]
    %v2787 = vld [vmem:[%s173 + $0x82] sm:$0xff]
    %v2788 = vld [vmem:[%s173 + $0x92] sm:$0xff]
    %v2789 = vld [vmem:[%s173 + $0x9a] sm:$0xff]
    %v2790 = vld [vmem:[%s173 + $0xaa] sm:$0xff]
    %v2791 = vld [vmem:[%s173 + $0xb2] sm:$0xff]
    %v2792 = vld [vmem:[%s173 + $0xc2] sm:$0xff]
    %v2793 = vld [vmem:[%s173 + $0xca] sm:$0xff]
    %v2794 = vld [vmem:[%s173 + $0xda] sm:$0xff]
    %v2795 = vld [vmem:[%s173 + $0xe2] sm:$0xff]
    %v2796 = vld [vmem:[%s173 + $0xf2] sm:$0xff]
    %v2797 = vld [vmem:[%s173 + $0xfa] sm:$0xff]
    %v2798 = vld [vmem:[%s173 + $0x10a] sm:$0xff]
    %v2799 = vld [vmem:[%s173 + $0x112] sm:$0xff]
    %v2800 = vld [vmem:[%s173 + $0x122] sm:$0xff]
    %v2801 = vld [vmem:[%s173 + $0x12a] sm:$0xff]
    %v2802 = vld [vmem:[%s173 + $0x13a] sm:$0xff]
    %v2803 = vld [vmem:[%s173 + $0x142] sm:$0xff]
    %v2804 = vld [vmem:[%s173 + $0x152] sm:$0xff]
    %v2805 = vld [vmem:[%s173 + $0x15a] sm:$0xff]
    %v2806 = vld [vmem:[%s173 + $0x16a] sm:$0xff]
    %v2807 = vld [vmem:[%s173 + $0x172] sm:$0xff]
    %v2808 = vld [vmem:[%s173 + $0x1b2] sm:$0xff]
    %v2809 = vld [vmem:[%s173 + $0x1ba] sm:$0xff]
    %v2810 = vld [vmem:[%s173 + $0x1ca] sm:$0xff]
    %v2811 = vld [vmem:[%s173 + $0x1d2] sm:$0xff]
    %v2812 = vld [vmem:[%s173 + $0x1e2] sm:$0xff]
    %v2813 = vld [vmem:[%s173 + $0x1ea] sm:$0xff]
    %v2814 = vld [vmem:[%s173 + $0x1fa] sm:$0xff]
    %v2815 = vld [vmem:[%s173 + $0x202] sm:$0xff]
    %v2816 = vld [vmem:[%s173 + $0x212] sm:$0xff]
    %v2817 = vld [vmem:[%s173 + $0x21a] sm:$0xff]
    %v2818 = vld [vmem:[%s173 + $0x22a] sm:$0xff]
    %v2819 = vld [vmem:[%s173 + $0x232] sm:$0xff]
    %v2820 = vld [vmem:[%s173 + $0x242] sm:$0xff]
    %v2821 = vld [vmem:[%s173 + $0x24a] sm:$0xff]
    %v2822 = vld [vmem:[%s173 + $0x25a] sm:$0xff]
    %v2823 = vld [vmem:[%s173 + $0x262] sm:$0xff]
    %v2824 = vld [vmem:[%s173 + $0x272] sm:$0xff]
    %v2825 = vld [vmem:[%s173 + $0x27a] sm:$0xff]
    %v2826 = vld [vmem:[%s173 + $0x28a] sm:$0xff]
    %v2827 = vld [vmem:[%s173 + $0x292] sm:$0xff]
    %v2828 = vld [vmem:[%s173 + $0x2a2] sm:$0xff]
    %v2829 = vld [vmem:[%s173 + $0x2aa] sm:$0xff]
    %v2830 = vld [vmem:[%s173 + $0x2ba] sm:$0xff]
    %v2831 = vld [vmem:[%s173 + $0x2c2] sm:$0xff]
    %v2832 = vld [vmem:[%s173 + $0x2d2] sm:$0xff]
    %v2833 = vld [vmem:[%s173 + $0x2da] sm:$0xff]
    %v2834 = vld [vmem:[%s173 + $0x2ea] sm:$0xff]
    %v2835 = vld [vmem:[%s173 + $0x2f2] sm:$0xff]
    %v2836 = vld [vmem:[%s173 + $0x302] sm:$0xff]
    %v2837 = vld [vmem:[%s173 + $0x30a] sm:$0xff]
    %v2838 = vld [vmem:[%s173 + $0x31a] sm:$0xff]
    %v2839 = vld [vmem:[%s173 + $0x322] sm:$0xff]
    %v2840 = vld [vmem:[%s1 + $0x14] sm:$0xf]
    %v2842 = vsel %vm85, %v2776, 0
    %v2845 = vsel %vm85, %v2777, 0
    %v2848 = vsel %vm85, %v2778, 0
    %v2851 = vsel %vm85, %v2779, 0
    %v2854 = vsel %vm85, %v2780, 0
    %v2857 = vsel %vm85, %v2781, 0
    %v2860 = vsel %vm85, %v2782, 0
    %v2863 = vsel %vm85, %v2783, 0
    %v2866 = vsel %vm85, %v2784, 0
    %v2869 = vsel %vm85, %v2785, 0
    %v2872 = vsel %vm85, %v2786, 0
    %v2875 = vsel %vm85, %v2787, 0
    %v2878 = vsel %vm85, %v2788, 0
    %v2881 = vsel %vm85, %v2789, 0
    %v2884 = vsel %vm85, %v2790, 0
    %v2887 = vsel %vm85, %v2791, 0
    %v2890 = vsel %vm85, %v2792, 0
    %v2893 = vsel %vm85, %v2793, 0
    %v2896 = vsel %vm85, %v2794, 0
    %v2899 = vsel %vm85, %v2795, 0
    %v2902 = vsel %vm85, %v2796, 0
    %v2905 = vsel %vm85, %v2797, 0
    %v2908 = vsel %vm85, %v2798, 0
    %v2911 = vsel %vm85, %v2799, 0
    %v2914 = vsel %vm85, %v2800, 0
    %v2917 = vsel %vm85, %v2801, 0
    %v2920 = vsel %vm85, %v2802, 0
    %v2923 = vsel %vm85, %v2803, 0
    %v2926 = vsel %vm85, %v2804, 0
    %v2929 = vsel %vm85, %v2805, 0
    %v2932 = vsel %vm85, %v2806, 0
    %v2935 = vsel %vm85, %v2807, 0
    %v2938 = vsel %vm85, %v2808, 0
    %v2941 = vsel %vm85, %v2809, 0
    %v2944 = vsel %vm85, %v2810, 0
    %v2947 = vsel %vm85, %v2811, 0
    %v2950 = vsel %vm85, %v2812, 0
    %v2953 = vsel %vm85, %v2813, 0
    %v2956 = vsel %vm85, %v2814, 0
    %v2959 = vsel %vm85, %v2815, 0
    %v2962 = vsel %vm85, %v2816, 0
    %v2965 = vsel %vm85, %v2817, 0
    %v2968 = vsel %vm85, %v2818, 0
    %v2971 = vsel %vm85, %v2819, 0
    %v2974 = vsel %vm85, %v2820, 0
    %v2977 = vsel %vm85, %v2821, 0
    %v2980 = vsel %vm85, %v2822, 0
    %v2983 = vsel %vm85, %v2823, 0
    %v2986 = vsel %vm85, %v2824, 0
    %v2989 = vsel %vm85, %v2825, 0
    %v2992 = vsel %vm85, %v2826, 0
    %v2995 = vsel %vm85, %v2827, 0
    %v2998 = vsel %vm85, %v2828, 0
    %v3001 = vsel %vm85, %v2829, 0
    %v3004 = vsel %vm85, %v2830, 0
    %v3007 = vsel %vm85, %v2831, 0
    %v3010 = vsel %vm85, %v2832, 0
    %v3013 = vsel %vm85, %v2833, 0
    %v3016 = vsel %vm85, %v2834, 0
    %v3019 = vsel %vm85, %v2835, 0
    %v3022 = vsel %vm85, %v2836, 0
    %v3025 = vsel %vm85, %v2837, 0
    %v3028 = vsel %vm85, %v2838, 0
    %v3031 = vsel %vm85, %v2839, 0
    %v3034 = vsel %vm560, %v2840, 0
    %3036 = vmatpush.msra.mxu0 0.0
    %3037 = vmatpush.msra.mxu0 0.0
    %3038 = vmatpush.msra.mxu0 0.0
    %3039 = vmatpush.msra.mxu0 0.0
    %3040 = vmatpush.msra.mxu0 0.0
    %3041 = vmatpush.msra.mxu0 0.0
    %3042 = vmatpush.msra.mxu0 0.0
    %3043 = vmatpush.msra.mxu0 0.0
    %3044 = vmatpush.msra.mxu0 0.0
    %3045 = vmatpush.msra.mxu0 0.0
    %3046 = vmatpush.msra.mxu0 0.0
    %3047 = vmatpush.msra.mxu0 0.0
    %3048 = vmatpush.msra.mxu0 0.0
    %3049 = vmatpush.msra.mxu0 0.0
    %3050 = vmatpush.msra.mxu0 0.0
    %3051 = vmatpush.msra.mxu0 %v3034
    %3052 = vmatmul.f32.gmra.mxu0 %v2842
    %v3053 = vpop.f32.mrf.mxu0
    %v3054 = vadd.f32 0.0, %v3053
    %3055 = vmatmul.f32.gmra.mxu0 %v2845
    %v3056 = vpop.f32.mrf.mxu0
    %v3057 = vadd.f32 0.0, %v3056
    %3058 = vmatmul.f32.gmra.mxu0 %v2848
    %v3059 = vpop.f32.mrf.mxu0
    %v3060 = vadd.f32 0.0, %v3059
    %3061 = vmatmul.f32.gmra.mxu0 %v2851
    %v3062 = vpop.f32.mrf.mxu0
    %v3063 = vadd.f32 0.0, %v3062
    %3064 = vmatmul.f32.gmra.mxu0 %v2854
    %v3065 = vpop.f32.mrf.mxu0
    %v3066 = vadd.f32 0.0, %v3065
    %3067 = vmatmul.f32.gmra.mxu0 %v2857
    %v3068 = vpop.f32.mrf.mxu0
    %v3069 = vadd.f32 0.0, %v3068
    %3070 = vmatmul.f32.gmra.mxu0 %v2860
    %v3071 = vpop.f32.mrf.mxu0
    %v3072 = vadd.f32 0.0, %v3071
    %3073 = vmatmul.f32.gmra.mxu0 %v2863
    %v3074 = vpop.f32.mrf.mxu0
    %v3075 = vadd.f32 0.0, %v3074
    %3076 = vmatmul.f32.gmra.mxu0 %v2866
    %v3077 = vpop.f32.mrf.mxu0
    %v3078 = vadd.f32 0.0, %v3077
    %3079 = vmatmul.f32.gmra.mxu0 %v2869
    %v3080 = vpop.f32.mrf.mxu0
    %v3081 = vadd.f32 0.0, %v3080
    %3082 = vmatmul.f32.gmra.mxu0 %v2872
    %v3083 = vpop.f32.mrf.mxu0
    %v3084 = vadd.f32 0.0, %v3083
    %3085 = vmatmul.f32.gmra.mxu0 %v2875
    %v3086 = vpop.f32.mrf.mxu0
    %v3087 = vadd.f32 0.0, %v3086
    %3088 = vmatmul.f32.gmra.mxu0 %v2878
    %v3089 = vpop.f32.mrf.mxu0
    %v3090 = vadd.f32 0.0, %v3089
    %3091 = vmatmul.f32.gmra.mxu0 %v2881
    %v3092 = vpop.f32.mrf.mxu0
    %v3093 = vadd.f32 0.0, %v3092
    %3094 = vmatmul.f32.gmra.mxu0 %v2884
    %v3095 = vpop.f32.mrf.mxu0
    %v3096 = vadd.f32 0.0, %v3095
    %3097 = vmatmul.f32.gmra.mxu0 %v2887
    %v3098 = vpop.f32.mrf.mxu0
    %v3099 = vadd.f32 0.0, %v3098
    %3100 = vmatmul.f32.gmra.mxu0 %v2890
    %v3101 = vpop.f32.mrf.mxu0
    %v3102 = vadd.f32 0.0, %v3101
    %3103 = vmatmul.f32.gmra.mxu0 %v2893
    %v3104 = vpop.f32.mrf.mxu0
    %v3105 = vadd.f32 0.0, %v3104
    %3106 = vmatmul.f32.gmra.mxu0 %v2896
    %v3107 = vpop.f32.mrf.mxu0
    %v3108 = vadd.f32 0.0, %v3107
    %3109 = vmatmul.f32.gmra.mxu0 %v2899
    %v3110 = vpop.f32.mrf.mxu0
    %v3111 = vadd.f32 0.0, %v3110
    %3112 = vmatmul.f32.gmra.mxu0 %v2902
    %v3113 = vpop.f32.mrf.mxu0
    %v3114 = vadd.f32 0.0, %v3113
    %3115 = vmatmul.f32.gmra.mxu0 %v2905
    %v3116 = vpop.f32.mrf.mxu0
    %v3117 = vadd.f32 0.0, %v3116
    %3118 = vmatmul.f32.gmra.mxu0 %v2908
    %v3119 = vpop.f32.mrf.mxu0
    %v3120 = vadd.f32 0.0, %v3119
    %3121 = vmatmul.f32.gmra.mxu0 %v2911
    %v3122 = vpop.f32.mrf.mxu0
    %v3123 = vadd.f32 0.0, %v3122
    %3124 = vmatmul.f32.gmra.mxu0 %v2914
    %v3125 = vpop.f32.mrf.mxu0
    %v3126 = vadd.f32 0.0, %v3125
    %3127 = vmatmul.f32.gmra.mxu0 %v2917
    %v3128 = vpop.f32.mrf.mxu0
    %v3129 = vadd.f32 0.0, %v3128
    %3130 = vmatmul.f32.gmra.mxu0 %v2920
    %v3131 = vpop.f32.mrf.mxu0
    %v3132 = vadd.f32 0.0, %v3131
    %3133 = vmatmul.f32.gmra.mxu0 %v2923
    %v3134 = vpop.f32.mrf.mxu0
    %v3135 = vadd.f32 0.0, %v3134
    %3136 = vmatmul.f32.gmra.mxu0 %v2926
    %v3137 = vpop.f32.mrf.mxu0
    %v3138 = vadd.f32 0.0, %v3137
    %3139 = vmatmul.f32.gmra.mxu0 %v2929
    %v3140 = vpop.f32.mrf.mxu0
    %v3141 = vadd.f32 0.0, %v3140
    %3142 = vmatmul.f32.gmra.mxu0 %v2932
    %v3143 = vpop.f32.mrf.mxu0
    %v3144 = vadd.f32 0.0, %v3143
    %3145 = vmatmul.f32.gmra.mxu0 %v2935
    %v3146 = vpop.f32.mrf.mxu0
    %v3147 = vadd.f32 0.0, %v3146
    %3148 = vmatmul.f32.gmra.mxu0 %v2938
    %v3149 = vpop.f32.mrf.mxu0
    %v3150 = vadd.f32 0.0, %v3149
    %3151 = vmatmul.f32.gmra.mxu0 %v2941
    %v3152 = vpop.f32.mrf.mxu0
    %v3153 = vadd.f32 0.0, %v3152
    %3154 = vmatmul.f32.gmra.mxu0 %v2944
    %v3155 = vpop.f32.mrf.mxu0
    %v3156 = vadd.f32 0.0, %v3155
    %3157 = vmatmul.f32.gmra.mxu0 %v2947
    %v3158 = vpop.f32.mrf.mxu0
    %v3159 = vadd.f32 0.0, %v3158
    %3160 = vmatmul.f32.gmra.mxu0 %v2950
    %v3161 = vpop.f32.mrf.mxu0
    %v3162 = vadd.f32 0.0, %v3161
    %3163 = vmatmul.f32.gmra.mxu0 %v2953
    %v3164 = vpop.f32.mrf.mxu0
    %v3165 = vadd.f32 0.0, %v3164
    %3166 = vmatmul.f32.gmra.mxu0 %v2956
    %v3167 = vpop.f32.mrf.mxu0
    %v3168 = vadd.f32 0.0, %v3167
    %3169 = vmatmul.f32.gmra.mxu0 %v2959
    %v3170 = vpop.f32.mrf.mxu0
    %v3171 = vadd.f32 0.0, %v3170
    %3172 = vmatmul.f32.gmra.mxu0 %v2962
    %v3173 = vpop.f32.mrf.mxu0
    %v3174 = vadd.f32 0.0, %v3173
    %3175 = vmatmul.f32.gmra.mxu0 %v2965
    %v3176 = vpop.f32.mrf.mxu0
    %v3177 = vadd.f32 0.0, %v3176
    %3178 = vmatmul.f32.gmra.mxu0 %v2968
    %v3179 = vpop.f32.mrf.mxu0
    %v3180 = vadd.f32 0.0, %v3179
    %3181 = vmatmul.f32.gmra.mxu0 %v2971
    %v3182 = vpop.f32.mrf.mxu0
    %v3183 = vadd.f32 0.0, %v3182
    %3184 = vmatmul.f32.gmra.mxu0 %v2974
    %v3185 = vpop.f32.mrf.mxu0
    %v3186 = vadd.f32 0.0, %v3185
    %3187 = vmatmul.f32.gmra.mxu0 %v2977
    %v3188 = vpop.f32.mrf.mxu0
    %v3189 = vadd.f32 0.0, %v3188
    %3190 = vmatmul.f32.gmra.mxu0 %v2980
    %v3191 = vpop.f32.mrf.mxu0
    %v3192 = vadd.f32 0.0, %v3191
    %3193 = vmatmul.f32.gmra.mxu0 %v2983
    %v3194 = vpop.f32.mrf.mxu0
    %v3195 = vadd.f32 0.0, %v3194
    %3196 = vmatmul.f32.gmra.mxu0 %v2986
    %v3197 = vpop.f32.mrf.mxu0
    %v3198 = vadd.f32 0.0, %v3197
    %3199 = vmatmul.f32.gmra.mxu0 %v2989
    %v3200 = vpop.f32.mrf.mxu0
    %v3201 = vadd.f32 0.0, %v3200
    %3202 = vmatmul.f32.gmra.mxu0 %v2992
    %v3203 = vpop.f32.mrf.mxu0
    %v3204 = vadd.f32 0.0, %v3203
    %3205 = vmatmul.f32.gmra.mxu0 %v2995
    %v3206 = vpop.f32.mrf.mxu0
    %v3207 = vadd.f32 0.0, %v3206
    %3208 = vmatmul.f32.gmra.mxu0 %v2998
    %v3209 = vpop.f32.mrf.mxu0
    %v3210 = vadd.f32 0.0, %v3209
    %3211 = vmatmul.f32.gmra.mxu0 %v3001
    %v3212 = vpop.f32.mrf.mxu0
    %v3213 = vadd.f32 0.0, %v3212
    %3214 = vmatmul.f32.gmra.mxu0 %v3004
    %v3215 = vpop.f32.mrf.mxu0
    %v3216 = vadd.f32 0.0, %v3215
    %3217 = vmatmul.f32.gmra.mxu0 %v3007
    %v3218 = vpop.f32.mrf.mxu0
    %v3219 = vadd.f32 0.0, %v3218
    %3220 = vmatmul.f32.gmra.mxu0 %v3010
    %v3221 = vpop.f32.mrf.mxu0
    %v3222 = vadd.f32 0.0, %v3221
    %3223 = vmatmul.f32.gmra.mxu0 %v3013
    %v3224 = vpop.f32.mrf.mxu0
    %v3225 = vadd.f32 0.0, %v3224
    %3226 = vmatmul.f32.gmra.mxu0 %v3016
    %v3227 = vpop.f32.mrf.mxu0
    %v3228 = vadd.f32 0.0, %v3227
    %3229 = vmatmul.f32.gmra.mxu0 %v3019
    %v3230 = vpop.f32.mrf.mxu0
    %v3231 = vadd.f32 0.0, %v3230
    %3232 = vmatmul.f32.gmra.mxu0 %v3022
    %v3233 = vpop.f32.mrf.mxu0
    %v3234 = vadd.f32 0.0, %v3233
    %3235 = vmatmul.f32.gmra.mxu0 %v3025
    %v3236 = vpop.f32.mrf.mxu0
    %v3237 = vadd.f32 0.0, %v3236
    %3238 = vmatmul.f32.gmra.mxu0 %v3028
    %v3239 = vpop.f32.mrf.mxu0
    %v3240 = vadd.f32 0.0, %v3239
    %3241 = vmatmul.f32.gmra.mxu0 %v3031
    %v3242 = vpop.f32.mrf.mxu0
    %v3243 = vadd.f32 0.0, %v3242
    %3244 = vdwg.mxu0
    %v3245 = vadd.f32 %v2712, %v3054
    %v3246 = vadd.f32 %v2713, %v3057
    %v3247 = vadd.f32 %v2714, %v3060
    %v3248 = vadd.f32 %v2715, %v3063
    %v3249 = vadd.f32 %v2716, %v3066
    %v3250 = vadd.f32 %v2717, %v3069
    %v3251 = vadd.f32 %v2718, %v3072
    %v3252 = vadd.f32 %v2719, %v3075
    %v3253 = vadd.f32 %v2720, %v3078
    %v3254 = vadd.f32 %v2721, %v3081
    %v3255 = vadd.f32 %v2722, %v3084
    %v3256 = vadd.f32 %v2723, %v3087
    %v3257 = vadd.f32 %v2724, %v3090
    %v3258 = vadd.f32 %v2725, %v3093
    %v3259 = vadd.f32 %v2726, %v3096
    %v3260 = vadd.f32 %v2727, %v3099
    %v3261 = vadd.f32 %v2728, %v3102
    %v3262 = vadd.f32 %v2729, %v3105
    %v3263 = vadd.f32 %v2730, %v3108
    %v3264 = vadd.f32 %v2731, %v3111
    %v3265 = vadd.f32 %v2732, %v3114
    %v3266 = vadd.f32 %v2733, %v3117
    %v3267 = vadd.f32 %v2734, %v3120
    %v3268 = vadd.f32 %v2735, %v3123
    %v3269 = vadd.f32 %v2736, %v3126
    %v3270 = vadd.f32 %v2737, %v3129
    %v3271 = vadd.f32 %v2738, %v3132
    %v3272 = vadd.f32 %v2739, %v3135
    %v3273 = vadd.f32 %v2740, %v3138
    %v3274 = vadd.f32 %v2741, %v3141
    %v3275 = vadd.f32 %v2742, %v3144
    %v3276 = vadd.f32 %v2743, %v3147
    %v3277 = vadd.f32 %v2744, %v3150
    %v3278 = vadd.f32 %v2745, %v3153
    %v3279 = vadd.f32 %v2746, %v3156
    %v3280 = vadd.f32 %v2747, %v3159
    %v3281 = vadd.f32 %v2748, %v3162
    %v3282 = vadd.f32 %v2749, %v3165
    %v3283 = vadd.f32 %v2750, %v3168
    %v3284 = vadd.f32 %v2751, %v3171
    %v3285 = vadd.f32 %v2752, %v3174
    %v3286 = vadd.f32 %v2753, %v3177
    %v3287 = vadd.f32 %v2754, %v3180
    %v3288 = vadd.f32 %v2755, %v3183
    %v3289 = vadd.f32 %v2756, %v3186
    %v3290 = vadd.f32 %v2757, %v3189
    %v3291 = vadd.f32 %v2758, %v3192
    %v3292 = vadd.f32 %v2759, %v3195
    %v3293 = vadd.f32 %v2760, %v3198
    %v3294 = vadd.f32 %v2761, %v3201
    %v3295 = vadd.f32 %v2762, %v3204
    %v3296 = vadd.f32 %v2763, %v3207
    %v3297 = vadd.f32 %v2764, %v3210
    %v3298 = vadd.f32 %v2765, %v3213
    %v3299 = vadd.f32 %v2766, %v3216
    %v3300 = vadd.f32 %v2767, %v3219
    %v3301 = vadd.f32 %v2768, %v3222
    %v3302 = vadd.f32 %v2769, %v3225
    %v3303 = vadd.f32 %v2770, %v3228
    %v3304 = vadd.f32 %v2771, %v3231
    %v3305 = vadd.f32 %v2772, %v3234
    %v3306 = vadd.f32 %v2773, %v3237
    %v3307 = vadd.f32 %v2774, %v3240
    %v3308 = vadd.f32 %v2775, %v3243
    %s3309 = scalar_lea.vmem [#allocation2], 48
    %v3310 = vld [vmem:[%s3309] sm:$0xff]
    %v3311 = vld [vmem:[%s3309 + $0x8] sm:$0xff]
    %v3312 = vld [vmem:[%s3309 + $0x18] sm:$0xff]
    %v3313 = vld [vmem:[%s3309 + $0x20] sm:$0xff]
    %v3314 = vld [vmem:[%s3309 + $0x30] sm:$0xff]
    %v3315 = vld [vmem:[%s3309 + $0x38] sm:$0xff]
    %v3316 = vld [vmem:[%s3309 + $0x48] sm:$0xff]
    %v3317 = vld [vmem:[%s3309 + $0x50] sm:$0xff]
    %v3318 = vld [vmem:[%s3309 + $0x60] sm:$0xff]
    %v3319 = vld [vmem:[%s3309 + $0x68] sm:$0xff]
    %v3320 = vld [vmem:[%s3309 + $0x78] sm:$0xff]
    %v3321 = vld [vmem:[%s3309 + $0x80] sm:$0xff]
    %v3322 = vld [vmem:[%s3309 + $0x90] sm:$0xff]
    %v3323 = vld [vmem:[%s3309 + $0x98] sm:$0xff]
    %v3324 = vld [vmem:[%s3309 + $0xa8] sm:$0xff]
    %v3325 = vld [vmem:[%s3309 + $0xb0] sm:$0xff]
    %v3326 = vld [vmem:[%s3309 + $0xc0] sm:$0xff]
    %v3327 = vld [vmem:[%s3309 + $0xc8] sm:$0xff]
    %v3328 = vld [vmem:[%s3309 + $0xd8] sm:$0xff]
    %v3329 = vld [vmem:[%s3309 + $0xe0] sm:$0xff]
    %v3330 = vld [vmem:[%s3309 + $0xf0] sm:$0xff]
    %v3331 = vld [vmem:[%s3309 + $0xf8] sm:$0xff]
    %v3332 = vld [vmem:[%s3309 + $0x108] sm:$0xff]
    %v3333 = vld [vmem:[%s3309 + $0x110] sm:$0xff]
    %v3334 = vld [vmem:[%s3309 + $0x120] sm:$0xff]
    %v3335 = vld [vmem:[%s3309 + $0x128] sm:$0xff]
    %v3336 = vld [vmem:[%s3309 + $0x138] sm:$0xff]
    %v3337 = vld [vmem:[%s3309 + $0x140] sm:$0xff]
    %v3338 = vld [vmem:[%s3309 + $0x150] sm:$0xff]
    %v3339 = vld [vmem:[%s3309 + $0x158] sm:$0xff]
    %v3340 = vld [vmem:[%s3309 + $0x168] sm:$0xff]
    %v3341 = vld [vmem:[%s3309 + $0x170] sm:$0xff]
    %v3342 = vld [vmem:[%s3309 + $0x1b0] sm:$0xff]
    %v3343 = vld [vmem:[%s3309 + $0x1b8] sm:$0xff]
    %v3344 = vld [vmem:[%s3309 + $0x1c8] sm:$0xff]
    %v3345 = vld [vmem:[%s3309 + $0x1d0] sm:$0xff]
    %v3346 = vld [vmem:[%s3309 + $0x1e0] sm:$0xff]
    %v3347 = vld [vmem:[%s3309 + $0x1e8] sm:$0xff]
    %v3348 = vld [vmem:[%s3309 + $0x1f8] sm:$0xff]
    %v3349 = vld [vmem:[%s3309 + $0x200] sm:$0xff]
    %v3350 = vld [vmem:[%s3309 + $0x210] sm:$0xff]
    %v3351 = vld [vmem:[%s3309 + $0x218] sm:$0xff]
    %v3352 = vld [vmem:[%s3309 + $0x228] sm:$0xff]
    %v3353 = vld [vmem:[%s3309 + $0x230] sm:$0xff]
    %v3354 = vld [vmem:[%s3309 + $0x240] sm:$0xff]
    %v3355 = vld [vmem:[%s3309 + $0x248] sm:$0xff]
    %v3356 = vld [vmem:[%s3309 + $0x258] sm:$0xff]
    %v3357 = vld [vmem:[%s3309 + $0x260] sm:$0xff]
    %v3358 = vld [vmem:[%s3309 + $0x270] sm:$0xff]
    %v3359 = vld [vmem:[%s3309 + $0x278] sm:$0xff]
    %v3360 = vld [vmem:[%s3309 + $0x288] sm:$0xff]
    %v3361 = vld [vmem:[%s3309 + $0x290] sm:$0xff]
    %v3362 = vld [vmem:[%s3309 + $0x2a0] sm:$0xff]
    %v3363 = vld [vmem:[%s3309 + $0x2a8] sm:$0xff]
    %v3364 = vld [vmem:[%s3309 + $0x2b8] sm:$0xff]
    %v3365 = vld [vmem:[%s3309 + $0x2c0] sm:$0xff]
    %v3366 = vld [vmem:[%s3309 + $0x2d0] sm:$0xff]
    %v3367 = vld [vmem:[%s3309 + $0x2d8] sm:$0xff]
    %v3368 = vld [vmem:[%s3309 + $0x2e8] sm:$0xff]
    %v3369 = vld [vmem:[%s3309 + $0x2f0] sm:$0xff]
    %v3370 = vld [vmem:[%s3309 + $0x300] sm:$0xff]
    %v3371 = vld [vmem:[%s3309 + $0x308] sm:$0xff]
    %v3372 = vld [vmem:[%s3309 + $0x318] sm:$0xff]
    %v3373 = vld [vmem:[%s3309 + $0x320] sm:$0xff]
    %v3374 = vld [vmem:[%s1 + $0x18] sm:$0xf]
    %v3376 = vsel %vm85, %v3310, 0
    %v3379 = vsel %vm85, %v3311, 0
    %v3382 = vsel %vm85, %v3312, 0
    %v3385 = vsel %vm85, %v3313, 0
    %v3388 = vsel %vm85, %v3314, 0
    %v3391 = vsel %vm85, %v3315, 0
    %v3394 = vsel %vm85, %v3316, 0
    %v3397 = vsel %vm85, %v3317, 0
    %v3400 = vsel %vm85, %v3318, 0
    %v3403 = vsel %vm85, %v3319, 0
    %v3406 = vsel %vm85, %v3320, 0
    %v3409 = vsel %vm85, %v3321, 0
    %v3412 = vsel %vm85, %v3322, 0
    %v3415 = vsel %vm85, %v3323, 0
    %v3418 = vsel %vm85, %v3324, 0
    %v3421 = vsel %vm85, %v3325, 0
    %v3424 = vsel %vm85, %v3326, 0
    %v3427 = vsel %vm85, %v3327, 0
    %v3430 = vsel %vm85, %v3328, 0
    %v3433 = vsel %vm85, %v3329, 0
    %v3436 = vsel %vm85, %v3330, 0
    %v3439 = vsel %vm85, %v3331, 0
    %v3442 = vsel %vm85, %v3332, 0
    %v3445 = vsel %vm85, %v3333, 0
    %v3448 = vsel %vm85, %v3334, 0
    %v3451 = vsel %vm85, %v3335, 0
    %v3454 = vsel %vm85, %v3336, 0
    %v3457 = vsel %vm85, %v3337, 0
    %v3460 = vsel %vm85, %v3338, 0
    %v3463 = vsel %vm85, %v3339, 0
    %v3466 = vsel %vm85, %v3340, 0
    %v3469 = vsel %vm85, %v3341, 0
    %v3472 = vsel %vm85, %v3342, 0
    %v3475 = vsel %vm85, %v3343, 0
    %v3478 = vsel %vm85, %v3344, 0
    %v3481 = vsel %vm85, %v3345, 0
    %v3484 = vsel %vm85, %v3346, 0
    %v3487 = vsel %vm85, %v3347, 0
    %v3490 = vsel %vm85, %v3348, 0
    %v3493 = vsel %vm85, %v3349, 0
    %v3496 = vsel %vm85, %v3350, 0
    %v3499 = vsel %vm85, %v3351, 0
    %v3502 = vsel %vm85, %v3352, 0
    %v3505 = vsel %vm85, %v3353, 0
    %v3508 = vsel %vm85, %v3354, 0
    %v3511 = vsel %vm85, %v3355, 0
    %v3514 = vsel %vm85, %v3356, 0
    %v3517 = vsel %vm85, %v3357, 0
    %v3520 = vsel %vm85, %v3358, 0
    %v3523 = vsel %vm85, %v3359, 0
    %v3526 = vsel %vm85, %v3360, 0
    %v3529 = vsel %vm85, %v3361, 0
    %v3532 = vsel %vm85, %v3362, 0
    %v3535 = vsel %vm85, %v3363, 0
    %v3538 = vsel %vm85, %v3364, 0
    %v3541 = vsel %vm85, %v3365, 0
    %v3544 = vsel %vm85, %v3366, 0
    %v3547 = vsel %vm85, %v3367, 0
    %v3550 = vsel %vm85, %v3368, 0
    %v3553 = vsel %vm85, %v3369, 0
    %v3556 = vsel %vm85, %v3370, 0
    %v3559 = vsel %vm85, %v3371, 0
    %v3562 = vsel %vm85, %v3372, 0
    %v3565 = vsel %vm85, %v3373, 0
    %v3568 = vsel %vm560, %v3374, 0
    %3570 = vmatpush.msra.mxu0 0.0
    %3571 = vmatpush.msra.mxu0 0.0
    %3572 = vmatpush.msra.mxu0 0.0
    %3573 = vmatpush.msra.mxu0 0.0
    %3574 = vmatpush.msra.mxu0 0.0
    %3575 = vmatpush.msra.mxu0 0.0
    %3576 = vmatpush.msra.mxu0 0.0
    %3577 = vmatpush.msra.mxu0 0.0
    %3578 = vmatpush.msra.mxu0 0.0
    %3579 = vmatpush.msra.mxu0 0.0
    %3580 = vmatpush.msra.mxu0 0.0
    %3581 = vmatpush.msra.mxu0 0.0
    %3582 = vmatpush.msra.mxu0 0.0
    %3583 = vmatpush.msra.mxu0 0.0
    %3584 = vmatpush.msra.mxu0 0.0
    %3585 = vmatpush.msra.mxu0 %v3568
    %3586 = vmatmul.f32.gmra.mxu0 %v3376
    %v3587 = vpop.f32.mrf.mxu0
    %v3588 = vadd.f32 0.0, %v3587
    %3589 = vmatmul.f32.gmra.mxu0 %v3379
    %v3590 = vpop.f32.mrf.mxu0
    %v3591 = vadd.f32 0.0, %v3590
    %3592 = vmatmul.f32.gmra.mxu0 %v3382
    %v3593 = vpop.f32.mrf.mxu0
    %v3594 = vadd.f32 0.0, %v3593
    %3595 = vmatmul.f32.gmra.mxu0 %v3385
    %v3596 = vpop.f32.mrf.mxu0
    %v3597 = vadd.f32 0.0, %v3596
    %3598 = vmatmul.f32.gmra.mxu0 %v3388
    %v3599 = vpop.f32.mrf.mxu0
    %v3600 = vadd.f32 0.0, %v3599
    %3601 = vmatmul.f32.gmra.mxu0 %v3391
    %v3602 = vpop.f32.mrf.mxu0
    %v3603 = vadd.f32 0.0, %v3602
    %3604 = vmatmul.f32.gmra.mxu0 %v3394
    %v3605 = vpop.f32.mrf.mxu0
    %v3606 = vadd.f32 0.0, %v3605
    %3607 = vmatmul.f32.gmra.mxu0 %v3397
    %v3608 = vpop.f32.mrf.mxu0
    %v3609 = vadd.f32 0.0, %v3608
    %3610 = vmatmul.f32.gmra.mxu0 %v3400
    %v3611 = vpop.f32.mrf.mxu0
    %v3612 = vadd.f32 0.0, %v3611
    %3613 = vmatmul.f32.gmra.mxu0 %v3403
    %v3614 = vpop.f32.mrf.mxu0
    %v3615 = vadd.f32 0.0, %v3614
    %3616 = vmatmul.f32.gmra.mxu0 %v3406
    %v3617 = vpop.f32.mrf.mxu0
    %v3618 = vadd.f32 0.0, %v3617
    %3619 = vmatmul.f32.gmra.mxu0 %v3409
    %v3620 = vpop.f32.mrf.mxu0
    %v3621 = vadd.f32 0.0, %v3620
    %3622 = vmatmul.f32.gmra.mxu0 %v3412
    %v3623 = vpop.f32.mrf.mxu0
    %v3624 = vadd.f32 0.0, %v3623
    %3625 = vmatmul.f32.gmra.mxu0 %v3415
    %v3626 = vpop.f32.mrf.mxu0
    %v3627 = vadd.f32 0.0, %v3626
    %3628 = vmatmul.f32.gmra.mxu0 %v3418
    %v3629 = vpop.f32.mrf.mxu0
    %v3630 = vadd.f32 0.0, %v3629
    %3631 = vmatmul.f32.gmra.mxu0 %v3421
    %v3632 = vpop.f32.mrf.mxu0
    %v3633 = vadd.f32 0.0, %v3632
    %3634 = vmatmul.f32.gmra.mxu0 %v3424
    %v3635 = vpop.f32.mrf.mxu0
    %v3636 = vadd.f32 0.0, %v3635
    %3637 = vmatmul.f32.gmra.mxu0 %v3427
    %v3638 = vpop.f32.mrf.mxu0
    %v3639 = vadd.f32 0.0, %v3638
    %3640 = vmatmul.f32.gmra.mxu0 %v3430
    %v3641 = vpop.f32.mrf.mxu0
    %v3642 = vadd.f32 0.0, %v3641
    %3643 = vmatmul.f32.gmra.mxu0 %v3433
    %v3644 = vpop.f32.mrf.mxu0
    %v3645 = vadd.f32 0.0, %v3644
    %3646 = vmatmul.f32.gmra.mxu0 %v3436
    %v3647 = vpop.f32.mrf.mxu0
    %v3648 = vadd.f32 0.0, %v3647
    %3649 = vmatmul.f32.gmra.mxu0 %v3439
    %v3650 = vpop.f32.mrf.mxu0
    %v3651 = vadd.f32 0.0, %v3650
    %3652 = vmatmul.f32.gmra.mxu0 %v3442
    %v3653 = vpop.f32.mrf.mxu0
    %v3654 = vadd.f32 0.0, %v3653
    %3655 = vmatmul.f32.gmra.mxu0 %v3445
    %v3656 = vpop.f32.mrf.mxu0
    %v3657 = vadd.f32 0.0, %v3656
    %3658 = vmatmul.f32.gmra.mxu0 %v3448
    %v3659 = vpop.f32.mrf.mxu0
    %v3660 = vadd.f32 0.0, %v3659
    %3661 = vmatmul.f32.gmra.mxu0 %v3451
    %v3662 = vpop.f32.mrf.mxu0
    %v3663 = vadd.f32 0.0, %v3662
    %3664 = vmatmul.f32.gmra.mxu0 %v3454
    %v3665 = vpop.f32.mrf.mxu0
    %v3666 = vadd.f32 0.0, %v3665
    %3667 = vmatmul.f32.gmra.mxu0 %v3457
    %v3668 = vpop.f32.mrf.mxu0
    %v3669 = vadd.f32 0.0, %v3668
    %3670 = vmatmul.f32.gmra.mxu0 %v3460
    %v3671 = vpop.f32.mrf.mxu0
    %v3672 = vadd.f32 0.0, %v3671
    %3673 = vmatmul.f32.gmra.mxu0 %v3463
    %v3674 = vpop.f32.mrf.mxu0
    %v3675 = vadd.f32 0.0, %v3674
    %3676 = vmatmul.f32.gmra.mxu0 %v3466
    %v3677 = vpop.f32.mrf.mxu0
    %v3678 = vadd.f32 0.0, %v3677
    %3679 = vmatmul.f32.gmra.mxu0 %v3469
    %v3680 = vpop.f32.mrf.mxu0
    %v3681 = vadd.f32 0.0, %v3680
    %3682 = vmatmul.f32.gmra.mxu0 %v3472
    %v3683 = vpop.f32.mrf.mxu0
    %v3684 = vadd.f32 0.0, %v3683
    %3685 = vmatmul.f32.gmra.mxu0 %v3475
    %v3686 = vpop.f32.mrf.mxu0
    %v3687 = vadd.f32 0.0, %v3686
    %3688 = vmatmul.f32.gmra.mxu0 %v3478
    %v3689 = vpop.f32.mrf.mxu0
    %v3690 = vadd.f32 0.0, %v3689
    %3691 = vmatmul.f32.gmra.mxu0 %v3481
    %v3692 = vpop.f32.mrf.mxu0
    %v3693 = vadd.f32 0.0, %v3692
    %3694 = vmatmul.f32.gmra.mxu0 %v3484
    %v3695 = vpop.f32.mrf.mxu0
    %v3696 = vadd.f32 0.0, %v3695
    %3697 = vmatmul.f32.gmra.mxu0 %v3487
    %v3698 = vpop.f32.mrf.mxu0
    %v3699 = vadd.f32 0.0, %v3698
    %3700 = vmatmul.f32.gmra.mxu0 %v3490
    %v3701 = vpop.f32.mrf.mxu0
    %v3702 = vadd.f32 0.0, %v3701
    %3703 = vmatmul.f32.gmra.mxu0 %v3493
    %v3704 = vpop.f32.mrf.mxu0
    %v3705 = vadd.f32 0.0, %v3704
    %3706 = vmatmul.f32.gmra.mxu0 %v3496
    %v3707 = vpop.f32.mrf.mxu0
    %v3708 = vadd.f32 0.0, %v3707
    %3709 = vmatmul.f32.gmra.mxu0 %v3499
    %v3710 = vpop.f32.mrf.mxu0
    %v3711 = vadd.f32 0.0, %v3710
    %3712 = vmatmul.f32.gmra.mxu0 %v3502
    %v3713 = vpop.f32.mrf.mxu0
    %v3714 = vadd.f32 0.0, %v3713
    %3715 = vmatmul.f32.gmra.mxu0 %v3505
    %v3716 = vpop.f32.mrf.mxu0
    %v3717 = vadd.f32 0.0, %v3716
    %3718 = vmatmul.f32.gmra.mxu0 %v3508
    %v3719 = vpop.f32.mrf.mxu0
    %v3720 = vadd.f32 0.0, %v3719
    %3721 = vmatmul.f32.gmra.mxu0 %v3511
    %v3722 = vpop.f32.mrf.mxu0
    %v3723 = vadd.f32 0.0, %v3722
    %3724 = vmatmul.f32.gmra.mxu0 %v3514
    %v3725 = vpop.f32.mrf.mxu0
    %v3726 = vadd.f32 0.0, %v3725
    %3727 = vmatmul.f32.gmra.mxu0 %v3517
    %v3728 = vpop.f32.mrf.mxu0
    %v3729 = vadd.f32 0.0, %v3728
    %3730 = vmatmul.f32.gmra.mxu0 %v3520
    %v3731 = vpop.f32.mrf.mxu0
    %v3732 = vadd.f32 0.0, %v3731
    %3733 = vmatmul.f32.gmra.mxu0 %v3523
    %v3734 = vpop.f32.mrf.mxu0
    %v3735 = vadd.f32 0.0, %v3734
    %3736 = vmatmul.f32.gmra.mxu0 %v3526
    %v3737 = vpop.f32.mrf.mxu0
    %v3738 = vadd.f32 0.0, %v3737
    %3739 = vmatmul.f32.gmra.mxu0 %v3529
    %v3740 = vpop.f32.mrf.mxu0
    %v3741 = vadd.f32 0.0, %v3740
    %3742 = vmatmul.f32.gmra.mxu0 %v3532
    %v3743 = vpop.f32.mrf.mxu0
    %v3744 = vadd.f32 0.0, %v3743
    %3745 = vmatmul.f32.gmra.mxu0 %v3535
    %v3746 = vpop.f32.mrf.mxu0
    %v3747 = vadd.f32 0.0, %v3746
    %3748 = vmatmul.f32.gmra.mxu0 %v3538
    %v3749 = vpop.f32.mrf.mxu0
    %v3750 = vadd.f32 0.0, %v3749
    %3751 = vmatmul.f32.gmra.mxu0 %v3541
    %v3752 = vpop.f32.mrf.mxu0
    %v3753 = vadd.f32 0.0, %v3752
    %3754 = vmatmul.f32.gmra.mxu0 %v3544
    %v3755 = vpop.f32.mrf.mxu0
    %v3756 = vadd.f32 0.0, %v3755
    %3757 = vmatmul.f32.gmra.mxu0 %v3547
    %v3758 = vpop.f32.mrf.mxu0
    %v3759 = vadd.f32 0.0, %v3758
    %3760 = vmatmul.f32.gmra.mxu0 %v3550
    %v3761 = vpop.f32.mrf.mxu0
    %v3762 = vadd.f32 0.0, %v3761
    %3763 = vmatmul.f32.gmra.mxu0 %v3553
    %v3764 = vpop.f32.mrf.mxu0
    %v3765 = vadd.f32 0.0, %v3764
    %3766 = vmatmul.f32.gmra.mxu0 %v3556
    %v3767 = vpop.f32.mrf.mxu0
    %v3768 = vadd.f32 0.0, %v3767
    %3769 = vmatmul.f32.gmra.mxu0 %v3559
    %v3770 = vpop.f32.mrf.mxu0
    %v3771 = vadd.f32 0.0, %v3770
    %3772 = vmatmul.f32.gmra.mxu0 %v3562
    %v3773 = vpop.f32.mrf.mxu0
    %v3774 = vadd.f32 0.0, %v3773
    %3775 = vmatmul.f32.gmra.mxu0 %v3565
    %v3776 = vpop.f32.mrf.mxu0
    %v3777 = vadd.f32 0.0, %v3776
    %3778 = vdwg.mxu0
    %v3779 = vadd.f32 %v3245, %v3588
    %v3780 = vadd.f32 %v3246, %v3591
    %v3781 = vadd.f32 %v3247, %v3594
    %v3782 = vadd.f32 %v3248, %v3597
    %v3783 = vadd.f32 %v3249, %v3600
    %v3784 = vadd.f32 %v3250, %v3603
    %v3785 = vadd.f32 %v3251, %v3606
    %v3786 = vadd.f32 %v3252, %v3609
    %v3787 = vadd.f32 %v3253, %v3612
    %v3788 = vadd.f32 %v3254, %v3615
    %v3789 = vadd.f32 %v3255, %v3618
    %v3790 = vadd.f32 %v3256, %v3621
    %v3791 = vadd.f32 %v3257, %v3624
    %v3792 = vadd.f32 %v3258, %v3627
    %v3793 = vadd.f32 %v3259, %v3630
    %v3794 = vadd.f32 %v3260, %v3633
    %v3795 = vadd.f32 %v3261, %v3636
    %v3796 = vadd.f32 %v3262, %v3639
    %v3797 = vadd.f32 %v3263, %v3642
    %v3798 = vadd.f32 %v3264, %v3645
    %v3799 = vadd.f32 %v3265, %v3648
    %v3800 = vadd.f32 %v3266, %v3651
    %v3801 = vadd.f32 %v3267, %v3654
    %v3802 = vadd.f32 %v3268, %v3657
    %v3803 = vadd.f32 %v3269, %v3660
    %v3804 = vadd.f32 %v3270, %v3663
    %v3805 = vadd.f32 %v3271, %v3666
    %v3806 = vadd.f32 %v3272, %v3669
    %v3807 = vadd.f32 %v3273, %v3672
    %v3808 = vadd.f32 %v3274, %v3675
    %v3809 = vadd.f32 %v3275, %v3678
    %v3810 = vadd.f32 %v3276, %v3681
    %v3811 = vadd.f32 %v3277, %v3684
    %v3812 = vadd.f32 %v3278, %v3687
    %v3813 = vadd.f32 %v3279, %v3690
    %v3814 = vadd.f32 %v3280, %v3693
    %v3815 = vadd.f32 %v3281, %v3696
    %v3816 = vadd.f32 %v3282, %v3699
    %v3817 = vadd.f32 %v3283, %v3702
    %v3818 = vadd.f32 %v3284, %v3705
    %v3819 = vadd.f32 %v3285, %v3708
    %v3820 = vadd.f32 %v3286, %v3711
    %v3821 = vadd.f32 %v3287, %v3714
    %v3822 = vadd.f32 %v3288, %v3717
    %v3823 = vadd.f32 %v3289, %v3720
    %v3824 = vadd.f32 %v3290, %v3723
    %v3825 = vadd.f32 %v3291, %v3726
    %v3826 = vadd.f32 %v3292, %v3729
    %v3827 = vadd.f32 %v3293, %v3732
    %v3828 = vadd.f32 %v3294, %v3735
    %v3829 = vadd.f32 %v3295, %v3738
    %v3830 = vadd.f32 %v3296, %v3741
    %v3831 = vadd.f32 %v3297, %v3744
    %v3832 = vadd.f32 %v3298, %v3747
    %v3833 = vadd.f32 %v3299, %v3750
    %v3834 = vadd.f32 %v3300, %v3753
    %v3835 = vadd.f32 %v3301, %v3756
    %v3836 = vadd.f32 %v3302, %v3759
    %v3837 = vadd.f32 %v3303, %v3762
    %v3838 = vadd.f32 %v3304, %v3765
    %v3839 = vadd.f32 %v3305, %v3768
    %v3840 = vadd.f32 %v3306, %v3771
    %v3841 = vadd.f32 %v3307, %v3774
    %v3842 = vadd.f32 %v3308, %v3777
    %v3843 = vld [vmem:[%s3309 + $0x1] sm:$0xff]
    %v3844 = vld [vmem:[%s3309 + $0x9] sm:$0xff]
    %v3845 = vld [vmem:[%s3309 + $0x19] sm:$0xff]
    %v3846 = vld [vmem:[%s3309 + $0x21] sm:$0xff]
    %v3847 = vld [vmem:[%s3309 + $0x31] sm:$0xff]
    %v3848 = vld [vmem:[%s3309 + $0x39] sm:$0xff]
    %v3849 = vld [vmem:[%s3309 + $0x49] sm:$0xff]
    %v3850 = vld [vmem:[%s3309 + $0x51] sm:$0xff]
    %v3851 = vld [vmem:[%s3309 + $0x61] sm:$0xff]
    %v3852 = vld [vmem:[%s3309 + $0x69] sm:$0xff]
    %v3853 = vld [vmem:[%s3309 + $0x79] sm:$0xff]
    %v3854 = vld [vmem:[%s3309 + $0x81] sm:$0xff]
    %v3855 = vld [vmem:[%s3309 + $0x91] sm:$0xff]
    %v3856 = vld [vmem:[%s3309 + $0x99] sm:$0xff]
    %v3857 = vld [vmem:[%s3309 + $0xa9] sm:$0xff]
    %v3858 = vld [vmem:[%s3309 + $0xb1] sm:$0xff]
    %v3859 = vld [vmem:[%s3309 + $0xc1] sm:$0xff]
    %v3860 = vld [vmem:[%s3309 + $0xc9] sm:$0xff]
    %v3861 = vld [vmem:[%s3309 + $0xd9] sm:$0xff]
    %v3862 = vld [vmem:[%s3309 + $0xe1] sm:$0xff]
    %v3863 = vld [vmem:[%s3309 + $0xf1] sm:$0xff]
    %v3864 = vld [vmem:[%s3309 + $0xf9] sm:$0xff]
    %v3865 = vld [vmem:[%s3309 + $0x109] sm:$0xff]
    %v3866 = vld [vmem:[%s3309 + $0x111] sm:$0xff]
    %v3867 = vld [vmem:[%s3309 + $0x121] sm:$0xff]
    %v3868 = vld [vmem:[%s3309 + $0x129] sm:$0xff]
    %v3869 = vld [vmem:[%s3309 + $0x139] sm:$0xff]
    %v3870 = vld [vmem:[%s3309 + $0x141] sm:$0xff]
    %v3871 = vld [vmem:[%s3309 + $0x151] sm:$0xff]
    %v3872 = vld [vmem:[%s3309 + $0x159] sm:$0xff]
    %v3873 = vld [vmem:[%s3309 + $0x169] sm:$0xff]
    %v3874 = vld [vmem:[%s3309 + $0x171] sm:$0xff]
    %v3875 = vld [vmem:[%s3309 + $0x1b1] sm:$0xff]
    %v3876 = vld [vmem:[%s3309 + $0x1b9] sm:$0xff]
    %v3877 = vld [vmem:[%s3309 + $0x1c9] sm:$0xff]
    %v3878 = vld [vmem:[%s3309 + $0x1d1] sm:$0xff]
    %v3879 = vld [vmem:[%s3309 + $0x1e1] sm:$0xff]
    %v3880 = vld [vmem:[%s3309 + $0x1e9] sm:$0xff]
    %v3881 = vld [vmem:[%s3309 + $0x1f9] sm:$0xff]
    %v3882 = vld [vmem:[%s3309 + $0x201] sm:$0xff]
    %v3883 = vld [vmem:[%s3309 + $0x211] sm:$0xff]
    %v3884 = vld [vmem:[%s3309 + $0x219] sm:$0xff]
    %v3885 = vld [vmem:[%s3309 + $0x229] sm:$0xff]
    %v3886 = vld [vmem:[%s3309 + $0x231] sm:$0xff]
    %v3887 = vld [vmem:[%s3309 + $0x241] sm:$0xff]
    %v3888 = vld [vmem:[%s3309 + $0x249] sm:$0xff]
    %v3889 = vld [vmem:[%s3309 + $0x259] sm:$0xff]
    %v3890 = vld [vmem:[%s3309 + $0x261] sm:$0xff]
    %v3891 = vld [vmem:[%s3309 + $0x271] sm:$0xff]
    %v3892 = vld [vmem:[%s3309 + $0x279] sm:$0xff]
    %v3893 = vld [vmem:[%s3309 + $0x289] sm:$0xff]
    %v3894 = vld [vmem:[%s3309 + $0x291] sm:$0xff]
    %v3895 = vld [vmem:[%s3309 + $0x2a1] sm:$0xff]
    %v3896 = vld [vmem:[%s3309 + $0x2a9] sm:$0xff]
    %v3897 = vld [vmem:[%s3309 + $0x2b9] sm:$0xff]
    %v3898 = vld [vmem:[%s3309 + $0x2c1] sm:$0xff]
    %v3899 = vld [vmem:[%s3309 + $0x2d1] sm:$0xff]
    %v3900 = vld [vmem:[%s3309 + $0x2d9] sm:$0xff]
    %v3901 = vld [vmem:[%s3309 + $0x2e9] sm:$0xff]
    %v3902 = vld [vmem:[%s3309 + $0x2f1] sm:$0xff]
    %v3903 = vld [vmem:[%s3309 + $0x301] sm:$0xff]
    %v3904 = vld [vmem:[%s3309 + $0x309] sm:$0xff]
    %v3905 = vld [vmem:[%s3309 + $0x319] sm:$0xff]
    %v3906 = vld [vmem:[%s3309 + $0x321] sm:$0xff]
    %v3907 = vld [vmem:[%s1 + $0x1c] sm:$0xf]
    %v3909 = vsel %vm85, %v3843, 0
    %v3912 = vsel %vm85, %v3844, 0
    %v3915 = vsel %vm85, %v3845, 0
    %v3918 = vsel %vm85, %v3846, 0
    %v3921 = vsel %vm85, %v3847, 0
    %v3924 = vsel %vm85, %v3848, 0
    %v3927 = vsel %vm85, %v3849, 0
    %v3930 = vsel %vm85, %v3850, 0
    %v3933 = vsel %vm85, %v3851, 0
    %v3936 = vsel %vm85, %v3852, 0
    %v3939 = vsel %vm85, %v3853, 0
    %v3942 = vsel %vm85, %v3854, 0
    %v3945 = vsel %vm85, %v3855, 0
    %v3948 = vsel %vm85, %v3856, 0
    %v3951 = vsel %vm85, %v3857, 0
    %v3954 = vsel %vm85, %v3858, 0
    %v3957 = vsel %vm85, %v3859, 0
    %v3960 = vsel %vm85, %v3860, 0
    %v3963 = vsel %vm85, %v3861, 0
    %v3966 = vsel %vm85, %v3862, 0
    %v3969 = vsel %vm85, %v3863, 0
    %v3972 = vsel %vm85, %v3864, 0
    %v3975 = vsel %vm85, %v3865, 0
    %v3978 = vsel %vm85, %v3866, 0
    %v3981 = vsel %vm85, %v3867, 0
    %v3984 = vsel %vm85, %v3868, 0
    %v3987 = vsel %vm85, %v3869, 0
    %v3990 = vsel %vm85, %v3870, 0
    %v3993 = vsel %vm85, %v3871, 0
    %v3996 = vsel %vm85, %v3872, 0
    %v3999 = vsel %vm85, %v3873, 0
    %v4002 = vsel %vm85, %v3874, 0
    %v4005 = vsel %vm85, %v3875, 0
    %v4008 = vsel %vm85, %v3876, 0
    %v4011 = vsel %vm85, %v3877, 0
    %v4014 = vsel %vm85, %v3878, 0
    %v4017 = vsel %vm85, %v3879, 0
    %v4020 = vsel %vm85, %v3880, 0
    %v4023 = vsel %vm85, %v3881, 0
    %v4026 = vsel %vm85, %v3882, 0
    %v4029 = vsel %vm85, %v3883, 0
    %v4032 = vsel %vm85, %v3884, 0
    %v4035 = vsel %vm85, %v3885, 0
    %v4038 = vsel %vm85, %v3886, 0
    %v4041 = vsel %vm85, %v3887, 0
    %v4044 = vsel %vm85, %v3888, 0
    %v4047 = vsel %vm85, %v3889, 0
    %v4050 = vsel %vm85, %v3890, 0
    %v4053 = vsel %vm85, %v3891, 0
    %v4056 = vsel %vm85, %v3892, 0
    %v4059 = vsel %vm85, %v3893, 0
    %v4062 = vsel %vm85, %v3894, 0
    %v4065 = vsel %vm85, %v3895, 0
    %v4068 = vsel %vm85, %v3896, 0
    %v4071 = vsel %vm85, %v3897, 0
    %v4074 = vsel %vm85, %v3898, 0
    %v4077 = vsel %vm85, %v3899, 0
    %v4080 = vsel %vm85, %v3900, 0
    %v4083 = vsel %vm85, %v3901, 0
    %v4086 = vsel %vm85, %v3902, 0
    %v4089 = vsel %vm85, %v3903, 0
    %v4092 = vsel %vm85, %v3904, 0
    %v4095 = vsel %vm85, %v3905, 0
    %v4098 = vsel %vm85, %v3906, 0
    %v4101 = vsel %vm560, %v3907, 0
    %4103 = vmatpush.msra.mxu0 0.0
    %4104 = vmatpush.msra.mxu0 0.0
    %4105 = vmatpush.msra.mxu0 0.0
    %4106 = vmatpush.msra.mxu0 0.0
    %4107 = vmatpush.msra.mxu0 0.0
    %4108 = vmatpush.msra.mxu0 0.0
    %4109 = vmatpush.msra.mxu0 0.0
    %4110 = vmatpush.msra.mxu0 0.0
    %4111 = vmatpush.msra.mxu0 0.0
    %4112 = vmatpush.msra.mxu0 0.0
    %4113 = vmatpush.msra.mxu0 0.0
    %4114 = vmatpush.msra.mxu0 0.0
    %4115 = vmatpush.msra.mxu0 0.0
    %4116 = vmatpush.msra.mxu0 0.0
    %4117 = vmatpush.msra.mxu0 0.0
    %4118 = vmatpush.msra.mxu0 %v4101
    %4119 = vmatmul.f32.gmra.mxu0 %v3909
    %v4120 = vpop.f32.mrf.mxu0
    %v4121 = vadd.f32 0.0, %v4120
    %4122 = vmatmul.f32.gmra.mxu0 %v3912
    %v4123 = vpop.f32.mrf.mxu0
    %v4124 = vadd.f32 0.0, %v4123
    %4125 = vmatmul.f32.gmra.mxu0 %v3915
    %v4126 = vpop.f32.mrf.mxu0
    %v4127 = vadd.f32 0.0, %v4126
    %4128 = vmatmul.f32.gmra.mxu0 %v3918
    %v4129 = vpop.f32.mrf.mxu0
    %v4130 = vadd.f32 0.0, %v4129
    %4131 = vmatmul.f32.gmra.mxu0 %v3921
    %v4132 = vpop.f32.mrf.mxu0
    %v4133 = vadd.f32 0.0, %v4132
    %4134 = vmatmul.f32.gmra.mxu0 %v3924
    %v4135 = vpop.f32.mrf.mxu0
    %v4136 = vadd.f32 0.0, %v4135
    %4137 = vmatmul.f32.gmra.mxu0 %v3927
    %v4138 = vpop.f32.mrf.mxu0
    %v4139 = vadd.f32 0.0, %v4138
    %4140 = vmatmul.f32.gmra.mxu0 %v3930
    %v4141 = vpop.f32.mrf.mxu0
    %v4142 = vadd.f32 0.0, %v4141
    %4143 = vmatmul.f32.gmra.mxu0 %v3933
    %v4144 = vpop.f32.mrf.mxu0
    %v4145 = vadd.f32 0.0, %v4144
    %4146 = vmatmul.f32.gmra.mxu0 %v3936
    %v4147 = vpop.f32.mrf.mxu0
    %v4148 = vadd.f32 0.0, %v4147
    %4149 = vmatmul.f32.gmra.mxu0 %v3939
    %v4150 = vpop.f32.mrf.mxu0
    %v4151 = vadd.f32 0.0, %v4150
    %4152 = vmatmul.f32.gmra.mxu0 %v3942
    %v4153 = vpop.f32.mrf.mxu0
    %v4154 = vadd.f32 0.0, %v4153
    %4155 = vmatmul.f32.gmra.mxu0 %v3945
    %v4156 = vpop.f32.mrf.mxu0
    %v4157 = vadd.f32 0.0, %v4156
    %4158 = vmatmul.f32.gmra.mxu0 %v3948
    %v4159 = vpop.f32.mrf.mxu0
    %v4160 = vadd.f32 0.0, %v4159
    %4161 = vmatmul.f32.gmra.mxu0 %v3951
    %v4162 = vpop.f32.mrf.mxu0
    %v4163 = vadd.f32 0.0, %v4162
    %4164 = vmatmul.f32.gmra.mxu0 %v3954
    %v4165 = vpop.f32.mrf.mxu0
    %v4166 = vadd.f32 0.0, %v4165
    %4167 = vmatmul.f32.gmra.mxu0 %v3957
    %v4168 = vpop.f32.mrf.mxu0
    %v4169 = vadd.f32 0.0, %v4168
    %4170 = vmatmul.f32.gmra.mxu0 %v3960
    %v4171 = vpop.f32.mrf.mxu0
    %v4172 = vadd.f32 0.0, %v4171
    %4173 = vmatmul.f32.gmra.mxu0 %v3963
    %v4174 = vpop.f32.mrf.mxu0
    %v4175 = vadd.f32 0.0, %v4174
    %4176 = vmatmul.f32.gmra.mxu0 %v3966
    %v4177 = vpop.f32.mrf.mxu0
    %v4178 = vadd.f32 0.0, %v4177
    %4179 = vmatmul.f32.gmra.mxu0 %v3969
    %v4180 = vpop.f32.mrf.mxu0
    %v4181 = vadd.f32 0.0, %v4180
    %4182 = vmatmul.f32.gmra.mxu0 %v3972
    %v4183 = vpop.f32.mrf.mxu0
    %v4184 = vadd.f32 0.0, %v4183
    %4185 = vmatmul.f32.gmra.mxu0 %v3975
    %v4186 = vpop.f32.mrf.mxu0
    %v4187 = vadd.f32 0.0, %v4186
    %4188 = vmatmul.f32.gmra.mxu0 %v3978
    %v4189 = vpop.f32.mrf.mxu0
    %v4190 = vadd.f32 0.0, %v4189
    %4191 = vmatmul.f32.gmra.mxu0 %v3981
    %v4192 = vpop.f32.mrf.mxu0
    %v4193 = vadd.f32 0.0, %v4192
    %4194 = vmatmul.f32.gmra.mxu0 %v3984
    %v4195 = vpop.f32.mrf.mxu0
    %v4196 = vadd.f32 0.0, %v4195
    %4197 = vmatmul.f32.gmra.mxu0 %v3987
    %v4198 = vpop.f32.mrf.mxu0
    %v4199 = vadd.f32 0.0, %v4198
    %4200 = vmatmul.f32.gmra.mxu0 %v3990
    %v4201 = vpop.f32.mrf.mxu0
    %v4202 = vadd.f32 0.0, %v4201
    %4203 = vmatmul.f32.gmra.mxu0 %v3993
    %v4204 = vpop.f32.mrf.mxu0
    %v4205 = vadd.f32 0.0, %v4204
    %4206 = vmatmul.f32.gmra.mxu0 %v3996
    %v4207 = vpop.f32.mrf.mxu0
    %v4208 = vadd.f32 0.0, %v4207
    %4209 = vmatmul.f32.gmra.mxu0 %v3999
    %v4210 = vpop.f32.mrf.mxu0
    %v4211 = vadd.f32 0.0, %v4210
    %4212 = vmatmul.f32.gmra.mxu0 %v4002
    %v4213 = vpop.f32.mrf.mxu0
    %v4214 = vadd.f32 0.0, %v4213
    %4215 = vmatmul.f32.gmra.mxu0 %v4005
    %v4216 = vpop.f32.mrf.mxu0
    %v4217 = vadd.f32 0.0, %v4216
    %4218 = vmatmul.f32.gmra.mxu0 %v4008
    %v4219 = vpop.f32.mrf.mxu0
    %v4220 = vadd.f32 0.0, %v4219
    %4221 = vmatmul.f32.gmra.mxu0 %v4011
    %v4222 = vpop.f32.mrf.mxu0
    %v4223 = vadd.f32 0.0, %v4222
    %4224 = vmatmul.f32.gmra.mxu0 %v4014
    %v4225 = vpop.f32.mrf.mxu0
    %v4226 = vadd.f32 0.0, %v4225
    %4227 = vmatmul.f32.gmra.mxu0 %v4017
    %v4228 = vpop.f32.mrf.mxu0
    %v4229 = vadd.f32 0.0, %v4228
    %4230 = vmatmul.f32.gmra.mxu0 %v4020
    %v4231 = vpop.f32.mrf.mxu0
    %v4232 = vadd.f32 0.0, %v4231
    %4233 = vmatmul.f32.gmra.mxu0 %v4023
    %v4234 = vpop.f32.mrf.mxu0
    %v4235 = vadd.f32 0.0, %v4234
    %4236 = vmatmul.f32.gmra.mxu0 %v4026
    %v4237 = vpop.f32.mrf.mxu0
    %v4238 = vadd.f32 0.0, %v4237
    %4239 = vmatmul.f32.gmra.mxu0 %v4029
    %v4240 = vpop.f32.mrf.mxu0
    %v4241 = vadd.f32 0.0, %v4240
    %4242 = vmatmul.f32.gmra.mxu0 %v4032
    %v4243 = vpop.f32.mrf.mxu0
    %v4244 = vadd.f32 0.0, %v4243
    %4245 = vmatmul.f32.gmra.mxu0 %v4035
    %v4246 = vpop.f32.mrf.mxu0
    %v4247 = vadd.f32 0.0, %v4246
    %4248 = vmatmul.f32.gmra.mxu0 %v4038
    %v4249 = vpop.f32.mrf.mxu0
    %v4250 = vadd.f32 0.0, %v4249
    %4251 = vmatmul.f32.gmra.mxu0 %v4041
    %v4252 = vpop.f32.mrf.mxu0
    %v4253 = vadd.f32 0.0, %v4252
    %4254 = vmatmul.f32.gmra.mxu0 %v4044
    %v4255 = vpop.f32.mrf.mxu0
    %v4256 = vadd.f32 0.0, %v4255
    %4257 = vmatmul.f32.gmra.mxu0 %v4047
    %v4258 = vpop.f32.mrf.mxu0
    %v4259 = vadd.f32 0.0, %v4258
    %4260 = vmatmul.f32.gmra.mxu0 %v4050
    %v4261 = vpop.f32.mrf.mxu0
    %v4262 = vadd.f32 0.0, %v4261
    %4263 = vmatmul.f32.gmra.mxu0 %v4053
    %v4264 = vpop.f32.mrf.mxu0
    %v4265 = vadd.f32 0.0, %v4264
    %4266 = vmatmul.f32.gmra.mxu0 %v4056
    %v4267 = vpop.f32.mrf.mxu0
    %v4268 = vadd.f32 0.0, %v4267
    %4269 = vmatmul.f32.gmra.mxu0 %v4059
    %v4270 = vpop.f32.mrf.mxu0
    %v4271 = vadd.f32 0.0, %v4270
    %4272 = vmatmul.f32.gmra.mxu0 %v4062
    %v4273 = vpop.f32.mrf.mxu0
    %v4274 = vadd.f32 0.0, %v4273
    %4275 = vmatmul.f32.gmra.mxu0 %v4065
    %v4276 = vpop.f32.mrf.mxu0
    %v4277 = vadd.f32 0.0, %v4276
    %4278 = vmatmul.f32.gmra.mxu0 %v4068
    %v4279 = vpop.f32.mrf.mxu0
    %v4280 = vadd.f32 0.0, %v4279
    %4281 = vmatmul.f32.gmra.mxu0 %v4071
    %v4282 = vpop.f32.mrf.mxu0
    %v4283 = vadd.f32 0.0, %v4282
    %4284 = vmatmul.f32.gmra.mxu0 %v4074
    %v4285 = vpop.f32.mrf.mxu0
    %v4286 = vadd.f32 0.0, %v4285
    %4287 = vmatmul.f32.gmra.mxu0 %v4077
    %v4288 = vpop.f32.mrf.mxu0
    %v4289 = vadd.f32 0.0, %v4288
    %4290 = vmatmul.f32.gmra.mxu0 %v4080
    %v4291 = vpop.f32.mrf.mxu0
    %v4292 = vadd.f32 0.0, %v4291
    %4293 = vmatmul.f32.gmra.mxu0 %v4083
    %v4294 = vpop.f32.mrf.mxu0
    %v4295 = vadd.f32 0.0, %v4294
    %4296 = vmatmul.f32.gmra.mxu0 %v4086
    %v4297 = vpop.f32.mrf.mxu0
    %v4298 = vadd.f32 0.0, %v4297
    %4299 = vmatmul.f32.gmra.mxu0 %v4089
    %v4300 = vpop.f32.mrf.mxu0
    %v4301 = vadd.f32 0.0, %v4300
    %4302 = vmatmul.f32.gmra.mxu0 %v4092
    %v4303 = vpop.f32.mrf.mxu0
    %v4304 = vadd.f32 0.0, %v4303
    %4305 = vmatmul.f32.gmra.mxu0 %v4095
    %v4306 = vpop.f32.mrf.mxu0
    %v4307 = vadd.f32 0.0, %v4306
    %4308 = vmatmul.f32.gmra.mxu0 %v4098
    %v4309 = vpop.f32.mrf.mxu0
    %v4310 = vadd.f32 0.0, %v4309
    %4311 = vdwg.mxu0
    %v4312 = vadd.f32 %v3779, %v4121
    %v4313 = vadd.f32 %v3780, %v4124
    %v4314 = vadd.f32 %v3781, %v4127
    %v4315 = vadd.f32 %v3782, %v4130
    %v4316 = vadd.f32 %v3783, %v4133
    %v4317 = vadd.f32 %v3784, %v4136
    %v4318 = vadd.f32 %v3785, %v4139
    %v4319 = vadd.f32 %v3786, %v4142
    %v4320 = vadd.f32 %v3787, %v4145
    %v4321 = vadd.f32 %v3788, %v4148
    %v4322 = vadd.f32 %v3789, %v4151
    %v4323 = vadd.f32 %v3790, %v4154
    %v4324 = vadd.f32 %v3791, %v4157
    %v4325 = vadd.f32 %v3792, %v4160
    %v4326 = vadd.f32 %v3793, %v4163
    %v4327 = vadd.f32 %v3794, %v4166
    %v4328 = vadd.f32 %v3795, %v4169
    %v4329 = vadd.f32 %v3796, %v4172
    %v4330 = vadd.f32 %v3797, %v4175
    %v4331 = vadd.f32 %v3798, %v4178
    %v4332 = vadd.f32 %v3799, %v4181
    %v4333 = vadd.f32 %v3800, %v4184
    %v4334 = vadd.f32 %v3801, %v4187
    %v4335 = vadd.f32 %v3802, %v4190
    %v4336 = vadd.f32 %v3803, %v4193
    %v4337 = vadd.f32 %v3804, %v4196
    %v4338 = vadd.f32 %v3805, %v4199
    %v4339 = vadd.f32 %v3806, %v4202
    %v4340 = vadd.f32 %v3807, %v4205
    %v4341 = vadd.f32 %v3808, %v4208
    %v4342 = vadd.f32 %v3809, %v4211
    %v4343 = vadd.f32 %v3810, %v4214
    %v4344 = vadd.f32 %v3811, %v4217
    %v4345 = vadd.f32 %v3812, %v4220
    %v4346 = vadd.f32 %v3813, %v4223
    %v4347 = vadd.f32 %v3814, %v4226
    %v4348 = vadd.f32 %v3815, %v4229
    %v4349 = vadd.f32 %v3816, %v4232
    %v4350 = vadd.f32 %v3817, %v4235
    %v4351 = vadd.f32 %v3818, %v4238
    %v4352 = vadd.f32 %v3819, %v4241
    %v4353 = vadd.f32 %v3820, %v4244
    %v4354 = vadd.f32 %v3821, %v4247
    %v4355 = vadd.f32 %v3822, %v4250
    %v4356 = vadd.f32 %v3823, %v4253
    %v4357 = vadd.f32 %v3824, %v4256
    %v4358 = vadd.f32 %v3825, %v4259
    %v4359 = vadd.f32 %v3826, %v4262
    %v4360 = vadd.f32 %v3827, %v4265
    %v4361 = vadd.f32 %v3828, %v4268
    %v4362 = vadd.f32 %v3829, %v4271
    %v4363 = vadd.f32 %v3830, %v4274
    %v4364 = vadd.f32 %v3831, %v4277
    %v4365 = vadd.f32 %v3832, %v4280
    %v4366 = vadd.f32 %v3833, %v4283
    %v4367 = vadd.f32 %v3834, %v4286
    %v4368 = vadd.f32 %v3835, %v4289
    %v4369 = vadd.f32 %v3836, %v4292
    %v4370 = vadd.f32 %v3837, %v4295
    %v4371 = vadd.f32 %v3838, %v4298
    %v4372 = vadd.f32 %v3839, %v4301
    %v4373 = vadd.f32 %v3840, %v4304
    %v4374 = vadd.f32 %v3841, %v4307
    %v4375 = vadd.f32 %v3842, %v4310
    %v4376 = vld [vmem:[%s3309 + $0x2] sm:$0xff]
    %v4377 = vld [vmem:[%s3309 + $0xa] sm:$0xff]
    %v4378 = vld [vmem:[%s3309 + $0x1a] sm:$0xff]
    %v4379 = vld [vmem:[%s3309 + $0x22] sm:$0xff]
    %v4380 = vld [vmem:[%s3309 + $0x32] sm:$0xff]
    %v4381 = vld [vmem:[%s3309 + $0x3a] sm:$0xff]
    %v4382 = vld [vmem:[%s3309 + $0x4a] sm:$0xff]
    %v4383 = vld [vmem:[%s3309 + $0x52] sm:$0xff]
    %v4384 = vld [vmem:[%s3309 + $0x62] sm:$0xff]
    %v4385 = vld [vmem:[%s3309 + $0x6a] sm:$0xff]
    %v4386 = vld [vmem:[%s3309 + $0x7a] sm:$0xff]
    %v4387 = vld [vmem:[%s3309 + $0x82] sm:$0xff]
    %v4388 = vld [vmem:[%s3309 + $0x92] sm:$0xff]
    %v4389 = vld [vmem:[%s3309 + $0x9a] sm:$0xff]
    %v4390 = vld [vmem:[%s3309 + $0xaa] sm:$0xff]
    %v4391 = vld [vmem:[%s3309 + $0xb2] sm:$0xff]
    %v4392 = vld [vmem:[%s3309 + $0xc2] sm:$0xff]
    %v4393 = vld [vmem:[%s3309 + $0xca] sm:$0xff]
    %v4394 = vld [vmem:[%s3309 + $0xda] sm:$0xff]
    %v4395 = vld [vmem:[%s3309 + $0xe2] sm:$0xff]
    %v4396 = vld [vmem:[%s3309 + $0xf2] sm:$0xff]
    %v4397 = vld [vmem:[%s3309 + $0xfa] sm:$0xff]
    %v4398 = vld [vmem:[%s3309 + $0x10a] sm:$0xff]
    %v4399 = vld [vmem:[%s3309 + $0x112] sm:$0xff]
    %v4400 = vld [vmem:[%s3309 + $0x122] sm:$0xff]
    %v4401 = vld [vmem:[%s3309 + $0x12a] sm:$0xff]
    %v4402 = vld [vmem:[%s3309 + $0x13a] sm:$0xff]
    %v4403 = vld [vmem:[%s3309 + $0x142] sm:$0xff]
    %v4404 = vld [vmem:[%s3309 + $0x152] sm:$0xff]
    %v4405 = vld [vmem:[%s3309 + $0x15a] sm:$0xff]
    %v4406 = vld [vmem:[%s3309 + $0x16a] sm:$0xff]
    %v4407 = vld [vmem:[%s3309 + $0x172] sm:$0xff]
    %v4408 = vld [vmem:[%s3309 + $0x1b2] sm:$0xff]
    %v4409 = vld [vmem:[%s3309 + $0x1ba] sm:$0xff]
    %v4410 = vld [vmem:[%s3309 + $0x1ca] sm:$0xff]
    %v4411 = vld [vmem:[%s3309 + $0x1d2] sm:$0xff]
    %v4412 = vld [vmem:[%s3309 + $0x1e2] sm:$0xff]
    %v4413 = vld [vmem:[%s3309 + $0x1ea] sm:$0xff]
    %v4414 = vld [vmem:[%s3309 + $0x1fa] sm:$0xff]
    %v4415 = vld [vmem:[%s3309 + $0x202] sm:$0xff]
    %v4416 = vld [vmem:[%s3309 + $0x212] sm:$0xff]
    %v4417 = vld [vmem:[%s3309 + $0x21a] sm:$0xff]
    %v4418 = vld [vmem:[%s3309 + $0x22a] sm:$0xff]
    %v4419 = vld [vmem:[%s3309 + $0x232] sm:$0xff]
    %v4420 = vld [vmem:[%s3309 + $0x242] sm:$0xff]
    %v4421 = vld [vmem:[%s3309 + $0x24a] sm:$0xff]
    %v4422 = vld [vmem:[%s3309 + $0x25a] sm:$0xff]
    %v4423 = vld [vmem:[%s3309 + $0x262] sm:$0xff]
    %v4424 = vld [vmem:[%s3309 + $0x272] sm:$0xff]
    %v4425 = vld [vmem:[%s3309 + $0x27a] sm:$0xff]
    %v4426 = vld [vmem:[%s3309 + $0x28a] sm:$0xff]
    %v4427 = vld [vmem:[%s3309 + $0x292] sm:$0xff]
    %v4428 = vld [vmem:[%s3309 + $0x2a2] sm:$0xff]
    %v4429 = vld [vmem:[%s3309 + $0x2aa] sm:$0xff]
    %v4430 = vld [vmem:[%s3309 + $0x2ba] sm:$0xff]
    %v4431 = vld [vmem:[%s3309 + $0x2c2] sm:$0xff]
    %v4432 = vld [vmem:[%s3309 + $0x2d2] sm:$0xff]
    %v4433 = vld [vmem:[%s3309 + $0x2da] sm:$0xff]
    %v4434 = vld [vmem:[%s3309 + $0x2ea] sm:$0xff]
    %v4435 = vld [vmem:[%s3309 + $0x2f2] sm:$0xff]
    %v4436 = vld [vmem:[%s3309 + $0x302] sm:$0xff]
    %v4437 = vld [vmem:[%s3309 + $0x30a] sm:$0xff]
    %v4438 = vld [vmem:[%s3309 + $0x31a] sm:$0xff]
    %v4439 = vld [vmem:[%s3309 + $0x322] sm:$0xff]
    %v4440 = vld [vmem:[%s1 + $0x20] sm:$0xf]
    %v4442 = vsel %vm85, %v4376, 0
    %v4445 = vsel %vm85, %v4377, 0
    %v4448 = vsel %vm85, %v4378, 0
    %v4451 = vsel %vm85, %v4379, 0
    %v4454 = vsel %vm85, %v4380, 0
    %v4457 = vsel %vm85, %v4381, 0
    %v4460 = vsel %vm85, %v4382, 0
    %v4463 = vsel %vm85, %v4383, 0
    %v4466 = vsel %vm85, %v4384, 0
    %v4469 = vsel %vm85, %v4385, 0
    %v4472 = vsel %vm85, %v4386, 0
    %v4475 = vsel %vm85, %v4387, 0
    %v4478 = vsel %vm85, %v4388, 0
    %v4481 = vsel %vm85, %v4389, 0
    %v4484 = vsel %vm85, %v4390, 0
    %v4487 = vsel %vm85, %v4391, 0
    %v4490 = vsel %vm85, %v4392, 0
    %v4493 = vsel %vm85, %v4393, 0
    %v4496 = vsel %vm85, %v4394, 0
    %v4499 = vsel %vm85, %v4395, 0
    %v4502 = vsel %vm85, %v4396, 0
    %v4505 = vsel %vm85, %v4397, 0
    %v4508 = vsel %vm85, %v4398, 0
    %v4511 = vsel %vm85, %v4399, 0
    %v4514 = vsel %vm85, %v4400, 0
    %v4517 = vsel %vm85, %v4401, 0
    %v4520 = vsel %vm85, %v4402, 0
    %v4523 = vsel %vm85, %v4403, 0
    %v4526 = vsel %vm85, %v4404, 0
    %v4529 = vsel %vm85, %v4405, 0
    %v4532 = vsel %vm85, %v4406, 0
    %v4535 = vsel %vm85, %v4407, 0
    %v4538 = vsel %vm85, %v4408, 0
    %v4541 = vsel %vm85, %v4409, 0
    %v4544 = vsel %vm85, %v4410, 0
    %v4547 = vsel %vm85, %v4411, 0
    %v4550 = vsel %vm85, %v4412, 0
    %v4553 = vsel %vm85, %v4413, 0
    %v4556 = vsel %vm85, %v4414, 0
    %v4559 = vsel %vm85, %v4415, 0
    %v4562 = vsel %vm85, %v4416, 0
    %v4565 = vsel %vm85, %v4417, 0
    %v4568 = vsel %vm85, %v4418, 0
    %v4571 = vsel %vm85, %v4419, 0
    %v4574 = vsel %vm85, %v4420, 0
    %v4577 = vsel %vm85, %v4421, 0
    %v4580 = vsel %vm85, %v4422, 0
    %v4583 = vsel %vm85, %v4423, 0
    %v4586 = vsel %vm85, %v4424, 0
    %v4589 = vsel %vm85, %v4425, 0
    %v4592 = vsel %vm85, %v4426, 0
    %v4595 = vsel %vm85, %v4427, 0
    %v4598 = vsel %vm85, %v4428, 0
    %v4601 = vsel %vm85, %v4429, 0
    %v4604 = vsel %vm85, %v4430, 0
    %v4607 = vsel %vm85, %v4431, 0
    %v4610 = vsel %vm85, %v4432, 0
    %v4613 = vsel %vm85, %v4433, 0
    %v4616 = vsel %vm85, %v4434, 0
    %v4619 = vsel %vm85, %v4435, 0
    %v4622 = vsel %vm85, %v4436, 0
    %v4625 = vsel %vm85, %v4437, 0
    %v4628 = vsel %vm85, %v4438, 0
    %v4631 = vsel %vm85, %v4439, 0
    %v4634 = vsel %vm560, %v4440, 0
    %4636 = vmatpush.msra.mxu0 0.0
    %4637 = vmatpush.msra.mxu0 0.0
    %4638 = vmatpush.msra.mxu0 0.0
    %4639 = vmatpush.msra.mxu0 0.0
    %4640 = vmatpush.msra.mxu0 0.0
    %4641 = vmatpush.msra.mxu0 0.0
    %4642 = vmatpush.msra.mxu0 0.0
    %4643 = vmatpush.msra.mxu0 0.0
    %4644 = vmatpush.msra.mxu0 0.0
    %4645 = vmatpush.msra.mxu0 0.0
    %4646 = vmatpush.msra.mxu0 0.0
    %4647 = vmatpush.msra.mxu0 0.0
    %4648 = vmatpush.msra.mxu0 0.0
    %4649 = vmatpush.msra.mxu0 0.0
    %4650 = vmatpush.msra.mxu0 0.0
    %4651 = vmatpush.msra.mxu0 %v4634
    %4652 = vmatmul.f32.gmra.mxu0 %v4442
    %v4653 = vpop.f32.mrf.mxu0
    %v4654 = vadd.f32 0.0, %v4653
    %4655 = vmatmul.f32.gmra.mxu0 %v4445
    %v4656 = vpop.f32.mrf.mxu0
    %v4657 = vadd.f32 0.0, %v4656
    %4658 = vmatmul.f32.gmra.mxu0 %v4448
    %v4659 = vpop.f32.mrf.mxu0
    %v4660 = vadd.f32 0.0, %v4659
    %4661 = vmatmul.f32.gmra.mxu0 %v4451
    %v4662 = vpop.f32.mrf.mxu0
    %v4663 = vadd.f32 0.0, %v4662
    %4664 = vmatmul.f32.gmra.mxu0 %v4454
    %v4665 = vpop.f32.mrf.mxu0
    %v4666 = vadd.f32 0.0, %v4665
    %4667 = vmatmul.f32.gmra.mxu0 %v4457
    %v4668 = vpop.f32.mrf.mxu0
    %v4669 = vadd.f32 0.0, %v4668
    %4670 = vmatmul.f32.gmra.mxu0 %v4460
    %v4671 = vpop.f32.mrf.mxu0
    %v4672 = vadd.f32 0.0, %v4671
    %4673 = vmatmul.f32.gmra.mxu0 %v4463
    %v4674 = vpop.f32.mrf.mxu0
    %v4675 = vadd.f32 0.0, %v4674
    %4676 = vmatmul.f32.gmra.mxu0 %v4466
    %v4677 = vpop.f32.mrf.mxu0
    %v4678 = vadd.f32 0.0, %v4677
    %4679 = vmatmul.f32.gmra.mxu0 %v4469
    %v4680 = vpop.f32.mrf.mxu0
    %v4681 = vadd.f32 0.0, %v4680
    %4682 = vmatmul.f32.gmra.mxu0 %v4472
    %v4683 = vpop.f32.mrf.mxu0
    %v4684 = vadd.f32 0.0, %v4683
    %4685 = vmatmul.f32.gmra.mxu0 %v4475
    %v4686 = vpop.f32.mrf.mxu0
    %v4687 = vadd.f32 0.0, %v4686
    %4688 = vmatmul.f32.gmra.mxu0 %v4478
    %v4689 = vpop.f32.mrf.mxu0
    %v4690 = vadd.f32 0.0, %v4689
    %4691 = vmatmul.f32.gmra.mxu0 %v4481
    %v4692 = vpop.f32.mrf.mxu0
    %v4693 = vadd.f32 0.0, %v4692
    %4694 = vmatmul.f32.gmra.mxu0 %v4484
    %v4695 = vpop.f32.mrf.mxu0
    %v4696 = vadd.f32 0.0, %v4695
    %4697 = vmatmul.f32.gmra.mxu0 %v4487
    %v4698 = vpop.f32.mrf.mxu0
    %v4699 = vadd.f32 0.0, %v4698
    %4700 = vmatmul.f32.gmra.mxu0 %v4490
    %v4701 = vpop.f32.mrf.mxu0
    %v4702 = vadd.f32 0.0, %v4701
    %4703 = vmatmul.f32.gmra.mxu0 %v4493
    %v4704 = vpop.f32.mrf.mxu0
    %v4705 = vadd.f32 0.0, %v4704
    %4706 = vmatmul.f32.gmra.mxu0 %v4496
    %v4707 = vpop.f32.mrf.mxu0
    %v4708 = vadd.f32 0.0, %v4707
    %4709 = vmatmul.f32.gmra.mxu0 %v4499
    %v4710 = vpop.f32.mrf.mxu0
    %v4711 = vadd.f32 0.0, %v4710
    %4712 = vmatmul.f32.gmra.mxu0 %v4502
    %v4713 = vpop.f32.mrf.mxu0
    %v4714 = vadd.f32 0.0, %v4713
    %4715 = vmatmul.f32.gmra.mxu0 %v4505
    %v4716 = vpop.f32.mrf.mxu0
    %v4717 = vadd.f32 0.0, %v4716
    %4718 = vmatmul.f32.gmra.mxu0 %v4508
    %v4719 = vpop.f32.mrf.mxu0
    %v4720 = vadd.f32 0.0, %v4719
    %4721 = vmatmul.f32.gmra.mxu0 %v4511
    %v4722 = vpop.f32.mrf.mxu0
    %v4723 = vadd.f32 0.0, %v4722
    %4724 = vmatmul.f32.gmra.mxu0 %v4514
    %v4725 = vpop.f32.mrf.mxu0
    %v4726 = vadd.f32 0.0, %v4725
    %4727 = vmatmul.f32.gmra.mxu0 %v4517
    %v4728 = vpop.f32.mrf.mxu0
    %v4729 = vadd.f32 0.0, %v4728
    %4730 = vmatmul.f32.gmra.mxu0 %v4520
    %v4731 = vpop.f32.mrf.mxu0
    %v4732 = vadd.f32 0.0, %v4731
    %4733 = vmatmul.f32.gmra.mxu0 %v4523
    %v4734 = vpop.f32.mrf.mxu0
    %v4735 = vadd.f32 0.0, %v4734
    %4736 = vmatmul.f32.gmra.mxu0 %v4526
    %v4737 = vpop.f32.mrf.mxu0
    %v4738 = vadd.f32 0.0, %v4737
    %4739 = vmatmul.f32.gmra.mxu0 %v4529
    %v4740 = vpop.f32.mrf.mxu0
    %v4741 = vadd.f32 0.0, %v4740
    %4742 = vmatmul.f32.gmra.mxu0 %v4532
    %v4743 = vpop.f32.mrf.mxu0
    %v4744 = vadd.f32 0.0, %v4743
    %4745 = vmatmul.f32.gmra.mxu0 %v4535
    %v4746 = vpop.f32.mrf.mxu0
    %v4747 = vadd.f32 0.0, %v4746
    %4748 = vmatmul.f32.gmra.mxu0 %v4538
    %v4749 = vpop.f32.mrf.mxu0
    %v4750 = vadd.f32 0.0, %v4749
    %4751 = vmatmul.f32.gmra.mxu0 %v4541
    %v4752 = vpop.f32.mrf.mxu0
    %v4753 = vadd.f32 0.0, %v4752
    %4754 = vmatmul.f32.gmra.mxu0 %v4544
    %v4755 = vpop.f32.mrf.mxu0
    %v4756 = vadd.f32 0.0, %v4755
    %4757 = vmatmul.f32.gmra.mxu0 %v4547
    %v4758 = vpop.f32.mrf.mxu0
    %v4759 = vadd.f32 0.0, %v4758
    %4760 = vmatmul.f32.gmra.mxu0 %v4550
    %v4761 = vpop.f32.mrf.mxu0
    %v4762 = vadd.f32 0.0, %v4761
    %4763 = vmatmul.f32.gmra.mxu0 %v4553
    %v4764 = vpop.f32.mrf.mxu0
    %v4765 = vadd.f32 0.0, %v4764
    %4766 = vmatmul.f32.gmra.mxu0 %v4556
    %v4767 = vpop.f32.mrf.mxu0
    %v4768 = vadd.f32 0.0, %v4767
    %4769 = vmatmul.f32.gmra.mxu0 %v4559
    %v4770 = vpop.f32.mrf.mxu0
    %v4771 = vadd.f32 0.0, %v4770
    %4772 = vmatmul.f32.gmra.mxu0 %v4562
    %v4773 = vpop.f32.mrf.mxu0
    %v4774 = vadd.f32 0.0, %v4773
    %4775 = vmatmul.f32.gmra.mxu0 %v4565
    %v4776 = vpop.f32.mrf.mxu0
    %v4777 = vadd.f32 0.0, %v4776
    %4778 = vmatmul.f32.gmra.mxu0 %v4568
    %v4779 = vpop.f32.mrf.mxu0
    %v4780 = vadd.f32 0.0, %v4779
    %4781 = vmatmul.f32.gmra.mxu0 %v4571
    %v4782 = vpop.f32.mrf.mxu0
    %v4783 = vadd.f32 0.0, %v4782
    %4784 = vmatmul.f32.gmra.mxu0 %v4574
    %v4785 = vpop.f32.mrf.mxu0
    %v4786 = vadd.f32 0.0, %v4785
    %4787 = vmatmul.f32.gmra.mxu0 %v4577
    %v4788 = vpop.f32.mrf.mxu0
    %v4789 = vadd.f32 0.0, %v4788
    %4790 = vmatmul.f32.gmra.mxu0 %v4580
    %v4791 = vpop.f32.mrf.mxu0
    %v4792 = vadd.f32 0.0, %v4791
    %4793 = vmatmul.f32.gmra.mxu0 %v4583
    %v4794 = vpop.f32.mrf.mxu0
    %v4795 = vadd.f32 0.0, %v4794
    %4796 = vmatmul.f32.gmra.mxu0 %v4586
    %v4797 = vpop.f32.mrf.mxu0
    %v4798 = vadd.f32 0.0, %v4797
    %4799 = vmatmul.f32.gmra.mxu0 %v4589
    %v4800 = vpop.f32.mrf.mxu0
    %v4801 = vadd.f32 0.0, %v4800
    %4802 = vmatmul.f32.gmra.mxu0 %v4592
    %v4803 = vpop.f32.mrf.mxu0
    %v4804 = vadd.f32 0.0, %v4803
    %4805 = vmatmul.f32.gmra.mxu0 %v4595
    %v4806 = vpop.f32.mrf.mxu0
    %v4807 = vadd.f32 0.0, %v4806
    %4808 = vmatmul.f32.gmra.mxu0 %v4598
    %v4809 = vpop.f32.mrf.mxu0
    %v4810 = vadd.f32 0.0, %v4809
    %4811 = vmatmul.f32.gmra.mxu0 %v4601
    %v4812 = vpop.f32.mrf.mxu0
    %v4813 = vadd.f32 0.0, %v4812
    %4814 = vmatmul.f32.gmra.mxu0 %v4604
    %v4815 = vpop.f32.mrf.mxu0
    %v4816 = vadd.f32 0.0, %v4815
    %4817 = vmatmul.f32.gmra.mxu0 %v4607
    %v4818 = vpop.f32.mrf.mxu0
    %v4819 = vadd.f32 0.0, %v4818
    %4820 = vmatmul.f32.gmra.mxu0 %v4610
    %v4821 = vpop.f32.mrf.mxu0
    %v4822 = vadd.f32 0.0, %v4821
    %4823 = vmatmul.f32.gmra.mxu0 %v4613
    %v4824 = vpop.f32.mrf.mxu0
    %v4825 = vadd.f32 0.0, %v4824
    %4826 = vmatmul.f32.gmra.mxu0 %v4616
    %v4827 = vpop.f32.mrf.mxu0
    %v4828 = vadd.f32 0.0, %v4827
    %4829 = vmatmul.f32.gmra.mxu0 %v4619
    %v4830 = vpop.f32.mrf.mxu0
    %v4831 = vadd.f32 0.0, %v4830
    %4832 = vmatmul.f32.gmra.mxu0 %v4622
    %v4833 = vpop.f32.mrf.mxu0
    %v4834 = vadd.f32 0.0, %v4833
    %4835 = vmatmul.f32.gmra.mxu0 %v4625
    %v4836 = vpop.f32.mrf.mxu0
    %v4837 = vadd.f32 0.0, %v4836
    %4838 = vmatmul.f32.gmra.mxu0 %v4628
    %v4839 = vpop.f32.mrf.mxu0
    %v4840 = vadd.f32 0.0, %v4839
    %4841 = vmatmul.f32.gmra.mxu0 %v4631
    %v4842 = vpop.f32.mrf.mxu0
    %v4843 = vadd.f32 0.0, %v4842
    %4844 = vdwg.mxu0
    %v4845 = vadd.f32 %v4312, %v4654
    %v4846 = vadd.f32 %v4313, %v4657
    %v4847 = vadd.f32 %v4314, %v4660
    %v4848 = vadd.f32 %v4315, %v4663
    %v4849 = vadd.f32 %v4316, %v4666
    %v4850 = vadd.f32 %v4317, %v4669
    %v4851 = vadd.f32 %v4318, %v4672
    %v4852 = vadd.f32 %v4319, %v4675
    %v4853 = vadd.f32 %v4320, %v4678
    %v4854 = vadd.f32 %v4321, %v4681
    %v4855 = vadd.f32 %v4322, %v4684
    %v4856 = vadd.f32 %v4323, %v4687
    %v4857 = vadd.f32 %v4324, %v4690
    %v4858 = vadd.f32 %v4325, %v4693
    %v4859 = vadd.f32 %v4326, %v4696
    %v4860 = vadd.f32 %v4327, %v4699
    %v4861 = vadd.f32 %v4328, %v4702
    %v4862 = vadd.f32 %v4329, %v4705
    %v4863 = vadd.f32 %v4330, %v4708
    %v4864 = vadd.f32 %v4331, %v4711
    %v4865 = vadd.f32 %v4332, %v4714
    %v4866 = vadd.f32 %v4333, %v4717
    %v4867 = vadd.f32 %v4334, %v4720
    %v4868 = vadd.f32 %v4335, %v4723
    %v4869 = vadd.f32 %v4336, %v4726
    %v4870 = vadd.f32 %v4337, %v4729
    %v4871 = vadd.f32 %v4338, %v4732
    %v4872 = vadd.f32 %v4339, %v4735
    %v4873 = vadd.f32 %v4340, %v4738
    %v4874 = vadd.f32 %v4341, %v4741
    %v4875 = vadd.f32 %v4342, %v4744
    %v4876 = vadd.f32 %v4343, %v4747
    %v4877 = vadd.f32 %v4344, %v4750
    %v4878 = vadd.f32 %v4345, %v4753
    %v4879 = vadd.f32 %v4346, %v4756
    %v4880 = vadd.f32 %v4347, %v4759
    %v4881 = vadd.f32 %v4348, %v4762
    %v4882 = vadd.f32 %v4349, %v4765
    %v4883 = vadd.f32 %v4350, %v4768
    %v4884 = vadd.f32 %v4351, %v4771
    %v4885 = vadd.f32 %v4352, %v4774
    %v4886 = vadd.f32 %v4353, %v4777
    %v4887 = vadd.f32 %v4354, %v4780
    %v4888 = vadd.f32 %v4355, %v4783
    %v4889 = vadd.f32 %v4356, %v4786
    %v4890 = vadd.f32 %v4357, %v4789
    %v4891 = vadd.f32 %v4358, %v4792
    %v4892 = vadd.f32 %v4359, %v4795
    %v4893 = vadd.f32 %v4360, %v4798
    %v4894 = vadd.f32 %v4361, %v4801
    %v4895 = vadd.f32 %v4362, %v4804
    %v4896 = vadd.f32 %v4363, %v4807
    %v4897 = vadd.f32 %v4364, %v4810
    %v4898 = vadd.f32 %v4365, %v4813
    %v4899 = vadd.f32 %v4366, %v4816
    %v4900 = vadd.f32 %v4367, %v4819
    %v4901 = vadd.f32 %v4368, %v4822
    %v4902 = vadd.f32 %v4369, %v4825
    %v4903 = vadd.f32 %v4370, %v4828
    %v4904 = vadd.f32 %v4371, %v4831
    %v4905 = vadd.f32 %v4372, %v4834
    %v4906 = vadd.f32 %v4373, %v4837
    %v4907 = vadd.f32 %v4374, %v4840
    %v4908 = vadd.f32 %v4375, %v4843
    %v4909 = vld [vmem:[%s2] sm:$0x1]
    %v4911 = vperm.slane %v4909, 0
    %v4913 = vadd.f32 %v4845, %v4911
    %v4914 = vadd.f32 %v4846, %v4911
    %v4915 = vadd.f32 %v4847, %v4911
    %v4916 = vadd.f32 %v4848, %v4911
    %v4917 = vadd.f32 %v4849, %v4911
    %v4918 = vadd.f32 %v4850, %v4911
    %v4919 = vadd.f32 %v4851, %v4911
    %v4920 = vadd.f32 %v4852, %v4911
    %v4921 = vadd.f32 %v4853, %v4911
    %v4922 = vadd.f32 %v4854, %v4911
    %v4923 = vadd.f32 %v4855, %v4911
    %v4924 = vadd.f32 %v4856, %v4911
    %v4925 = vadd.f32 %v4857, %v4911
    %v4926 = vadd.f32 %v4858, %v4911
    %v4927 = vadd.f32 %v4859, %v4911
    %v4928 = vadd.f32 %v4860, %v4911
    %v4929 = vadd.f32 %v4861, %v4911
    %v4930 = vadd.f32 %v4862, %v4911
    %v4931 = vadd.f32 %v4863, %v4911
    %v4932 = vadd.f32 %v4864, %v4911
    %v4933 = vadd.f32 %v4865, %v4911
    %v4934 = vadd.f32 %v4866, %v4911
    %v4935 = vadd.f32 %v4867, %v4911
    %v4936 = vadd.f32 %v4868, %v4911
    %v4937 = vadd.f32 %v4869, %v4911
    %v4938 = vadd.f32 %v4870, %v4911
    %v4939 = vadd.f32 %v4871, %v4911
    %v4940 = vadd.f32 %v4872, %v4911
    %v4941 = vadd.f32 %v4873, %v4911
    %v4942 = vadd.f32 %v4874, %v4911
    %v4943 = vadd.f32 %v4875, %v4911
    %v4944 = vadd.f32 %v4876, %v4911
    %v4945 = vadd.f32 %v4877, %v4911
    %v4946 = vadd.f32 %v4878, %v4911
    %v4947 = vadd.f32 %v4879, %v4911
    %v4948 = vadd.f32 %v4880, %v4911
    %v4949 = vadd.f32 %v4881, %v4911
    %v4950 = vadd.f32 %v4882, %v4911
    %v4951 = vadd.f32 %v4883, %v4911
    %v4952 = vadd.f32 %v4884, %v4911
    %v4953 = vadd.f32 %v4885, %v4911
    %v4954 = vadd.f32 %v4886, %v4911
    %v4955 = vadd.f32 %v4887, %v4911
    %v4956 = vadd.f32 %v4888, %v4911
    %v4957 = vadd.f32 %v4889, %v4911
    %v4958 = vadd.f32 %v4890, %v4911
    %v4959 = vadd.f32 %v4891, %v4911
    %v4960 = vadd.f32 %v4892, %v4911
    %v4961 = vadd.f32 %v4893, %v4911
    %v4962 = vadd.f32 %v4894, %v4911
    %v4963 = vadd.f32 %v4895, %v4911
    %v4964 = vadd.f32 %v4896, %v4911
    %v4965 = vadd.f32 %v4897, %v4911
    %v4966 = vadd.f32 %v4898, %v4911
    %v4967 = vadd.f32 %v4899, %v4911
    %v4968 = vadd.f32 %v4900, %v4911
    %v4969 = vadd.f32 %v4901, %v4911
    %v4970 = vadd.f32 %v4902, %v4911
    %v4971 = vadd.f32 %v4903, %v4911
    %v4972 = vadd.f32 %v4904, %v4911
    %v4973 = vadd.f32 %v4905, %v4911
    %v4974 = vadd.f32 %v4906, %v4911
    %v4975 = vadd.f32 %v4907, %v4911
    %v4976 = vadd.f32 %v4908, %v4911
    %v4977 = vmax.f32 %v4913, 0.0
    %v4978 = vmax.f32 %v4914, 0.0
    %v4979 = vmax.f32 %v4915, 0.0
    %v4980 = vmax.f32 %v4916, 0.0
    %v4981 = vmax.f32 %v4917, 0.0
    %v4982 = vmax.f32 %v4918, 0.0
    %v4983 = vmax.f32 %v4919, 0.0
    %v4984 = vmax.f32 %v4920, 0.0
    %v4985 = vmax.f32 %v4921, 0.0
    %v4986 = vmax.f32 %v4922, 0.0
    %v4987 = vmax.f32 %v4923, 0.0
    %v4988 = vmax.f32 %v4924, 0.0
    %v4989 = vmax.f32 %v4925, 0.0
    %v4990 = vmax.f32 %v4926, 0.0
    %v4991 = vmax.f32 %v4927, 0.0
    %v4992 = vmax.f32 %v4928, 0.0
    %v4993 = vmax.f32 %v4929, 0.0
    %v4994 = vmax.f32 %v4930, 0.0
    %v4995 = vmax.f32 %v4931, 0.0
    %v4996 = vmax.f32 %v4932, 0.0
    %v4997 = vmax.f32 %v4933, 0.0
    %v4998 = vmax.f32 %v4934, 0.0
    %v4999 = vmax.f32 %v4935, 0.0
    %v5000 = vmax.f32 %v4936, 0.0
    %v5001 = vmax.f32 %v4937, 0.0
    %v5002 = vmax.f32 %v4938, 0.0
    %v5003 = vmax.f32 %v4939, 0.0
    %v5004 = vmax.f32 %v4940, 0.0
    %v5005 = vmax.f32 %v4941, 0.0
    %v5006 = vmax.f32 %v4942, 0.0
    %v5007 = vmax.f32 %v4943, 0.0
    %v5008 = vmax.f32 %v4944, 0.0
    %v5009 = vmax.f32 %v4945, 0.0
    %v5010 = vmax.f32 %v4946, 0.0
    %v5011 = vmax.f32 %v4947, 0.0
    %v5012 = vmax.f32 %v4948, 0.0
    %v5013 = vmax.f32 %v4949, 0.0
    %v5014 = vmax.f32 %v4950, 0.0
    %v5015 = vmax.f32 %v4951, 0.0
    %v5016 = vmax.f32 %v4952, 0.0
    %v5017 = vmax.f32 %v4953, 0.0
    %v5018 = vmax.f32 %v4954, 0.0
    %v5019 = vmax.f32 %v4955, 0.0
    %v5020 = vmax.f32 %v4956, 0.0
    %v5021 = vmax.f32 %v4957, 0.0
    %v5022 = vmax.f32 %v4958, 0.0
    %v5023 = vmax.f32 %v4959, 0.0
    %v5024 = vmax.f32 %v4960, 0.0
    %v5025 = vmax.f32 %v4961, 0.0
    %v5026 = vmax.f32 %v4962, 0.0
    %v5027 = vmax.f32 %v4963, 0.0
    %v5028 = vmax.f32 %v4964, 0.0
    %v5029 = vmax.f32 %v4965, 0.0
    %v5030 = vmax.f32 %v4966, 0.0
    %v5031 = vmax.f32 %v4967, 0.0
    %v5032 = vmax.f32 %v4968, 0.0
    %v5033 = vmax.f32 %v4969, 0.0
    %v5034 = vmax.f32 %v4970, 0.0
    %v5035 = vmax.f32 %v4971, 0.0
    %v5036 = vmax.f32 %v4972, 0.0
    %v5037 = vmax.f32 %v4973, 0.0
    %v5038 = vmax.f32 %v4974, 0.0
    %v5039 = vmax.f32 %v4975, 0.0
    %v5040 = vmax.f32 %v4976, 0.0
    %vm5041 = vcmask 130048
    %5042 = vst.msk [vmem:[#allocation3] sm:$0xff] %vm5041, 0.0
    %5043 = vst.msk [vmem:[#allocation3 + $0x8] sm:$0xff] %vm5041, 0.0
    %vm5044 = vcmask 123904
    %5045 = vst.msk [vmem:[#allocation3 + $0x10] sm:$0x3] %vm5044, 0.0
    %5046 = vst.msk [vmem:[#allocation3 + $0x1b0] sm:$0xff] %vm5041, 0.0
    %5047 = vst.msk [vmem:[#allocation3 + $0x1b8] sm:$0xff] %vm5041, 0.0
    %5048 = vst.msk [vmem:[#allocation3 + $0x1c0] sm:$0x3] %vm5044, 0.0
    %s5049 = scalar_lea.vmem [#allocation3], 408
    %5050 = vst.msk [vmem:[%s5049] sm:$0xff] %vm5041, 0.0
    %5051 = vst.msk [vmem:[%s5049 + $0x8] sm:$0xff] %vm5041, 0.0
    %5052 = vst.msk [vmem:[%s5049 + $0x10] sm:$0x3] %vm5044, 0.0
    %5053 = vst.msk [vmem:[%s5049 + $0x1b0] sm:$0xff] %vm5041, 0.0
    %5054 = vst.msk [vmem:[%s5049 + $0x1b8] sm:$0xff] %vm5041, 0.0
    %5055 = vst.msk [vmem:[%s5049 + $0x1c0] sm:$0x3] %vm5044, 0.0
    %vm5056 = vcmask 122880
    %5057 = vst.msk [vmem:[#allocation3] sm:$0x1] %vm5056, 0.0
    %5058 = vst.msk [vmem:[#allocation3 + $0x18] sm:$0x1] %vm5056, 0.0
    %5059 = vst.msk [vmem:[#allocation3 + $0x30] sm:$0x1] %vm5056, 0.0
    %5060 = vst.msk [vmem:[#allocation3 + $0x48] sm:$0x1] %vm5056, 0.0
    %5061 = vst.msk [vmem:[#allocation3 + $0x60] sm:$0x1] %vm5056, 0.0
    %5062 = vst.msk [vmem:[#allocation3 + $0x78] sm:$0x1] %vm5056, 0.0
    %5063 = vst.msk [vmem:[#allocation3 + $0x90] sm:$0x1] %vm5056, 0.0
    %5064 = vst.msk [vmem:[#allocation3 + $0xa8] sm:$0x1] %vm5056, 0.0
    %5065 = vst.msk [vmem:[#allocation3 + $0xc0] sm:$0x1] %vm5056, 0.0
    %5066 = vst.msk [vmem:[#allocation3 + $0xd8] sm:$0x1] %vm5056, 0.0
    %5067 = vst.msk [vmem:[#allocation3 + $0xf0] sm:$0x1] %vm5056, 0.0
    %5068 = vst.msk [vmem:[#allocation3 + $0x108] sm:$0x1] %vm5056, 0.0
    %5069 = vst.msk [vmem:[#allocation3 + $0x120] sm:$0x1] %vm5056, 0.0
    %5070 = vst.msk [vmem:[#allocation3 + $0x138] sm:$0x1] %vm5056, 0.0
    %5071 = vst.msk [vmem:[#allocation3 + $0x150] sm:$0x1] %vm5056, 0.0
    %5072 = vst.msk [vmem:[#allocation3 + $0x168] sm:$0x1] %vm5056, 0.0
    %5073 = vst.msk [vmem:[#allocation3 + $0x180] sm:$0x1] %vm5056, 0.0
    %5074 = vst.msk [vmem:[#allocation3 + $0x198] sm:$0x1] %vm5056, 0.0
    %5075 = vst.msk [vmem:[#allocation3 + $0x1b0] sm:$0x1] %vm5056, 0.0
    %5076 = vst.msk [vmem:[#allocation3 + $0x1c8] sm:$0x1] %vm5056, 0.0
    %5077 = vst.msk [vmem:[#allocation3 + $0x1e0] sm:$0x1] %vm5056, 0.0
    %5078 = vst.msk [vmem:[#allocation3 + $0x1f8] sm:$0x1] %vm5056, 0.0
    %5079 = vst.msk [vmem:[#allocation3 + $0x210] sm:$0x1] %vm5056, 0.0
    %5080 = vst.msk [vmem:[#allocation3 + $0x228] sm:$0x1] %vm5056, 0.0
    %5081 = vst.msk [vmem:[#allocation3 + $0x240] sm:$0x1] %vm5056, 0.0
    %5082 = vst.msk [vmem:[#allocation3 + $0x258] sm:$0x1] %vm5056, 0.0
    %5083 = vst.msk [vmem:[#allocation3 + $0x270] sm:$0x1] %vm5056, 0.0
    %5084 = vst.msk [vmem:[#allocation3 + $0x288] sm:$0x1] %vm5056, 0.0
    %5085 = vst.msk [vmem:[#allocation3 + $0x2a0] sm:$0x1] %vm5056, 0.0
    %5086 = vst.msk [vmem:[#allocation3 + $0x2b8] sm:$0x1] %vm5056, 0.0
    %5087 = vst.msk [vmem:[#allocation3 + $0x2d0] sm:$0x1] %vm5056, 0.0
    %5088 = vst.msk [vmem:[#allocation3 + $0x2e8] sm:$0x1] %vm5056, 0.0
    %5089 = vst.msk [vmem:[#allocation3 + $0x300] sm:$0x1] %vm5056, 0.0
    %5090 = vst.msk [vmem:[#allocation3 + $0x318] sm:$0x1] %vm5056, 0.0
    %5091 = vst.msk [vmem:[#allocation3 + $0x330] sm:$0x1] %vm5056, 0.0
    %5092 = vst.msk [vmem:[#allocation3 + $0x348] sm:$0x1] %vm5056, 0.0
    %5093 = vst.msk [vmem:[#allocation3 + $0x11] sm:$0x1] %vm5056, 0.0
    %5094 = vst.msk [vmem:[#allocation3 + $0x29] sm:$0x1] %vm5056, 0.0
    %5095 = vst.msk [vmem:[#allocation3 + $0x41] sm:$0x1] %vm5056, 0.0
    %5096 = vst.msk [vmem:[#allocation3 + $0x59] sm:$0x1] %vm5056, 0.0
    %5097 = vst.msk [vmem:[#allocation3 + $0x71] sm:$0x1] %vm5056, 0.0
    %5098 = vst.msk [vmem:[#allocation3 + $0x89] sm:$0x1] %vm5056, 0.0
    %5099 = vst.msk [vmem:[#allocation3 + $0xa1] sm:$0x1] %vm5056, 0.0
    %5100 = vst.msk [vmem:[#allocation3 + $0xb9] sm:$0x1] %vm5056, 0.0
    %5101 = vst.msk [vmem:[#allocation3 + $0xd1] sm:$0x1] %vm5056, 0.0
    %5102 = vst.msk [vmem:[#allocation3 + $0xe9] sm:$0x1] %vm5056, 0.0
    %5103 = vst.msk [vmem:[#allocation3 + $0x101] sm:$0x1] %vm5056, 0.0
    %5104 = vst.msk [vmem:[#allocation3 + $0x119] sm:$0x1] %vm5056, 0.0
    %5105 = vst.msk [vmem:[#allocation3 + $0x131] sm:$0x1] %vm5056, 0.0
    %5106 = vst.msk [vmem:[#allocation3 + $0x149] sm:$0x1] %vm5056, 0.0
    %5107 = vst.msk [vmem:[#allocation3 + $0x161] sm:$0x1] %vm5056, 0.0
    %5108 = vst.msk [vmem:[#allocation3 + $0x179] sm:$0x1] %vm5056, 0.0
    %5109 = vst.msk [vmem:[#allocation3 + $0x191] sm:$0x1] %vm5056, 0.0
    %5110 = vst.msk [vmem:[#allocation3 + $0x1a9] sm:$0x1] %vm5056, 0.0
    %5111 = vst.msk [vmem:[#allocation3 + $0x1c1] sm:$0x1] %vm5056, 0.0
    %5112 = vst.msk [vmem:[#allocation3 + $0x1d9] sm:$0x1] %vm5056, 0.0
    %5113 = vst.msk [vmem:[#allocation3 + $0x1f1] sm:$0x1] %vm5056, 0.0
    %5114 = vst.msk [vmem:[#allocation3 + $0x209] sm:$0x1] %vm5056, 0.0
    %5115 = vst.msk [vmem:[#allocation3 + $0x221] sm:$0x1] %vm5056, 0.0
    %5116 = vst.msk [vmem:[#allocation3 + $0x239] sm:$0x1] %vm5056, 0.0
    %5117 = vst.msk [vmem:[#allocation3 + $0x251] sm:$0x1] %vm5056, 0.0
    %5118 = vst.msk [vmem:[#allocation3 + $0x269] sm:$0x1] %vm5056, 0.0
    %5119 = vst.msk [vmem:[#allocation3 + $0x281] sm:$0x1] %vm5056, 0.0
    %5120 = vst.msk [vmem:[#allocation3 + $0x299] sm:$0x1] %vm5056, 0.0
    %5121 = vst.msk [vmem:[#allocation3 + $0x2b1] sm:$0x1] %vm5056, 0.0
    %5122 = vst.msk [vmem:[#allocation3 + $0x2c9] sm:$0x1] %vm5056, 0.0
    %5123 = vst.msk [vmem:[#allocation3 + $0x2e1] sm:$0x1] %vm5056, 0.0
    %5124 = vst.msk [vmem:[#allocation3 + $0x2f9] sm:$0x1] %vm5056, 0.0
    %5125 = vst.msk [vmem:[#allocation3 + $0x311] sm:$0x1] %vm5056, 0.0
    %5126 = vst.msk [vmem:[#allocation3 + $0x329] sm:$0x1] %vm5056, 0.0
    %5127 = vst.msk [vmem:[#allocation3 + $0x341] sm:$0x1] %vm5056, 0.0
    %5128 = vst.msk [vmem:[#allocation3 + $0x359] sm:$0x1] %vm5056, 0.0
    %s5129 = scalar_lea.vmem [#allocation3], 24
    %5130 = vst.msk [vmem:[%s5129 + $0x1] sm:$0xff] %vm5041, %v4977
    %5131 = vst.msk [vmem:[%s5129 + $0x9] sm:$0xff] %vm5041, %v4978
    %5132 = vst.msk [vmem:[%s5129 + $0x19] sm:$0xff] %vm5041, %v4979
    %5133 = vst.msk [vmem:[%s5129 + $0x21] sm:$0xff] %vm5041, %v4980
    %5134 = vst.msk [vmem:[%s5129 + $0x31] sm:$0xff] %vm5041, %v4981
    %5135 = vst.msk [vmem:[%s5129 + $0x39] sm:$0xff] %vm5041, %v4982
    %5136 = vst.msk [vmem:[%s5129 + $0x49] sm:$0xff] %vm5041, %v4983
    %5137 = vst.msk [vmem:[%s5129 + $0x51] sm:$0xff] %vm5041, %v4984
    %5138 = vst.msk [vmem:[%s5129 + $0x61] sm:$0xff] %vm5041, %v4985
    %5139 = vst.msk [vmem:[%s5129 + $0x69] sm:$0xff] %vm5041, %v4986
    %5140 = vst.msk [vmem:[%s5129 + $0x79] sm:$0xff] %vm5041, %v4987
    %5141 = vst.msk [vmem:[%s5129 + $0x81] sm:$0xff] %vm5041, %v4988
    %5142 = vst.msk [vmem:[%s5129 + $0x91] sm:$0xff] %vm5041, %v4989
    %5143 = vst.msk [vmem:[%s5129 + $0x99] sm:$0xff] %vm5041, %v4990
    %5144 = vst.msk [vmem:[%s5129 + $0xa9] sm:$0xff] %vm5041, %v4991
    %5145 = vst.msk [vmem:[%s5129 + $0xb1] sm:$0xff] %vm5041, %v4992
    %5146 = vst.msk [vmem:[%s5129 + $0xc1] sm:$0xff] %vm5041, %v4993
    %5147 = vst.msk [vmem:[%s5129 + $0xc9] sm:$0xff] %vm5041, %v4994
    %5148 = vst.msk [vmem:[%s5129 + $0xd9] sm:$0xff] %vm5041, %v4995
    %5149 = vst.msk [vmem:[%s5129 + $0xe1] sm:$0xff] %vm5041, %v4996
    %5150 = vst.msk [vmem:[%s5129 + $0xf1] sm:$0xff] %vm5041, %v4997
    %5151 = vst.msk [vmem:[%s5129 + $0xf9] sm:$0xff] %vm5041, %v4998
    %5152 = vst.msk [vmem:[%s5129 + $0x109] sm:$0xff] %vm5041, %v4999
    %5153 = vst.msk [vmem:[%s5129 + $0x111] sm:$0xff] %vm5041, %v5000
    %5154 = vst.msk [vmem:[%s5129 + $0x121] sm:$0xff] %vm5041, %v5001
    %5155 = vst.msk [vmem:[%s5129 + $0x129] sm:$0xff] %vm5041, %v5002
    %5156 = vst.msk [vmem:[%s5129 + $0x139] sm:$0xff] %vm5041, %v5003
    %5157 = vst.msk [vmem:[%s5129 + $0x141] sm:$0xff] %vm5041, %v5004
    %5158 = vst.msk [vmem:[%s5129 + $0x151] sm:$0xff] %vm5041, %v5005
    %5159 = vst.msk [vmem:[%s5129 + $0x159] sm:$0xff] %vm5041, %v5006
    %5160 = vst.msk [vmem:[%s5129 + $0x169] sm:$0xff] %vm5041, %v5007
    %5161 = vst.msk [vmem:[%s5129 + $0x171] sm:$0xff] %vm5041, %v5008
    %5162 = vst.msk [vmem:[%s5129 + $0x1b1] sm:$0xff] %vm5041, %v5009
    %5163 = vst.msk [vmem:[%s5129 + $0x1b9] sm:$0xff] %vm5041, %v5010
    %5164 = vst.msk [vmem:[%s5129 + $0x1c9] sm:$0xff] %vm5041, %v5011
    %5165 = vst.msk [vmem:[%s5129 + $0x1d1] sm:$0xff] %vm5041, %v5012
    %5166 = vst.msk [vmem:[%s5129 + $0x1e1] sm:$0xff] %vm5041, %v5013
    %5167 = vst.msk [vmem:[%s5129 + $0x1e9] sm:$0xff] %vm5041, %v5014
    %5168 = vst.msk [vmem:[%s5129 + $0x1f9] sm:$0xff] %vm5041, %v5015
    %5169 = vst.msk [vmem:[%s5129 + $0x201] sm:$0xff] %vm5041, %v5016
    %5170 = vst.msk [vmem:[%s5129 + $0x211] sm:$0xff] %vm5041, %v5017
    %5171 = vst.msk [vmem:[%s5129 + $0x219] sm:$0xff] %vm5041, %v5018
    %5172 = vst.msk [vmem:[%s5129 + $0x229] sm:$0xff] %vm5041, %v5019
    %5173 = vst.msk [vmem:[%s5129 + $0x231] sm:$0xff] %vm5041, %v5020
    %5174 = vst.msk [vmem:[%s5129 + $0x241] sm:$0xff] %vm5041, %v5021
    %5175 = vst.msk [vmem:[%s5129 + $0x249] sm:$0xff] %vm5041, %v5022
    %5176 = vst.msk [vmem:[%s5129 + $0x259] sm:$0xff] %vm5041, %v5023
    %5177 = vst.msk [vmem:[%s5129 + $0x261] sm:$0xff] %vm5041, %v5024
    %5178 = vst.msk [vmem:[%s5129 + $0x271] sm:$0xff] %vm5041, %v5025
    %5179 = vst.msk [vmem:[%s5129 + $0x279] sm:$0xff] %vm5041, %v5026
    %5180 = vst.msk [vmem:[%s5129 + $0x289] sm:$0xff] %vm5041, %v5027
    %5181 = vst.msk [vmem:[%s5129 + $0x291] sm:$0xff] %vm5041, %v5028
    %5182 = vst.msk [vmem:[%s5129 + $0x2a1] sm:$0xff] %vm5041, %v5029
    %5183 = vst.msk [vmem:[%s5129 + $0x2a9] sm:$0xff] %vm5041, %v5030
    %5184 = vst.msk [vmem:[%s5129 + $0x2b9] sm:$0xff] %vm5041, %v5031
    %5185 = vst.msk [vmem:[%s5129 + $0x2c1] sm:$0xff] %vm5041, %v5032
    %5186 = vst.msk [vmem:[%s5129 + $0x2d1] sm:$0xff] %vm5041, %v5033
    %5187 = vst.msk [vmem:[%s5129 + $0x2d9] sm:$0xff] %vm5041, %v5034
    %5188 = vst.msk [vmem:[%s5129 + $0x2e9] sm:$0xff] %vm5041, %v5035
    %5189 = vst.msk [vmem:[%s5129 + $0x2f1] sm:$0xff] %vm5041, %v5036
    %5190 = vst.msk [vmem:[%s5129 + $0x301] sm:$0xff] %vm5041, %v5037
    %5191 = vst.msk [vmem:[%s5129 + $0x309] sm:$0xff] %vm5041, %v5038
    %5192 = vst.msk [vmem:[%s5129 + $0x319] sm:$0xff] %vm5041, %v5039
    %5193 = vst.msk [vmem:[%s5129 + $0x321] sm:$0xff] %vm5041, %v5040
    %v5194 = vld [vmem:[#allocation3] sm:$0xff]
    %v5195 = vld [vmem:[#allocation3 + $0x8] sm:$0xff]
    %v5196 = vld [vmem:[#allocation3 + $0x18] sm:$0xff]
    %v5197 = vld [vmem:[#allocation3 + $0x20] sm:$0xff]
    %v5198 = vld [vmem:[#allocation3 + $0x30] sm:$0xff]
    %v5199 = vld [vmem:[#allocation3 + $0x38] sm:$0xff]
    %v5200 = vld [vmem:[#allocation3 + $0x48] sm:$0xff]
    %v5201 = vld [vmem:[#allocation3 + $0x50] sm:$0xff]
    %v5202 = vld [vmem:[#allocation3 + $0x60] sm:$0xff]
    %v5203 = vld [vmem:[#allocation3 + $0x68] sm:$0xff]
    %v5204 = vld [vmem:[#allocation3 + $0x78] sm:$0xff]
    %v5205 = vld [vmem:[#allocation3 + $0x80] sm:$0xff]
    %v5206 = vld [vmem:[#allocation3 + $0x90] sm:$0xff]
    %v5207 = vld [vmem:[#allocation3 + $0x98] sm:$0xff]
    %v5208 = vld [vmem:[#allocation3 + $0xa8] sm:$0xff]
    %v5209 = vld [vmem:[#allocation3 + $0xb0] sm:$0xff]
    %v5210 = vld [vmem:[#allocation3 + $0xc0] sm:$0xff]
    %v5211 = vld [vmem:[#allocation3 + $0xc8] sm:$0xff]
    %v5212 = vld [vmem:[#allocation3 + $0xd8] sm:$0xff]
    %v5213 = vld [vmem:[#allocation3 + $0xe0] sm:$0xff]
    %v5214 = vld [vmem:[#allocation3 + $0xf0] sm:$0xff]
    %v5215 = vld [vmem:[#allocation3 + $0xf8] sm:$0xff]
    %v5216 = vld [vmem:[#allocation3 + $0x108] sm:$0xff]
    %v5217 = vld [vmem:[#allocation3 + $0x110] sm:$0xff]
    %v5218 = vld [vmem:[#allocation3 + $0x120] sm:$0xff]
    %v5219 = vld [vmem:[#allocation3 + $0x128] sm:$0xff]
    %v5220 = vld [vmem:[#allocation3 + $0x138] sm:$0xff]
    %v5221 = vld [vmem:[#allocation3 + $0x140] sm:$0xff]
    %v5222 = vld [vmem:[#allocation3 + $0x150] sm:$0xff]
    %v5223 = vld [vmem:[#allocation3 + $0x158] sm:$0xff]
    %v5224 = vld [vmem:[#allocation3 + $0x168] sm:$0xff]
    %v5225 = vld [vmem:[#allocation3 + $0x170] sm:$0xff]
    %v5226 = vld [vmem:[#allocation3 + $0x1b0] sm:$0xff]
    %v5227 = vld [vmem:[#allocation3 + $0x1b8] sm:$0xff]
    %v5228 = vld [vmem:[#allocation3 + $0x1c8] sm:$0xff]
    %v5229 = vld [vmem:[#allocation3 + $0x1d0] sm:$0xff]
    %v5230 = vld [vmem:[#allocation3 + $0x1e0] sm:$0xff]
    %v5231 = vld [vmem:[#allocation3 + $0x1e8] sm:$0xff]
    %v5232 = vld [vmem:[#allocation3 + $0x1f8] sm:$0xff]
    %v5233 = vld [vmem:[#allocation3 + $0x200] sm:$0xff]
    %v5234 = vld [vmem:[#allocation3 + $0x210] sm:$0xff]
    %v5235 = vld [vmem:[#allocation3 + $0x218] sm:$0xff]
    %v5236 = vld [vmem:[#allocation3 + $0x228] sm:$0xff]
    %v5237 = vld [vmem:[#allocation3 + $0x230] sm:$0xff]
    %v5238 = vld [vmem:[#allocation3 + $0x240] sm:$0xff]
    %v5239 = vld [vmem:[#allocation3 + $0x248] sm:$0xff]
    %v5240 = vld [vmem:[#allocation3 + $0x258] sm:$0xff]
    %v5241 = vld [vmem:[#allocation3 + $0x260] sm:$0xff]
    %v5242 = vld [vmem:[#allocation3 + $0x270] sm:$0xff]
    %v5243 = vld [vmem:[#allocation3 + $0x278] sm:$0xff]
    %v5244 = vld [vmem:[#allocation3 + $0x288] sm:$0xff]
    %v5245 = vld [vmem:[#allocation3 + $0x290] sm:$0xff]
    %v5246 = vld [vmem:[#allocation3 + $0x2a0] sm:$0xff]
    %v5247 = vld [vmem:[#allocation3 + $0x2a8] sm:$0xff]
    %v5248 = vld [vmem:[#allocation3 + $0x2b8] sm:$0xff]
    %v5249 = vld [vmem:[#allocation3 + $0x2c0] sm:$0xff]
    %v5250 = vld [vmem:[#allocation3 + $0x2d0] sm:$0xff]
    %v5251 = vld [vmem:[#allocation3 + $0x2d8] sm:$0xff]
    %v5252 = vld [vmem:[#allocation3 + $0x2e8] sm:$0xff]
    %v5253 = vld [vmem:[#allocation3 + $0x2f0] sm:$0xff]
    %v5254 = vld [vmem:[#allocation3 + $0x300] sm:$0xff]
    %v5255 = vld [vmem:[#allocation3 + $0x308] sm:$0xff]
    %v5256 = vld [vmem:[#allocation3 + $0x318] sm:$0xff]
    %v5257 = vld [vmem:[#allocation3 + $0x320] sm:$0xff]
    %v5258 = vld [vmem:[%s3] sm:$0xff]
    %v5259 = vld [vmem:[%s3 + $0x8] sm:$0xff]
    %v5260 = vld [vmem:[#allocation3 + $0x1] sm:$0xff]
    %v5261 = vld [vmem:[#allocation3 + $0x9] sm:$0xff]
    %v5262 = vld [vmem:[#allocation3 + $0x19] sm:$0xff]
    %v5263 = vld [vmem:[#allocation3 + $0x21] sm:$0xff]
    %v5264 = vld [vmem:[#allocation3 + $0x31] sm:$0xff]
    %v5265 = vld [vmem:[#allocation3 + $0x39] sm:$0xff]
    %v5266 = vld [vmem:[#allocation3 + $0x49] sm:$0xff]
    %v5267 = vld [vmem:[#allocation3 + $0x51] sm:$0xff]
    %v5268 = vld [vmem:[#allocation3 + $0x61] sm:$0xff]
    %v5269 = vld [vmem:[#allocation3 + $0x69] sm:$0xff]
    %v5270 = vld [vmem:[#allocation3 + $0x79] sm:$0xff]
    %v5271 = vld [vmem:[#allocation3 + $0x81] sm:$0xff]
    %v5272 = vld [vmem:[#allocation3 + $0x91] sm:$0xff]
    %v5273 = vld [vmem:[#allocation3 + $0x99] sm:$0xff]
    %v5274 = vld [vmem:[#allocation3 + $0xa9] sm:$0xff]
    %v5275 = vld [vmem:[#allocation3 + $0xb1] sm:$0xff]
    %v5276 = vld [vmem:[#allocation3 + $0xc1] sm:$0xff]
    %v5277 = vld [vmem:[#allocation3 + $0xc9] sm:$0xff]
    %v5278 = vld [vmem:[#allocation3 + $0xd9] sm:$0xff]
    %v5279 = vld [vmem:[#allocation3 + $0xe1] sm:$0xff]
    %v5280 = vld [vmem:[#allocation3 + $0xf1] sm:$0xff]
    %v5281 = vld [vmem:[#allocation3 + $0xf9] sm:$0xff]
    %v5282 = vld [vmem:[#allocation3 + $0x109] sm:$0xff]
    %v5283 = vld [vmem:[#allocation3 + $0x111] sm:$0xff]
    %v5284 = vld [vmem:[#allocation3 + $0x121] sm:$0xff]
    %v5285 = vld [vmem:[#allocation3 + $0x129] sm:$0xff]
    %v5286 = vld [vmem:[#allocation3 + $0x139] sm:$0xff]
    %v5287 = vld [vmem:[#allocation3 + $0x141] sm:$0xff]
    %v5288 = vld [vmem:[#allocation3 + $0x151] sm:$0xff]
    %v5289 = vld [vmem:[#allocation3 + $0x159] sm:$0xff]
    %v5290 = vld [vmem:[#allocation3 + $0x169] sm:$0xff]
    %v5291 = vld [vmem:[#allocation3 + $0x171] sm:$0xff]
    %v5292 = vld [vmem:[#allocation3 + $0x1b1] sm:$0xff]
    %v5293 = vld [vmem:[#allocation3 + $0x1b9] sm:$0xff]
    %v5294 = vld [vmem:[#allocation3 + $0x1c9] sm:$0xff]
    %v5295 = vld [vmem:[#allocation3 + $0x1d1] sm:$0xff]
    %v5296 = vld [vmem:[#allocation3 + $0x1e1] sm:$0xff]
    %v5297 = vld [vmem:[#allocation3 + $0x1e9] sm:$0xff]
    %v5298 = vld [vmem:[#allocation3 + $0x1f9] sm:$0xff]
    %v5299 = vld [vmem:[#allocation3 + $0x201] sm:$0xff]
    %v5300 = vld [vmem:[#allocation3 + $0x211] sm:$0xff]
    %v5301 = vld [vmem:[#allocation3 + $0x219] sm:$0xff]
    %v5302 = vld [vmem:[#allocation3 + $0x229] sm:$0xff]
    %v5303 = vld [vmem:[#allocation3 + $0x231] sm:$0xff]
    %v5304 = vld [vmem:[#allocation3 + $0x241] sm:$0xff]
    %v5305 = vld [vmem:[#allocation3 + $0x249] sm:$0xff]
    %v5306 = vld [vmem:[#allocation3 + $0x259] sm:$0xff]
    %v5307 = vld [vmem:[#allocation3 + $0x261] sm:$0xff]
    %v5308 = vld [vmem:[#allocation3 + $0x271] sm:$0xff]
    %v5309 = vld [vmem:[#allocation3 + $0x279] sm:$0xff]
    %v5310 = vld [vmem:[#allocation3 + $0x289] sm:$0xff]
    %v5311 = vld [vmem:[#allocation3 + $0x291] sm:$0xff]
    %v5312 = vld [vmem:[#allocation3 + $0x2a1] sm:$0xff]
    %v5313 = vld [vmem:[#allocation3 + $0x2a9] sm:$0xff]
    %v5314 = vld [vmem:[#allocation3 + $0x2b9] sm:$0xff]
    %v5315 = vld [vmem:[#allocation3 + $0x2c1] sm:$0xff]
    %v5316 = vld [vmem:[#allocation3 + $0x2d1] sm:$0xff]
    %v5317 = vld [vmem:[#allocation3 + $0x2d9] sm:$0xff]
    %v5318 = vld [vmem:[#allocation3 + $0x2e9] sm:$0xff]
    %v5319 = vld [vmem:[#allocation3 + $0x2f1] sm:$0xff]
    %v5320 = vld [vmem:[#allocation3 + $0x301] sm:$0xff]
    %v5321 = vld [vmem:[#allocation3 + $0x309] sm:$0xff]
    %v5322 = vld [vmem:[#allocation3 + $0x319] sm:$0xff]
    %v5323 = vld [vmem:[#allocation3 + $0x321] sm:$0xff]
    %v5324 = vld [vmem:[%s3 + $0x10] sm:$0xff]
    %v5325 = vld [vmem:[%s3 + $0x18] sm:$0xff]
    %v5327 = vsel %vm5041, %v5260, 0
    %v5330 = vsel %vm5041, %v5261, 0
    %v5333 = vsel %vm5041, %v5262, 0
    %v5336 = vsel %vm5041, %v5263, 0
    %v5339 = vsel %vm5041, %v5264, 0
    %v5342 = vsel %vm5041, %v5265, 0
    %v5345 = vsel %vm5041, %v5266, 0
    %v5348 = vsel %vm5041, %v5267, 0
    %v5351 = vsel %vm5041, %v5268, 0
    %v5354 = vsel %vm5041, %v5269, 0
    %v5357 = vsel %vm5041, %v5270, 0
    %v5360 = vsel %vm5041, %v5271, 0
    %v5363 = vsel %vm5041, %v5272, 0
    %v5366 = vsel %vm5041, %v5273, 0
    %v5369 = vsel %vm5041, %v5274, 0
    %v5372 = vsel %vm5041, %v5275, 0
    %v5375 = vsel %vm5041, %v5276, 0
    %v5378 = vsel %vm5041, %v5277, 0
    %v5381 = vsel %vm5041, %v5278, 0
    %v5384 = vsel %vm5041, %v5279, 0
    %v5387 = vsel %vm5041, %v5280, 0
    %v5390 = vsel %vm5041, %v5281, 0
    %v5393 = vsel %vm5041, %v5282, 0
    %v5396 = vsel %vm5041, %v5283, 0
    %v5399 = vsel %vm5041, %v5284, 0
    %v5402 = vsel %vm5041, %v5285, 0
    %v5405 = vsel %vm5041, %v5286, 0
    %v5408 = vsel %vm5041, %v5287, 0
    %v5411 = vsel %vm5041, %v5288, 0
    %v5414 = vsel %vm5041, %v5289, 0
    %v5417 = vsel %vm5041, %v5290, 0
    %v5420 = vsel %vm5041, %v5291, 0
    %v5423 = vsel %vm5041, %v5292, 0
    %v5426 = vsel %vm5041, %v5293, 0
    %v5429 = vsel %vm5041, %v5294, 0
    %v5432 = vsel %vm5041, %v5295, 0
    %v5435 = vsel %vm5041, %v5296, 0
    %v5438 = vsel %vm5041, %v5297, 0
    %v5441 = vsel %vm5041, %v5298, 0
    %v5444 = vsel %vm5041, %v5299, 0
    %v5447 = vsel %vm5041, %v5300, 0
    %v5450 = vsel %vm5041, %v5301, 0
    %v5453 = vsel %vm5041, %v5302, 0
    %v5456 = vsel %vm5041, %v5303, 0
    %v5459 = vsel %vm5041, %v5304, 0
    %v5462 = vsel %vm5041, %v5305, 0
    %v5465 = vsel %vm5041, %v5306, 0
    %v5468 = vsel %vm5041, %v5307, 0
    %v5471 = vsel %vm5041, %v5308, 0
    %v5474 = vsel %vm5041, %v5309, 0
    %v5477 = vsel %vm5041, %v5310, 0
    %v5480 = vsel %vm5041, %v5311, 0
    %v5483 = vsel %vm5041, %v5312, 0
    %v5486 = vsel %vm5041, %v5313, 0
    %v5489 = vsel %vm5041, %v5314, 0
    %v5492 = vsel %vm5041, %v5315, 0
    %v5495 = vsel %vm5041, %v5316, 0
    %v5498 = vsel %vm5041, %v5317, 0
    %v5501 = vsel %vm5041, %v5318, 0
    %v5504 = vsel %vm5041, %v5319, 0
    %v5507 = vsel %vm5041, %v5320, 0
    %v5510 = vsel %vm5041, %v5321, 0
    %v5513 = vsel %vm5041, %v5322, 0
    %v5516 = vsel %vm5041, %v5323, 0
    %5518 = vmatpush.msra.mxu0 0.0
    %5519 = vmatpush.msra.mxu0 0.0
    %5520 = vmatpush.msra.mxu0 0.0
    %5521 = vmatpush.msra.mxu0 0.0
    %5522 = vmatpush.msra.mxu0 0.0
    %5523 = vmatpush.msra.mxu0 0.0
    %5524 = vmatpush.msra.mxu0 0.0
    %5525 = vmatpush.msra.mxu0 0.0
    %5526 = vmatpush.msra.mxu0 0.0
    %5527 = vmatpush.msra.mxu0 0.0
    %5528 = vmatpush.msra.mxu0 0.0
    %5529 = vmatpush.msra.mxu0 0.0
    %5530 = vmatpush.msra.mxu0 0.0
    %5531 = vmatpush.msra.mxu0 0.0
    %5532 = vmatpush.msra.mxu0 %v5325
    %5533 = vmatpush.msra.mxu0 %v5324
    %5534 = vmatmul.f32.gmra.mxu0 %v5327
    %v5535 = vpop.f32.mrf.mxu0
    %v5536 = vadd.f32 0.0, %v5535
    %5537 = vmatmul.f32.gmra.mxu0 %v5330
    %v5538 = vpop.f32.mrf.mxu0
    %v5539 = vadd.f32 0.0, %v5538
    %5540 = vmatmul.f32.gmra.mxu0 %v5333
    %v5541 = vpop.f32.mrf.mxu0
    %v5542 = vadd.f32 0.0, %v5541
    %5543 = vmatmul.f32.gmra.mxu0 %v5336
    %v5544 = vpop.f32.mrf.mxu0
    %v5545 = vadd.f32 0.0, %v5544
    %5546 = vmatmul.f32.gmra.mxu0 %v5339
    %v5547 = vpop.f32.mrf.mxu0
    %v5548 = vadd.f32 0.0, %v5547
    %5549 = vmatmul.f32.gmra.mxu0 %v5342
    %v5550 = vpop.f32.mrf.mxu0
    %v5551 = vadd.f32 0.0, %v5550
    %5552 = vmatmul.f32.gmra.mxu0 %v5345
    %v5553 = vpop.f32.mrf.mxu0
    %v5554 = vadd.f32 0.0, %v5553
    %5555 = vmatmul.f32.gmra.mxu0 %v5348
    %v5556 = vpop.f32.mrf.mxu0
    %v5557 = vadd.f32 0.0, %v5556
    %5558 = vmatmul.f32.gmra.mxu0 %v5351
    %v5559 = vpop.f32.mrf.mxu0
    %v5560 = vadd.f32 0.0, %v5559
    %5561 = vmatmul.f32.gmra.mxu0 %v5354
    %v5562 = vpop.f32.mrf.mxu0
    %v5563 = vadd.f32 0.0, %v5562
    %5564 = vmatmul.f32.gmra.mxu0 %v5357
    %v5565 = vpop.f32.mrf.mxu0
    %v5566 = vadd.f32 0.0, %v5565
    %5567 = vmatmul.f32.gmra.mxu0 %v5360
    %v5568 = vpop.f32.mrf.mxu0
    %v5569 = vadd.f32 0.0, %v5568
    %5570 = vmatmul.f32.gmra.mxu0 %v5363
    %v5571 = vpop.f32.mrf.mxu0
    %v5572 = vadd.f32 0.0, %v5571
    %5573 = vmatmul.f32.gmra.mxu0 %v5366
    %v5574 = vpop.f32.mrf.mxu0
    %v5575 = vadd.f32 0.0, %v5574
    %5576 = vmatmul.f32.gmra.mxu0 %v5369
    %v5577 = vpop.f32.mrf.mxu0
    %v5578 = vadd.f32 0.0, %v5577
    %5579 = vmatmul.f32.gmra.mxu0 %v5372
    %v5580 = vpop.f32.mrf.mxu0
    %v5581 = vadd.f32 0.0, %v5580
    %5582 = vmatmul.f32.gmra.mxu0 %v5375
    %v5583 = vpop.f32.mrf.mxu0
    %v5584 = vadd.f32 0.0, %v5583
    %5585 = vmatmul.f32.gmra.mxu0 %v5378
    %v5586 = vpop.f32.mrf.mxu0
    %v5587 = vadd.f32 0.0, %v5586
    %5588 = vmatmul.f32.gmra.mxu0 %v5381
    %v5589 = vpop.f32.mrf.mxu0
    %v5590 = vadd.f32 0.0, %v5589
    %5591 = vmatmul.f32.gmra.mxu0 %v5384
    %v5592 = vpop.f32.mrf.mxu0
    %v5593 = vadd.f32 0.0, %v5592
    %5594 = vmatmul.f32.gmra.mxu0 %v5387
    %v5595 = vpop.f32.mrf.mxu0
    %v5596 = vadd.f32 0.0, %v5595
    %5597 = vmatmul.f32.gmra.mxu0 %v5390
    %v5598 = vpop.f32.mrf.mxu0
    %v5599 = vadd.f32 0.0, %v5598
    %5600 = vmatmul.f32.gmra.mxu0 %v5393
    %v5601 = vpop.f32.mrf.mxu0
    %v5602 = vadd.f32 0.0, %v5601
    %5603 = vmatmul.f32.gmra.mxu0 %v5396
    %v5604 = vpop.f32.mrf.mxu0
    %v5605 = vadd.f32 0.0, %v5604
    %5606 = vmatmul.f32.gmra.mxu0 %v5399
    %v5607 = vpop.f32.mrf.mxu0
    %v5608 = vadd.f32 0.0, %v5607
    %5609 = vmatmul.f32.gmra.mxu0 %v5402
    %v5610 = vpop.f32.mrf.mxu0
    %v5611 = vadd.f32 0.0, %v5610
    %5612 = vmatmul.f32.gmra.mxu0 %v5405
    %v5613 = vpop.f32.mrf.mxu0
    %v5614 = vadd.f32 0.0, %v5613
    %5615 = vmatmul.f32.gmra.mxu0 %v5408
    %v5616 = vpop.f32.mrf.mxu0
    %v5617 = vadd.f32 0.0, %v5616
    %5618 = vmatmul.f32.gmra.mxu0 %v5411
    %v5619 = vpop.f32.mrf.mxu0
    %v5620 = vadd.f32 0.0, %v5619
    %5621 = vmatmul.f32.gmra.mxu0 %v5414
    %v5622 = vpop.f32.mrf.mxu0
    %v5623 = vadd.f32 0.0, %v5622
    %5624 = vmatmul.f32.gmra.mxu0 %v5417
    %v5625 = vpop.f32.mrf.mxu0
    %v5626 = vadd.f32 0.0, %v5625
    %5627 = vmatmul.f32.gmra.mxu0 %v5420
    %v5628 = vpop.f32.mrf.mxu0
    %v5629 = vadd.f32 0.0, %v5628
    %5630 = vmatmul.f32.gmra.mxu0 %v5423
    %v5631 = vpop.f32.mrf.mxu0
    %v5632 = vadd.f32 0.0, %v5631
    %5633 = vmatmul.f32.gmra.mxu0 %v5426
    %v5634 = vpop.f32.mrf.mxu0
    %v5635 = vadd.f32 0.0, %v5634
    %5636 = vmatmul.f32.gmra.mxu0 %v5429
    %v5637 = vpop.f32.mrf.mxu0
    %v5638 = vadd.f32 0.0, %v5637
    %5639 = vmatmul.f32.gmra.mxu0 %v5432
    %v5640 = vpop.f32.mrf.mxu0
    %v5641 = vadd.f32 0.0, %v5640
    %5642 = vmatmul.f32.gmra.mxu0 %v5435
    %v5643 = vpop.f32.mrf.mxu0
    %v5644 = vadd.f32 0.0, %v5643
    %5645 = vmatmul.f32.gmra.mxu0 %v5438
    %v5646 = vpop.f32.mrf.mxu0
    %v5647 = vadd.f32 0.0, %v5646
    %5648 = vmatmul.f32.gmra.mxu0 %v5441
    %v5649 = vpop.f32.mrf.mxu0
    %v5650 = vadd.f32 0.0, %v5649
    %5651 = vmatmul.f32.gmra.mxu0 %v5444
    %v5652 = vpop.f32.mrf.mxu0
    %v5653 = vadd.f32 0.0, %v5652
    %5654 = vmatmul.f32.gmra.mxu0 %v5447
    %v5655 = vpop.f32.mrf.mxu0
    %v5656 = vadd.f32 0.0, %v5655
    %5657 = vmatmul.f32.gmra.mxu0 %v5450
    %v5658 = vpop.f32.mrf.mxu0
    %v5659 = vadd.f32 0.0, %v5658
    %5660 = vmatmul.f32.gmra.mxu0 %v5453
    %v5661 = vpop.f32.mrf.mxu0
    %v5662 = vadd.f32 0.0, %v5661
    %5663 = vmatmul.f32.gmra.mxu0 %v5456
    %v5664 = vpop.f32.mrf.mxu0
    %v5665 = vadd.f32 0.0, %v5664
    %5666 = vmatmul.f32.gmra.mxu0 %v5459
    %v5667 = vpop.f32.mrf.mxu0
    %v5668 = vadd.f32 0.0, %v5667
    %5669 = vmatmul.f32.gmra.mxu0 %v5462
    %v5670 = vpop.f32.mrf.mxu0
    %v5671 = vadd.f32 0.0, %v5670
    %5672 = vmatmul.f32.gmra.mxu0 %v5465
    %v5673 = vpop.f32.mrf.mxu0
    %v5674 = vadd.f32 0.0, %v5673
    %5675 = vmatmul.f32.gmra.mxu0 %v5468
    %v5676 = vpop.f32.mrf.mxu0
    %v5677 = vadd.f32 0.0, %v5676
    %5678 = vmatmul.f32.gmra.mxu0 %v5471
    %v5679 = vpop.f32.mrf.mxu0
    %v5680 = vadd.f32 0.0, %v5679
    %5681 = vmatmul.f32.gmra.mxu0 %v5474
    %v5682 = vpop.f32.mrf.mxu0
    %v5683 = vadd.f32 0.0, %v5682
    %5684 = vmatmul.f32.gmra.mxu0 %v5477
    %v5685 = vpop.f32.mrf.mxu0
    %v5686 = vadd.f32 0.0, %v5685
    %5687 = vmatmul.f32.gmra.mxu0 %v5480
    %v5688 = vpop.f32.mrf.mxu0
    %v5689 = vadd.f32 0.0, %v5688
    %5690 = vmatmul.f32.gmra.mxu0 %v5483
    %v5691 = vpop.f32.mrf.mxu0
    %v5692 = vadd.f32 0.0, %v5691
    %5693 = vmatmul.f32.gmra.mxu0 %v5486
    %v5694 = vpop.f32.mrf.mxu0
    %v5695 = vadd.f32 0.0, %v5694
    %5696 = vmatmul.f32.gmra.mxu0 %v5489
    %v5697 = vpop.f32.mrf.mxu0
    %v5698 = vadd.f32 0.0, %v5697
    %5699 = vmatmul.f32.gmra.mxu0 %v5492
    %v5700 = vpop.f32.mrf.mxu0
    %v5701 = vadd.f32 0.0, %v5700
    %5702 = vmatmul.f32.gmra.mxu0 %v5495
    %v5703 = vpop.f32.mrf.mxu0
    %v5704 = vadd.f32 0.0, %v5703
    %5705 = vmatmul.f32.gmra.mxu0 %v5498
    %v5706 = vpop.f32.mrf.mxu0
    %v5707 = vadd.f32 0.0, %v5706
    %5708 = vmatmul.f32.gmra.mxu0 %v5501
    %v5709 = vpop.f32.mrf.mxu0
    %v5710 = vadd.f32 0.0, %v5709
    %5711 = vmatmul.f32.gmra.mxu0 %v5504
    %v5712 = vpop.f32.mrf.mxu0
    %v5713 = vadd.f32 0.0, %v5712
    %5714 = vmatmul.f32.gmra.mxu0 %v5507
    %v5715 = vpop.f32.mrf.mxu0
    %v5716 = vadd.f32 0.0, %v5715
    %5717 = vmatmul.f32.gmra.mxu0 %v5510
    %v5718 = vpop.f32.mrf.mxu0
    %v5719 = vadd.f32 0.0, %v5718
    %5720 = vmatmul.f32.gmra.mxu0 %v5513
    %v5721 = vpop.f32.mrf.mxu0
    %v5722 = vadd.f32 0.0, %v5721
    %5723 = vmatmul.f32.gmra.mxu0 %v5516
    %v5724 = vpop.f32.mrf.mxu0
    %v5725 = vadd.f32 0.0, %v5724
    %5726 = vdwg.mxu0
    %v5728 = vsel %vm5041, %v5194, 0
    %v5731 = vsel %vm5041, %v5195, 0
    %v5734 = vsel %vm5041, %v5196, 0
    %v5737 = vsel %vm5041, %v5197, 0
    %v5740 = vsel %vm5041, %v5198, 0
    %v5743 = vsel %vm5041, %v5199, 0
    %v5746 = vsel %vm5041, %v5200, 0
    %v5749 = vsel %vm5041, %v5201, 0
    %v5752 = vsel %vm5041, %v5202, 0
    %v5755 = vsel %vm5041, %v5203, 0
    %v5758 = vsel %vm5041, %v5204, 0
    %v5761 = vsel %vm5041, %v5205, 0
    %v5764 = vsel %vm5041, %v5206, 0
    %v5767 = vsel %vm5041, %v5207, 0
    %v5770 = vsel %vm5041, %v5208, 0
    %v5773 = vsel %vm5041, %v5209, 0
    %v5776 = vsel %vm5041, %v5210, 0
    %v5779 = vsel %vm5041, %v5211, 0
    %v5782 = vsel %vm5041, %v5212, 0
    %v5785 = vsel %vm5041, %v5213, 0
    %v5788 = vsel %vm5041, %v5214, 0
    %v5791 = vsel %vm5041, %v5215, 0
    %v5794 = vsel %vm5041, %v5216, 0
    %v5797 = vsel %vm5041, %v5217, 0
    %v5800 = vsel %vm5041, %v5218, 0
    %v5803 = vsel %vm5041, %v5219, 0
    %v5806 = vsel %vm5041, %v5220, 0
    %v5809 = vsel %vm5041, %v5221, 0
    %v5812 = vsel %vm5041, %v5222, 0
    %v5815 = vsel %vm5041, %v5223, 0
    %v5818 = vsel %vm5041, %v5224, 0
    %v5821 = vsel %vm5041, %v5225, 0
    %v5824 = vsel %vm5041, %v5226, 0
    %v5827 = vsel %vm5041, %v5227, 0
    %v5830 = vsel %vm5041, %v5228, 0
    %v5833 = vsel %vm5041, %v5229, 0
    %v5836 = vsel %vm5041, %v5230, 0
    %v5839 = vsel %vm5041, %v5231, 0
    %v5842 = vsel %vm5041, %v5232, 0
    %v5845 = vsel %vm5041, %v5233, 0
    %v5848 = vsel %vm5041, %v5234, 0
    %v5851 = vsel %vm5041, %v5235, 0
    %v5854 = vsel %vm5041, %v5236, 0
    %v5857 = vsel %vm5041, %v5237, 0
    %v5860 = vsel %vm5041, %v5238, 0
    %v5863 = vsel %vm5041, %v5239, 0
    %v5866 = vsel %vm5041, %v5240, 0
    %v5869 = vsel %vm5041, %v5241, 0
    %v5872 = vsel %vm5041, %v5242, 0
    %v5875 = vsel %vm5041, %v5243, 0
    %v5878 = vsel %vm5041, %v5244, 0
    %v5881 = vsel %vm5041, %v5245, 0
    %v5884 = vsel %vm5041, %v5246, 0
    %v5887 = vsel %vm5041, %v5247, 0
    %v5890 = vsel %vm5041, %v5248, 0
    %v5893 = vsel %vm5041, %v5249, 0
    %v5896 = vsel %vm5041, %v5250, 0
    %v5899 = vsel %vm5041, %v5251, 0
    %v5902 = vsel %vm5041, %v5252, 0
    %v5905 = vsel %vm5041, %v5253, 0
    %v5908 = vsel %vm5041, %v5254, 0
    %v5911 = vsel %vm5041, %v5255, 0
    %v5914 = vsel %vm5041, %v5256, 0
    %v5917 = vsel %vm5041, %v5257, 0
    %5919 = vmatpush.msra.mxu0 0.0
    %5920 = vmatpush.msra.mxu0 0.0
    %5921 = vmatpush.msra.mxu0 0.0
    %5922 = vmatpush.msra.mxu0 0.0
    %5923 = vmatpush.msra.mxu0 0.0
    %5924 = vmatpush.msra.mxu0 0.0
    %5925 = vmatpush.msra.mxu0 0.0
    %5926 = vmatpush.msra.mxu0 0.0
    %5927 = vmatpush.msra.mxu0 0.0
    %5928 = vmatpush.msra.mxu0 0.0
    %5929 = vmatpush.msra.mxu0 0.0
    %5930 = vmatpush.msra.mxu0 0.0
    %5931 = vmatpush.msra.mxu0 0.0
    %5932 = vmatpush.msra.mxu0 0.0
    %5933 = vmatpush.msra.mxu0 %v5259
    %5934 = vmatpush.msra.mxu0 %v5258
    %5935 = vmatmul.f32.gmra.mxu0 %v5728
    %v5936 = vpop.f32.mrf.mxu0
    %v5937 = vadd.f32 %v5536, %v5936
    %5938 = vmatmul.f32.gmra.mxu0 %v5731
    %v5939 = vpop.f32.mrf.mxu0
    %v5940 = vadd.f32 %v5539, %v5939
    %5941 = vmatmul.f32.gmra.mxu0 %v5734
    %v5942 = vpop.f32.mrf.mxu0
    %v5943 = vadd.f32 %v5542, %v5942
    %5944 = vmatmul.f32.gmra.mxu0 %v5737
    %v5945 = vpop.f32.mrf.mxu0
    %v5946 = vadd.f32 %v5545, %v5945
    %5947 = vmatmul.f32.gmra.mxu0 %v5740
    %v5948 = vpop.f32.mrf.mxu0
    %v5949 = vadd.f32 %v5548, %v5948
    %5950 = vmatmul.f32.gmra.mxu0 %v5743
    %v5951 = vpop.f32.mrf.mxu0
    %v5952 = vadd.f32 %v5551, %v5951
    %5953 = vmatmul.f32.gmra.mxu0 %v5746
    %v5954 = vpop.f32.mrf.mxu0
    %v5955 = vadd.f32 %v5554, %v5954
    %5956 = vmatmul.f32.gmra.mxu0 %v5749
    %v5957 = vpop.f32.mrf.mxu0
    %v5958 = vadd.f32 %v5557, %v5957
    %5959 = vmatmul.f32.gmra.mxu0 %v5752
    %v5960 = vpop.f32.mrf.mxu0
    %v5961 = vadd.f32 %v5560, %v5960
    %5962 = vmatmul.f32.gmra.mxu0 %v5755
    %v5963 = vpop.f32.mrf.mxu0
    %v5964 = vadd.f32 %v5563, %v5963
    %5965 = vmatmul.f32.gmra.mxu0 %v5758
    %v5966 = vpop.f32.mrf.mxu0
    %v5967 = vadd.f32 %v5566, %v5966
    %5968 = vmatmul.f32.gmra.mxu0 %v5761
    %v5969 = vpop.f32.mrf.mxu0
    %v5970 = vadd.f32 %v5569, %v5969
    %5971 = vmatmul.f32.gmra.mxu0 %v5764
    %v5972 = vpop.f32.mrf.mxu0
    %v5973 = vadd.f32 %v5572, %v5972
    %5974 = vmatmul.f32.gmra.mxu0 %v5767
    %v5975 = vpop.f32.mrf.mxu0
    %v5976 = vadd.f32 %v5575, %v5975
    %5977 = vmatmul.f32.gmra.mxu0 %v5770
    %v5978 = vpop.f32.mrf.mxu0
    %v5979 = vadd.f32 %v5578, %v5978
    %5980 = vmatmul.f32.gmra.mxu0 %v5773
    %v5981 = vpop.f32.mrf.mxu0
    %v5982 = vadd.f32 %v5581, %v5981
    %5983 = vmatmul.f32.gmra.mxu0 %v5776
    %v5984 = vpop.f32.mrf.mxu0
    %v5985 = vadd.f32 %v5584, %v5984
    %5986 = vmatmul.f32.gmra.mxu0 %v5779
    %v5987 = vpop.f32.mrf.mxu0
    %v5988 = vadd.f32 %v5587, %v5987
    %5989 = vmatmul.f32.gmra.mxu0 %v5782
    %v5990 = vpop.f32.mrf.mxu0
    %v5991 = vadd.f32 %v5590, %v5990
    %5992 = vmatmul.f32.gmra.mxu0 %v5785
    %v5993 = vpop.f32.mrf.mxu0
    %v5994 = vadd.f32 %v5593, %v5993
    %5995 = vmatmul.f32.gmra.mxu0 %v5788
    %v5996 = vpop.f32.mrf.mxu0
    %v5997 = vadd.f32 %v5596, %v5996
    %5998 = vmatmul.f32.gmra.mxu0 %v5791
    %v5999 = vpop.f32.mrf.mxu0
    %v6000 = vadd.f32 %v5599, %v5999
    %6001 = vmatmul.f32.gmra.mxu0 %v5794
    %v6002 = vpop.f32.mrf.mxu0
    %v6003 = vadd.f32 %v5602, %v6002
    %6004 = vmatmul.f32.gmra.mxu0 %v5797
    %v6005 = vpop.f32.mrf.mxu0
    %v6006 = vadd.f32 %v5605, %v6005
    %6007 = vmatmul.f32.gmra.mxu0 %v5800
    %v6008 = vpop.f32.mrf.mxu0
    %v6009 = vadd.f32 %v5608, %v6008
    %6010 = vmatmul.f32.gmra.mxu0 %v5803
    %v6011 = vpop.f32.mrf.mxu0
    %v6012 = vadd.f32 %v5611, %v6011
    %6013 = vmatmul.f32.gmra.mxu0 %v5806
    %v6014 = vpop.f32.mrf.mxu0
    %v6015 = vadd.f32 %v5614, %v6014
    %6016 = vmatmul.f32.gmra.mxu0 %v5809
    %v6017 = vpop.f32.mrf.mxu0
    %v6018 = vadd.f32 %v5617, %v6017
    %6019 = vmatmul.f32.gmra.mxu0 %v5812
    %v6020 = vpop.f32.mrf.mxu0
    %v6021 = vadd.f32 %v5620, %v6020
    %6022 = vmatmul.f32.gmra.mxu0 %v5815
    %v6023 = vpop.f32.mrf.mxu0
    %v6024 = vadd.f32 %v5623, %v6023
    %6025 = vmatmul.f32.gmra.mxu0 %v5818
    %v6026 = vpop.f32.mrf.mxu0
    %v6027 = vadd.f32 %v5626, %v6026
    %6028 = vmatmul.f32.gmra.mxu0 %v5821
    %v6029 = vpop.f32.mrf.mxu0
    %v6030 = vadd.f32 %v5629, %v6029
    %6031 = vmatmul.f32.gmra.mxu0 %v5824
    %v6032 = vpop.f32.mrf.mxu0
    %v6033 = vadd.f32 %v5632, %v6032
    %6034 = vmatmul.f32.gmra.mxu0 %v5827
    %v6035 = vpop.f32.mrf.mxu0
    %v6036 = vadd.f32 %v5635, %v6035
    %6037 = vmatmul.f32.gmra.mxu0 %v5830
    %v6038 = vpop.f32.mrf.mxu0
    %v6039 = vadd.f32 %v5638, %v6038
    %6040 = vmatmul.f32.gmra.mxu0 %v5833
    %v6041 = vpop.f32.mrf.mxu0
    %v6042 = vadd.f32 %v5641, %v6041
    %6043 = vmatmul.f32.gmra.mxu0 %v5836
    %v6044 = vpop.f32.mrf.mxu0
    %v6045 = vadd.f32 %v5644, %v6044
    %6046 = vmatmul.f32.gmra.mxu0 %v5839
    %v6047 = vpop.f32.mrf.mxu0
    %v6048 = vadd.f32 %v5647, %v6047
    %6049 = vmatmul.f32.gmra.mxu0 %v5842
    %v6050 = vpop.f32.mrf.mxu0
    %v6051 = vadd.f32 %v5650, %v6050
    %6052 = vmatmul.f32.gmra.mxu0 %v5845
    %v6053 = vpop.f32.mrf.mxu0
    %v6054 = vadd.f32 %v5653, %v6053
    %6055 = vmatmul.f32.gmra.mxu0 %v5848
    %v6056 = vpop.f32.mrf.mxu0
    %v6057 = vadd.f32 %v5656, %v6056
    %6058 = vmatmul.f32.gmra.mxu0 %v5851
    %v6059 = vpop.f32.mrf.mxu0
    %v6060 = vadd.f32 %v5659, %v6059
    %6061 = vmatmul.f32.gmra.mxu0 %v5854
    %v6062 = vpop.f32.mrf.mxu0
    %v6063 = vadd.f32 %v5662, %v6062
    %6064 = vmatmul.f32.gmra.mxu0 %v5857
    %v6065 = vpop.f32.mrf.mxu0
    %v6066 = vadd.f32 %v5665, %v6065
    %6067 = vmatmul.f32.gmra.mxu0 %v5860
    %v6068 = vpop.f32.mrf.mxu0
    %v6069 = vadd.f32 %v5668, %v6068
    %6070 = vmatmul.f32.gmra.mxu0 %v5863
    %v6071 = vpop.f32.mrf.mxu0
    %v6072 = vadd.f32 %v5671, %v6071
    %6073 = vmatmul.f32.gmra.mxu0 %v5866
    %v6074 = vpop.f32.mrf.mxu0
    %v6075 = vadd.f32 %v5674, %v6074
    %6076 = vmatmul.f32.gmra.mxu0 %v5869
    %v6077 = vpop.f32.mrf.mxu0
    %v6078 = vadd.f32 %v5677, %v6077
    %6079 = vmatmul.f32.gmra.mxu0 %v5872
    %v6080 = vpop.f32.mrf.mxu0
    %v6081 = vadd.f32 %v5680, %v6080
    %6082 = vmatmul.f32.gmra.mxu0 %v5875
    %v6083 = vpop.f32.mrf.mxu0
    %v6084 = vadd.f32 %v5683, %v6083
    %6085 = vmatmul.f32.gmra.mxu0 %v5878
    %v6086 = vpop.f32.mrf.mxu0
    %v6087 = vadd.f32 %v5686, %v6086
    %6088 = vmatmul.f32.gmra.mxu0 %v5881
    %v6089 = vpop.f32.mrf.mxu0
    %v6090 = vadd.f32 %v5689, %v6089
    %6091 = vmatmul.f32.gmra.mxu0 %v5884
    %v6092 = vpop.f32.mrf.mxu0
    %v6093 = vadd.f32 %v5692, %v6092
    %6094 = vmatmul.f32.gmra.mxu0 %v5887
    %v6095 = vpop.f32.mrf.mxu0
    %v6096 = vadd.f32 %v5695, %v6095
    %6097 = vmatmul.f32.gmra.mxu0 %v5890
    %v6098 = vpop.f32.mrf.mxu0
    %v6099 = vadd.f32 %v5698, %v6098
    %6100 = vmatmul.f32.gmra.mxu0 %v5893
    %v6101 = vpop.f32.mrf.mxu0
    %v6102 = vadd.f32 %v5701, %v6101
    %6103 = vmatmul.f32.gmra.mxu0 %v5896
    %v6104 = vpop.f32.mrf.mxu0
    %v6105 = vadd.f32 %v5704, %v6104
    %6106 = vmatmul.f32.gmra.mxu0 %v5899
    %v6107 = vpop.f32.mrf.mxu0
    %v6108 = vadd.f32 %v5707, %v6107
    %6109 = vmatmul.f32.gmra.mxu0 %v5902
    %v6110 = vpop.f32.mrf.mxu0
    %v6111 = vadd.f32 %v5710, %v6110
    %6112 = vmatmul.f32.gmra.mxu0 %v5905
    %v6113 = vpop.f32.mrf.mxu0
    %v6114 = vadd.f32 %v5713, %v6113
    %6115 = vmatmul.f32.gmra.mxu0 %v5908
    %v6116 = vpop.f32.mrf.mxu0
    %v6117 = vadd.f32 %v5716, %v6116
    %6118 = vmatmul.f32.gmra.mxu0 %v5911
    %v6119 = vpop.f32.mrf.mxu0
    %v6120 = vadd.f32 %v5719, %v6119
    %6121 = vmatmul.f32.gmra.mxu0 %v5914
    %v6122 = vpop.f32.mrf.mxu0
    %v6123 = vadd.f32 %v5722, %v6122
    %6124 = vmatmul.f32.gmra.mxu0 %v5917
    %v6125 = vpop.f32.mrf.mxu0
    %v6126 = vadd.f32 %v5725, %v6125
    %6127 = vdwg.mxu0
    %v6128 = vld [vmem:[#allocation3 + $0x2] sm:$0xff]
    %v6129 = vld [vmem:[#allocation3 + $0xa] sm:$0xff]
    %v6130 = vld [vmem:[#allocation3 + $0x1a] sm:$0xff]
    %v6131 = vld [vmem:[#allocation3 + $0x22] sm:$0xff]
    %v6132 = vld [vmem:[#allocation3 + $0x32] sm:$0xff]
    %v6133 = vld [vmem:[#allocation3 + $0x3a] sm:$0xff]
    %v6134 = vld [vmem:[#allocation3 + $0x4a] sm:$0xff]
    %v6135 = vld [vmem:[#allocation3 + $0x52] sm:$0xff]
    %v6136 = vld [vmem:[#allocation3 + $0x62] sm:$0xff]
    %v6137 = vld [vmem:[#allocation3 + $0x6a] sm:$0xff]
    %v6138 = vld [vmem:[#allocation3 + $0x7a] sm:$0xff]
    %v6139 = vld [vmem:[#allocation3 + $0x82] sm:$0xff]
    %v6140 = vld [vmem:[#allocation3 + $0x92] sm:$0xff]
    %v6141 = vld [vmem:[#allocation3 + $0x9a] sm:$0xff]
    %v6142 = vld [vmem:[#allocation3 + $0xaa] sm:$0xff]
    %v6143 = vld [vmem:[#allocation3 + $0xb2] sm:$0xff]
    %v6144 = vld [vmem:[#allocation3 + $0xc2] sm:$0xff]
    %v6145 = vld [vmem:[#allocation3 + $0xca] sm:$0xff]
    %v6146 = vld [vmem:[#allocation3 + $0xda] sm:$0xff]
    %v6147 = vld [vmem:[#allocation3 + $0xe2] sm:$0xff]
    %v6148 = vld [vmem:[#allocation3 + $0xf2] sm:$0xff]
    %v6149 = vld [vmem:[#allocation3 + $0xfa] sm:$0xff]
    %v6150 = vld [vmem:[#allocation3 + $0x10a] sm:$0xff]
    %v6151 = vld [vmem:[#allocation3 + $0x112] sm:$0xff]
    %v6152 = vld [vmem:[#allocation3 + $0x122] sm:$0xff]
    %v6153 = vld [vmem:[#allocation3 + $0x12a] sm:$0xff]
    %v6154 = vld [vmem:[#allocation3 + $0x13a] sm:$0xff]
    %v6155 = vld [vmem:[#allocation3 + $0x142] sm:$0xff]
    %v6156 = vld [vmem:[#allocation3 + $0x152] sm:$0xff]
    %v6157 = vld [vmem:[#allocation3 + $0x15a] sm:$0xff]
    %v6158 = vld [vmem:[#allocation3 + $0x16a] sm:$0xff]
    %v6159 = vld [vmem:[#allocation3 + $0x172] sm:$0xff]
    %v6160 = vld [vmem:[#allocation3 + $0x1b2] sm:$0xff]
    %v6161 = vld [vmem:[#allocation3 + $0x1ba] sm:$0xff]
    %v6162 = vld [vmem:[#allocation3 + $0x1ca] sm:$0xff]
    %v6163 = vld [vmem:[#allocation3 + $0x1d2] sm:$0xff]
    %v6164 = vld [vmem:[#allocation3 + $0x1e2] sm:$0xff]
    %v6165 = vld [vmem:[#allocation3 + $0x1ea] sm:$0xff]
    %v6166 = vld [vmem:[#allocation3 + $0x1fa] sm:$0xff]
    %v6167 = vld [vmem:[#allocation3 + $0x202] sm:$0xff]
    %v6168 = vld [vmem:[#allocation3 + $0x212] sm:$0xff]
    %v6169 = vld [vmem:[#allocation3 + $0x21a] sm:$0xff]
    %v6170 = vld [vmem:[#allocation3 + $0x22a] sm:$0xff]
    %v6171 = vld [vmem:[#allocation3 + $0x232] sm:$0xff]
    %v6172 = vld [vmem:[#allocation3 + $0x242] sm:$0xff]
    %v6173 = vld [vmem:[#allocation3 + $0x24a] sm:$0xff]
    %v6174 = vld [vmem:[#allocation3 + $0x25a] sm:$0xff]
    %v6175 = vld [vmem:[#allocation3 + $0x262] sm:$0xff]
    %v6176 = vld [vmem:[#allocation3 + $0x272] sm:$0xff]
    %v6177 = vld [vmem:[#allocation3 + $0x27a] sm:$0xff]
    %v6178 = vld [vmem:[#allocation3 + $0x28a] sm:$0xff]
    %v6179 = vld [vmem:[#allocation3 + $0x292] sm:$0xff]
    %v6180 = vld [vmem:[#allocation3 + $0x2a2] sm:$0xff]
    %v6181 = vld [vmem:[#allocation3 + $0x2aa] sm:$0xff]
    %v6182 = vld [vmem:[#allocation3 + $0x2ba] sm:$0xff]
    %v6183 = vld [vmem:[#allocation3 + $0x2c2] sm:$0xff]
    %v6184 = vld [vmem:[#allocation3 + $0x2d2] sm:$0xff]
    %v6185 = vld [vmem:[#allocation3 + $0x2da] sm:$0xff]
    %v6186 = vld [vmem:[#allocation3 + $0x2ea] sm:$0xff]
    %v6187 = vld [vmem:[#allocation3 + $0x2f2] sm:$0xff]
    %v6188 = vld [vmem:[#allocation3 + $0x302] sm:$0xff]
    %v6189 = vld [vmem:[#allocation3 + $0x30a] sm:$0xff]
    %v6190 = vld [vmem:[#allocation3 + $0x31a] sm:$0xff]
    %v6191 = vld [vmem:[#allocation3 + $0x322] sm:$0xff]
    %v6192 = vld [vmem:[%s3 + $0x20] sm:$0xff]
    %v6193 = vld [vmem:[%s3 + $0x28] sm:$0xff]
    %v6195 = vsel %vm5041, %v6128, 0
    %v6198 = vsel %vm5041, %v6129, 0
    %v6201 = vsel %vm5041, %v6130, 0
    %v6204 = vsel %vm5041, %v6131, 0
    %v6207 = vsel %vm5041, %v6132, 0
    %v6210 = vsel %vm5041, %v6133, 0
    %v6213 = vsel %vm5041, %v6134, 0
    %v6216 = vsel %vm5041, %v6135, 0
    %v6219 = vsel %vm5041, %v6136, 0
    %v6222 = vsel %vm5041, %v6137, 0
    %v6225 = vsel %vm5041, %v6138, 0
    %v6228 = vsel %vm5041, %v6139, 0
    %v6231 = vsel %vm5041, %v6140, 0
    %v6234 = vsel %vm5041, %v6141, 0
    %v6237 = vsel %vm5041, %v6142, 0
    %v6240 = vsel %vm5041, %v6143, 0
    %v6243 = vsel %vm5041, %v6144, 0
    %v6246 = vsel %vm5041, %v6145, 0
    %v6249 = vsel %vm5041, %v6146, 0
    %v6252 = vsel %vm5041, %v6147, 0
    %v6255 = vsel %vm5041, %v6148, 0
    %v6258 = vsel %vm5041, %v6149, 0
    %v6261 = vsel %vm5041, %v6150, 0
    %v6264 = vsel %vm5041, %v6151, 0
    %v6267 = vsel %vm5041, %v6152, 0
    %v6270 = vsel %vm5041, %v6153, 0
    %v6273 = vsel %vm5041, %v6154, 0
    %v6276 = vsel %vm5041, %v6155, 0
    %v6279 = vsel %vm5041, %v6156, 0
    %v6282 = vsel %vm5041, %v6157, 0
    %v6285 = vsel %vm5041, %v6158, 0
    %v6288 = vsel %vm5041, %v6159, 0
    %v6291 = vsel %vm5041, %v6160, 0
    %v6294 = vsel %vm5041, %v6161, 0
    %v6297 = vsel %vm5041, %v6162, 0
    %v6300 = vsel %vm5041, %v6163, 0
    %v6303 = vsel %vm5041, %v6164, 0
    %v6306 = vsel %vm5041, %v6165, 0
    %v6309 = vsel %vm5041, %v6166, 0
    %v6312 = vsel %vm5041, %v6167, 0
    %v6315 = vsel %vm5041, %v6168, 0
    %v6318 = vsel %vm5041, %v6169, 0
    %v6321 = vsel %vm5041, %v6170, 0
    %v6324 = vsel %vm5041, %v6171, 0
    %v6327 = vsel %vm5041, %v6172, 0
    %v6330 = vsel %vm5041, %v6173, 0
    %v6333 = vsel %vm5041, %v6174, 0
    %v6336 = vsel %vm5041, %v6175, 0
    %v6339 = vsel %vm5041, %v6176, 0
    %v6342 = vsel %vm5041, %v6177, 0
    %v6345 = vsel %vm5041, %v6178, 0
    %v6348 = vsel %vm5041, %v6179, 0
    %v6351 = vsel %vm5041, %v6180, 0
    %v6354 = vsel %vm5041, %v6181, 0
    %v6357 = vsel %vm5041, %v6182, 0
    %v6360 = vsel %vm5041, %v6183, 0
    %v6363 = vsel %vm5041, %v6184, 0
    %v6366 = vsel %vm5041, %v6185, 0
    %v6369 = vsel %vm5041, %v6186, 0
    %v6372 = vsel %vm5041, %v6187, 0
    %v6375 = vsel %vm5041, %v6188, 0
    %v6378 = vsel %vm5041, %v6189, 0
    %v6381 = vsel %vm5041, %v6190, 0
    %v6384 = vsel %vm5041, %v6191, 0
    %6386 = vmatpush.msra.mxu0 0.0
    %6387 = vmatpush.msra.mxu0 0.0
    %6388 = vmatpush.msra.mxu0 0.0
    %6389 = vmatpush.msra.mxu0 0.0
    %6390 = vmatpush.msra.mxu0 0.0
    %6391 = vmatpush.msra.mxu0 0.0
    %6392 = vmatpush.msra.mxu0 0.0
    %6393 = vmatpush.msra.mxu0 0.0
    %6394 = vmatpush.msra.mxu0 0.0
    %6395 = vmatpush.msra.mxu0 0.0
    %6396 = vmatpush.msra.mxu0 0.0
    %6397 = vmatpush.msra.mxu0 0.0
    %6398 = vmatpush.msra.mxu0 0.0
    %6399 = vmatpush.msra.mxu0 0.0
    %6400 = vmatpush.msra.mxu0 %v6193
    %6401 = vmatpush.msra.mxu0 %v6192
    %6402 = vmatmul.f32.gmra.mxu0 %v6195
    %v6403 = vpop.f32.mrf.mxu0
    %v6404 = vadd.f32 0.0, %v6403
    %6405 = vmatmul.f32.gmra.mxu0 %v6198
    %v6406 = vpop.f32.mrf.mxu0
    %v6407 = vadd.f32 0.0, %v6406
    %6408 = vmatmul.f32.gmra.mxu0 %v6201
    %v6409 = vpop.f32.mrf.mxu0
    %v6410 = vadd.f32 0.0, %v6409
    %6411 = vmatmul.f32.gmra.mxu0 %v6204
    %v6412 = vpop.f32.mrf.mxu0
    %v6413 = vadd.f32 0.0, %v6412
    %6414 = vmatmul.f32.gmra.mxu0 %v6207
    %v6415 = vpop.f32.mrf.mxu0
    %v6416 = vadd.f32 0.0, %v6415
    %6417 = vmatmul.f32.gmra.mxu0 %v6210
    %v6418 = vpop.f32.mrf.mxu0
    %v6419 = vadd.f32 0.0, %v6418
    %6420 = vmatmul.f32.gmra.mxu0 %v6213
    %v6421 = vpop.f32.mrf.mxu0
    %v6422 = vadd.f32 0.0, %v6421
    %6423 = vmatmul.f32.gmra.mxu0 %v6216
    %v6424 = vpop.f32.mrf.mxu0
    %v6425 = vadd.f32 0.0, %v6424
    %6426 = vmatmul.f32.gmra.mxu0 %v6219
    %v6427 = vpop.f32.mrf.mxu0
    %v6428 = vadd.f32 0.0, %v6427
    %6429 = vmatmul.f32.gmra.mxu0 %v6222
    %v6430 = vpop.f32.mrf.mxu0
    %v6431 = vadd.f32 0.0, %v6430
    %6432 = vmatmul.f32.gmra.mxu0 %v6225
    %v6433 = vpop.f32.mrf.mxu0
    %v6434 = vadd.f32 0.0, %v6433
    %6435 = vmatmul.f32.gmra.mxu0 %v6228
    %v6436 = vpop.f32.mrf.mxu0
    %v6437 = vadd.f32 0.0, %v6436
    %6438 = vmatmul.f32.gmra.mxu0 %v6231
    %v6439 = vpop.f32.mrf.mxu0
    %v6440 = vadd.f32 0.0, %v6439
    %6441 = vmatmul.f32.gmra.mxu0 %v6234
    %v6442 = vpop.f32.mrf.mxu0
    %v6443 = vadd.f32 0.0, %v6442
    %6444 = vmatmul.f32.gmra.mxu0 %v6237
    %v6445 = vpop.f32.mrf.mxu0
    %v6446 = vadd.f32 0.0, %v6445
    %6447 = vmatmul.f32.gmra.mxu0 %v6240
    %v6448 = vpop.f32.mrf.mxu0
    %v6449 = vadd.f32 0.0, %v6448
    %6450 = vmatmul.f32.gmra.mxu0 %v6243
    %v6451 = vpop.f32.mrf.mxu0
    %v6452 = vadd.f32 0.0, %v6451
    %6453 = vmatmul.f32.gmra.mxu0 %v6246
    %v6454 = vpop.f32.mrf.mxu0
    %v6455 = vadd.f32 0.0, %v6454
    %6456 = vmatmul.f32.gmra.mxu0 %v6249
    %v6457 = vpop.f32.mrf.mxu0
    %v6458 = vadd.f32 0.0, %v6457
    %6459 = vmatmul.f32.gmra.mxu0 %v6252
    %v6460 = vpop.f32.mrf.mxu0
    %v6461 = vadd.f32 0.0, %v6460
    %6462 = vmatmul.f32.gmra.mxu0 %v6255
    %v6463 = vpop.f32.mrf.mxu0
    %v6464 = vadd.f32 0.0, %v6463
    %6465 = vmatmul.f32.gmra.mxu0 %v6258
    %v6466 = vpop.f32.mrf.mxu0
    %v6467 = vadd.f32 0.0, %v6466
    %6468 = vmatmul.f32.gmra.mxu0 %v6261
    %v6469 = vpop.f32.mrf.mxu0
    %v6470 = vadd.f32 0.0, %v6469
    %6471 = vmatmul.f32.gmra.mxu0 %v6264
    %v6472 = vpop.f32.mrf.mxu0
    %v6473 = vadd.f32 0.0, %v6472
    %6474 = vmatmul.f32.gmra.mxu0 %v6267
    %v6475 = vpop.f32.mrf.mxu0
    %v6476 = vadd.f32 0.0, %v6475
    %6477 = vmatmul.f32.gmra.mxu0 %v6270
    %v6478 = vpop.f32.mrf.mxu0
    %v6479 = vadd.f32 0.0, %v6478
    %6480 = vmatmul.f32.gmra.mxu0 %v6273
    %v6481 = vpop.f32.mrf.mxu0
    %v6482 = vadd.f32 0.0, %v6481
    %6483 = vmatmul.f32.gmra.mxu0 %v6276
    %v6484 = vpop.f32.mrf.mxu0
    %v6485 = vadd.f32 0.0, %v6484
    %6486 = vmatmul.f32.gmra.mxu0 %v6279
    %v6487 = vpop.f32.mrf.mxu0
    %v6488 = vadd.f32 0.0, %v6487
    %6489 = vmatmul.f32.gmra.mxu0 %v6282
    %v6490 = vpop.f32.mrf.mxu0
    %v6491 = vadd.f32 0.0, %v6490
    %6492 = vmatmul.f32.gmra.mxu0 %v6285
    %v6493 = vpop.f32.mrf.mxu0
    %v6494 = vadd.f32 0.0, %v6493
    %6495 = vmatmul.f32.gmra.mxu0 %v6288
    %v6496 = vpop.f32.mrf.mxu0
    %v6497 = vadd.f32 0.0, %v6496
    %6498 = vmatmul.f32.gmra.mxu0 %v6291
    %v6499 = vpop.f32.mrf.mxu0
    %v6500 = vadd.f32 0.0, %v6499
    %6501 = vmatmul.f32.gmra.mxu0 %v6294
    %v6502 = vpop.f32.mrf.mxu0
    %v6503 = vadd.f32 0.0, %v6502
    %6504 = vmatmul.f32.gmra.mxu0 %v6297
    %v6505 = vpop.f32.mrf.mxu0
    %v6506 = vadd.f32 0.0, %v6505
    %6507 = vmatmul.f32.gmra.mxu0 %v6300
    %v6508 = vpop.f32.mrf.mxu0
    %v6509 = vadd.f32 0.0, %v6508
    %6510 = vmatmul.f32.gmra.mxu0 %v6303
    %v6511 = vpop.f32.mrf.mxu0
    %v6512 = vadd.f32 0.0, %v6511
    %6513 = vmatmul.f32.gmra.mxu0 %v6306
    %v6514 = vpop.f32.mrf.mxu0
    %v6515 = vadd.f32 0.0, %v6514
    %6516 = vmatmul.f32.gmra.mxu0 %v6309
    %v6517 = vpop.f32.mrf.mxu0
    %v6518 = vadd.f32 0.0, %v6517
    %6519 = vmatmul.f32.gmra.mxu0 %v6312
    %v6520 = vpop.f32.mrf.mxu0
    %v6521 = vadd.f32 0.0, %v6520
    %6522 = vmatmul.f32.gmra.mxu0 %v6315
    %v6523 = vpop.f32.mrf.mxu0
    %v6524 = vadd.f32 0.0, %v6523
    %6525 = vmatmul.f32.gmra.mxu0 %v6318
    %v6526 = vpop.f32.mrf.mxu0
    %v6527 = vadd.f32 0.0, %v6526
    %6528 = vmatmul.f32.gmra.mxu0 %v6321
    %v6529 = vpop.f32.mrf.mxu0
    %v6530 = vadd.f32 0.0, %v6529
    %6531 = vmatmul.f32.gmra.mxu0 %v6324
    %v6532 = vpop.f32.mrf.mxu0
    %v6533 = vadd.f32 0.0, %v6532
    %6534 = vmatmul.f32.gmra.mxu0 %v6327
    %v6535 = vpop.f32.mrf.mxu0
    %v6536 = vadd.f32 0.0, %v6535
    %6537 = vmatmul.f32.gmra.mxu0 %v6330
    %v6538 = vpop.f32.mrf.mxu0
    %v6539 = vadd.f32 0.0, %v6538
    %6540 = vmatmul.f32.gmra.mxu0 %v6333
    %v6541 = vpop.f32.mrf.mxu0
    %v6542 = vadd.f32 0.0, %v6541
    %6543 = vmatmul.f32.gmra.mxu0 %v6336
    %v6544 = vpop.f32.mrf.mxu0
    %v6545 = vadd.f32 0.0, %v6544
    %6546 = vmatmul.f32.gmra.mxu0 %v6339
    %v6547 = vpop.f32.mrf.mxu0
    %v6548 = vadd.f32 0.0, %v6547
    %6549 = vmatmul.f32.gmra.mxu0 %v6342
    %v6550 = vpop.f32.mrf.mxu0
    %v6551 = vadd.f32 0.0, %v6550
    %6552 = vmatmul.f32.gmra.mxu0 %v6345
    %v6553 = vpop.f32.mrf.mxu0
    %v6554 = vadd.f32 0.0, %v6553
    %6555 = vmatmul.f32.gmra.mxu0 %v6348
    %v6556 = vpop.f32.mrf.mxu0
    %v6557 = vadd.f32 0.0, %v6556
    %6558 = vmatmul.f32.gmra.mxu0 %v6351
    %v6559 = vpop.f32.mrf.mxu0
    %v6560 = vadd.f32 0.0, %v6559
    %6561 = vmatmul.f32.gmra.mxu0 %v6354
    %v6562 = vpop.f32.mrf.mxu0
    %v6563 = vadd.f32 0.0, %v6562
    %6564 = vmatmul.f32.gmra.mxu0 %v6357
    %v6565 = vpop.f32.mrf.mxu0
    %v6566 = vadd.f32 0.0, %v6565
    %6567 = vmatmul.f32.gmra.mxu0 %v6360
    %v6568 = vpop.f32.mrf.mxu0
    %v6569 = vadd.f32 0.0, %v6568
    %6570 = vmatmul.f32.gmra.mxu0 %v6363
    %v6571 = vpop.f32.mrf.mxu0
    %v6572 = vadd.f32 0.0, %v6571
    %6573 = vmatmul.f32.gmra.mxu0 %v6366
    %v6574 = vpop.f32.mrf.mxu0
    %v6575 = vadd.f32 0.0, %v6574
    %6576 = vmatmul.f32.gmra.mxu0 %v6369
    %v6577 = vpop.f32.mrf.mxu0
    %v6578 = vadd.f32 0.0, %v6577
    %6579 = vmatmul.f32.gmra.mxu0 %v6372
    %v6580 = vpop.f32.mrf.mxu0
    %v6581 = vadd.f32 0.0, %v6580
    %6582 = vmatmul.f32.gmra.mxu0 %v6375
    %v6583 = vpop.f32.mrf.mxu0
    %v6584 = vadd.f32 0.0, %v6583
    %6585 = vmatmul.f32.gmra.mxu0 %v6378
    %v6586 = vpop.f32.mrf.mxu0
    %v6587 = vadd.f32 0.0, %v6586
    %6588 = vmatmul.f32.gmra.mxu0 %v6381
    %v6589 = vpop.f32.mrf.mxu0
    %v6590 = vadd.f32 0.0, %v6589
    %6591 = vmatmul.f32.gmra.mxu0 %v6384
    %v6592 = vpop.f32.mrf.mxu0
    %v6593 = vadd.f32 0.0, %v6592
    %6594 = vdwg.mxu0
    %v6595 = vadd.f32 %v5937, %v6404
    %v6596 = vadd.f32 %v5940, %v6407
    %v6597 = vadd.f32 %v5943, %v6410
    %v6598 = vadd.f32 %v5946, %v6413
    %v6599 = vadd.f32 %v5949, %v6416
    %v6600 = vadd.f32 %v5952, %v6419
    %v6601 = vadd.f32 %v5955, %v6422
    %v6602 = vadd.f32 %v5958, %v6425
    %v6603 = vadd.f32 %v5961, %v6428
    %v6604 = vadd.f32 %v5964, %v6431
    %v6605 = vadd.f32 %v5967, %v6434
    %v6606 = vadd.f32 %v5970, %v6437
    %v6607 = vadd.f32 %v5973, %v6440
    %v6608 = vadd.f32 %v5976, %v6443
    %v6609 = vadd.f32 %v5979, %v6446
    %v6610 = vadd.f32 %v5982, %v6449
    %v6611 = vadd.f32 %v5985, %v6452
    %v6612 = vadd.f32 %v5988, %v6455
    %v6613 = vadd.f32 %v5991, %v6458
    %v6614 = vadd.f32 %v5994, %v6461
    %v6615 = vadd.f32 %v5997, %v6464
    %v6616 = vadd.f32 %v6000, %v6467
    %v6617 = vadd.f32 %v6003, %v6470
    %v6618 = vadd.f32 %v6006, %v6473
    %v6619 = vadd.f32 %v6009, %v6476
    %v6620 = vadd.f32 %v6012, %v6479
    %v6621 = vadd.f32 %v6015, %v6482
    %v6622 = vadd.f32 %v6018, %v6485
    %v6623 = vadd.f32 %v6021, %v6488
    %v6624 = vadd.f32 %v6024, %v6491
    %v6625 = vadd.f32 %v6027, %v6494
    %v6626 = vadd.f32 %v6030, %v6497
    %v6627 = vadd.f32 %v6033, %v6500
    %v6628 = vadd.f32 %v6036, %v6503
    %v6629 = vadd.f32 %v6039, %v6506
    %v6630 = vadd.f32 %v6042, %v6509
    %v6631 = vadd.f32 %v6045, %v6512
    %v6632 = vadd.f32 %v6048, %v6515
    %v6633 = vadd.f32 %v6051, %v6518
    %v6634 = vadd.f32 %v6054, %v6521
    %v6635 = vadd.f32 %v6057, %v6524
    %v6636 = vadd.f32 %v6060, %v6527
    %v6637 = vadd.f32 %v6063, %v6530
    %v6638 = vadd.f32 %v6066, %v6533
    %v6639 = vadd.f32 %v6069, %v6536
    %v6640 = vadd.f32 %v6072, %v6539
    %v6641 = vadd.f32 %v6075, %v6542
    %v6642 = vadd.f32 %v6078, %v6545
    %v6643 = vadd.f32 %v6081, %v6548
    %v6644 = vadd.f32 %v6084, %v6551
    %v6645 = vadd.f32 %v6087, %v6554
    %v6646 = vadd.f32 %v6090, %v6557
    %v6647 = vadd.f32 %v6093, %v6560
    %v6648 = vadd.f32 %v6096, %v6563
    %v6649 = vadd.f32 %v6099, %v6566
    %v6650 = vadd.f32 %v6102, %v6569
    %v6651 = vadd.f32 %v6105, %v6572
    %v6652 = vadd.f32 %v6108, %v6575
    %v6653 = vadd.f32 %v6111, %v6578
    %v6654 = vadd.f32 %v6114, %v6581
    %v6655 = vadd.f32 %v6117, %v6584
    %v6656 = vadd.f32 %v6120, %v6587
    %v6657 = vadd.f32 %v6123, %v6590
    %v6658 = vadd.f32 %v6126, %v6593
    %v6659 = vld [vmem:[%s5129] sm:$0xff]
    %v6660 = vld [vmem:[%s5129 + $0x8] sm:$0xff]
    %v6661 = vld [vmem:[%s5129 + $0x18] sm:$0xff]
    %v6662 = vld [vmem:[%s5129 + $0x20] sm:$0xff]
    %v6663 = vld [vmem:[%s5129 + $0x30] sm:$0xff]
    %v6664 = vld [vmem:[%s5129 + $0x38] sm:$0xff]
    %v6665 = vld [vmem:[%s5129 + $0x48] sm:$0xff]
    %v6666 = vld [vmem:[%s5129 + $0x50] sm:$0xff]
    %v6667 = vld [vmem:[%s5129 + $0x60] sm:$0xff]
    %v6668 = vld [vmem:[%s5129 + $0x68] sm:$0xff]
    %v6669 = vld [vmem:[%s5129 + $0x78] sm:$0xff]
    %v6670 = vld [vmem:[%s5129 + $0x80] sm:$0xff]
    %v6671 = vld [vmem:[%s5129 + $0x90] sm:$0xff]
    %v6672 = vld [vmem:[%s5129 + $0x98] sm:$0xff]
    %v6673 = vld [vmem:[%s5129 + $0xa8] sm:$0xff]
    %v6674 = vld [vmem:[%s5129 + $0xb0] sm:$0xff]
    %v6675 = vld [vmem:[%s5129 + $0xc0] sm:$0xff]
    %v6676 = vld [vmem:[%s5129 + $0xc8] sm:$0xff]
    %v6677 = vld [vmem:[%s5129 + $0xd8] sm:$0xff]
    %v6678 = vld [vmem:[%s5129 + $0xe0] sm:$0xff]
    %v6679 = vld [vmem:[%s5129 + $0xf0] sm:$0xff]
    %v6680 = vld [vmem:[%s5129 + $0xf8] sm:$0xff]
    %v6681 = vld [vmem:[%s5129 + $0x108] sm:$0xff]
    %v6682 = vld [vmem:[%s5129 + $0x110] sm:$0xff]
    %v6683 = vld [vmem:[%s5129 + $0x120] sm:$0xff]
    %v6684 = vld [vmem:[%s5129 + $0x128] sm:$0xff]
    %v6685 = vld [vmem:[%s5129 + $0x138] sm:$0xff]
    %v6686 = vld [vmem:[%s5129 + $0x140] sm:$0xff]
    %v6687 = vld [vmem:[%s5129 + $0x150] sm:$0xff]
    %v6688 = vld [vmem:[%s5129 + $0x158] sm:$0xff]
    %v6689 = vld [vmem:[%s5129 + $0x168] sm:$0xff]
    %v6690 = vld [vmem:[%s5129 + $0x170] sm:$0xff]
    %v6691 = vld [vmem:[%s5129 + $0x1b0] sm:$0xff]
    %v6692 = vld [vmem:[%s5129 + $0x1b8] sm:$0xff]
    %v6693 = vld [vmem:[%s5129 + $0x1c8] sm:$0xff]
    %v6694 = vld [vmem:[%s5129 + $0x1d0] sm:$0xff]
    %v6695 = vld [vmem:[%s5129 + $0x1e0] sm:$0xff]
    %v6696 = vld [vmem:[%s5129 + $0x1e8] sm:$0xff]
    %v6697 = vld [vmem:[%s5129 + $0x1f8] sm:$0xff]
    %v6698 = vld [vmem:[%s5129 + $0x200] sm:$0xff]
    %v6699 = vld [vmem:[%s5129 + $0x210] sm:$0xff]
    %v6700 = vld [vmem:[%s5129 + $0x218] sm:$0xff]
    %v6701 = vld [vmem:[%s5129 + $0x228] sm:$0xff]
    %v6702 = vld [vmem:[%s5129 + $0x230] sm:$0xff]
    %v6703 = vld [vmem:[%s5129 + $0x240] sm:$0xff]
    %v6704 = vld [vmem:[%s5129 + $0x248] sm:$0xff]
    %v6705 = vld [vmem:[%s5129 + $0x258] sm:$0xff]
    %v6706 = vld [vmem:[%s5129 + $0x260] sm:$0xff]
    %v6707 = vld [vmem:[%s5129 + $0x270] sm:$0xff]
    %v6708 = vld [vmem:[%s5129 + $0x278] sm:$0xff]
    %v6709 = vld [vmem:[%s5129 + $0x288] sm:$0xff]
    %v6710 = vld [vmem:[%s5129 + $0x290] sm:$0xff]
    %v6711 = vld [vmem:[%s5129 + $0x2a0] sm:$0xff]
    %v6712 = vld [vmem:[%s5129 + $0x2a8] sm:$0xff]
    %v6713 = vld [vmem:[%s5129 + $0x2b8] sm:$0xff]
    %v6714 = vld [vmem:[%s5129 + $0x2c0] sm:$0xff]
    %v6715 = vld [vmem:[%s5129 + $0x2d0] sm:$0xff]
    %v6716 = vld [vmem:[%s5129 + $0x2d8] sm:$0xff]
    %v6717 = vld [vmem:[%s5129 + $0x2e8] sm:$0xff]
    %v6718 = vld [vmem:[%s5129 + $0x2f0] sm:$0xff]
    %v6719 = vld [vmem:[%s5129 + $0x300] sm:$0xff]
    %v6720 = vld [vmem:[%s5129 + $0x308] sm:$0xff]
    %v6721 = vld [vmem:[%s5129 + $0x318] sm:$0xff]
    %v6722 = vld [vmem:[%s5129 + $0x320] sm:$0xff]
    %v6723 = vld [vmem:[%s3 + $0x30] sm:$0xff]
    %v6724 = vld [vmem:[%s3 + $0x38] sm:$0xff]
    %v6726 = vsel %vm5041, %v6659, 0
    %v6729 = vsel %vm5041, %v6660, 0
    %v6732 = vsel %vm5041, %v6661, 0
    %v6735 = vsel %vm5041, %v6662, 0
    %v6738 = vsel %vm5041, %v6663, 0
    %v6741 = vsel %vm5041, %v6664, 0
    %v6744 = vsel %vm5041, %v6665, 0
    %v6747 = vsel %vm5041, %v6666, 0
    %v6750 = vsel %vm5041, %v6667, 0
    %v6753 = vsel %vm5041, %v6668, 0
    %v6756 = vsel %vm5041, %v6669, 0
    %v6759 = vsel %vm5041, %v6670, 0
    %v6762 = vsel %vm5041, %v6671, 0
    %v6765 = vsel %vm5041, %v6672, 0
    %v6768 = vsel %vm5041, %v6673, 0
    %v6771 = vsel %vm5041, %v6674, 0
    %v6774 = vsel %vm5041, %v6675, 0
    %v6777 = vsel %vm5041, %v6676, 0
    %v6780 = vsel %vm5041, %v6677, 0
    %v6783 = vsel %vm5041, %v6678, 0
    %v6786 = vsel %vm5041, %v6679, 0
    %v6789 = vsel %vm5041, %v6680, 0
    %v6792 = vsel %vm5041, %v6681, 0
    %v6795 = vsel %vm5041, %v6682, 0
    %v6798 = vsel %vm5041, %v6683, 0
    %v6801 = vsel %vm5041, %v6684, 0
    %v6804 = vsel %vm5041, %v6685, 0
    %v6807 = vsel %vm5041, %v6686, 0
    %v6810 = vsel %vm5041, %v6687, 0
    %v6813 = vsel %vm5041, %v6688, 0
    %v6816 = vsel %vm5041, %v6689, 0
    %v6819 = vsel %vm5041, %v6690, 0
    %v6822 = vsel %vm5041, %v6691, 0
    %v6825 = vsel %vm5041, %v6692, 0
    %v6828 = vsel %vm5041, %v6693, 0
    %v6831 = vsel %vm5041, %v6694, 0
    %v6834 = vsel %vm5041, %v6695, 0
    %v6837 = vsel %vm5041, %v6696, 0
    %v6840 = vsel %vm5041, %v6697, 0
    %v6843 = vsel %vm5041, %v6698, 0
    %v6846 = vsel %vm5041, %v6699, 0
    %v6849 = vsel %vm5041, %v6700, 0
    %v6852 = vsel %vm5041, %v6701, 0
    %v6855 = vsel %vm5041, %v6702, 0
    %v6858 = vsel %vm5041, %v6703, 0
    %v6861 = vsel %vm5041, %v6704, 0
    %v6864 = vsel %vm5041, %v6705, 0
    %v6867 = vsel %vm5041, %v6706, 0
    %v6870 = vsel %vm5041, %v6707, 0
    %v6873 = vsel %vm5041, %v6708, 0
    %v6876 = vsel %vm5041, %v6709, 0
    %v6879 = vsel %vm5041, %v6710, 0
    %v6882 = vsel %vm5041, %v6711, 0
    %v6885 = vsel %vm5041, %v6712, 0
    %v6888 = vsel %vm5041, %v6713, 0
    %v6891 = vsel %vm5041, %v6714, 0
    %v6894 = vsel %vm5041, %v6715, 0
    %v6897 = vsel %vm5041, %v6716, 0
    %v6900 = vsel %vm5041, %v6717, 0
    %v6903 = vsel %vm5041, %v6718, 0
    %v6906 = vsel %vm5041, %v6719, 0
    %v6909 = vsel %vm5041, %v6720, 0
    %v6912 = vsel %vm5041, %v6721, 0
    %v6915 = vsel %vm5041, %v6722, 0
    %6917 = vmatpush.msra.mxu0 0.0
    %6918 = vmatpush.msra.mxu0 0.0
    %6919 = vmatpush.msra.mxu0 0.0
    %6920 = vmatpush.msra.mxu0 0.0
    %6921 = vmatpush.msra.mxu0 0.0
    %6922 = vmatpush.msra.mxu0 0.0
    %6923 = vmatpush.msra.mxu0 0.0
    %6924 = vmatpush.msra.mxu0 0.0
    %6925 = vmatpush.msra.mxu0 0.0
    %6926 = vmatpush.msra.mxu0 0.0
    %6927 = vmatpush.msra.mxu0 0.0
    %6928 = vmatpush.msra.mxu0 0.0
    %6929 = vmatpush.msra.mxu0 0.0
    %6930 = vmatpush.msra.mxu0 0.0
    %6931 = vmatpush.msra.mxu0 %v6724
    %6932 = vmatpush.msra.mxu0 %v6723
    %6933 = vmatmul.f32.gmra.mxu0 %v6726
    %v6934 = vpop.f32.mrf.mxu0
    %v6935 = vadd.f32 0.0, %v6934
    %6936 = vmatmul.f32.gmra.mxu0 %v6729
    %v6937 = vpop.f32.mrf.mxu0
    %v6938 = vadd.f32 0.0, %v6937
    %6939 = vmatmul.f32.gmra.mxu0 %v6732
    %v6940 = vpop.f32.mrf.mxu0
    %v6941 = vadd.f32 0.0, %v6940
    %6942 = vmatmul.f32.gmra.mxu0 %v6735
    %v6943 = vpop.f32.mrf.mxu0
    %v6944 = vadd.f32 0.0, %v6943
    %6945 = vmatmul.f32.gmra.mxu0 %v6738
    %v6946 = vpop.f32.mrf.mxu0
    %v6947 = vadd.f32 0.0, %v6946
    %6948 = vmatmul.f32.gmra.mxu0 %v6741
    %v6949 = vpop.f32.mrf.mxu0
    %v6950 = vadd.f32 0.0, %v6949
    %6951 = vmatmul.f32.gmra.mxu0 %v6744
    %v6952 = vpop.f32.mrf.mxu0
    %v6953 = vadd.f32 0.0, %v6952
    %6954 = vmatmul.f32.gmra.mxu0 %v6747
    %v6955 = vpop.f32.mrf.mxu0
    %v6956 = vadd.f32 0.0, %v6955
    %6957 = vmatmul.f32.gmra.mxu0 %v6750
    %v6958 = vpop.f32.mrf.mxu0
    %v6959 = vadd.f32 0.0, %v6958
    %6960 = vmatmul.f32.gmra.mxu0 %v6753
    %v6961 = vpop.f32.mrf.mxu0
    %v6962 = vadd.f32 0.0, %v6961
    %6963 = vmatmul.f32.gmra.mxu0 %v6756
    %v6964 = vpop.f32.mrf.mxu0
    %v6965 = vadd.f32 0.0, %v6964
    %6966 = vmatmul.f32.gmra.mxu0 %v6759
    %v6967 = vpop.f32.mrf.mxu0
    %v6968 = vadd.f32 0.0, %v6967
    %6969 = vmatmul.f32.gmra.mxu0 %v6762
    %v6970 = vpop.f32.mrf.mxu0
    %v6971 = vadd.f32 0.0, %v6970
    %6972 = vmatmul.f32.gmra.mxu0 %v6765
    %v6973 = vpop.f32.mrf.mxu0
    %v6974 = vadd.f32 0.0, %v6973
    %6975 = vmatmul.f32.gmra.mxu0 %v6768
    %v6976 = vpop.f32.mrf.mxu0
    %v6977 = vadd.f32 0.0, %v6976
    %6978 = vmatmul.f32.gmra.mxu0 %v6771
    %v6979 = vpop.f32.mrf.mxu0
    %v6980 = vadd.f32 0.0, %v6979
    %6981 = vmatmul.f32.gmra.mxu0 %v6774
    %v6982 = vpop.f32.mrf.mxu0
    %v6983 = vadd.f32 0.0, %v6982
    %6984 = vmatmul.f32.gmra.mxu0 %v6777
    %v6985 = vpop.f32.mrf.mxu0
    %v6986 = vadd.f32 0.0, %v6985
    %6987 = vmatmul.f32.gmra.mxu0 %v6780
    %v6988 = vpop.f32.mrf.mxu0
    %v6989 = vadd.f32 0.0, %v6988
    %6990 = vmatmul.f32.gmra.mxu0 %v6783
    %v6991 = vpop.f32.mrf.mxu0
    %v6992 = vadd.f32 0.0, %v6991
    %6993 = vmatmul.f32.gmra.mxu0 %v6786
    %v6994 = vpop.f32.mrf.mxu0
    %v6995 = vadd.f32 0.0, %v6994
    %6996 = vmatmul.f32.gmra.mxu0 %v6789
    %v6997 = vpop.f32.mrf.mxu0
    %v6998 = vadd.f32 0.0, %v6997
    %6999 = vmatmul.f32.gmra.mxu0 %v6792
    %v7000 = vpop.f32.mrf.mxu0
    %v7001 = vadd.f32 0.0, %v7000
    %7002 = vmatmul.f32.gmra.mxu0 %v6795
    %v7003 = vpop.f32.mrf.mxu0
    %v7004 = vadd.f32 0.0, %v7003
    %7005 = vmatmul.f32.gmra.mxu0 %v6798
    %v7006 = vpop.f32.mrf.mxu0
    %v7007 = vadd.f32 0.0, %v7006
    %7008 = vmatmul.f32.gmra.mxu0 %v6801
    %v7009 = vpop.f32.mrf.mxu0
    %v7010 = vadd.f32 0.0, %v7009
    %7011 = vmatmul.f32.gmra.mxu0 %v6804
    %v7012 = vpop.f32.mrf.mxu0
    %v7013 = vadd.f32 0.0, %v7012
    %7014 = vmatmul.f32.gmra.mxu0 %v6807
    %v7015 = vpop.f32.mrf.mxu0
    %v7016 = vadd.f32 0.0, %v7015
    %7017 = vmatmul.f32.gmra.mxu0 %v6810
    %v7018 = vpop.f32.mrf.mxu0
    %v7019 = vadd.f32 0.0, %v7018
    %7020 = vmatmul.f32.gmra.mxu0 %v6813
    %v7021 = vpop.f32.mrf.mxu0
    %v7022 = vadd.f32 0.0, %v7021
    %7023 = vmatmul.f32.gmra.mxu0 %v6816
    %v7024 = vpop.f32.mrf.mxu0
    %v7025 = vadd.f32 0.0, %v7024
    %7026 = vmatmul.f32.gmra.mxu0 %v6819
    %v7027 = vpop.f32.mrf.mxu0
    %v7028 = vadd.f32 0.0, %v7027
    %7029 = vmatmul.f32.gmra.mxu0 %v6822
    %v7030 = vpop.f32.mrf.mxu0
    %v7031 = vadd.f32 0.0, %v7030
    %7032 = vmatmul.f32.gmra.mxu0 %v6825
    %v7033 = vpop.f32.mrf.mxu0
    %v7034 = vadd.f32 0.0, %v7033
    %7035 = vmatmul.f32.gmra.mxu0 %v6828
    %v7036 = vpop.f32.mrf.mxu0
    %v7037 = vadd.f32 0.0, %v7036
    %7038 = vmatmul.f32.gmra.mxu0 %v6831
    %v7039 = vpop.f32.mrf.mxu0
    %v7040 = vadd.f32 0.0, %v7039
    %7041 = vmatmul.f32.gmra.mxu0 %v6834
    %v7042 = vpop.f32.mrf.mxu0
    %v7043 = vadd.f32 0.0, %v7042
    %7044 = vmatmul.f32.gmra.mxu0 %v6837
    %v7045 = vpop.f32.mrf.mxu0
    %v7046 = vadd.f32 0.0, %v7045
    %7047 = vmatmul.f32.gmra.mxu0 %v6840
    %v7048 = vpop.f32.mrf.mxu0
    %v7049 = vadd.f32 0.0, %v7048
    %7050 = vmatmul.f32.gmra.mxu0 %v6843
    %v7051 = vpop.f32.mrf.mxu0
    %v7052 = vadd.f32 0.0, %v7051
    %7053 = vmatmul.f32.gmra.mxu0 %v6846
    %v7054 = vpop.f32.mrf.mxu0
    %v7055 = vadd.f32 0.0, %v7054
    %7056 = vmatmul.f32.gmra.mxu0 %v6849
    %v7057 = vpop.f32.mrf.mxu0
    %v7058 = vadd.f32 0.0, %v7057
    %7059 = vmatmul.f32.gmra.mxu0 %v6852
    %v7060 = vpop.f32.mrf.mxu0
    %v7061 = vadd.f32 0.0, %v7060
    %7062 = vmatmul.f32.gmra.mxu0 %v6855
    %v7063 = vpop.f32.mrf.mxu0
    %v7064 = vadd.f32 0.0, %v7063
    %7065 = vmatmul.f32.gmra.mxu0 %v6858
    %v7066 = vpop.f32.mrf.mxu0
    %v7067 = vadd.f32 0.0, %v7066
    %7068 = vmatmul.f32.gmra.mxu0 %v6861
    %v7069 = vpop.f32.mrf.mxu0
    %v7070 = vadd.f32 0.0, %v7069
    %7071 = vmatmul.f32.gmra.mxu0 %v6864
    %v7072 = vpop.f32.mrf.mxu0
    %v7073 = vadd.f32 0.0, %v7072
    %7074 = vmatmul.f32.gmra.mxu0 %v6867
    %v7075 = vpop.f32.mrf.mxu0
    %v7076 = vadd.f32 0.0, %v7075
    %7077 = vmatmul.f32.gmra.mxu0 %v6870
    %v7078 = vpop.f32.mrf.mxu0
    %v7079 = vadd.f32 0.0, %v7078
    %7080 = vmatmul.f32.gmra.mxu0 %v6873
    %v7081 = vpop.f32.mrf.mxu0
    %v7082 = vadd.f32 0.0, %v7081
    %7083 = vmatmul.f32.gmra.mxu0 %v6876
    %v7084 = vpop.f32.mrf.mxu0
    %v7085 = vadd.f32 0.0, %v7084
    %7086 = vmatmul.f32.gmra.mxu0 %v6879
    %v7087 = vpop.f32.mrf.mxu0
    %v7088 = vadd.f32 0.0, %v7087
    %7089 = vmatmul.f32.gmra.mxu0 %v6882
    %v7090 = vpop.f32.mrf.mxu0
    %v7091 = vadd.f32 0.0, %v7090
    %7092 = vmatmul.f32.gmra.mxu0 %v6885
    %v7093 = vpop.f32.mrf.mxu0
    %v7094 = vadd.f32 0.0, %v7093
    %7095 = vmatmul.f32.gmra.mxu0 %v6888
    %v7096 = vpop.f32.mrf.mxu0
    %v7097 = vadd.f32 0.0, %v7096
    %7098 = vmatmul.f32.gmra.mxu0 %v6891
    %v7099 = vpop.f32.mrf.mxu0
    %v7100 = vadd.f32 0.0, %v7099
    %7101 = vmatmul.f32.gmra.mxu0 %v6894
    %v7102 = vpop.f32.mrf.mxu0
    %v7103 = vadd.f32 0.0, %v7102
    %7104 = vmatmul.f32.gmra.mxu0 %v6897
    %v7105 = vpop.f32.mrf.mxu0
    %v7106 = vadd.f32 0.0, %v7105
    %7107 = vmatmul.f32.gmra.mxu0 %v6900
    %v7108 = vpop.f32.mrf.mxu0
    %v7109 = vadd.f32 0.0, %v7108
    %7110 = vmatmul.f32.gmra.mxu0 %v6903
    %v7111 = vpop.f32.mrf.mxu0
    %v7112 = vadd.f32 0.0, %v7111
    %7113 = vmatmul.f32.gmra.mxu0 %v6906
    %v7114 = vpop.f32.mrf.mxu0
    %v7115 = vadd.f32 0.0, %v7114
    %7116 = vmatmul.f32.gmra.mxu0 %v6909
    %v7117 = vpop.f32.mrf.mxu0
    %v7118 = vadd.f32 0.0, %v7117
    %7119 = vmatmul.f32.gmra.mxu0 %v6912
    %v7120 = vpop.f32.mrf.mxu0
    %v7121 = vadd.f32 0.0, %v7120
    %7122 = vmatmul.f32.gmra.mxu0 %v6915
    %v7123 = vpop.f32.mrf.mxu0
    %v7124 = vadd.f32 0.0, %v7123
    %7125 = vdwg.mxu0
    %v7126 = vadd.f32 %v6595, %v6935
    %v7127 = vadd.f32 %v6596, %v6938
    %v7128 = vadd.f32 %v6597, %v6941
    %v7129 = vadd.f32 %v6598, %v6944
    %v7130 = vadd.f32 %v6599, %v6947
    %v7131 = vadd.f32 %v6600, %v6950
    %v7132 = vadd.f32 %v6601, %v6953
    %v7133 = vadd.f32 %v6602, %v6956
    %v7134 = vadd.f32 %v6603, %v6959
    %v7135 = vadd.f32 %v6604, %v6962
    %v7136 = vadd.f32 %v6605, %v6965
    %v7137 = vadd.f32 %v6606, %v6968
    %v7138 = vadd.f32 %v6607, %v6971
    %v7139 = vadd.f32 %v6608, %v6974
    %v7140 = vadd.f32 %v6609, %v6977
    %v7141 = vadd.f32 %v6610, %v6980
    %v7142 = vadd.f32 %v6611, %v6983
    %v7143 = vadd.f32 %v6612, %v6986
    %v7144 = vadd.f32 %v6613, %v6989
    %v7145 = vadd.f32 %v6614, %v6992
    %v7146 = vadd.f32 %v6615, %v6995
    %v7147 = vadd.f32 %v6616, %v6998
    %v7148 = vadd.f32 %v6617, %v7001
    %v7149 = vadd.f32 %v6618, %v7004
    %v7150 = vadd.f32 %v6619, %v7007
    %v7151 = vadd.f32 %v6620, %v7010
    %v7152 = vadd.f32 %v6621, %v7013
    %v7153 = vadd.f32 %v6622, %v7016
    %v7154 = vadd.f32 %v6623, %v7019
    %v7155 = vadd.f32 %v6624, %v7022
    %v7156 = vadd.f32 %v6625, %v7025
    %v7157 = vadd.f32 %v6626, %v7028
    %v7158 = vadd.f32 %v6627, %v7031
    %v7159 = vadd.f32 %v6628, %v7034
    %v7160 = vadd.f32 %v6629, %v7037
    %v7161 = vadd.f32 %v6630, %v7040
    %v7162 = vadd.f32 %v6631, %v7043
    %v7163 = vadd.f32 %v6632, %v7046
    %v7164 = vadd.f32 %v6633, %v7049
    %v7165 = vadd.f32 %v6634, %v7052
    %v7166 = vadd.f32 %v6635, %v7055
    %v7167 = vadd.f32 %v6636, %v7058
    %v7168 = vadd.f32 %v6637, %v7061
    %v7169 = vadd.f32 %v6638, %v7064
    %v7170 = vadd.f32 %v6639, %v7067
    %v7171 = vadd.f32 %v6640, %v7070
    %v7172 = vadd.f32 %v6641, %v7073
    %v7173 = vadd.f32 %v6642, %v7076
    %v7174 = vadd.f32 %v6643, %v7079
    %v7175 = vadd.f32 %v6644, %v7082
    %v7176 = vadd.f32 %v6645, %v7085
    %v7177 = vadd.f32 %v6646, %v7088
    %v7178 = vadd.f32 %v6647, %v7091
    %v7179 = vadd.f32 %v6648, %v7094
    %v7180 = vadd.f32 %v6649, %v7097
    %v7181 = vadd.f32 %v6650, %v7100
    %v7182 = vadd.f32 %v6651, %v7103
    %v7183 = vadd.f32 %v6652, %v7106
    %v7184 = vadd.f32 %v6653, %v7109
    %v7185 = vadd.f32 %v6654, %v7112
    %v7186 = vadd.f32 %v6655, %v7115
    %v7187 = vadd.f32 %v6656, %v7118
    %v7188 = vadd.f32 %v6657, %v7121
    %v7189 = vadd.f32 %v6658, %v7124
    %v7190 = vld [vmem:[%s5129 + $0x1] sm:$0xff]
    %v7191 = vld [vmem:[%s5129 + $0x9] sm:$0xff]
    %v7192 = vld [vmem:[%s5129 + $0x19] sm:$0xff]
    %v7193 = vld [vmem:[%s5129 + $0x21] sm:$0xff]
    %v7194 = vld [vmem:[%s5129 + $0x31] sm:$0xff]
    %v7195 = vld [vmem:[%s5129 + $0x39] sm:$0xff]
    %v7196 = vld [vmem:[%s5129 + $0x49] sm:$0xff]
    %v7197 = vld [vmem:[%s5129 + $0x51] sm:$0xff]
    %v7198 = vld [vmem:[%s5129 + $0x61] sm:$0xff]
    %v7199 = vld [vmem:[%s5129 + $0x69] sm:$0xff]
    %v7200 = vld [vmem:[%s5129 + $0x79] sm:$0xff]
    %v7201 = vld [vmem:[%s5129 + $0x81] sm:$0xff]
    %v7202 = vld [vmem:[%s5129 + $0x91] sm:$0xff]
    %v7203 = vld [vmem:[%s5129 + $0x99] sm:$0xff]
    %v7204 = vld [vmem:[%s5129 + $0xa9] sm:$0xff]
    %v7205 = vld [vmem:[%s5129 + $0xb1] sm:$0xff]
    %v7206 = vld [vmem:[%s5129 + $0xc1] sm:$0xff]
    %v7207 = vld [vmem:[%s5129 + $0xc9] sm:$0xff]
    %v7208 = vld [vmem:[%s5129 + $0xd9] sm:$0xff]
    %v7209 = vld [vmem:[%s5129 + $0xe1] sm:$0xff]
    %v7210 = vld [vmem:[%s5129 + $0xf1] sm:$0xff]
    %v7211 = vld [vmem:[%s5129 + $0xf9] sm:$0xff]
    %v7212 = vld [vmem:[%s5129 + $0x109] sm:$0xff]
    %v7213 = vld [vmem:[%s5129 + $0x111] sm:$0xff]
    %v7214 = vld [vmem:[%s5129 + $0x121] sm:$0xff]
    %v7215 = vld [vmem:[%s5129 + $0x129] sm:$0xff]
    %v7216 = vld [vmem:[%s5129 + $0x139] sm:$0xff]
    %v7217 = vld [vmem:[%s5129 + $0x141] sm:$0xff]
    %v7218 = vld [vmem:[%s5129 + $0x151] sm:$0xff]
    %v7219 = vld [vmem:[%s5129 + $0x159] sm:$0xff]
    %v7220 = vld [vmem:[%s5129 + $0x169] sm:$0xff]
    %v7221 = vld [vmem:[%s5129 + $0x171] sm:$0xff]
    %v7222 = vld [vmem:[%s5129 + $0x1b1] sm:$0xff]
    %v7223 = vld [vmem:[%s5129 + $0x1b9] sm:$0xff]
    %v7224 = vld [vmem:[%s5129 + $0x1c9] sm:$0xff]
    %v7225 = vld [vmem:[%s5129 + $0x1d1] sm:$0xff]
    %v7226 = vld [vmem:[%s5129 + $0x1e1] sm:$0xff]
    %v7227 = vld [vmem:[%s5129 + $0x1e9] sm:$0xff]
    %v7228 = vld [vmem:[%s5129 + $0x1f9] sm:$0xff]
    %v7229 = vld [vmem:[%s5129 + $0x201] sm:$0xff]
    %v7230 = vld [vmem:[%s5129 + $0x211] sm:$0xff]
    %v7231 = vld [vmem:[%s5129 + $0x219] sm:$0xff]
    %v7232 = vld [vmem:[%s5129 + $0x229] sm:$0xff]
    %v7233 = vld [vmem:[%s5129 + $0x231] sm:$0xff]
    %v7234 = vld [vmem:[%s5129 + $0x241] sm:$0xff]
    %v7235 = vld [vmem:[%s5129 + $0x249] sm:$0xff]
    %v7236 = vld [vmem:[%s5129 + $0x259] sm:$0xff]
    %v7237 = vld [vmem:[%s5129 + $0x261] sm:$0xff]
    %v7238 = vld [vmem:[%s5129 + $0x271] sm:$0xff]
    %v7239 = vld [vmem:[%s5129 + $0x279] sm:$0xff]
    %v7240 = vld [vmem:[%s5129 + $0x289] sm:$0xff]
    %v7241 = vld [vmem:[%s5129 + $0x291] sm:$0xff]
    %v7242 = vld [vmem:[%s5129 + $0x2a1] sm:$0xff]
    %v7243 = vld [vmem:[%s5129 + $0x2a9] sm:$0xff]
    %v7244 = vld [vmem:[%s5129 + $0x2b9] sm:$0xff]
    %v7245 = vld [vmem:[%s5129 + $0x2c1] sm:$0xff]
    %v7246 = vld [vmem:[%s5129 + $0x2d1] sm:$0xff]
    %v7247 = vld [vmem:[%s5129 + $0x2d9] sm:$0xff]
    %v7248 = vld [vmem:[%s5129 + $0x2e9] sm:$0xff]
    %v7249 = vld [vmem:[%s5129 + $0x2f1] sm:$0xff]
    %v7250 = vld [vmem:[%s5129 + $0x301] sm:$0xff]
    %v7251 = vld [vmem:[%s5129 + $0x309] sm:$0xff]
    %v7252 = vld [vmem:[%s5129 + $0x319] sm:$0xff]
    %v7253 = vld [vmem:[%s5129 + $0x321] sm:$0xff]
    %v7254 = vld [vmem:[%s3 + $0x40] sm:$0xff]
    %v7255 = vld [vmem:[%s3 + $0x48] sm:$0xff]
    %v7257 = vsel %vm5041, %v7190, 0
    %v7260 = vsel %vm5041, %v7191, 0
    %v7263 = vsel %vm5041, %v7192, 0
    %v7266 = vsel %vm5041, %v7193, 0
    %v7269 = vsel %vm5041, %v7194, 0
    %v7272 = vsel %vm5041, %v7195, 0
    %v7275 = vsel %vm5041, %v7196, 0
    %v7278 = vsel %vm5041, %v7197, 0
    %v7281 = vsel %vm5041, %v7198, 0
    %v7284 = vsel %vm5041, %v7199, 0
    %v7287 = vsel %vm5041, %v7200, 0
    %v7290 = vsel %vm5041, %v7201, 0
    %v7293 = vsel %vm5041, %v7202, 0
    %v7296 = vsel %vm5041, %v7203, 0
    %v7299 = vsel %vm5041, %v7204, 0
    %v7302 = vsel %vm5041, %v7205, 0
    %v7305 = vsel %vm5041, %v7206, 0
    %v7308 = vsel %vm5041, %v7207, 0
    %v7311 = vsel %vm5041, %v7208, 0
    %v7314 = vsel %vm5041, %v7209, 0
    %v7317 = vsel %vm5041, %v7210, 0
    %v7320 = vsel %vm5041, %v7211, 0
    %v7323 = vsel %vm5041, %v7212, 0
    %v7326 = vsel %vm5041, %v7213, 0
    %v7329 = vsel %vm5041, %v7214, 0
    %v7332 = vsel %vm5041, %v7215, 0
    %v7335 = vsel %vm5041, %v7216, 0
    %v7338 = vsel %vm5041, %v7217, 0
    %v7341 = vsel %vm5041, %v7218, 0
    %v7344 = vsel %vm5041, %v7219, 0
    %v7347 = vsel %vm5041, %v7220, 0
    %v7350 = vsel %vm5041, %v7221, 0
    %v7353 = vsel %vm5041, %v7222, 0
    %v7356 = vsel %vm5041, %v7223, 0
    %v7359 = vsel %vm5041, %v7224, 0
    %v7362 = vsel %vm5041, %v7225, 0
    %v7365 = vsel %vm5041, %v7226, 0
    %v7368 = vsel %vm5041, %v7227, 0
    %v7371 = vsel %vm5041, %v7228, 0
    %v7374 = vsel %vm5041, %v7229, 0
    %v7377 = vsel %vm5041, %v7230, 0
    %v7380 = vsel %vm5041, %v7231, 0
    %v7383 = vsel %vm5041, %v7232, 0
    %v7386 = vsel %vm5041, %v7233, 0
    %v7389 = vsel %vm5041, %v7234, 0
    %v7392 = vsel %vm5041, %v7235, 0
    %v7395 = vsel %vm5041, %v7236, 0
    %v7398 = vsel %vm5041, %v7237, 0
    %v7401 = vsel %vm5041, %v7238, 0
    %v7404 = vsel %vm5041, %v7239, 0
    %v7407 = vsel %vm5041, %v7240, 0
    %v7410 = vsel %vm5041, %v7241, 0
    %v7413 = vsel %vm5041, %v7242, 0
    %v7416 = vsel %vm5041, %v7243, 0
    %v7419 = vsel %vm5041, %v7244, 0
    %v7422 = vsel %vm5041, %v7245, 0
    %v7425 = vsel %vm5041, %v7246, 0
    %v7428 = vsel %vm5041, %v7247, 0
    %v7431 = vsel %vm5041, %v7248, 0
    %v7434 = vsel %vm5041, %v7249, 0
    %v7437 = vsel %vm5041, %v7250, 0
    %v7440 = vsel %vm5041, %v7251, 0
    %v7443 = vsel %vm5041, %v7252, 0
    %v7446 = vsel %vm5041, %v7253, 0
    %7448 = vmatpush.msra.mxu0 0.0
    %7449 = vmatpush.msra.mxu0 0.0
    %7450 = vmatpush.msra.mxu0 0.0
    %7451 = vmatpush.msra.mxu0 0.0
    %7452 = vmatpush.msra.mxu0 0.0
    %7453 = vmatpush.msra.mxu0 0.0
    %7454 = vmatpush.msra.mxu0 0.0
    %7455 = vmatpush.msra.mxu0 0.0
    %7456 = vmatpush.msra.mxu0 0.0
    %7457 = vmatpush.msra.mxu0 0.0
    %7458 = vmatpush.msra.mxu0 0.0
    %7459 = vmatpush.msra.mxu0 0.0
    %7460 = vmatpush.msra.mxu0 0.0
    %7461 = vmatpush.msra.mxu0 0.0
    %7462 = vmatpush.msra.mxu0 %v7255
    %7463 = vmatpush.msra.mxu0 %v7254
    %7464 = vmatmul.f32.gmra.mxu0 %v7257
    %v7465 = vpop.f32.mrf.mxu0
    %v7466 = vadd.f32 0.0, %v7465
    %7467 = vmatmul.f32.gmra.mxu0 %v7260
    %v7468 = vpop.f32.mrf.mxu0
    %v7469 = vadd.f32 0.0, %v7468
    %7470 = vmatmul.f32.gmra.mxu0 %v7263
    %v7471 = vpop.f32.mrf.mxu0
    %v7472 = vadd.f32 0.0, %v7471
    %7473 = vmatmul.f32.gmra.mxu0 %v7266
    %v7474 = vpop.f32.mrf.mxu0
    %v7475 = vadd.f32 0.0, %v7474
    %7476 = vmatmul.f32.gmra.mxu0 %v7269
    %v7477 = vpop.f32.mrf.mxu0
    %v7478 = vadd.f32 0.0, %v7477
    %7479 = vmatmul.f32.gmra.mxu0 %v7272
    %v7480 = vpop.f32.mrf.mxu0
    %v7481 = vadd.f32 0.0, %v7480
    %7482 = vmatmul.f32.gmra.mxu0 %v7275
    %v7483 = vpop.f32.mrf.mxu0
    %v7484 = vadd.f32 0.0, %v7483
    %7485 = vmatmul.f32.gmra.mxu0 %v7278
    %v7486 = vpop.f32.mrf.mxu0
    %v7487 = vadd.f32 0.0, %v7486
    %7488 = vmatmul.f32.gmra.mxu0 %v7281
    %v7489 = vpop.f32.mrf.mxu0
    %v7490 = vadd.f32 0.0, %v7489
    %7491 = vmatmul.f32.gmra.mxu0 %v7284
    %v7492 = vpop.f32.mrf.mxu0
    %v7493 = vadd.f32 0.0, %v7492
    %7494 = vmatmul.f32.gmra.mxu0 %v7287
    %v7495 = vpop.f32.mrf.mxu0
    %v7496 = vadd.f32 0.0, %v7495
    %7497 = vmatmul.f32.gmra.mxu0 %v7290
    %v7498 = vpop.f32.mrf.mxu0
    %v7499 = vadd.f32 0.0, %v7498
    %7500 = vmatmul.f32.gmra.mxu0 %v7293
    %v7501 = vpop.f32.mrf.mxu0
    %v7502 = vadd.f32 0.0, %v7501
    %7503 = vmatmul.f32.gmra.mxu0 %v7296
    %v7504 = vpop.f32.mrf.mxu0
    %v7505 = vadd.f32 0.0, %v7504
    %7506 = vmatmul.f32.gmra.mxu0 %v7299
    %v7507 = vpop.f32.mrf.mxu0
    %v7508 = vadd.f32 0.0, %v7507
    %7509 = vmatmul.f32.gmra.mxu0 %v7302
    %v7510 = vpop.f32.mrf.mxu0
    %v7511 = vadd.f32 0.0, %v7510
    %7512 = vmatmul.f32.gmra.mxu0 %v7305
    %v7513 = vpop.f32.mrf.mxu0
    %v7514 = vadd.f32 0.0, %v7513
    %7515 = vmatmul.f32.gmra.mxu0 %v7308
    %v7516 = vpop.f32.mrf.mxu0
    %v7517 = vadd.f32 0.0, %v7516
    %7518 = vmatmul.f32.gmra.mxu0 %v7311
    %v7519 = vpop.f32.mrf.mxu0
    %v7520 = vadd.f32 0.0, %v7519
    %7521 = vmatmul.f32.gmra.mxu0 %v7314
    %v7522 = vpop.f32.mrf.mxu0
    %v7523 = vadd.f32 0.0, %v7522
    %7524 = vmatmul.f32.gmra.mxu0 %v7317
    %v7525 = vpop.f32.mrf.mxu0
    %v7526 = vadd.f32 0.0, %v7525
    %7527 = vmatmul.f32.gmra.mxu0 %v7320
    %v7528 = vpop.f32.mrf.mxu0
    %v7529 = vadd.f32 0.0, %v7528
    %7530 = vmatmul.f32.gmra.mxu0 %v7323
    %v7531 = vpop.f32.mrf.mxu0
    %v7532 = vadd.f32 0.0, %v7531
    %7533 = vmatmul.f32.gmra.mxu0 %v7326
    %v7534 = vpop.f32.mrf.mxu0
    %v7535 = vadd.f32 0.0, %v7534
    %7536 = vmatmul.f32.gmra.mxu0 %v7329
    %v7537 = vpop.f32.mrf.mxu0
    %v7538 = vadd.f32 0.0, %v7537
    %7539 = vmatmul.f32.gmra.mxu0 %v7332
    %v7540 = vpop.f32.mrf.mxu0
    %v7541 = vadd.f32 0.0, %v7540
    %7542 = vmatmul.f32.gmra.mxu0 %v7335
    %v7543 = vpop.f32.mrf.mxu0
    %v7544 = vadd.f32 0.0, %v7543
    %7545 = vmatmul.f32.gmra.mxu0 %v7338
    %v7546 = vpop.f32.mrf.mxu0
    %v7547 = vadd.f32 0.0, %v7546
    %7548 = vmatmul.f32.gmra.mxu0 %v7341
    %v7549 = vpop.f32.mrf.mxu0
    %v7550 = vadd.f32 0.0, %v7549
    %7551 = vmatmul.f32.gmra.mxu0 %v7344
    %v7552 = vpop.f32.mrf.mxu0
    %v7553 = vadd.f32 0.0, %v7552
    %7554 = vmatmul.f32.gmra.mxu0 %v7347
    %v7555 = vpop.f32.mrf.mxu0
    %v7556 = vadd.f32 0.0, %v7555
    %7557 = vmatmul.f32.gmra.mxu0 %v7350
    %v7558 = vpop.f32.mrf.mxu0
    %v7559 = vadd.f32 0.0, %v7558
    %7560 = vmatmul.f32.gmra.mxu0 %v7353
    %v7561 = vpop.f32.mrf.mxu0
    %v7562 = vadd.f32 0.0, %v7561
    %7563 = vmatmul.f32.gmra.mxu0 %v7356
    %v7564 = vpop.f32.mrf.mxu0
    %v7565 = vadd.f32 0.0, %v7564
    %7566 = vmatmul.f32.gmra.mxu0 %v7359
    %v7567 = vpop.f32.mrf.mxu0
    %v7568 = vadd.f32 0.0, %v7567
    %7569 = vmatmul.f32.gmra.mxu0 %v7362
    %v7570 = vpop.f32.mrf.mxu0
    %v7571 = vadd.f32 0.0, %v7570
    %7572 = vmatmul.f32.gmra.mxu0 %v7365
    %v7573 = vpop.f32.mrf.mxu0
    %v7574 = vadd.f32 0.0, %v7573
    %7575 = vmatmul.f32.gmra.mxu0 %v7368
    %v7576 = vpop.f32.mrf.mxu0
    %v7577 = vadd.f32 0.0, %v7576
    %7578 = vmatmul.f32.gmra.mxu0 %v7371
    %v7579 = vpop.f32.mrf.mxu0
    %v7580 = vadd.f32 0.0, %v7579
    %7581 = vmatmul.f32.gmra.mxu0 %v7374
    %v7582 = vpop.f32.mrf.mxu0
    %v7583 = vadd.f32 0.0, %v7582
    %7584 = vmatmul.f32.gmra.mxu0 %v7377
    %v7585 = vpop.f32.mrf.mxu0
    %v7586 = vadd.f32 0.0, %v7585
    %7587 = vmatmul.f32.gmra.mxu0 %v7380
    %v7588 = vpop.f32.mrf.mxu0
    %v7589 = vadd.f32 0.0, %v7588
    %7590 = vmatmul.f32.gmra.mxu0 %v7383
    %v7591 = vpop.f32.mrf.mxu0
    %v7592 = vadd.f32 0.0, %v7591
    %7593 = vmatmul.f32.gmra.mxu0 %v7386
    %v7594 = vpop.f32.mrf.mxu0
    %v7595 = vadd.f32 0.0, %v7594
    %7596 = vmatmul.f32.gmra.mxu0 %v7389
    %v7597 = vpop.f32.mrf.mxu0
    %v7598 = vadd.f32 0.0, %v7597
    %7599 = vmatmul.f32.gmra.mxu0 %v7392
    %v7600 = vpop.f32.mrf.mxu0
    %v7601 = vadd.f32 0.0, %v7600
    %7602 = vmatmul.f32.gmra.mxu0 %v7395
    %v7603 = vpop.f32.mrf.mxu0
    %v7604 = vadd.f32 0.0, %v7603
    %7605 = vmatmul.f32.gmra.mxu0 %v7398
    %v7606 = vpop.f32.mrf.mxu0
    %v7607 = vadd.f32 0.0, %v7606
    %7608 = vmatmul.f32.gmra.mxu0 %v7401
    %v7609 = vpop.f32.mrf.mxu0
    %v7610 = vadd.f32 0.0, %v7609
    %7611 = vmatmul.f32.gmra.mxu0 %v7404
    %v7612 = vpop.f32.mrf.mxu0
    %v7613 = vadd.f32 0.0, %v7612
    %7614 = vmatmul.f32.gmra.mxu0 %v7407
    %v7615 = vpop.f32.mrf.mxu0
    %v7616 = vadd.f32 0.0, %v7615
    %7617 = vmatmul.f32.gmra.mxu0 %v7410
    %v7618 = vpop.f32.mrf.mxu0
    %v7619 = vadd.f32 0.0, %v7618
    %7620 = vmatmul.f32.gmra.mxu0 %v7413
    %v7621 = vpop.f32.mrf.mxu0
    %v7622 = vadd.f32 0.0, %v7621
    %7623 = vmatmul.f32.gmra.mxu0 %v7416
    %v7624 = vpop.f32.mrf.mxu0
    %v7625 = vadd.f32 0.0, %v7624
    %7626 = vmatmul.f32.gmra.mxu0 %v7419
    %v7627 = vpop.f32.mrf.mxu0
    %v7628 = vadd.f32 0.0, %v7627
    %7629 = vmatmul.f32.gmra.mxu0 %v7422
    %v7630 = vpop.f32.mrf.mxu0
    %v7631 = vadd.f32 0.0, %v7630
    %7632 = vmatmul.f32.gmra.mxu0 %v7425
    %v7633 = vpop.f32.mrf.mxu0
    %v7634 = vadd.f32 0.0, %v7633
    %7635 = vmatmul.f32.gmra.mxu0 %v7428
    %v7636 = vpop.f32.mrf.mxu0
    %v7637 = vadd.f32 0.0, %v7636
    %7638 = vmatmul.f32.gmra.mxu0 %v7431
    %v7639 = vpop.f32.mrf.mxu0
    %v7640 = vadd.f32 0.0, %v7639
    %7641 = vmatmul.f32.gmra.mxu0 %v7434
    %v7642 = vpop.f32.mrf.mxu0
    %v7643 = vadd.f32 0.0, %v7642
    %7644 = vmatmul.f32.gmra.mxu0 %v7437
    %v7645 = vpop.f32.mrf.mxu0
    %v7646 = vadd.f32 0.0, %v7645
    %7647 = vmatmul.f32.gmra.mxu0 %v7440
    %v7648 = vpop.f32.mrf.mxu0
    %v7649 = vadd.f32 0.0, %v7648
    %7650 = vmatmul.f32.gmra.mxu0 %v7443
    %v7651 = vpop.f32.mrf.mxu0
    %v7652 = vadd.f32 0.0, %v7651
    %7653 = vmatmul.f32.gmra.mxu0 %v7446
    %v7654 = vpop.f32.mrf.mxu0
    %v7655 = vadd.f32 0.0, %v7654
    %7656 = vdwg.mxu0
    %v7657 = vadd.f32 %v7126, %v7466
    %v7658 = vadd.f32 %v7127, %v7469
    %v7659 = vadd.f32 %v7128, %v7472
    %v7660 = vadd.f32 %v7129, %v7475
    %v7661 = vadd.f32 %v7130, %v7478
    %v7662 = vadd.f32 %v7131, %v7481
    %v7663 = vadd.f32 %v7132, %v7484
    %v7664 = vadd.f32 %v7133, %v7487
    %v7665 = vadd.f32 %v7134, %v7490
    %v7666 = vadd.f32 %v7135, %v7493
    %v7667 = vadd.f32 %v7136, %v7496
    %v7668 = vadd.f32 %v7137, %v7499
    %v7669 = vadd.f32 %v7138, %v7502
    %v7670 = vadd.f32 %v7139, %v7505
    %v7671 = vadd.f32 %v7140, %v7508
    %v7672 = vadd.f32 %v7141, %v7511
    %v7673 = vadd.f32 %v7142, %v7514
    %v7674 = vadd.f32 %v7143, %v7517
    %v7675 = vadd.f32 %v7144, %v7520
    %v7676 = vadd.f32 %v7145, %v7523
    %v7677 = vadd.f32 %v7146, %v7526
    %v7678 = vadd.f32 %v7147, %v7529
    %v7679 = vadd.f32 %v7148, %v7532
    %v7680 = vadd.f32 %v7149, %v7535
    %v7681 = vadd.f32 %v7150, %v7538
    %v7682 = vadd.f32 %v7151, %v7541
    %v7683 = vadd.f32 %v7152, %v7544
    %v7684 = vadd.f32 %v7153, %v7547
    %v7685 = vadd.f32 %v7154, %v7550
    %v7686 = vadd.f32 %v7155, %v7553
    %v7687 = vadd.f32 %v7156, %v7556
    %v7688 = vadd.f32 %v7157, %v7559
    %v7689 = vadd.f32 %v7158, %v7562
    %v7690 = vadd.f32 %v7159, %v7565
    %v7691 = vadd.f32 %v7160, %v7568
    %v7692 = vadd.f32 %v7161, %v7571
    %v7693 = vadd.f32 %v7162, %v7574
    %v7694 = vadd.f32 %v7163, %v7577
    %v7695 = vadd.f32 %v7164, %v7580
    %v7696 = vadd.f32 %v7165, %v7583
    %v7697 = vadd.f32 %v7166, %v7586
    %v7698 = vadd.f32 %v7167, %v7589
    %v7699 = vadd.f32 %v7168, %v7592
    %v7700 = vadd.f32 %v7169, %v7595
    %v7701 = vadd.f32 %v7170, %v7598
    %v7702 = vadd.f32 %v7171, %v7601
    %v7703 = vadd.f32 %v7172, %v7604
    %v7704 = vadd.f32 %v7173, %v7607
    %v7705 = vadd.f32 %v7174, %v7610
    %v7706 = vadd.f32 %v7175, %v7613
    %v7707 = vadd.f32 %v7176, %v7616
    %v7708 = vadd.f32 %v7177, %v7619
    %v7709 = vadd.f32 %v7178, %v7622
    %v7710 = vadd.f32 %v7179, %v7625
    %v7711 = vadd.f32 %v7180, %v7628
    %v7712 = vadd.f32 %v7181, %v7631
    %v7713 = vadd.f32 %v7182, %v7634
    %v7714 = vadd.f32 %v7183, %v7637
    %v7715 = vadd.f32 %v7184, %v7640
    %v7716 = vadd.f32 %v7185, %v7643
    %v7717 = vadd.f32 %v7186, %v7646
    %v7718 = vadd.f32 %v7187, %v7649
    %v7719 = vadd.f32 %v7188, %v7652
    %v7720 = vadd.f32 %v7189, %v7655
    %v7721 = vld [vmem:[%s5129 + $0x2] sm:$0xff]
    %v7722 = vld [vmem:[%s5129 + $0xa] sm:$0xff]
    %v7723 = vld [vmem:[%s5129 + $0x1a] sm:$0xff]
    %v7724 = vld [vmem:[%s5129 + $0x22] sm:$0xff]
    %v7725 = vld [vmem:[%s5129 + $0x32] sm:$0xff]
    %v7726 = vld [vmem:[%s5129 + $0x3a] sm:$0xff]
    %v7727 = vld [vmem:[%s5129 + $0x4a] sm:$0xff]
    %v7728 = vld [vmem:[%s5129 + $0x52] sm:$0xff]
    %v7729 = vld [vmem:[%s5129 + $0x62] sm:$0xff]
    %v7730 = vld [vmem:[%s5129 + $0x6a] sm:$0xff]
    %v7731 = vld [vmem:[%s5129 + $0x7a] sm:$0xff]
    %v7732 = vld [vmem:[%s5129 + $0x82] sm:$0xff]
    %v7733 = vld [vmem:[%s5129 + $0x92] sm:$0xff]
    %v7734 = vld [vmem:[%s5129 + $0x9a] sm:$0xff]
    %v7735 = vld [vmem:[%s5129 + $0xaa] sm:$0xff]
    %v7736 = vld [vmem:[%s5129 + $0xb2] sm:$0xff]
    %v7737 = vld [vmem:[%s5129 + $0xc2] sm:$0xff]
    %v7738 = vld [vmem:[%s5129 + $0xca] sm:$0xff]
    %v7739 = vld [vmem:[%s5129 + $0xda] sm:$0xff]
    %v7740 = vld [vmem:[%s5129 + $0xe2] sm:$0xff]
    %v7741 = vld [vmem:[%s5129 + $0xf2] sm:$0xff]
    %v7742 = vld [vmem:[%s5129 + $0xfa] sm:$0xff]
    %v7743 = vld [vmem:[%s5129 + $0x10a] sm:$0xff]
    %v7744 = vld [vmem:[%s5129 + $0x112] sm:$0xff]
    %v7745 = vld [vmem:[%s5129 + $0x122] sm:$0xff]
    %v7746 = vld [vmem:[%s5129 + $0x12a] sm:$0xff]
    %v7747 = vld [vmem:[%s5129 + $0x13a] sm:$0xff]
    %v7748 = vld [vmem:[%s5129 + $0x142] sm:$0xff]
    %v7749 = vld [vmem:[%s5129 + $0x152] sm:$0xff]
    %v7750 = vld [vmem:[%s5129 + $0x15a] sm:$0xff]
    %v7751 = vld [vmem:[%s5129 + $0x16a] sm:$0xff]
    %v7752 = vld [vmem:[%s5129 + $0x172] sm:$0xff]
    %v7753 = vld [vmem:[%s5129 + $0x1b2] sm:$0xff]
    %v7754 = vld [vmem:[%s5129 + $0x1ba] sm:$0xff]
    %v7755 = vld [vmem:[%s5129 + $0x1ca] sm:$0xff]
    %v7756 = vld [vmem:[%s5129 + $0x1d2] sm:$0xff]
    %v7757 = vld [vmem:[%s5129 + $0x1e2] sm:$0xff]
    %v7758 = vld [vmem:[%s5129 + $0x1ea] sm:$0xff]
    %v7759 = vld [vmem:[%s5129 + $0x1fa] sm:$0xff]
    %v7760 = vld [vmem:[%s5129 + $0x202] sm:$0xff]
    %v7761 = vld [vmem:[%s5129 + $0x212] sm:$0xff]
    %v7762 = vld [vmem:[%s5129 + $0x21a] sm:$0xff]
    %v7763 = vld [vmem:[%s5129 + $0x22a] sm:$0xff]
    %v7764 = vld [vmem:[%s5129 + $0x232] sm:$0xff]
    %v7765 = vld [vmem:[%s5129 + $0x242] sm:$0xff]
    %v7766 = vld [vmem:[%s5129 + $0x24a] sm:$0xff]
    %v7767 = vld [vmem:[%s5129 + $0x25a] sm:$0xff]
    %v7768 = vld [vmem:[%s5129 + $0x262] sm:$0xff]
    %v7769 = vld [vmem:[%s5129 + $0x272] sm:$0xff]
    %v7770 = vld [vmem:[%s5129 + $0x27a] sm:$0xff]
    %v7771 = vld [vmem:[%s5129 + $0x28a] sm:$0xff]
    %v7772 = vld [vmem:[%s5129 + $0x292] sm:$0xff]
    %v7773 = vld [vmem:[%s5129 + $0x2a2] sm:$0xff]
    %v7774 = vld [vmem:[%s5129 + $0x2aa] sm:$0xff]
    %v7775 = vld [vmem:[%s5129 + $0x2ba] sm:$0xff]
    %v7776 = vld [vmem:[%s5129 + $0x2c2] sm:$0xff]
    %v7777 = vld [vmem:[%s5129 + $0x2d2] sm:$0xff]
    %v7778 = vld [vmem:[%s5129 + $0x2da] sm:$0xff]
    %v7779 = vld [vmem:[%s5129 + $0x2ea] sm:$0xff]
    %v7780 = vld [vmem:[%s5129 + $0x2f2] sm:$0xff]
    %v7781 = vld [vmem:[%s5129 + $0x302] sm:$0xff]
    %v7782 = vld [vmem:[%s5129 + $0x30a] sm:$0xff]
    %v7783 = vld [vmem:[%s5129 + $0x31a] sm:$0xff]
    %v7784 = vld [vmem:[%s5129 + $0x322] sm:$0xff]
    %v7785 = vld [vmem:[%s3 + $0x50] sm:$0xff]
    %v7786 = vld [vmem:[%s3 + $0x58] sm:$0xff]
    %v7788 = vsel %vm5041, %v7721, 0
    %v7791 = vsel %vm5041, %v7722, 0
    %v7794 = vsel %vm5041, %v7723, 0
    %v7797 = vsel %vm5041, %v7724, 0
    %v7800 = vsel %vm5041, %v7725, 0
    %v7803 = vsel %vm5041, %v7726, 0
    %v7806 = vsel %vm5041, %v7727, 0
    %v7809 = vsel %vm5041, %v7728, 0
    %v7812 = vsel %vm5041, %v7729, 0
    %v7815 = vsel %vm5041, %v7730, 0
    %v7818 = vsel %vm5041, %v7731, 0
    %v7821 = vsel %vm5041, %v7732, 0
    %v7824 = vsel %vm5041, %v7733, 0
    %v7827 = vsel %vm5041, %v7734, 0
    %v7830 = vsel %vm5041, %v7735, 0
    %v7833 = vsel %vm5041, %v7736, 0
    %v7836 = vsel %vm5041, %v7737, 0
    %v7839 = vsel %vm5041, %v7738, 0
    %v7842 = vsel %vm5041, %v7739, 0
    %v7845 = vsel %vm5041, %v7740, 0
    %v7848 = vsel %vm5041, %v7741, 0
    %v7851 = vsel %vm5041, %v7742, 0
    %v7854 = vsel %vm5041, %v7743, 0
    %v7857 = vsel %vm5041, %v7744, 0
    %v7860 = vsel %vm5041, %v7745, 0
    %v7863 = vsel %vm5041, %v7746, 0
    %v7866 = vsel %vm5041, %v7747, 0
    %v7869 = vsel %vm5041, %v7748, 0
    %v7872 = vsel %vm5041, %v7749, 0
    %v7875 = vsel %vm5041, %v7750, 0
    %v7878 = vsel %vm5041, %v7751, 0
    %v7881 = vsel %vm5041, %v7752, 0
    %v7884 = vsel %vm5041, %v7753, 0
    %v7887 = vsel %vm5041, %v7754, 0
    %v7890 = vsel %vm5041, %v7755, 0
    %v7893 = vsel %vm5041, %v7756, 0
    %v7896 = vsel %vm5041, %v7757, 0
    %v7899 = vsel %vm5041, %v7758, 0
    %v7902 = vsel %vm5041, %v7759, 0
    %v7905 = vsel %vm5041, %v7760, 0
    %v7908 = vsel %vm5041, %v7761, 0
    %v7911 = vsel %vm5041, %v7762, 0
    %v7914 = vsel %vm5041, %v7763, 0
    %v7917 = vsel %vm5041, %v7764, 0
    %v7920 = vsel %vm5041, %v7765, 0
    %v7923 = vsel %vm5041, %v7766, 0
    %v7926 = vsel %vm5041, %v7767, 0
    %v7929 = vsel %vm5041, %v7768, 0
    %v7932 = vsel %vm5041, %v7769, 0
    %v7935 = vsel %vm5041, %v7770, 0
    %v7938 = vsel %vm5041, %v7771, 0
    %v7941 = vsel %vm5041, %v7772, 0
    %v7944 = vsel %vm5041, %v7773, 0
    %v7947 = vsel %vm5041, %v7774, 0
    %v7950 = vsel %vm5041, %v7775, 0
    %v7953 = vsel %vm5041, %v7776, 0
    %v7956 = vsel %vm5041, %v7777, 0
    %v7959 = vsel %vm5041, %v7778, 0
    %v7962 = vsel %vm5041, %v7779, 0
    %v7965 = vsel %vm5041, %v7780, 0
    %v7968 = vsel %vm5041, %v7781, 0
    %v7971 = vsel %vm5041, %v7782, 0
    %v7974 = vsel %vm5041, %v7783, 0
    %v7977 = vsel %vm5041, %v7784, 0
    %7979 = vmatpush.msra.mxu0 0.0
    %7980 = vmatpush.msra.mxu0 0.0
    %7981 = vmatpush.msra.mxu0 0.0
    %7982 = vmatpush.msra.mxu0 0.0
    %7983 = vmatpush.msra.mxu0 0.0
    %7984 = vmatpush.msra.mxu0 0.0
    %7985 = vmatpush.msra.mxu0 0.0
    %7986 = vmatpush.msra.mxu0 0.0
    %7987 = vmatpush.msra.mxu0 0.0
    %7988 = vmatpush.msra.mxu0 0.0
    %7989 = vmatpush.msra.mxu0 0.0
    %7990 = vmatpush.msra.mxu0 0.0
    %7991 = vmatpush.msra.mxu0 0.0
    %7992 = vmatpush.msra.mxu0 0.0
    %7993 = vmatpush.msra.mxu0 %v7786
    %7994 = vmatpush.msra.mxu0 %v7785
    %7995 = vmatmul.f32.gmra.mxu0 %v7788
    %v7996 = vpop.f32.mrf.mxu0
    %v7997 = vadd.f32 0.0, %v7996
    %7998 = vmatmul.f32.gmra.mxu0 %v7791
    %v7999 = vpop.f32.mrf.mxu0
    %v8000 = vadd.f32 0.0, %v7999
    %8001 = vmatmul.f32.gmra.mxu0 %v7794
    %v8002 = vpop.f32.mrf.mxu0
    %v8003 = vadd.f32 0.0, %v8002
    %8004 = vmatmul.f32.gmra.mxu0 %v7797
    %v8005 = vpop.f32.mrf.mxu0
    %v8006 = vadd.f32 0.0, %v8005
    %8007 = vmatmul.f32.gmra.mxu0 %v7800
    %v8008 = vpop.f32.mrf.mxu0
    %v8009 = vadd.f32 0.0, %v8008
    %8010 = vmatmul.f32.gmra.mxu0 %v7803
    %v8011 = vpop.f32.mrf.mxu0
    %v8012 = vadd.f32 0.0, %v8011
    %8013 = vmatmul.f32.gmra.mxu0 %v7806
    %v8014 = vpop.f32.mrf.mxu0
    %v8015 = vadd.f32 0.0, %v8014
    %8016 = vmatmul.f32.gmra.mxu0 %v7809
    %v8017 = vpop.f32.mrf.mxu0
    %v8018 = vadd.f32 0.0, %v8017
    %8019 = vmatmul.f32.gmra.mxu0 %v7812
    %v8020 = vpop.f32.mrf.mxu0
    %v8021 = vadd.f32 0.0, %v8020
    %8022 = vmatmul.f32.gmra.mxu0 %v7815
    %v8023 = vpop.f32.mrf.mxu0
    %v8024 = vadd.f32 0.0, %v8023
    %8025 = vmatmul.f32.gmra.mxu0 %v7818
    %v8026 = vpop.f32.mrf.mxu0
    %v8027 = vadd.f32 0.0, %v8026
    %8028 = vmatmul.f32.gmra.mxu0 %v7821
    %v8029 = vpop.f32.mrf.mxu0
    %v8030 = vadd.f32 0.0, %v8029
    %8031 = vmatmul.f32.gmra.mxu0 %v7824
    %v8032 = vpop.f32.mrf.mxu0
    %v8033 = vadd.f32 0.0, %v8032
    %8034 = vmatmul.f32.gmra.mxu0 %v7827
    %v8035 = vpop.f32.mrf.mxu0
    %v8036 = vadd.f32 0.0, %v8035
    %8037 = vmatmul.f32.gmra.mxu0 %v7830
    %v8038 = vpop.f32.mrf.mxu0
    %v8039 = vadd.f32 0.0, %v8038
    %8040 = vmatmul.f32.gmra.mxu0 %v7833
    %v8041 = vpop.f32.mrf.mxu0
    %v8042 = vadd.f32 0.0, %v8041
    %8043 = vmatmul.f32.gmra.mxu0 %v7836
    %v8044 = vpop.f32.mrf.mxu0
    %v8045 = vadd.f32 0.0, %v8044
    %8046 = vmatmul.f32.gmra.mxu0 %v7839
    %v8047 = vpop.f32.mrf.mxu0
    %v8048 = vadd.f32 0.0, %v8047
    %8049 = vmatmul.f32.gmra.mxu0 %v7842
    %v8050 = vpop.f32.mrf.mxu0
    %v8051 = vadd.f32 0.0, %v8050
    %8052 = vmatmul.f32.gmra.mxu0 %v7845
    %v8053 = vpop.f32.mrf.mxu0
    %v8054 = vadd.f32 0.0, %v8053
    %8055 = vmatmul.f32.gmra.mxu0 %v7848
    %v8056 = vpop.f32.mrf.mxu0
    %v8057 = vadd.f32 0.0, %v8056
    %8058 = vmatmul.f32.gmra.mxu0 %v7851
    %v8059 = vpop.f32.mrf.mxu0
    %v8060 = vadd.f32 0.0, %v8059
    %8061 = vmatmul.f32.gmra.mxu0 %v7854
    %v8062 = vpop.f32.mrf.mxu0
    %v8063 = vadd.f32 0.0, %v8062
    %8064 = vmatmul.f32.gmra.mxu0 %v7857
    %v8065 = vpop.f32.mrf.mxu0
    %v8066 = vadd.f32 0.0, %v8065
    %8067 = vmatmul.f32.gmra.mxu0 %v7860
    %v8068 = vpop.f32.mrf.mxu0
    %v8069 = vadd.f32 0.0, %v8068
    %8070 = vmatmul.f32.gmra.mxu0 %v7863
    %v8071 = vpop.f32.mrf.mxu0
    %v8072 = vadd.f32 0.0, %v8071
    %8073 = vmatmul.f32.gmra.mxu0 %v7866
    %v8074 = vpop.f32.mrf.mxu0
    %v8075 = vadd.f32 0.0, %v8074
    %8076 = vmatmul.f32.gmra.mxu0 %v7869
    %v8077 = vpop.f32.mrf.mxu0
    %v8078 = vadd.f32 0.0, %v8077
    %8079 = vmatmul.f32.gmra.mxu0 %v7872
    %v8080 = vpop.f32.mrf.mxu0
    %v8081 = vadd.f32 0.0, %v8080
    %8082 = vmatmul.f32.gmra.mxu0 %v7875
    %v8083 = vpop.f32.mrf.mxu0
    %v8084 = vadd.f32 0.0, %v8083
    %8085 = vmatmul.f32.gmra.mxu0 %v7878
    %v8086 = vpop.f32.mrf.mxu0
    %v8087 = vadd.f32 0.0, %v8086
    %8088 = vmatmul.f32.gmra.mxu0 %v7881
    %v8089 = vpop.f32.mrf.mxu0
    %v8090 = vadd.f32 0.0, %v8089
    %8091 = vmatmul.f32.gmra.mxu0 %v7884
    %v8092 = vpop.f32.mrf.mxu0
    %v8093 = vadd.f32 0.0, %v8092
    %8094 = vmatmul.f32.gmra.mxu0 %v7887
    %v8095 = vpop.f32.mrf.mxu0
    %v8096 = vadd.f32 0.0, %v8095
    %8097 = vmatmul.f32.gmra.mxu0 %v7890
    %v8098 = vpop.f32.mrf.mxu0
    %v8099 = vadd.f32 0.0, %v8098
    %8100 = vmatmul.f32.gmra.mxu0 %v7893
    %v8101 = vpop.f32.mrf.mxu0
    %v8102 = vadd.f32 0.0, %v8101
    %8103 = vmatmul.f32.gmra.mxu0 %v7896
    %v8104 = vpop.f32.mrf.mxu0
    %v8105 = vadd.f32 0.0, %v8104
    %8106 = vmatmul.f32.gmra.mxu0 %v7899
    %v8107 = vpop.f32.mrf.mxu0
    %v8108 = vadd.f32 0.0, %v8107
    %8109 = vmatmul.f32.gmra.mxu0 %v7902
    %v8110 = vpop.f32.mrf.mxu0
    %v8111 = vadd.f32 0.0, %v8110
    %8112 = vmatmul.f32.gmra.mxu0 %v7905
    %v8113 = vpop.f32.mrf.mxu0
    %v8114 = vadd.f32 0.0, %v8113
    %8115 = vmatmul.f32.gmra.mxu0 %v7908
    %v8116 = vpop.f32.mrf.mxu0
    %v8117 = vadd.f32 0.0, %v8116
    %8118 = vmatmul.f32.gmra.mxu0 %v7911
    %v8119 = vpop.f32.mrf.mxu0
    %v8120 = vadd.f32 0.0, %v8119
    %8121 = vmatmul.f32.gmra.mxu0 %v7914
    %v8122 = vpop.f32.mrf.mxu0
    %v8123 = vadd.f32 0.0, %v8122
    %8124 = vmatmul.f32.gmra.mxu0 %v7917
    %v8125 = vpop.f32.mrf.mxu0
    %v8126 = vadd.f32 0.0, %v8125
    %8127 = vmatmul.f32.gmra.mxu0 %v7920
    %v8128 = vpop.f32.mrf.mxu0
    %v8129 = vadd.f32 0.0, %v8128
    %8130 = vmatmul.f32.gmra.mxu0 %v7923
    %v8131 = vpop.f32.mrf.mxu0
    %v8132 = vadd.f32 0.0, %v8131
    %8133 = vmatmul.f32.gmra.mxu0 %v7926
    %v8134 = vpop.f32.mrf.mxu0
    %v8135 = vadd.f32 0.0, %v8134
    %8136 = vmatmul.f32.gmra.mxu0 %v7929
    %v8137 = vpop.f32.mrf.mxu0
    %v8138 = vadd.f32 0.0, %v8137
    %8139 = vmatmul.f32.gmra.mxu0 %v7932
    %v8140 = vpop.f32.mrf.mxu0
    %v8141 = vadd.f32 0.0, %v8140
    %8142 = vmatmul.f32.gmra.mxu0 %v7935
    %v8143 = vpop.f32.mrf.mxu0
    %v8144 = vadd.f32 0.0, %v8143
    %8145 = vmatmul.f32.gmra.mxu0 %v7938
    %v8146 = vpop.f32.mrf.mxu0
    %v8147 = vadd.f32 0.0, %v8146
    %8148 = vmatmul.f32.gmra.mxu0 %v7941
    %v8149 = vpop.f32.mrf.mxu0
    %v8150 = vadd.f32 0.0, %v8149
    %8151 = vmatmul.f32.gmra.mxu0 %v7944
    %v8152 = vpop.f32.mrf.mxu0
    %v8153 = vadd.f32 0.0, %v8152
    %8154 = vmatmul.f32.gmra.mxu0 %v7947
    %v8155 = vpop.f32.mrf.mxu0
    %v8156 = vadd.f32 0.0, %v8155
    %8157 = vmatmul.f32.gmra.mxu0 %v7950
    %v8158 = vpop.f32.mrf.mxu0
    %v8159 = vadd.f32 0.0, %v8158
    %8160 = vmatmul.f32.gmra.mxu0 %v7953
    %v8161 = vpop.f32.mrf.mxu0
    %v8162 = vadd.f32 0.0, %v8161
    %8163 = vmatmul.f32.gmra.mxu0 %v7956
    %v8164 = vpop.f32.mrf.mxu0
    %v8165 = vadd.f32 0.0, %v8164
    %8166 = vmatmul.f32.gmra.mxu0 %v7959
    %v8167 = vpop.f32.mrf.mxu0
    %v8168 = vadd.f32 0.0, %v8167
    %8169 = vmatmul.f32.gmra.mxu0 %v7962
    %v8170 = vpop.f32.mrf.mxu0
    %v8171 = vadd.f32 0.0, %v8170
    %8172 = vmatmul.f32.gmra.mxu0 %v7965
    %v8173 = vpop.f32.mrf.mxu0
    %v8174 = vadd.f32 0.0, %v8173
    %8175 = vmatmul.f32.gmra.mxu0 %v7968
    %v8176 = vpop.f32.mrf.mxu0
    %v8177 = vadd.f32 0.0, %v8176
    %8178 = vmatmul.f32.gmra.mxu0 %v7971
    %v8179 = vpop.f32.mrf.mxu0
    %v8180 = vadd.f32 0.0, %v8179
    %8181 = vmatmul.f32.gmra.mxu0 %v7974
    %v8182 = vpop.f32.mrf.mxu0
    %v8183 = vadd.f32 0.0, %v8182
    %8184 = vmatmul.f32.gmra.mxu0 %v7977
    %v8185 = vpop.f32.mrf.mxu0
    %v8186 = vadd.f32 0.0, %v8185
    %8187 = vdwg.mxu0
    %v8188 = vadd.f32 %v7657, %v7997
    %v8189 = vadd.f32 %v7658, %v8000
    %v8190 = vadd.f32 %v7659, %v8003
    %v8191 = vadd.f32 %v7660, %v8006
    %v8192 = vadd.f32 %v7661, %v8009
    %v8193 = vadd.f32 %v7662, %v8012
    %v8194 = vadd.f32 %v7663, %v8015
    %v8195 = vadd.f32 %v7664, %v8018
    %v8196 = vadd.f32 %v7665, %v8021
    %v8197 = vadd.f32 %v7666, %v8024
    %v8198 = vadd.f32 %v7667, %v8027
    %v8199 = vadd.f32 %v7668, %v8030
    %v8200 = vadd.f32 %v7669, %v8033
    %v8201 = vadd.f32 %v7670, %v8036
    %v8202 = vadd.f32 %v7671, %v8039
    %v8203 = vadd.f32 %v7672, %v8042
    %v8204 = vadd.f32 %v7673, %v8045
    %v8205 = vadd.f32 %v7674, %v8048
    %v8206 = vadd.f32 %v7675, %v8051
    %v8207 = vadd.f32 %v7676, %v8054
    %v8208 = vadd.f32 %v7677, %v8057
    %v8209 = vadd.f32 %v7678, %v8060
    %v8210 = vadd.f32 %v7679, %v8063
    %v8211 = vadd.f32 %v7680, %v8066
    %v8212 = vadd.f32 %v7681, %v8069
    %v8213 = vadd.f32 %v7682, %v8072
    %v8214 = vadd.f32 %v7683, %v8075
    %v8215 = vadd.f32 %v7684, %v8078
    %v8216 = vadd.f32 %v7685, %v8081
    %v8217 = vadd.f32 %v7686, %v8084
    %v8218 = vadd.f32 %v7687, %v8087
    %v8219 = vadd.f32 %v7688, %v8090
    %v8220 = vadd.f32 %v7689, %v8093
    %v8221 = vadd.f32 %v7690, %v8096
    %v8222 = vadd.f32 %v7691, %v8099
    %v8223 = vadd.f32 %v7692, %v8102
    %v8224 = vadd.f32 %v7693, %v8105
    %v8225 = vadd.f32 %v7694, %v8108
    %v8226 = vadd.f32 %v7695, %v8111
    %v8227 = vadd.f32 %v7696, %v8114
    %v8228 = vadd.f32 %v7697, %v8117
    %v8229 = vadd.f32 %v7698, %v8120
    %v8230 = vadd.f32 %v7699, %v8123
    %v8231 = vadd.f32 %v7700, %v8126
    %v8232 = vadd.f32 %v7701, %v8129
    %v8233 = vadd.f32 %v7702, %v8132
    %v8234 = vadd.f32 %v7703, %v8135
    %v8235 = vadd.f32 %v7704, %v8138
    %v8236 = vadd.f32 %v7705, %v8141
    %v8237 = vadd.f32 %v7706, %v8144
    %v8238 = vadd.f32 %v7707, %v8147
    %v8239 = vadd.f32 %v7708, %v8150
    %v8240 = vadd.f32 %v7709, %v8153
    %v8241 = vadd.f32 %v7710, %v8156
    %v8242 = vadd.f32 %v7711, %v8159
    %v8243 = vadd.f32 %v7712, %v8162
    %v8244 = vadd.f32 %v7713, %v8165
    %v8245 = vadd.f32 %v7714, %v8168
    %v8246 = vadd.f32 %v7715, %v8171
    %v8247 = vadd.f32 %v7716, %v8174
    %v8248 = vadd.f32 %v7717, %v8177
    %v8249 = vadd.f32 %v7718, %v8180
    %v8250 = vadd.f32 %v7719, %v8183
    %v8251 = vadd.f32 %v7720, %v8186
    %s8252 = scalar_lea.vmem [#allocation3], 48
    %v8253 = vld [vmem:[%s8252] sm:$0xff]
    %v8254 = vld [vmem:[%s8252 + $0x8] sm:$0xff]
    %v8255 = vld [vmem:[%s8252 + $0x18] sm:$0xff]
    %v8256 = vld [vmem:[%s8252 + $0x20] sm:$0xff]
    %v8257 = vld [vmem:[%s8252 + $0x30] sm:$0xff]
    %v8258 = vld [vmem:[%s8252 + $0x38] sm:$0xff]
    %v8259 = vld [vmem:[%s8252 + $0x48] sm:$0xff]
    %v8260 = vld [vmem:[%s8252 + $0x50] sm:$0xff]
    %v8261 = vld [vmem:[%s8252 + $0x60] sm:$0xff]
    %v8262 = vld [vmem:[%s8252 + $0x68] sm:$0xff]
    %v8263 = vld [vmem:[%s8252 + $0x78] sm:$0xff]
    %v8264 = vld [vmem:[%s8252 + $0x80] sm:$0xff]
    %v8265 = vld [vmem:[%s8252 + $0x90] sm:$0xff]
    %v8266 = vld [vmem:[%s8252 + $0x98] sm:$0xff]
    %v8267 = vld [vmem:[%s8252 + $0xa8] sm:$0xff]
    %v8268 = vld [vmem:[%s8252 + $0xb0] sm:$0xff]
    %v8269 = vld [vmem:[%s8252 + $0xc0] sm:$0xff]
    %v8270 = vld [vmem:[%s8252 + $0xc8] sm:$0xff]
    %v8271 = vld [vmem:[%s8252 + $0xd8] sm:$0xff]
    %v8272 = vld [vmem:[%s8252 + $0xe0] sm:$0xff]
    %v8273 = vld [vmem:[%s8252 + $0xf0] sm:$0xff]
    %v8274 = vld [vmem:[%s8252 + $0xf8] sm:$0xff]
    %v8275 = vld [vmem:[%s8252 + $0x108] sm:$0xff]
    %v8276 = vld [vmem:[%s8252 + $0x110] sm:$0xff]
    %v8277 = vld [vmem:[%s8252 + $0x120] sm:$0xff]
    %v8278 = vld [vmem:[%s8252 + $0x128] sm:$0xff]
    %v8279 = vld [vmem:[%s8252 + $0x138] sm:$0xff]
    %v8280 = vld [vmem:[%s8252 + $0x140] sm:$0xff]
    %v8281 = vld [vmem:[%s8252 + $0x150] sm:$0xff]
    %v8282 = vld [vmem:[%s8252 + $0x158] sm:$0xff]
    %v8283 = vld [vmem:[%s8252 + $0x168] sm:$0xff]
    %v8284 = vld [vmem:[%s8252 + $0x170] sm:$0xff]
    %v8285 = vld [vmem:[%s8252 + $0x1b0] sm:$0xff]
    %v8286 = vld [vmem:[%s8252 + $0x1b8] sm:$0xff]
    %v8287 = vld [vmem:[%s8252 + $0x1c8] sm:$0xff]
    %v8288 = vld [vmem:[%s8252 + $0x1d0] sm:$0xff]
    %v8289 = vld [vmem:[%s8252 + $0x1e0] sm:$0xff]
    %v8290 = vld [vmem:[%s8252 + $0x1e8] sm:$0xff]
    %v8291 = vld [vmem:[%s8252 + $0x1f8] sm:$0xff]
    %v8292 = vld [vmem:[%s8252 + $0x200] sm:$0xff]
    %v8293 = vld [vmem:[%s8252 + $0x210] sm:$0xff]
    %v8294 = vld [vmem:[%s8252 + $0x218] sm:$0xff]
    %v8295 = vld [vmem:[%s8252 + $0x228] sm:$0xff]
    %v8296 = vld [vmem:[%s8252 + $0x230] sm:$0xff]
    %v8297 = vld [vmem:[%s8252 + $0x240] sm:$0xff]
    %v8298 = vld [vmem:[%s8252 + $0x248] sm:$0xff]
    %v8299 = vld [vmem:[%s8252 + $0x258] sm:$0xff]
    %v8300 = vld [vmem:[%s8252 + $0x260] sm:$0xff]
    %v8301 = vld [vmem:[%s8252 + $0x270] sm:$0xff]
    %v8302 = vld [vmem:[%s8252 + $0x278] sm:$0xff]
    %v8303 = vld [vmem:[%s8252 + $0x288] sm:$0xff]
    %v8304 = vld [vmem:[%s8252 + $0x290] sm:$0xff]
    %v8305 = vld [vmem:[%s8252 + $0x2a0] sm:$0xff]
    %v8306 = vld [vmem:[%s8252 + $0x2a8] sm:$0xff]
    %v8307 = vld [vmem:[%s8252 + $0x2b8] sm:$0xff]
    %v8308 = vld [vmem:[%s8252 + $0x2c0] sm:$0xff]
    %v8309 = vld [vmem:[%s8252 + $0x2d0] sm:$0xff]
    %v8310 = vld [vmem:[%s8252 + $0x2d8] sm:$0xff]
    %v8311 = vld [vmem:[%s8252 + $0x2e8] sm:$0xff]
    %v8312 = vld [vmem:[%s8252 + $0x2f0] sm:$0xff]
    %v8313 = vld [vmem:[%s8252 + $0x300] sm:$0xff]
    %v8314 = vld [vmem:[%s8252 + $0x308] sm:$0xff]
    %v8315 = vld [vmem:[%s8252 + $0x318] sm:$0xff]
    %v8316 = vld [vmem:[%s8252 + $0x320] sm:$0xff]
    %v8317 = vld [vmem:[%s3 + $0x60] sm:$0xff]
    %v8318 = vld [vmem:[%s3 + $0x68] sm:$0xff]
    %v8320 = vsel %vm5041, %v8253, 0
    %v8323 = vsel %vm5041, %v8254, 0
    %v8326 = vsel %vm5041, %v8255, 0
    %v8329 = vsel %vm5041, %v8256, 0
    %v8332 = vsel %vm5041, %v8257, 0
    %v8335 = vsel %vm5041, %v8258, 0
    %v8338 = vsel %vm5041, %v8259, 0
    %v8341 = vsel %vm5041, %v8260, 0
    %v8344 = vsel %vm5041, %v8261, 0
    %v8347 = vsel %vm5041, %v8262, 0
    %v8350 = vsel %vm5041, %v8263, 0
    %v8353 = vsel %vm5041, %v8264, 0
    %v8356 = vsel %vm5041, %v8265, 0
    %v8359 = vsel %vm5041, %v8266, 0
    %v8362 = vsel %vm5041, %v8267, 0
    %v8365 = vsel %vm5041, %v8268, 0
    %v8368 = vsel %vm5041, %v8269, 0
    %v8371 = vsel %vm5041, %v8270, 0
    %v8374 = vsel %vm5041, %v8271, 0
    %v8377 = vsel %vm5041, %v8272, 0
    %v8380 = vsel %vm5041, %v8273, 0
    %v8383 = vsel %vm5041, %v8274, 0
    %v8386 = vsel %vm5041, %v8275, 0
    %v8389 = vsel %vm5041, %v8276, 0
    %v8392 = vsel %vm5041, %v8277, 0
    %v8395 = vsel %vm5041, %v8278, 0
    %v8398 = vsel %vm5041, %v8279, 0
    %v8401 = vsel %vm5041, %v8280, 0
    %v8404 = vsel %vm5041, %v8281, 0
    %v8407 = vsel %vm5041, %v8282, 0
    %v8410 = vsel %vm5041, %v8283, 0
    %v8413 = vsel %vm5041, %v8284, 0
    %v8416 = vsel %vm5041, %v8285, 0
    %v8419 = vsel %vm5041, %v8286, 0
    %v8422 = vsel %vm5041, %v8287, 0
    %v8425 = vsel %vm5041, %v8288, 0
    %v8428 = vsel %vm5041, %v8289, 0
    %v8431 = vsel %vm5041, %v8290, 0
    %v8434 = vsel %vm5041, %v8291, 0
    %v8437 = vsel %vm5041, %v8292, 0
    %v8440 = vsel %vm5041, %v8293, 0
    %v8443 = vsel %vm5041, %v8294, 0
    %v8446 = vsel %vm5041, %v8295, 0
    %v8449 = vsel %vm5041, %v8296, 0
    %v8452 = vsel %vm5041, %v8297, 0
    %v8455 = vsel %vm5041, %v8298, 0
    %v8458 = vsel %vm5041, %v8299, 0
    %v8461 = vsel %vm5041, %v8300, 0
    %v8464 = vsel %vm5041, %v8301, 0
    %v8467 = vsel %vm5041, %v8302, 0
    %v8470 = vsel %vm5041, %v8303, 0
    %v8473 = vsel %vm5041, %v8304, 0
    %v8476 = vsel %vm5041, %v8305, 0
    %v8479 = vsel %vm5041, %v8306, 0
    %v8482 = vsel %vm5041, %v8307, 0
    %v8485 = vsel %vm5041, %v8308, 0
    %v8488 = vsel %vm5041, %v8309, 0
    %v8491 = vsel %vm5041, %v8310, 0
    %v8494 = vsel %vm5041, %v8311, 0
    %v8497 = vsel %vm5041, %v8312, 0
    %v8500 = vsel %vm5041, %v8313, 0
    %v8503 = vsel %vm5041, %v8314, 0
    %v8506 = vsel %vm5041, %v8315, 0
    %v8509 = vsel %vm5041, %v8316, 0
    %8511 = vmatpush.msra.mxu0 0.0
    %8512 = vmatpush.msra.mxu0 0.0
    %8513 = vmatpush.msra.mxu0 0.0
    %8514 = vmatpush.msra.mxu0 0.0
    %8515 = vmatpush.msra.mxu0 0.0
    %8516 = vmatpush.msra.mxu0 0.0
    %8517 = vmatpush.msra.mxu0 0.0
    %8518 = vmatpush.msra.mxu0 0.0
    %8519 = vmatpush.msra.mxu0 0.0
    %8520 = vmatpush.msra.mxu0 0.0
    %8521 = vmatpush.msra.mxu0 0.0
    %8522 = vmatpush.msra.mxu0 0.0
    %8523 = vmatpush.msra.mxu0 0.0
    %8524 = vmatpush.msra.mxu0 0.0
    %8525 = vmatpush.msra.mxu0 %v8318
    %8526 = vmatpush.msra.mxu0 %v8317
    %8527 = vmatmul.f32.gmra.mxu0 %v8320
    %v8528 = vpop.f32.mrf.mxu0
    %v8529 = vadd.f32 0.0, %v8528
    %8530 = vmatmul.f32.gmra.mxu0 %v8323
    %v8531 = vpop.f32.mrf.mxu0
    %v8532 = vadd.f32 0.0, %v8531
    %8533 = vmatmul.f32.gmra.mxu0 %v8326
    %v8534 = vpop.f32.mrf.mxu0
    %v8535 = vadd.f32 0.0, %v8534
    %8536 = vmatmul.f32.gmra.mxu0 %v8329
    %v8537 = vpop.f32.mrf.mxu0
    %v8538 = vadd.f32 0.0, %v8537
    %8539 = vmatmul.f32.gmra.mxu0 %v8332
    %v8540 = vpop.f32.mrf.mxu0
    %v8541 = vadd.f32 0.0, %v8540
    %8542 = vmatmul.f32.gmra.mxu0 %v8335
    %v8543 = vpop.f32.mrf.mxu0
    %v8544 = vadd.f32 0.0, %v8543
    %8545 = vmatmul.f32.gmra.mxu0 %v8338
    %v8546 = vpop.f32.mrf.mxu0
    %v8547 = vadd.f32 0.0, %v8546
    %8548 = vmatmul.f32.gmra.mxu0 %v8341
    %v8549 = vpop.f32.mrf.mxu0
    %v8550 = vadd.f32 0.0, %v8549
    %8551 = vmatmul.f32.gmra.mxu0 %v8344
    %v8552 = vpop.f32.mrf.mxu0
    %v8553 = vadd.f32 0.0, %v8552
    %8554 = vmatmul.f32.gmra.mxu0 %v8347
    %v8555 = vpop.f32.mrf.mxu0
    %v8556 = vadd.f32 0.0, %v8555
    %8557 = vmatmul.f32.gmra.mxu0 %v8350
    %v8558 = vpop.f32.mrf.mxu0
    %v8559 = vadd.f32 0.0, %v8558
    %8560 = vmatmul.f32.gmra.mxu0 %v8353
    %v8561 = vpop.f32.mrf.mxu0
    %v8562 = vadd.f32 0.0, %v8561
    %8563 = vmatmul.f32.gmra.mxu0 %v8356
    %v8564 = vpop.f32.mrf.mxu0
    %v8565 = vadd.f32 0.0, %v8564
    %8566 = vmatmul.f32.gmra.mxu0 %v8359
    %v8567 = vpop.f32.mrf.mxu0
    %v8568 = vadd.f32 0.0, %v8567
    %8569 = vmatmul.f32.gmra.mxu0 %v8362
    %v8570 = vpop.f32.mrf.mxu0
    %v8571 = vadd.f32 0.0, %v8570
    %8572 = vmatmul.f32.gmra.mxu0 %v8365
    %v8573 = vpop.f32.mrf.mxu0
    %v8574 = vadd.f32 0.0, %v8573
    %8575 = vmatmul.f32.gmra.mxu0 %v8368
    %v8576 = vpop.f32.mrf.mxu0
    %v8577 = vadd.f32 0.0, %v8576
    %8578 = vmatmul.f32.gmra.mxu0 %v8371
    %v8579 = vpop.f32.mrf.mxu0
    %v8580 = vadd.f32 0.0, %v8579
    %8581 = vmatmul.f32.gmra.mxu0 %v8374
    %v8582 = vpop.f32.mrf.mxu0
    %v8583 = vadd.f32 0.0, %v8582
    %8584 = vmatmul.f32.gmra.mxu0 %v8377
    %v8585 = vpop.f32.mrf.mxu0
    %v8586 = vadd.f32 0.0, %v8585
    %8587 = vmatmul.f32.gmra.mxu0 %v8380
    %v8588 = vpop.f32.mrf.mxu0
    %v8589 = vadd.f32 0.0, %v8588
    %8590 = vmatmul.f32.gmra.mxu0 %v8383
    %v8591 = vpop.f32.mrf.mxu0
    %v8592 = vadd.f32 0.0, %v8591
    %8593 = vmatmul.f32.gmra.mxu0 %v8386
    %v8594 = vpop.f32.mrf.mxu0
    %v8595 = vadd.f32 0.0, %v8594
    %8596 = vmatmul.f32.gmra.mxu0 %v8389
    %v8597 = vpop.f32.mrf.mxu0
    %v8598 = vadd.f32 0.0, %v8597
    %8599 = vmatmul.f32.gmra.mxu0 %v8392
    %v8600 = vpop.f32.mrf.mxu0
    %v8601 = vadd.f32 0.0, %v8600
    %8602 = vmatmul.f32.gmra.mxu0 %v8395
    %v8603 = vpop.f32.mrf.mxu0
    %v8604 = vadd.f32 0.0, %v8603
    %8605 = vmatmul.f32.gmra.mxu0 %v8398
    %v8606 = vpop.f32.mrf.mxu0
    %v8607 = vadd.f32 0.0, %v8606
    %8608 = vmatmul.f32.gmra.mxu0 %v8401
    %v8609 = vpop.f32.mrf.mxu0
    %v8610 = vadd.f32 0.0, %v8609
    %8611 = vmatmul.f32.gmra.mxu0 %v8404
    %v8612 = vpop.f32.mrf.mxu0
    %v8613 = vadd.f32 0.0, %v8612
    %8614 = vmatmul.f32.gmra.mxu0 %v8407
    %v8615 = vpop.f32.mrf.mxu0
    %v8616 = vadd.f32 0.0, %v8615
    %8617 = vmatmul.f32.gmra.mxu0 %v8410
    %v8618 = vpop.f32.mrf.mxu0
    %v8619 = vadd.f32 0.0, %v8618
    %8620 = vmatmul.f32.gmra.mxu0 %v8413
    %v8621 = vpop.f32.mrf.mxu0
    %v8622 = vadd.f32 0.0, %v8621
    %8623 = vmatmul.f32.gmra.mxu0 %v8416
    %v8624 = vpop.f32.mrf.mxu0
    %v8625 = vadd.f32 0.0, %v8624
    %8626 = vmatmul.f32.gmra.mxu0 %v8419
    %v8627 = vpop.f32.mrf.mxu0
    %v8628 = vadd.f32 0.0, %v8627
    %8629 = vmatmul.f32.gmra.mxu0 %v8422
    %v8630 = vpop.f32.mrf.mxu0
    %v8631 = vadd.f32 0.0, %v8630
    %8632 = vmatmul.f32.gmra.mxu0 %v8425
    %v8633 = vpop.f32.mrf.mxu0
    %v8634 = vadd.f32 0.0, %v8633
    %8635 = vmatmul.f32.gmra.mxu0 %v8428
    %v8636 = vpop.f32.mrf.mxu0
    %v8637 = vadd.f32 0.0, %v8636
    %8638 = vmatmul.f32.gmra.mxu0 %v8431
    %v8639 = vpop.f32.mrf.mxu0
    %v8640 = vadd.f32 0.0, %v8639
    %8641 = vmatmul.f32.gmra.mxu0 %v8434
    %v8642 = vpop.f32.mrf.mxu0
    %v8643 = vadd.f32 0.0, %v8642
    %8644 = vmatmul.f32.gmra.mxu0 %v8437
    %v8645 = vpop.f32.mrf.mxu0
    %v8646 = vadd.f32 0.0, %v8645
    %8647 = vmatmul.f32.gmra.mxu0 %v8440
    %v8648 = vpop.f32.mrf.mxu0
    %v8649 = vadd.f32 0.0, %v8648
    %8650 = vmatmul.f32.gmra.mxu0 %v8443
    %v8651 = vpop.f32.mrf.mxu0
    %v8652 = vadd.f32 0.0, %v8651
    %8653 = vmatmul.f32.gmra.mxu0 %v8446
    %v8654 = vpop.f32.mrf.mxu0
    %v8655 = vadd.f32 0.0, %v8654
    %8656 = vmatmul.f32.gmra.mxu0 %v8449
    %v8657 = vpop.f32.mrf.mxu0
    %v8658 = vadd.f32 0.0, %v8657
    %8659 = vmatmul.f32.gmra.mxu0 %v8452
    %v8660 = vpop.f32.mrf.mxu0
    %v8661 = vadd.f32 0.0, %v8660
    %8662 = vmatmul.f32.gmra.mxu0 %v8455
    %v8663 = vpop.f32.mrf.mxu0
    %v8664 = vadd.f32 0.0, %v8663
    %8665 = vmatmul.f32.gmra.mxu0 %v8458
    %v8666 = vpop.f32.mrf.mxu0
    %v8667 = vadd.f32 0.0, %v8666
    %8668 = vmatmul.f32.gmra.mxu0 %v8461
    %v8669 = vpop.f32.mrf.mxu0
    %v8670 = vadd.f32 0.0, %v8669
    %8671 = vmatmul.f32.gmra.mxu0 %v8464
    %v8672 = vpop.f32.mrf.mxu0
    %v8673 = vadd.f32 0.0, %v8672
    %8674 = vmatmul.f32.gmra.mxu0 %v8467
    %v8675 = vpop.f32.mrf.mxu0
    %v8676 = vadd.f32 0.0, %v8675
    %8677 = vmatmul.f32.gmra.mxu0 %v8470
    %v8678 = vpop.f32.mrf.mxu0
    %v8679 = vadd.f32 0.0, %v8678
    %8680 = vmatmul.f32.gmra.mxu0 %v8473
    %v8681 = vpop.f32.mrf.mxu0
    %v8682 = vadd.f32 0.0, %v8681
    %8683 = vmatmul.f32.gmra.mxu0 %v8476
    %v8684 = vpop.f32.mrf.mxu0
    %v8685 = vadd.f32 0.0, %v8684
    %8686 = vmatmul.f32.gmra.mxu0 %v8479
    %v8687 = vpop.f32.mrf.mxu0
    %v8688 = vadd.f32 0.0, %v8687
    %8689 = vmatmul.f32.gmra.mxu0 %v8482
    %v8690 = vpop.f32.mrf.mxu0
    %v8691 = vadd.f32 0.0, %v8690
    %8692 = vmatmul.f32.gmra.mxu0 %v8485
    %v8693 = vpop.f32.mrf.mxu0
    %v8694 = vadd.f32 0.0, %v8693
    %8695 = vmatmul.f32.gmra.mxu0 %v8488
    %v8696 = vpop.f32.mrf.mxu0
    %v8697 = vadd.f32 0.0, %v8696
    %8698 = vmatmul.f32.gmra.mxu0 %v8491
    %v8699 = vpop.f32.mrf.mxu0
    %v8700 = vadd.f32 0.0, %v8699
    %8701 = vmatmul.f32.gmra.mxu0 %v8494
    %v8702 = vpop.f32.mrf.mxu0
    %v8703 = vadd.f32 0.0, %v8702
    %8704 = vmatmul.f32.gmra.mxu0 %v8497
    %v8705 = vpop.f32.mrf.mxu0
    %v8706 = vadd.f32 0.0, %v8705
    %8707 = vmatmul.f32.gmra.mxu0 %v8500
    %v8708 = vpop.f32.mrf.mxu0
    %v8709 = vadd.f32 0.0, %v8708
    %8710 = vmatmul.f32.gmra.mxu0 %v8503
    %v8711 = vpop.f32.mrf.mxu0
    %v8712 = vadd.f32 0.0, %v8711
    %8713 = vmatmul.f32.gmra.mxu0 %v8506
    %v8714 = vpop.f32.mrf.mxu0
    %v8715 = vadd.f32 0.0, %v8714
    %8716 = vmatmul.f32.gmra.mxu0 %v8509
    %v8717 = vpop.f32.mrf.mxu0
    %v8718 = vadd.f32 0.0, %v8717
    %8719 = vdwg.mxu0
    %v8720 = vadd.f32 %v8188, %v8529
    %v8721 = vadd.f32 %v8189, %v8532
    %v8722 = vadd.f32 %v8190, %v8535
    %v8723 = vadd.f32 %v8191, %v8538
    %v8724 = vadd.f32 %v8192, %v8541
    %v8725 = vadd.f32 %v8193, %v8544
    %v8726 = vadd.f32 %v8194, %v8547
    %v8727 = vadd.f32 %v8195, %v8550
    %v8728 = vadd.f32 %v8196, %v8553
    %v8729 = vadd.f32 %v8197, %v8556
    %v8730 = vadd.f32 %v8198, %v8559
    %v8731 = vadd.f32 %v8199, %v8562
    %v8732 = vadd.f32 %v8200, %v8565
    %v8733 = vadd.f32 %v8201, %v8568
    %v8734 = vadd.f32 %v8202, %v8571
    %v8735 = vadd.f32 %v8203, %v8574
    %v8736 = vadd.f32 %v8204, %v8577
    %v8737 = vadd.f32 %v8205, %v8580
    %v8738 = vadd.f32 %v8206, %v8583
    %v8739 = vadd.f32 %v8207, %v8586
    %v8740 = vadd.f32 %v8208, %v8589
    %v8741 = vadd.f32 %v8209, %v8592
    %v8742 = vadd.f32 %v8210, %v8595
    %v8743 = vadd.f32 %v8211, %v8598
    %v8744 = vadd.f32 %v8212, %v8601
    %v8745 = vadd.f32 %v8213, %v8604
    %v8746 = vadd.f32 %v8214, %v8607
    %v8747 = vadd.f32 %v8215, %v8610
    %v8748 = vadd.f32 %v8216, %v8613
    %v8749 = vadd.f32 %v8217, %v8616
    %v8750 = vadd.f32 %v8218, %v8619
    %v8751 = vadd.f32 %v8219, %v8622
    %v8752 = vadd.f32 %v8220, %v8625
    %v8753 = vadd.f32 %v8221, %v8628
    %v8754 = vadd.f32 %v8222, %v8631
    %v8755 = vadd.f32 %v8223, %v8634
    %v8756 = vadd.f32 %v8224, %v8637
    %v8757 = vadd.f32 %v8225, %v8640
    %v8758 = vadd.f32 %v8226, %v8643
    %v8759 = vadd.f32 %v8227, %v8646
    %v8760 = vadd.f32 %v8228, %v8649
    %v8761 = vadd.f32 %v8229, %v8652
    %v8762 = vadd.f32 %v8230, %v8655
    %v8763 = vadd.f32 %v8231, %v8658
    %v8764 = vadd.f32 %v8232, %v8661
    %v8765 = vadd.f32 %v8233, %v8664
    %v8766 = vadd.f32 %v8234, %v8667
    %v8767 = vadd.f32 %v8235, %v8670
    %v8768 = vadd.f32 %v8236, %v8673
    %v8769 = vadd.f32 %v8237, %v8676
    %v8770 = vadd.f32 %v8238, %v8679
    %v8771 = vadd.f32 %v8239, %v8682
    %v8772 = vadd.f32 %v8240, %v8685
    %v8773 = vadd.f32 %v8241, %v8688
    %v8774 = vadd.f32 %v8242, %v8691
    %v8775 = vadd.f32 %v8243, %v8694
    %v8776 = vadd.f32 %v8244, %v8697
    %v8777 = vadd.f32 %v8245, %v8700
    %v8778 = vadd.f32 %v8246, %v8703
    %v8779 = vadd.f32 %v8247, %v8706
    %v8780 = vadd.f32 %v8248, %v8709
    %v8781 = vadd.f32 %v8249, %v8712
    %v8782 = vadd.f32 %v8250, %v8715
    %v8783 = vadd.f32 %v8251, %v8718
    %v8784 = vld [vmem:[%s8252 + $0x1] sm:$0xff]
    %v8785 = vld [vmem:[%s8252 + $0x9] sm:$0xff]
    %v8786 = vld [vmem:[%s8252 + $0x19] sm:$0xff]
    %v8787 = vld [vmem:[%s8252 + $0x21] sm:$0xff]
    %v8788 = vld [vmem:[%s8252 + $0x31] sm:$0xff]
    %v8789 = vld [vmem:[%s8252 + $0x39] sm:$0xff]
    %v8790 = vld [vmem:[%s8252 + $0x49] sm:$0xff]
    %v8791 = vld [vmem:[%s8252 + $0x51] sm:$0xff]
    %v8792 = vld [vmem:[%s8252 + $0x61] sm:$0xff]
    %v8793 = vld [vmem:[%s8252 + $0x69] sm:$0xff]
    %v8794 = vld [vmem:[%s8252 + $0x79] sm:$0xff]
    %v8795 = vld [vmem:[%s8252 + $0x81] sm:$0xff]
    %v8796 = vld [vmem:[%s8252 + $0x91] sm:$0xff]
    %v8797 = vld [vmem:[%s8252 + $0x99] sm:$0xff]
    %v8798 = vld [vmem:[%s8252 + $0xa9] sm:$0xff]
    %v8799 = vld [vmem:[%s8252 + $0xb1] sm:$0xff]
    %v8800 = vld [vmem:[%s8252 + $0xc1] sm:$0xff]
    %v8801 = vld [vmem:[%s8252 + $0xc9] sm:$0xff]
    %v8802 = vld [vmem:[%s8252 + $0xd9] sm:$0xff]
    %v8803 = vld [vmem:[%s8252 + $0xe1] sm:$0xff]
    %v8804 = vld [vmem:[%s8252 + $0xf1] sm:$0xff]
    %v8805 = vld [vmem:[%s8252 + $0xf9] sm:$0xff]
    %v8806 = vld [vmem:[%s8252 + $0x109] sm:$0xff]
    %v8807 = vld [vmem:[%s8252 + $0x111] sm:$0xff]
    %v8808 = vld [vmem:[%s8252 + $0x121] sm:$0xff]
    %v8809 = vld [vmem:[%s8252 + $0x129] sm:$0xff]
    %v8810 = vld [vmem:[%s8252 + $0x139] sm:$0xff]
    %v8811 = vld [vmem:[%s8252 + $0x141] sm:$0xff]
    %v8812 = vld [vmem:[%s8252 + $0x151] sm:$0xff]
    %v8813 = vld [vmem:[%s8252 + $0x159] sm:$0xff]
    %v8814 = vld [vmem:[%s8252 + $0x169] sm:$0xff]
    %v8815 = vld [vmem:[%s8252 + $0x171] sm:$0xff]
    %v8816 = vld [vmem:[%s8252 + $0x1b1] sm:$0xff]
    %v8817 = vld [vmem:[%s8252 + $0x1b9] sm:$0xff]
    %v8818 = vld [vmem:[%s8252 + $0x1c9] sm:$0xff]
    %v8819 = vld [vmem:[%s8252 + $0x1d1] sm:$0xff]
    %v8820 = vld [vmem:[%s8252 + $0x1e1] sm:$0xff]
    %v8821 = vld [vmem:[%s8252 + $0x1e9] sm:$0xff]
    %v8822 = vld [vmem:[%s8252 + $0x1f9] sm:$0xff]
    %v8823 = vld [vmem:[%s8252 + $0x201] sm:$0xff]
    %v8824 = vld [vmem:[%s8252 + $0x211] sm:$0xff]
    %v8825 = vld [vmem:[%s8252 + $0x219] sm:$0xff]
    %v8826 = vld [vmem:[%s8252 + $0x229] sm:$0xff]
    %v8827 = vld [vmem:[%s8252 + $0x231] sm:$0xff]
    %v8828 = vld [vmem:[%s8252 + $0x241] sm:$0xff]
    %v8829 = vld [vmem:[%s8252 + $0x249] sm:$0xff]
    %v8830 = vld [vmem:[%s8252 + $0x259] sm:$0xff]
    %v8831 = vld [vmem:[%s8252 + $0x261] sm:$0xff]
    %v8832 = vld [vmem:[%s8252 + $0x271] sm:$0xff]
    %v8833 = vld [vmem:[%s8252 + $0x279] sm:$0xff]
    %v8834 = vld [vmem:[%s8252 + $0x289] sm:$0xff]
    %v8835 = vld [vmem:[%s8252 + $0x291] sm:$0xff]
    %v8836 = vld [vmem:[%s8252 + $0x2a1] sm:$0xff]
    %v8837 = vld [vmem:[%s8252 + $0x2a9] sm:$0xff]
    %v8838 = vld [vmem:[%s8252 + $0x2b9] sm:$0xff]
    %v8839 = vld [vmem:[%s8252 + $0x2c1] sm:$0xff]
    %v8840 = vld [vmem:[%s8252 + $0x2d1] sm:$0xff]
    %v8841 = vld [vmem:[%s8252 + $0x2d9] sm:$0xff]
    %v8842 = vld [vmem:[%s8252 + $0x2e9] sm:$0xff]
    %v8843 = vld [vmem:[%s8252 + $0x2f1] sm:$0xff]
    %v8844 = vld [vmem:[%s8252 + $0x301] sm:$0xff]
    %v8845 = vld [vmem:[%s8252 + $0x309] sm:$0xff]
    %v8846 = vld [vmem:[%s8252 + $0x319] sm:$0xff]
    %v8847 = vld [vmem:[%s8252 + $0x321] sm:$0xff]
    %v8848 = vld [vmem:[%s3 + $0x70] sm:$0xff]
    %v8849 = vld [vmem:[%s3 + $0x78] sm:$0xff]
    %v8851 = vsel %vm5041, %v8784, 0
    %v8854 = vsel %vm5041, %v8785, 0
    %v8857 = vsel %vm5041, %v8786, 0
    %v8860 = vsel %vm5041, %v8787, 0
    %v8863 = vsel %vm5041, %v8788, 0
    %v8866 = vsel %vm5041, %v8789, 0
    %v8869 = vsel %vm5041, %v8790, 0
    %v8872 = vsel %vm5041, %v8791, 0
    %v8875 = vsel %vm5041, %v8792, 0
    %v8878 = vsel %vm5041, %v8793, 0
    %v8881 = vsel %vm5041, %v8794, 0
    %v8884 = vsel %vm5041, %v8795, 0
    %v8887 = vsel %vm5041, %v8796, 0
    %v8890 = vsel %vm5041, %v8797, 0
    %v8893 = vsel %vm5041, %v8798, 0
    %v8896 = vsel %vm5041, %v8799, 0
    %v8899 = vsel %vm5041, %v8800, 0
    %v8902 = vsel %vm5041, %v8801, 0
    %v8905 = vsel %vm5041, %v8802, 0
    %v8908 = vsel %vm5041, %v8803, 0
    %v8911 = vsel %vm5041, %v8804, 0
    %v8914 = vsel %vm5041, %v8805, 0
    %v8917 = vsel %vm5041, %v8806, 0
    %v8920 = vsel %vm5041, %v8807, 0
    %v8923 = vsel %vm5041, %v8808, 0
    %v8926 = vsel %vm5041, %v8809, 0
    %v8929 = vsel %vm5041, %v8810, 0
    %v8932 = vsel %vm5041, %v8811, 0
    %v8935 = vsel %vm5041, %v8812, 0
    %v8938 = vsel %vm5041, %v8813, 0
    %v8941 = vsel %vm5041, %v8814, 0
    %v8944 = vsel %vm5041, %v8815, 0
    %v8947 = vsel %vm5041, %v8816, 0
    %v8950 = vsel %vm5041, %v8817, 0
    %v8953 = vsel %vm5041, %v8818, 0
    %v8956 = vsel %vm5041, %v8819, 0
    %v8959 = vsel %vm5041, %v8820, 0
    %v8962 = vsel %vm5041, %v8821, 0
    %v8965 = vsel %vm5041, %v8822, 0
    %v8968 = vsel %vm5041, %v8823, 0
    %v8971 = vsel %vm5041, %v8824, 0
    %v8974 = vsel %vm5041, %v8825, 0
    %v8977 = vsel %vm5041, %v8826, 0
    %v8980 = vsel %vm5041, %v8827, 0
    %v8983 = vsel %vm5041, %v8828, 0
    %v8986 = vsel %vm5041, %v8829, 0
    %v8989 = vsel %vm5041, %v8830, 0
    %v8992 = vsel %vm5041, %v8831, 0
    %v8995 = vsel %vm5041, %v8832, 0
    %v8998 = vsel %vm5041, %v8833, 0
    %v9001 = vsel %vm5041, %v8834, 0
    %v9004 = vsel %vm5041, %v8835, 0
    %v9007 = vsel %vm5041, %v8836, 0
    %v9010 = vsel %vm5041, %v8837, 0
    %v9013 = vsel %vm5041, %v8838, 0
    %v9016 = vsel %vm5041, %v8839, 0
    %v9019 = vsel %vm5041, %v8840, 0
    %v9022 = vsel %vm5041, %v8841, 0
    %v9025 = vsel %vm5041, %v8842, 0
    %v9028 = vsel %vm5041, %v8843, 0
    %v9031 = vsel %vm5041, %v8844, 0
    %v9034 = vsel %vm5041, %v8845, 0
    %v9037 = vsel %vm5041, %v8846, 0
    %v9040 = vsel %vm5041, %v8847, 0
    %9042 = vmatpush.msra.mxu0 0.0
    %9043 = vmatpush.msra.mxu0 0.0
    %9044 = vmatpush.msra.mxu0 0.0
    %9045 = vmatpush.msra.mxu0 0.0
    %9046 = vmatpush.msra.mxu0 0.0
    %9047 = vmatpush.msra.mxu0 0.0
    %9048 = vmatpush.msra.mxu0 0.0
    %9049 = vmatpush.msra.mxu0 0.0
    %9050 = vmatpush.msra.mxu0 0.0
    %9051 = vmatpush.msra.mxu0 0.0
    %9052 = vmatpush.msra.mxu0 0.0
    %9053 = vmatpush.msra.mxu0 0.0
    %9054 = vmatpush.msra.mxu0 0.0
    %9055 = vmatpush.msra.mxu0 0.0
    %9056 = vmatpush.msra.mxu0 %v8849
    %9057 = vmatpush.msra.mxu0 %v8848
    %9058 = vmatmul.f32.gmra.mxu0 %v8851
    %v9059 = vpop.f32.mrf.mxu0
    %v9060 = vadd.f32 0.0, %v9059
    %9061 = vmatmul.f32.gmra.mxu0 %v8854
    %v9062 = vpop.f32.mrf.mxu0
    %v9063 = vadd.f32 0.0, %v9062
    %9064 = vmatmul.f32.gmra.mxu0 %v8857
    %v9065 = vpop.f32.mrf.mxu0
    %v9066 = vadd.f32 0.0, %v9065
    %9067 = vmatmul.f32.gmra.mxu0 %v8860
    %v9068 = vpop.f32.mrf.mxu0
    %v9069 = vadd.f32 0.0, %v9068
    %9070 = vmatmul.f32.gmra.mxu0 %v8863
    %v9071 = vpop.f32.mrf.mxu0
    %v9072 = vadd.f32 0.0, %v9071
    %9073 = vmatmul.f32.gmra.mxu0 %v8866
    %v9074 = vpop.f32.mrf.mxu0
    %v9075 = vadd.f32 0.0, %v9074
    %9076 = vmatmul.f32.gmra.mxu0 %v8869
    %v9077 = vpop.f32.mrf.mxu0
    %v9078 = vadd.f32 0.0, %v9077
    %9079 = vmatmul.f32.gmra.mxu0 %v8872
    %v9080 = vpop.f32.mrf.mxu0
    %v9081 = vadd.f32 0.0, %v9080
    %9082 = vmatmul.f32.gmra.mxu0 %v8875
    %v9083 = vpop.f32.mrf.mxu0
    %v9084 = vadd.f32 0.0, %v9083
    %9085 = vmatmul.f32.gmra.mxu0 %v8878
    %v9086 = vpop.f32.mrf.mxu0
    %v9087 = vadd.f32 0.0, %v9086
    %9088 = vmatmul.f32.gmra.mxu0 %v8881
    %v9089 = vpop.f32.mrf.mxu0
    %v9090 = vadd.f32 0.0, %v9089
    %9091 = vmatmul.f32.gmra.mxu0 %v8884
    %v9092 = vpop.f32.mrf.mxu0
    %v9093 = vadd.f32 0.0, %v9092
    %9094 = vmatmul.f32.gmra.mxu0 %v8887
    %v9095 = vpop.f32.mrf.mxu0
    %v9096 = vadd.f32 0.0, %v9095
    %9097 = vmatmul.f32.gmra.mxu0 %v8890
    %v9098 = vpop.f32.mrf.mxu0
    %v9099 = vadd.f32 0.0, %v9098
    %9100 = vmatmul.f32.gmra.mxu0 %v8893
    %v9101 = vpop.f32.mrf.mxu0
    %v9102 = vadd.f32 0.0, %v9101
    %9103 = vmatmul.f32.gmra.mxu0 %v8896
    %v9104 = vpop.f32.mrf.mxu0
    %v9105 = vadd.f32 0.0, %v9104
    %9106 = vmatmul.f32.gmra.mxu0 %v8899
    %v9107 = vpop.f32.mrf.mxu0
    %v9108 = vadd.f32 0.0, %v9107
    %9109 = vmatmul.f32.gmra.mxu0 %v8902
    %v9110 = vpop.f32.mrf.mxu0
    %v9111 = vadd.f32 0.0, %v9110
    %9112 = vmatmul.f32.gmra.mxu0 %v8905
    %v9113 = vpop.f32.mrf.mxu0
    %v9114 = vadd.f32 0.0, %v9113
    %9115 = vmatmul.f32.gmra.mxu0 %v8908
    %v9116 = vpop.f32.mrf.mxu0
    %v9117 = vadd.f32 0.0, %v9116
    %9118 = vmatmul.f32.gmra.mxu0 %v8911
    %v9119 = vpop.f32.mrf.mxu0
    %v9120 = vadd.f32 0.0, %v9119
    %9121 = vmatmul.f32.gmra.mxu0 %v8914
    %v9122 = vpop.f32.mrf.mxu0
    %v9123 = vadd.f32 0.0, %v9122
    %9124 = vmatmul.f32.gmra.mxu0 %v8917
    %v9125 = vpop.f32.mrf.mxu0
    %v9126 = vadd.f32 0.0, %v9125
    %9127 = vmatmul.f32.gmra.mxu0 %v8920
    %v9128 = vpop.f32.mrf.mxu0
    %v9129 = vadd.f32 0.0, %v9128
    %9130 = vmatmul.f32.gmra.mxu0 %v8923
    %v9131 = vpop.f32.mrf.mxu0
    %v9132 = vadd.f32 0.0, %v9131
    %9133 = vmatmul.f32.gmra.mxu0 %v8926
    %v9134 = vpop.f32.mrf.mxu0
    %v9135 = vadd.f32 0.0, %v9134
    %9136 = vmatmul.f32.gmra.mxu0 %v8929
    %v9137 = vpop.f32.mrf.mxu0
    %v9138 = vadd.f32 0.0, %v9137
    %9139 = vmatmul.f32.gmra.mxu0 %v8932
    %v9140 = vpop.f32.mrf.mxu0
    %v9141 = vadd.f32 0.0, %v9140
    %9142 = vmatmul.f32.gmra.mxu0 %v8935
    %v9143 = vpop.f32.mrf.mxu0
    %v9144 = vadd.f32 0.0, %v9143
    %9145 = vmatmul.f32.gmra.mxu0 %v8938
    %v9146 = vpop.f32.mrf.mxu0
    %v9147 = vadd.f32 0.0, %v9146
    %9148 = vmatmul.f32.gmra.mxu0 %v8941
    %v9149 = vpop.f32.mrf.mxu0
    %v9150 = vadd.f32 0.0, %v9149
    %9151 = vmatmul.f32.gmra.mxu0 %v8944
    %v9152 = vpop.f32.mrf.mxu0
    %v9153 = vadd.f32 0.0, %v9152
    %9154 = vmatmul.f32.gmra.mxu0 %v8947
    %v9155 = vpop.f32.mrf.mxu0
    %v9156 = vadd.f32 0.0, %v9155
    %9157 = vmatmul.f32.gmra.mxu0 %v8950
    %v9158 = vpop.f32.mrf.mxu0
    %v9159 = vadd.f32 0.0, %v9158
    %9160 = vmatmul.f32.gmra.mxu0 %v8953
    %v9161 = vpop.f32.mrf.mxu0
    %v9162 = vadd.f32 0.0, %v9161
    %9163 = vmatmul.f32.gmra.mxu0 %v8956
    %v9164 = vpop.f32.mrf.mxu0
    %v9165 = vadd.f32 0.0, %v9164
    %9166 = vmatmul.f32.gmra.mxu0 %v8959
    %v9167 = vpop.f32.mrf.mxu0
    %v9168 = vadd.f32 0.0, %v9167
    %9169 = vmatmul.f32.gmra.mxu0 %v8962
    %v9170 = vpop.f32.mrf.mxu0
    %v9171 = vadd.f32 0.0, %v9170
    %9172 = vmatmul.f32.gmra.mxu0 %v8965
    %v9173 = vpop.f32.mrf.mxu0
    %v9174 = vadd.f32 0.0, %v9173
    %9175 = vmatmul.f32.gmra.mxu0 %v8968
    %v9176 = vpop.f32.mrf.mxu0
    %v9177 = vadd.f32 0.0, %v9176
    %9178 = vmatmul.f32.gmra.mxu0 %v8971
    %v9179 = vpop.f32.mrf.mxu0
    %v9180 = vadd.f32 0.0, %v9179
    %9181 = vmatmul.f32.gmra.mxu0 %v8974
    %v9182 = vpop.f32.mrf.mxu0
    %v9183 = vadd.f32 0.0, %v9182
    %9184 = vmatmul.f32.gmra.mxu0 %v8977
    %v9185 = vpop.f32.mrf.mxu0
    %v9186 = vadd.f32 0.0, %v9185
    %9187 = vmatmul.f32.gmra.mxu0 %v8980
    %v9188 = vpop.f32.mrf.mxu0
    %v9189 = vadd.f32 0.0, %v9188
    %9190 = vmatmul.f32.gmra.mxu0 %v8983
    %v9191 = vpop.f32.mrf.mxu0
    %v9192 = vadd.f32 0.0, %v9191
    %9193 = vmatmul.f32.gmra.mxu0 %v8986
    %v9194 = vpop.f32.mrf.mxu0
    %v9195 = vadd.f32 0.0, %v9194
    %9196 = vmatmul.f32.gmra.mxu0 %v8989
    %v9197 = vpop.f32.mrf.mxu0
    %v9198 = vadd.f32 0.0, %v9197
    %9199 = vmatmul.f32.gmra.mxu0 %v8992
    %v9200 = vpop.f32.mrf.mxu0
    %v9201 = vadd.f32 0.0, %v9200
    %9202 = vmatmul.f32.gmra.mxu0 %v8995
    %v9203 = vpop.f32.mrf.mxu0
    %v9204 = vadd.f32 0.0, %v9203
    %9205 = vmatmul.f32.gmra.mxu0 %v8998
    %v9206 = vpop.f32.mrf.mxu0
    %v9207 = vadd.f32 0.0, %v9206
    %9208 = vmatmul.f32.gmra.mxu0 %v9001
    %v9209 = vpop.f32.mrf.mxu0
    %v9210 = vadd.f32 0.0, %v9209
    %9211 = vmatmul.f32.gmra.mxu0 %v9004
    %v9212 = vpop.f32.mrf.mxu0
    %v9213 = vadd.f32 0.0, %v9212
    %9214 = vmatmul.f32.gmra.mxu0 %v9007
    %v9215 = vpop.f32.mrf.mxu0
    %v9216 = vadd.f32 0.0, %v9215
    %9217 = vmatmul.f32.gmra.mxu0 %v9010
    %v9218 = vpop.f32.mrf.mxu0
    %v9219 = vadd.f32 0.0, %v9218
    %9220 = vmatmul.f32.gmra.mxu0 %v9013
    %v9221 = vpop.f32.mrf.mxu0
    %v9222 = vadd.f32 0.0, %v9221
    %9223 = vmatmul.f32.gmra.mxu0 %v9016
    %v9224 = vpop.f32.mrf.mxu0
    %v9225 = vadd.f32 0.0, %v9224
    %9226 = vmatmul.f32.gmra.mxu0 %v9019
    %v9227 = vpop.f32.mrf.mxu0
    %v9228 = vadd.f32 0.0, %v9227
    %9229 = vmatmul.f32.gmra.mxu0 %v9022
    %v9230 = vpop.f32.mrf.mxu0
    %v9231 = vadd.f32 0.0, %v9230
    %9232 = vmatmul.f32.gmra.mxu0 %v9025
    %v9233 = vpop.f32.mrf.mxu0
    %v9234 = vadd.f32 0.0, %v9233
    %9235 = vmatmul.f32.gmra.mxu0 %v9028
    %v9236 = vpop.f32.mrf.mxu0
    %v9237 = vadd.f32 0.0, %v9236
    %9238 = vmatmul.f32.gmra.mxu0 %v9031
    %v9239 = vpop.f32.mrf.mxu0
    %v9240 = vadd.f32 0.0, %v9239
    %9241 = vmatmul.f32.gmra.mxu0 %v9034
    %v9242 = vpop.f32.mrf.mxu0
    %v9243 = vadd.f32 0.0, %v9242
    %9244 = vmatmul.f32.gmra.mxu0 %v9037
    %v9245 = vpop.f32.mrf.mxu0
    %v9246 = vadd.f32 0.0, %v9245
    %9247 = vmatmul.f32.gmra.mxu0 %v9040
    %v9248 = vpop.f32.mrf.mxu0
    %v9249 = vadd.f32 0.0, %v9248
    %9250 = vdwg.mxu0
    %v9251 = vadd.f32 %v8720, %v9060
    %v9252 = vadd.f32 %v8721, %v9063
    %v9253 = vadd.f32 %v8722, %v9066
    %v9254 = vadd.f32 %v8723, %v9069
    %v9255 = vadd.f32 %v8724, %v9072
    %v9256 = vadd.f32 %v8725, %v9075
    %v9257 = vadd.f32 %v8726, %v9078
    %v9258 = vadd.f32 %v8727, %v9081
    %v9259 = vadd.f32 %v8728, %v9084
    %v9260 = vadd.f32 %v8729, %v9087
    %v9261 = vadd.f32 %v8730, %v9090
    %v9262 = vadd.f32 %v8731, %v9093
    %v9263 = vadd.f32 %v8732, %v9096
    %v9264 = vadd.f32 %v8733, %v9099
    %v9265 = vadd.f32 %v8734, %v9102
    %v9266 = vadd.f32 %v8735, %v9105
    %v9267 = vadd.f32 %v8736, %v9108
    %v9268 = vadd.f32 %v8737, %v9111
    %v9269 = vadd.f32 %v8738, %v9114
    %v9270 = vadd.f32 %v8739, %v9117
    %v9271 = vadd.f32 %v8740, %v9120
    %v9272 = vadd.f32 %v8741, %v9123
    %v9273 = vadd.f32 %v8742, %v9126
    %v9274 = vadd.f32 %v8743, %v9129
    %v9275 = vadd.f32 %v8744, %v9132
    %v9276 = vadd.f32 %v8745, %v9135
    %v9277 = vadd.f32 %v8746, %v9138
    %v9278 = vadd.f32 %v8747, %v9141
    %v9279 = vadd.f32 %v8748, %v9144
    %v9280 = vadd.f32 %v8749, %v9147
    %v9281 = vadd.f32 %v8750, %v9150
    %v9282 = vadd.f32 %v8751, %v9153
    %v9283 = vadd.f32 %v8752, %v9156
    %v9284 = vadd.f32 %v8753, %v9159
    %v9285 = vadd.f32 %v8754, %v9162
    %v9286 = vadd.f32 %v8755, %v9165
    %v9287 = vadd.f32 %v8756, %v9168
    %v9288 = vadd.f32 %v8757, %v9171
    %v9289 = vadd.f32 %v8758, %v9174
    %v9290 = vadd.f32 %v8759, %v9177
    %v9291 = vadd.f32 %v8760, %v9180
    %v9292 = vadd.f32 %v8761, %v9183
    %v9293 = vadd.f32 %v8762, %v9186
    %v9294 = vadd.f32 %v8763, %v9189
    %v9295 = vadd.f32 %v8764, %v9192
    %v9296 = vadd.f32 %v8765, %v9195
    %v9297 = vadd.f32 %v8766, %v9198
    %v9298 = vadd.f32 %v8767, %v9201
    %v9299 = vadd.f32 %v8768, %v9204
    %v9300 = vadd.f32 %v8769, %v9207
    %v9301 = vadd.f32 %v8770, %v9210
    %v9302 = vadd.f32 %v8771, %v9213
    %v9303 = vadd.f32 %v8772, %v9216
    %v9304 = vadd.f32 %v8773, %v9219
    %v9305 = vadd.f32 %v8774, %v9222
    %v9306 = vadd.f32 %v8775, %v9225
    %v9307 = vadd.f32 %v8776, %v9228
    %v9308 = vadd.f32 %v8777, %v9231
    %v9309 = vadd.f32 %v8778, %v9234
    %v9310 = vadd.f32 %v8779, %v9237
    %v9311 = vadd.f32 %v8780, %v9240
    %v9312 = vadd.f32 %v8781, %v9243
    %v9313 = vadd.f32 %v8782, %v9246
    %v9314 = vadd.f32 %v8783, %v9249
    %v9315 = vld [vmem:[%s8252 + $0x2] sm:$0xff]
    %v9316 = vld [vmem:[%s8252 + $0xa] sm:$0xff]
    %v9317 = vld [vmem:[%s8252 + $0x1a] sm:$0xff]
    %v9318 = vld [vmem:[%s8252 + $0x22] sm:$0xff]
    %v9319 = vld [vmem:[%s8252 + $0x32] sm:$0xff]
    %v9320 = vld [vmem:[%s8252 + $0x3a] sm:$0xff]
    %v9321 = vld [vmem:[%s8252 + $0x4a] sm:$0xff]
    %v9322 = vld [vmem:[%s8252 + $0x52] sm:$0xff]
    %v9323 = vld [vmem:[%s8252 + $0x62] sm:$0xff]
    %v9324 = vld [vmem:[%s8252 + $0x6a] sm:$0xff]
    %v9325 = vld [vmem:[%s8252 + $0x7a] sm:$0xff]
    %v9326 = vld [vmem:[%s8252 + $0x82] sm:$0xff]
    %v9327 = vld [vmem:[%s8252 + $0x92] sm:$0xff]
    %v9328 = vld [vmem:[%s8252 + $0x9a] sm:$0xff]
    %v9329 = vld [vmem:[%s8252 + $0xaa] sm:$0xff]
    %v9330 = vld [vmem:[%s8252 + $0xb2] sm:$0xff]
    %v9331 = vld [vmem:[%s8252 + $0xc2] sm:$0xff]
    %v9332 = vld [vmem:[%s8252 + $0xca] sm:$0xff]
    %v9333 = vld [vmem:[%s8252 + $0xda] sm:$0xff]
    %v9334 = vld [vmem:[%s8252 + $0xe2] sm:$0xff]
    %v9335 = vld [vmem:[%s8252 + $0xf2] sm:$0xff]
    %v9336 = vld [vmem:[%s8252 + $0xfa] sm:$0xff]
    %v9337 = vld [vmem:[%s8252 + $0x10a] sm:$0xff]
    %v9338 = vld [vmem:[%s8252 + $0x112] sm:$0xff]
    %v9339 = vld [vmem:[%s8252 + $0x122] sm:$0xff]
    %v9340 = vld [vmem:[%s8252 + $0x12a] sm:$0xff]
    %v9341 = vld [vmem:[%s8252 + $0x13a] sm:$0xff]
    %v9342 = vld [vmem:[%s8252 + $0x142] sm:$0xff]
    %v9343 = vld [vmem:[%s8252 + $0x152] sm:$0xff]
    %v9344 = vld [vmem:[%s8252 + $0x15a] sm:$0xff]
    %v9345 = vld [vmem:[%s8252 + $0x16a] sm:$0xff]
    %v9346 = vld [vmem:[%s8252 + $0x172] sm:$0xff]
    %v9347 = vld [vmem:[%s8252 + $0x1b2] sm:$0xff]
    %v9348 = vld [vmem:[%s8252 + $0x1ba] sm:$0xff]
    %v9349 = vld [vmem:[%s8252 + $0x1ca] sm:$0xff]
    %v9350 = vld [vmem:[%s8252 + $0x1d2] sm:$0xff]
    %v9351 = vld [vmem:[%s8252 + $0x1e2] sm:$0xff]
    %v9352 = vld [vmem:[%s8252 + $0x1ea] sm:$0xff]
    %v9353 = vld [vmem:[%s8252 + $0x1fa] sm:$0xff]
    %v9354 = vld [vmem:[%s8252 + $0x202] sm:$0xff]
    %v9355 = vld [vmem:[%s8252 + $0x212] sm:$0xff]
    %v9356 = vld [vmem:[%s8252 + $0x21a] sm:$0xff]
    %v9357 = vld [vmem:[%s8252 + $0x22a] sm:$0xff]
    %v9358 = vld [vmem:[%s8252 + $0x232] sm:$0xff]
    %v9359 = vld [vmem:[%s8252 + $0x242] sm:$0xff]
    %v9360 = vld [vmem:[%s8252 + $0x24a] sm:$0xff]
    %v9361 = vld [vmem:[%s8252 + $0x25a] sm:$0xff]
    %v9362 = vld [vmem:[%s8252 + $0x262] sm:$0xff]
    %v9363 = vld [vmem:[%s8252 + $0x272] sm:$0xff]
    %v9364 = vld [vmem:[%s8252 + $0x27a] sm:$0xff]
    %v9365 = vld [vmem:[%s8252 + $0x28a] sm:$0xff]
    %v9366 = vld [vmem:[%s8252 + $0x292] sm:$0xff]
    %v9367 = vld [vmem:[%s8252 + $0x2a2] sm:$0xff]
    %v9368 = vld [vmem:[%s8252 + $0x2aa] sm:$0xff]
    %v9369 = vld [vmem:[%s8252 + $0x2ba] sm:$0xff]
    %v9370 = vld [vmem:[%s8252 + $0x2c2] sm:$0xff]
    %v9371 = vld [vmem:[%s8252 + $0x2d2] sm:$0xff]
    %v9372 = vld [vmem:[%s8252 + $0x2da] sm:$0xff]
    %v9373 = vld [vmem:[%s8252 + $0x2ea] sm:$0xff]
    %v9374 = vld [vmem:[%s8252 + $0x2f2] sm:$0xff]
    %v9375 = vld [vmem:[%s8252 + $0x302] sm:$0xff]
    %v9376 = vld [vmem:[%s8252 + $0x30a] sm:$0xff]
    %v9377 = vld [vmem:[%s8252 + $0x31a] sm:$0xff]
    %v9378 = vld [vmem:[%s8252 + $0x322] sm:$0xff]
    %v9379 = vld [vmem:[%s3 + $0x80] sm:$0xff]
    %v9380 = vld [vmem:[%s3 + $0x88] sm:$0xff]
    %v9382 = vsel %vm5041, %v9315, 0
    %v9385 = vsel %vm5041, %v9316, 0
    %v9388 = vsel %vm5041, %v9317, 0
    %v9391 = vsel %vm5041, %v9318, 0
    %v9394 = vsel %vm5041, %v9319, 0
    %v9397 = vsel %vm5041, %v9320, 0
    %v9400 = vsel %vm5041, %v9321, 0
    %v9403 = vsel %vm5041, %v9322, 0
    %v9406 = vsel %vm5041, %v9323, 0
    %v9409 = vsel %vm5041, %v9324, 0
    %v9412 = vsel %vm5041, %v9325, 0
    %v9415 = vsel %vm5041, %v9326, 0
    %v9418 = vsel %vm5041, %v9327, 0
    %v9421 = vsel %vm5041, %v9328, 0
    %v9424 = vsel %vm5041, %v9329, 0
    %v9427 = vsel %vm5041, %v9330, 0
    %v9430 = vsel %vm5041, %v9331, 0
    %v9433 = vsel %vm5041, %v9332, 0
    %v9436 = vsel %vm5041, %v9333, 0
    %v9439 = vsel %vm5041, %v9334, 0
    %v9442 = vsel %vm5041, %v9335, 0
    %v9445 = vsel %vm5041, %v9336, 0
    %v9448 = vsel %vm5041, %v9337, 0
    %v9451 = vsel %vm5041, %v9338, 0
    %v9454 = vsel %vm5041, %v9339, 0
    %v9457 = vsel %vm5041, %v9340, 0
    %v9460 = vsel %vm5041, %v9341, 0
    %v9463 = vsel %vm5041, %v9342, 0
    %v9466 = vsel %vm5041, %v9343, 0
    %v9469 = vsel %vm5041, %v9344, 0
    %v9472 = vsel %vm5041, %v9345, 0
    %v9475 = vsel %vm5041, %v9346, 0
    %v9478 = vsel %vm5041, %v9347, 0
    %v9481 = vsel %vm5041, %v9348, 0
    %v9484 = vsel %vm5041, %v9349, 0
    %v9487 = vsel %vm5041, %v9350, 0
    %v9490 = vsel %vm5041, %v9351, 0
    %v9493 = vsel %vm5041, %v9352, 0
    %v9496 = vsel %vm5041, %v9353, 0
    %v9499 = vsel %vm5041, %v9354, 0
    %v9502 = vsel %vm5041, %v9355, 0
    %v9505 = vsel %vm5041, %v9356, 0
    %v9508 = vsel %vm5041, %v9357, 0
    %v9511 = vsel %vm5041, %v9358, 0
    %v9514 = vsel %vm5041, %v9359, 0
    %v9517 = vsel %vm5041, %v9360, 0
    %v9520 = vsel %vm5041, %v9361, 0
    %v9523 = vsel %vm5041, %v9362, 0
    %v9526 = vsel %vm5041, %v9363, 0
    %v9529 = vsel %vm5041, %v9364, 0
    %v9532 = vsel %vm5041, %v9365, 0
    %v9535 = vsel %vm5041, %v9366, 0
    %v9538 = vsel %vm5041, %v9367, 0
    %v9541 = vsel %vm5041, %v9368, 0
    %v9544 = vsel %vm5041, %v9369, 0
    %v9547 = vsel %vm5041, %v9370, 0
    %v9550 = vsel %vm5041, %v9371, 0
    %v9553 = vsel %vm5041, %v9372, 0
    %v9556 = vsel %vm5041, %v9373, 0
    %v9559 = vsel %vm5041, %v9374, 0
    %v9562 = vsel %vm5041, %v9375, 0
    %v9565 = vsel %vm5041, %v9376, 0
    %v9568 = vsel %vm5041, %v9377, 0
    %v9571 = vsel %vm5041, %v9378, 0
    %9573 = vmatpush.msra.mxu0 0.0
    %9574 = vmatpush.msra.mxu0 0.0
    %9575 = vmatpush.msra.mxu0 0.0
    %9576 = vmatpush.msra.mxu0 0.0
    %9577 = vmatpush.msra.mxu0 0.0
    %9578 = vmatpush.msra.mxu0 0.0
    %9579 = vmatpush.msra.mxu0 0.0
    %9580 = vmatpush.msra.mxu0 0.0
    %9581 = vmatpush.msra.mxu0 0.0
    %9582 = vmatpush.msra.mxu0 0.0
    %9583 = vmatpush.msra.mxu0 0.0
    %9584 = vmatpush.msra.mxu0 0.0
    %9585 = vmatpush.msra.mxu0 0.0
    %9586 = vmatpush.msra.mxu0 0.0
    %9587 = vmatpush.msra.mxu0 %v9380
    %9588 = vmatpush.msra.mxu0 %v9379
    %9589 = vmatmul.f32.gmra.mxu0 %v9382
    %v9590 = vpop.f32.mrf.mxu0
    %v9591 = vadd.f32 0.0, %v9590
    %9592 = vmatmul.f32.gmra.mxu0 %v9385
    %v9593 = vpop.f32.mrf.mxu0
    %v9594 = vadd.f32 0.0, %v9593
    %9595 = vmatmul.f32.gmra.mxu0 %v9388
    %v9596 = vpop.f32.mrf.mxu0
    %v9597 = vadd.f32 0.0, %v9596
    %9598 = vmatmul.f32.gmra.mxu0 %v9391
    %v9599 = vpop.f32.mrf.mxu0
    %v9600 = vadd.f32 0.0, %v9599
    %9601 = vmatmul.f32.gmra.mxu0 %v9394
    %v9602 = vpop.f32.mrf.mxu0
    %v9603 = vadd.f32 0.0, %v9602
    %9604 = vmatmul.f32.gmra.mxu0 %v9397
    %v9605 = vpop.f32.mrf.mxu0
    %v9606 = vadd.f32 0.0, %v9605
    %9607 = vmatmul.f32.gmra.mxu0 %v9400
    %v9608 = vpop.f32.mrf.mxu0
    %v9609 = vadd.f32 0.0, %v9608
    %9610 = vmatmul.f32.gmra.mxu0 %v9403
    %v9611 = vpop.f32.mrf.mxu0
    %v9612 = vadd.f32 0.0, %v9611
    %9613 = vmatmul.f32.gmra.mxu0 %v9406
    %v9614 = vpop.f32.mrf.mxu0
    %v9615 = vadd.f32 0.0, %v9614
    %9616 = vmatmul.f32.gmra.mxu0 %v9409
    %v9617 = vpop.f32.mrf.mxu0
    %v9618 = vadd.f32 0.0, %v9617
    %9619 = vmatmul.f32.gmra.mxu0 %v9412
    %v9620 = vpop.f32.mrf.mxu0
    %v9621 = vadd.f32 0.0, %v9620
    %9622 = vmatmul.f32.gmra.mxu0 %v9415
    %v9623 = vpop.f32.mrf.mxu0
    %v9624 = vadd.f32 0.0, %v9623
    %9625 = vmatmul.f32.gmra.mxu0 %v9418
    %v9626 = vpop.f32.mrf.mxu0
    %v9627 = vadd.f32 0.0, %v9626
    %9628 = vmatmul.f32.gmra.mxu0 %v9421
    %v9629 = vpop.f32.mrf.mxu0
    %v9630 = vadd.f32 0.0, %v9629
    %9631 = vmatmul.f32.gmra.mxu0 %v9424
    %v9632 = vpop.f32.mrf.mxu0
    %v9633 = vadd.f32 0.0, %v9632
    %9634 = vmatmul.f32.gmra.mxu0 %v9427
    %v9635 = vpop.f32.mrf.mxu0
    %v9636 = vadd.f32 0.0, %v9635
    %9637 = vmatmul.f32.gmra.mxu0 %v9430
    %v9638 = vpop.f32.mrf.mxu0
    %v9639 = vadd.f32 0.0, %v9638
    %9640 = vmatmul.f32.gmra.mxu0 %v9433
    %v9641 = vpop.f32.mrf.mxu0
    %v9642 = vadd.f32 0.0, %v9641
    %9643 = vmatmul.f32.gmra.mxu0 %v9436
    %v9644 = vpop.f32.mrf.mxu0
    %v9645 = vadd.f32 0.0, %v9644
    %9646 = vmatmul.f32.gmra.mxu0 %v9439
    %v9647 = vpop.f32.mrf.mxu0
    %v9648 = vadd.f32 0.0, %v9647
    %9649 = vmatmul.f32.gmra.mxu0 %v9442
    %v9650 = vpop.f32.mrf.mxu0
    %v9651 = vadd.f32 0.0, %v9650
    %9652 = vmatmul.f32.gmra.mxu0 %v9445
    %v9653 = vpop.f32.mrf.mxu0
    %v9654 = vadd.f32 0.0, %v9653
    %9655 = vmatmul.f32.gmra.mxu0 %v9448
    %v9656 = vpop.f32.mrf.mxu0
    %v9657 = vadd.f32 0.0, %v9656
    %9658 = vmatmul.f32.gmra.mxu0 %v9451
    %v9659 = vpop.f32.mrf.mxu0
    %v9660 = vadd.f32 0.0, %v9659
    %9661 = vmatmul.f32.gmra.mxu0 %v9454
    %v9662 = vpop.f32.mrf.mxu0
    %v9663 = vadd.f32 0.0, %v9662
    %9664 = vmatmul.f32.gmra.mxu0 %v9457
    %v9665 = vpop.f32.mrf.mxu0
    %v9666 = vadd.f32 0.0, %v9665
    %9667 = vmatmul.f32.gmra.mxu0 %v9460
    %v9668 = vpop.f32.mrf.mxu0
    %v9669 = vadd.f32 0.0, %v9668
    %9670 = vmatmul.f32.gmra.mxu0 %v9463
    %v9671 = vpop.f32.mrf.mxu0
    %v9672 = vadd.f32 0.0, %v9671
    %9673 = vmatmul.f32.gmra.mxu0 %v9466
    %v9674 = vpop.f32.mrf.mxu0
    %v9675 = vadd.f32 0.0, %v9674
    %9676 = vmatmul.f32.gmra.mxu0 %v9469
    %v9677 = vpop.f32.mrf.mxu0
    %v9678 = vadd.f32 0.0, %v9677
    %9679 = vmatmul.f32.gmra.mxu0 %v9472
    %v9680 = vpop.f32.mrf.mxu0
    %v9681 = vadd.f32 0.0, %v9680
    %9682 = vmatmul.f32.gmra.mxu0 %v9475
    %v9683 = vpop.f32.mrf.mxu0
    %v9684 = vadd.f32 0.0, %v9683
    %9685 = vmatmul.f32.gmra.mxu0 %v9478
    %v9686 = vpop.f32.mrf.mxu0
    %v9687 = vadd.f32 0.0, %v9686
    %9688 = vmatmul.f32.gmra.mxu0 %v9481
    %v9689 = vpop.f32.mrf.mxu0
    %v9690 = vadd.f32 0.0, %v9689
    %9691 = vmatmul.f32.gmra.mxu0 %v9484
    %v9692 = vpop.f32.mrf.mxu0
    %v9693 = vadd.f32 0.0, %v9692
    %9694 = vmatmul.f32.gmra.mxu0 %v9487
    %v9695 = vpop.f32.mrf.mxu0
    %v9696 = vadd.f32 0.0, %v9695
    %9697 = vmatmul.f32.gmra.mxu0 %v9490
    %v9698 = vpop.f32.mrf.mxu0
    %v9699 = vadd.f32 0.0, %v9698
    %9700 = vmatmul.f32.gmra.mxu0 %v9493
    %v9701 = vpop.f32.mrf.mxu0
    %v9702 = vadd.f32 0.0, %v9701
    %9703 = vmatmul.f32.gmra.mxu0 %v9496
    %v9704 = vpop.f32.mrf.mxu0
    %v9705 = vadd.f32 0.0, %v9704
    %9706 = vmatmul.f32.gmra.mxu0 %v9499
    %v9707 = vpop.f32.mrf.mxu0
    %v9708 = vadd.f32 0.0, %v9707
    %9709 = vmatmul.f32.gmra.mxu0 %v9502
    %v9710 = vpop.f32.mrf.mxu0
    %v9711 = vadd.f32 0.0, %v9710
    %9712 = vmatmul.f32.gmra.mxu0 %v9505
    %v9713 = vpop.f32.mrf.mxu0
    %v9714 = vadd.f32 0.0, %v9713
    %9715 = vmatmul.f32.gmra.mxu0 %v9508
    %v9716 = vpop.f32.mrf.mxu0
    %v9717 = vadd.f32 0.0, %v9716
    %9718 = vmatmul.f32.gmra.mxu0 %v9511
    %v9719 = vpop.f32.mrf.mxu0
    %v9720 = vadd.f32 0.0, %v9719
    %9721 = vmatmul.f32.gmra.mxu0 %v9514
    %v9722 = vpop.f32.mrf.mxu0
    %v9723 = vadd.f32 0.0, %v9722
    %9724 = vmatmul.f32.gmra.mxu0 %v9517
    %v9725 = vpop.f32.mrf.mxu0
    %v9726 = vadd.f32 0.0, %v9725
    %9727 = vmatmul.f32.gmra.mxu0 %v9520
    %v9728 = vpop.f32.mrf.mxu0
    %v9729 = vadd.f32 0.0, %v9728
    %9730 = vmatmul.f32.gmra.mxu0 %v9523
    %v9731 = vpop.f32.mrf.mxu0
    %v9732 = vadd.f32 0.0, %v9731
    %9733 = vmatmul.f32.gmra.mxu0 %v9526
    %v9734 = vpop.f32.mrf.mxu0
    %v9735 = vadd.f32 0.0, %v9734
    %9736 = vmatmul.f32.gmra.mxu0 %v9529
    %v9737 = vpop.f32.mrf.mxu0
    %v9738 = vadd.f32 0.0, %v9737
    %9739 = vmatmul.f32.gmra.mxu0 %v9532
    %v9740 = vpop.f32.mrf.mxu0
    %v9741 = vadd.f32 0.0, %v9740
    %9742 = vmatmul.f32.gmra.mxu0 %v9535
    %v9743 = vpop.f32.mrf.mxu0
    %v9744 = vadd.f32 0.0, %v9743
    %9745 = vmatmul.f32.gmra.mxu0 %v9538
    %v9746 = vpop.f32.mrf.mxu0
    %v9747 = vadd.f32 0.0, %v9746
    %9748 = vmatmul.f32.gmra.mxu0 %v9541
    %v9749 = vpop.f32.mrf.mxu0
    %v9750 = vadd.f32 0.0, %v9749
    %9751 = vmatmul.f32.gmra.mxu0 %v9544
    %v9752 = vpop.f32.mrf.mxu0
    %v9753 = vadd.f32 0.0, %v9752
    %9754 = vmatmul.f32.gmra.mxu0 %v9547
    %v9755 = vpop.f32.mrf.mxu0
    %v9756 = vadd.f32 0.0, %v9755
    %9757 = vmatmul.f32.gmra.mxu0 %v9550
    %v9758 = vpop.f32.mrf.mxu0
    %v9759 = vadd.f32 0.0, %v9758
    %9760 = vmatmul.f32.gmra.mxu0 %v9553
    %v9761 = vpop.f32.mrf.mxu0
    %v9762 = vadd.f32 0.0, %v9761
    %9763 = vmatmul.f32.gmra.mxu0 %v9556
    %v9764 = vpop.f32.mrf.mxu0
    %v9765 = vadd.f32 0.0, %v9764
    %9766 = vmatmul.f32.gmra.mxu0 %v9559
    %v9767 = vpop.f32.mrf.mxu0
    %v9768 = vadd.f32 0.0, %v9767
    %9769 = vmatmul.f32.gmra.mxu0 %v9562
    %v9770 = vpop.f32.mrf.mxu0
    %v9771 = vadd.f32 0.0, %v9770
    %9772 = vmatmul.f32.gmra.mxu0 %v9565
    %v9773 = vpop.f32.mrf.mxu0
    %v9774 = vadd.f32 0.0, %v9773
    %9775 = vmatmul.f32.gmra.mxu0 %v9568
    %v9776 = vpop.f32.mrf.mxu0
    %v9777 = vadd.f32 0.0, %v9776
    %9778 = vmatmul.f32.gmra.mxu0 %v9571
    %v9779 = vpop.f32.mrf.mxu0
    %v9780 = vadd.f32 0.0, %v9779
    %9781 = vdwg.mxu0
    %v9782 = vadd.f32 %v9251, %v9591
    %v9783 = vadd.f32 %v9252, %v9594
    %v9784 = vadd.f32 %v9253, %v9597
    %v9785 = vadd.f32 %v9254, %v9600
    %v9786 = vadd.f32 %v9255, %v9603
    %v9787 = vadd.f32 %v9256, %v9606
    %v9788 = vadd.f32 %v9257, %v9609
    %v9789 = vadd.f32 %v9258, %v9612
    %v9790 = vadd.f32 %v9259, %v9615
    %v9791 = vadd.f32 %v9260, %v9618
    %v9792 = vadd.f32 %v9261, %v9621
    %v9793 = vadd.f32 %v9262, %v9624
    %v9794 = vadd.f32 %v9263, %v9627
    %v9795 = vadd.f32 %v9264, %v9630
    %v9796 = vadd.f32 %v9265, %v9633
    %v9797 = vadd.f32 %v9266, %v9636
    %v9798 = vadd.f32 %v9267, %v9639
    %v9799 = vadd.f32 %v9268, %v9642
    %v9800 = vadd.f32 %v9269, %v9645
    %v9801 = vadd.f32 %v9270, %v9648
    %v9802 = vadd.f32 %v9271, %v9651
    %v9803 = vadd.f32 %v9272, %v9654
    %v9804 = vadd.f32 %v9273, %v9657
    %v9805 = vadd.f32 %v9274, %v9660
    %v9806 = vadd.f32 %v9275, %v9663
    %v9807 = vadd.f32 %v9276, %v9666
    %v9808 = vadd.f32 %v9277, %v9669
    %v9809 = vadd.f32 %v9278, %v9672
    %v9810 = vadd.f32 %v9279, %v9675
    %v9811 = vadd.f32 %v9280, %v9678
    %v9812 = vadd.f32 %v9281, %v9681
    %v9813 = vadd.f32 %v9282, %v9684
    %v9814 = vadd.f32 %v9283, %v9687
    %v9815 = vadd.f32 %v9284, %v9690
    %v9816 = vadd.f32 %v9285, %v9693
    %v9817 = vadd.f32 %v9286, %v9696
    %v9818 = vadd.f32 %v9287, %v9699
    %v9819 = vadd.f32 %v9288, %v9702
    %v9820 = vadd.f32 %v9289, %v9705
    %v9821 = vadd.f32 %v9290, %v9708
    %v9822 = vadd.f32 %v9291, %v9711
    %v9823 = vadd.f32 %v9292, %v9714
    %v9824 = vadd.f32 %v9293, %v9717
    %v9825 = vadd.f32 %v9294, %v9720
    %v9826 = vadd.f32 %v9295, %v9723
    %v9827 = vadd.f32 %v9296, %v9726
    %v9828 = vadd.f32 %v9297, %v9729
    %v9829 = vadd.f32 %v9298, %v9732
    %v9830 = vadd.f32 %v9299, %v9735
    %v9831 = vadd.f32 %v9300, %v9738
    %v9832 = vadd.f32 %v9301, %v9741
    %v9833 = vadd.f32 %v9302, %v9744
    %v9834 = vadd.f32 %v9303, %v9747
    %v9835 = vadd.f32 %v9304, %v9750
    %v9836 = vadd.f32 %v9305, %v9753
    %v9837 = vadd.f32 %v9306, %v9756
    %v9838 = vadd.f32 %v9307, %v9759
    %v9839 = vadd.f32 %v9308, %v9762
    %v9840 = vadd.f32 %v9309, %v9765
    %v9841 = vadd.f32 %v9310, %v9768
    %v9842 = vadd.f32 %v9311, %v9771
    %v9843 = vadd.f32 %v9312, %v9774
    %v9844 = vadd.f32 %v9313, %v9777
    %v9845 = vadd.f32 %v9314, %v9780
    %v9846 = vld [vmem:[%s4] sm:$0x1]
    %v9848 = vperm.slane %v9846, 0
    %v9850 = vadd.f32 %v9782, %v9848
    %v9851 = vadd.f32 %v9783, %v9848
    %v9852 = vadd.f32 %v9784, %v9848
    %v9853 = vadd.f32 %v9785, %v9848
    %v9854 = vadd.f32 %v9786, %v9848
    %v9855 = vadd.f32 %v9787, %v9848
    %v9856 = vadd.f32 %v9788, %v9848
    %v9857 = vadd.f32 %v9789, %v9848
    %v9858 = vadd.f32 %v9790, %v9848
    %v9859 = vadd.f32 %v9791, %v9848
    %v9860 = vadd.f32 %v9792, %v9848
    %v9861 = vadd.f32 %v9793, %v9848
    %v9862 = vadd.f32 %v9794, %v9848
    %v9863 = vadd.f32 %v9795, %v9848
    %v9864 = vadd.f32 %v9796, %v9848
    %v9865 = vadd.f32 %v9797, %v9848
    %v9866 = vadd.f32 %v9798, %v9848
    %v9867 = vadd.f32 %v9799, %v9848
    %v9868 = vadd.f32 %v9800, %v9848
    %v9869 = vadd.f32 %v9801, %v9848
    %v9870 = vadd.f32 %v9802, %v9848
    %v9871 = vadd.f32 %v9803, %v9848
    %v9872 = vadd.f32 %v9804, %v9848
    %v9873 = vadd.f32 %v9805, %v9848
    %v9874 = vadd.f32 %v9806, %v9848
    %v9875 = vadd.f32 %v9807, %v9848
    %v9876 = vadd.f32 %v9808, %v9848
    %v9877 = vadd.f32 %v9809, %v9848
    %v9878 = vadd.f32 %v9810, %v9848
    %v9879 = vadd.f32 %v9811, %v9848
    %v9880 = vadd.f32 %v9812, %v9848
    %v9881 = vadd.f32 %v9813, %v9848
    %v9882 = vadd.f32 %v9814, %v9848
    %v9883 = vadd.f32 %v9815, %v9848
    %v9884 = vadd.f32 %v9816, %v9848
    %v9885 = vadd.f32 %v9817, %v9848
    %v9886 = vadd.f32 %v9818, %v9848
    %v9887 = vadd.f32 %v9819, %v9848
    %v9888 = vadd.f32 %v9820, %v9848
    %v9889 = vadd.f32 %v9821, %v9848
    %v9890 = vadd.f32 %v9822, %v9848
    %v9891 = vadd.f32 %v9823, %v9848
    %v9892 = vadd.f32 %v9824, %v9848
    %v9893 = vadd.f32 %v9825, %v9848
    %v9894 = vadd.f32 %v9826, %v9848
    %v9895 = vadd.f32 %v9827, %v9848
    %v9896 = vadd.f32 %v9828, %v9848
    %v9897 = vadd.f32 %v9829, %v9848
    %v9898 = vadd.f32 %v9830, %v9848
    %v9899 = vadd.f32 %v9831, %v9848
    %v9900 = vadd.f32 %v9832, %v9848
    %v9901 = vadd.f32 %v9833, %v9848
    %v9902 = vadd.f32 %v9834, %v9848
    %v9903 = vadd.f32 %v9835, %v9848
    %v9904 = vadd.f32 %v9836, %v9848
    %v9905 = vadd.f32 %v9837, %v9848
    %v9906 = vadd.f32 %v9838, %v9848
    %v9907 = vadd.f32 %v9839, %v9848
    %v9908 = vadd.f32 %v9840, %v9848
    %v9909 = vadd.f32 %v9841, %v9848
    %v9910 = vadd.f32 %v9842, %v9848
    %v9911 = vadd.f32 %v9843, %v9848
    %v9912 = vadd.f32 %v9844, %v9848
    %v9913 = vadd.f32 %v9845, %v9848
    %v9914 = vmax.f32 %v9850, 0.0
    %v9915 = vmax.f32 %v9851, 0.0
    %v9916 = vmax.f32 %v9852, 0.0
    %v9917 = vmax.f32 %v9853, 0.0
    %v9918 = vmax.f32 %v9854, 0.0
    %v9919 = vmax.f32 %v9855, 0.0
    %v9920 = vmax.f32 %v9856, 0.0
    %v9921 = vmax.f32 %v9857, 0.0
    %v9922 = vmax.f32 %v9858, 0.0
    %v9923 = vmax.f32 %v9859, 0.0
    %v9924 = vmax.f32 %v9860, 0.0
    %v9925 = vmax.f32 %v9861, 0.0
    %v9926 = vmax.f32 %v9862, 0.0
    %v9927 = vmax.f32 %v9863, 0.0
    %v9928 = vmax.f32 %v9864, 0.0
    %v9929 = vmax.f32 %v9865, 0.0
    %v9930 = vmax.f32 %v9866, 0.0
    %v9931 = vmax.f32 %v9867, 0.0
    %v9932 = vmax.f32 %v9868, 0.0
    %v9933 = vmax.f32 %v9869, 0.0
    %v9934 = vmax.f32 %v9870, 0.0
    %v9935 = vmax.f32 %v9871, 0.0
    %v9936 = vmax.f32 %v9872, 0.0
    %v9937 = vmax.f32 %v9873, 0.0
    %v9938 = vmax.f32 %v9874, 0.0
    %v9939 = vmax.f32 %v9875, 0.0
    %v9940 = vmax.f32 %v9876, 0.0
    %v9941 = vmax.f32 %v9877, 0.0
    %v9942 = vmax.f32 %v9878, 0.0
    %v9943 = vmax.f32 %v9879, 0.0
    %v9944 = vmax.f32 %v9880, 0.0
    %v9945 = vmax.f32 %v9881, 0.0
    %v9946 = vmax.f32 %v9882, 0.0
    %v9947 = vmax.f32 %v9883, 0.0
    %v9948 = vmax.f32 %v9884, 0.0
    %v9949 = vmax.f32 %v9885, 0.0
    %v9950 = vmax.f32 %v9886, 0.0
    %v9951 = vmax.f32 %v9887, 0.0
    %v9952 = vmax.f32 %v9888, 0.0
    %v9953 = vmax.f32 %v9889, 0.0
    %v9954 = vmax.f32 %v9890, 0.0
    %v9955 = vmax.f32 %v9891, 0.0
    %v9956 = vmax.f32 %v9892, 0.0
    %v9957 = vmax.f32 %v9893, 0.0
    %v9958 = vmax.f32 %v9894, 0.0
    %v9959 = vmax.f32 %v9895, 0.0
    %v9960 = vmax.f32 %v9896, 0.0
    %v9961 = vmax.f32 %v9897, 0.0
    %v9962 = vmax.f32 %v9898, 0.0
    %v9963 = vmax.f32 %v9899, 0.0
    %v9964 = vmax.f32 %v9900, 0.0
    %v9965 = vmax.f32 %v9901, 0.0
    %v9966 = vmax.f32 %v9902, 0.0
    %v9967 = vmax.f32 %v9903, 0.0
    %v9968 = vmax.f32 %v9904, 0.0
    %v9969 = vmax.f32 %v9905, 0.0
    %v9970 = vmax.f32 %v9906, 0.0
    %v9971 = vmax.f32 %v9907, 0.0
    %v9972 = vmax.f32 %v9908, 0.0
    %v9973 = vmax.f32 %v9909, 0.0
    %v9974 = vmax.f32 %v9910, 0.0
    %v9975 = vmax.f32 %v9911, 0.0
    %v9976 = vmax.f32 %v9912, 0.0
    %v9977 = vmax.f32 %v9913, 0.0
    %vm9978 = vcmask 261120
    %v9979 = vsel %vm9978, %v9914, 0.0
    %v9980 = vsel %vm9978, %v9915, 0.0
    %v9981 = vadd.f32 %v9979, %v9980
    %v9982 = vsel %vm9978, %v9916, 0.0
    %v9983 = vadd.f32 %v9981, %v9982
    %v9984 = vsel %vm9978, %v9917, 0.0
    %v9985 = vadd.f32 %v9983, %v9984
    %v9986 = vsel %vm9978, %v9918, 0.0
    %v9987 = vadd.f32 %v9985, %v9986
    %v9988 = vsel %vm9978, %v9919, 0.0
    %v9989 = vadd.f32 %v9987, %v9988
    %v9990 = vsel %vm9978, %v9920, 0.0
    %v9991 = vadd.f32 %v9989, %v9990
    %v9992 = vsel %vm9978, %v9921, 0.0
    %v9993 = vadd.f32 %v9991, %v9992
    %v9994 = vsel %vm9978, %v9922, 0.0
    %v9995 = vadd.f32 %v9993, %v9994
    %v9996 = vsel %vm9978, %v9923, 0.0
    %v9997 = vadd.f32 %v9995, %v9996
    %v9998 = vsel %vm9978, %v9924, 0.0
    %v9999 = vadd.f32 %v9997, %v9998
    %v10000 = vsel %vm9978, %v9925, 0.0
    %v10001 = vadd.f32 %v9999, %v10000
    %v10002 = vsel %vm9978, %v9926, 0.0
    %v10003 = vadd.f32 %v10001, %v10002
    %v10004 = vsel %vm9978, %v9927, 0.0
    %v10005 = vadd.f32 %v10003, %v10004
    %v10006 = vsel %vm9978, %v9928, 0.0
    %v10007 = vadd.f32 %v10005, %v10006
    %v10008 = vsel %vm9978, %v9929, 0.0
    %v10009 = vadd.f32 %v10007, %v10008
    %v10010 = vsel %vm9978, %v9930, 0.0
    %v10011 = vadd.f32 %v10009, %v10010
    %v10012 = vsel %vm9978, %v9931, 0.0
    %v10013 = vadd.f32 %v10011, %v10012
    %v10014 = vsel %vm9978, %v9932, 0.0
    %v10015 = vadd.f32 %v10013, %v10014
    %v10016 = vsel %vm9978, %v9933, 0.0
    %v10017 = vadd.f32 %v10015, %v10016
    %v10018 = vsel %vm9978, %v9934, 0.0
    %v10019 = vadd.f32 %v10017, %v10018
    %v10020 = vsel %vm9978, %v9935, 0.0
    %v10021 = vadd.f32 %v10019, %v10020
    %v10022 = vsel %vm9978, %v9936, 0.0
    %v10023 = vadd.f32 %v10021, %v10022
    %v10024 = vsel %vm9978, %v9937, 0.0
    %v10025 = vadd.f32 %v10023, %v10024
    %v10026 = vsel %vm9978, %v9938, 0.0
    %v10027 = vadd.f32 %v10025, %v10026
    %v10028 = vsel %vm9978, %v9939, 0.0
    %v10029 = vadd.f32 %v10027, %v10028
    %v10030 = vsel %vm9978, %v9940, 0.0
    %v10031 = vadd.f32 %v10029, %v10030
    %v10032 = vsel %vm9978, %v9941, 0.0
    %v10033 = vadd.f32 %v10031, %v10032
    %v10034 = vsel %vm9978, %v9942, 0.0
    %v10035 = vadd.f32 %v10033, %v10034
    %v10036 = vsel %vm9978, %v9943, 0.0
    %v10037 = vadd.f32 %v10035, %v10036
    %v10038 = vsel %vm9978, %v9944, 0.0
    %v10039 = vadd.f32 %v10037, %v10038
    %v10040 = vsel %vm9978, %v9945, 0.0
    %v10041 = vadd.f32 %v10039, %v10040
    %v10042 = vrot.slane %v10041, 4
    %v10043 = vadd.f32 %v10041, %v10042
    %v10044 = vrot.slane %v10043, 2
    %v10045 = vadd.f32 %v10043, %v10044
    %v10046 = vrot.slane %v10045, 1
    %v10047 = vadd.f32 %v10045, %v10046
    %v10048 = vsel %vm9978, %v9946, 0.0
    %v10049 = vsel %vm9978, %v9947, 0.0
    %v10050 = vadd.f32 %v10048, %v10049
    %v10051 = vsel %vm9978, %v9948, 0.0
    %v10052 = vadd.f32 %v10050, %v10051
    %v10053 = vsel %vm9978, %v9949, 0.0
    %v10054 = vadd.f32 %v10052, %v10053
    %v10055 = vsel %vm9978, %v9950, 0.0
    %v10056 = vadd.f32 %v10054, %v10055
    %v10057 = vsel %vm9978, %v9951, 0.0
    %v10058 = vadd.f32 %v10056, %v10057
    %v10059 = vsel %vm9978, %v9952, 0.0
    %v10060 = vadd.f32 %v10058, %v10059
    %v10061 = vsel %vm9978, %v9953, 0.0
    %v10062 = vadd.f32 %v10060, %v10061
    %v10063 = vsel %vm9978, %v9954, 0.0
    %v10064 = vadd.f32 %v10062, %v10063
    %v10065 = vsel %vm9978, %v9955, 0.0
    %v10066 = vadd.f32 %v10064, %v10065
    %v10067 = vsel %vm9978, %v9956, 0.0
    %v10068 = vadd.f32 %v10066, %v10067
    %v10069 = vsel %vm9978, %v9957, 0.0
    %v10070 = vadd.f32 %v10068, %v10069
    %v10071 = vsel %vm9978, %v9958, 0.0
    %v10072 = vadd.f32 %v10070, %v10071
    %v10073 = vsel %vm9978, %v9959, 0.0
    %v10074 = vadd.f32 %v10072, %v10073
    %v10075 = vsel %vm9978, %v9960, 0.0
    %v10076 = vadd.f32 %v10074, %v10075
    %v10077 = vsel %vm9978, %v9961, 0.0
    %v10078 = vadd.f32 %v10076, %v10077
    %v10079 = vsel %vm9978, %v9962, 0.0
    %v10080 = vadd.f32 %v10078, %v10079
    %v10081 = vsel %vm9978, %v9963, 0.0
    %v10082 = vadd.f32 %v10080, %v10081
    %v10083 = vsel %vm9978, %v9964, 0.0
    %v10084 = vadd.f32 %v10082, %v10083
    %v10085 = vsel %vm9978, %v9965, 0.0
    %v10086 = vadd.f32 %v10084, %v10085
    %v10087 = vsel %vm9978, %v9966, 0.0
    %v10088 = vadd.f32 %v10086, %v10087
    %v10089 = vsel %vm9978, %v9967, 0.0
    %v10090 = vadd.f32 %v10088, %v10089
    %v10091 = vsel %vm9978, %v9968, 0.0
    %v10092 = vadd.f32 %v10090, %v10091
    %v10093 = vsel %vm9978, %v9969, 0.0
    %v10094 = vadd.f32 %v10092, %v10093
    %v10095 = vsel %vm9978, %v9970, 0.0
    %v10096 = vadd.f32 %v10094, %v10095
    %v10097 = vsel %vm9978, %v9971, 0.0
    %v10098 = vadd.f32 %v10096, %v10097
    %v10099 = vsel %vm9978, %v9972, 0.0
    %v10100 = vadd.f32 %v10098, %v10099
    %v10101 = vsel %vm9978, %v9973, 0.0
    %v10102 = vadd.f32 %v10100, %v10101
    %v10103 = vsel %vm9978, %v9974, 0.0
    %v10104 = vadd.f32 %v10102, %v10103
    %v10105 = vsel %vm9978, %v9975, 0.0
    %v10106 = vadd.f32 %v10104, %v10105
    %v10107 = vsel %vm9978, %v9976, 0.0
    %v10108 = vadd.f32 %v10106, %v10107
    %v10109 = vsel %vm9978, %v9977, 0.0
    %v10110 = vadd.f32 %v10108, %v10109
    %v10111 = vrot.slane %v10110, 4
    %v10112 = vadd.f32 %v10110, %v10111
    %v10113 = vrot.slane %v10112, 2
    %v10114 = vadd.f32 %v10112, %v10113
    %v10115 = vrot.slane %v10114, 1
    %v10116 = vadd.f32 %v10114, %v10115
    %v10117 = vmul.f32 %v10047, 0.00390625
    %v10118 = vmul.f32 %v10116, 0.00390625
    %vm10121 = vcmask 1041409
    %v10122 = vsel %vm10121, %v10118, %v10117
    %vm10124 = vcmask 254976
    %10125 = vst.msk [vmem:[#allocation4] sm:$0x3] %vm10124, %v10122
    // Predicated region
    $region22: #{tpu_custom_call.1} parent=1 // pred_check
      _
    $region23: #{tpu_custom_call.1} parent=1 // pred_check_branch
      %10127 = sbr.rel (0) target = $region25
    $region24: #{tpu_custom_call.1} parent=1 // pred_region
      %10129 = vsyncadd [#allocation5], 0
      %s10131 = sshll.u32 [#allocation4], 4
      %s10132 = int_to_ptr.vmem [resolvable:$true] %s10131
      %s10133 = sshll.u32 %s5, 4
      %s10134 = int_to_ptr.hbm [resolvable:$true] %s10133
      %10136 = dma.vmem_to_hbm [thread:$0]  %s10132, 32, %s10134, [#allocation5]
    $region25: #{tpu_custom_call.1} parent=1 // pred_fallthru
      _
    // Predicated region
    $region26: #{tpu_custom_call.1} parent=1 // pred_check
      _
    $region27: #{tpu_custom_call.1} parent=1 // pred_check_branch
      %10138 = sbr.rel (0) target = $region29
    $region28: #{tpu_custom_call.1} parent=1 // pred_region
      %10140 = dma.done [#allocation5], 32
    $region29: #{tpu_custom_call.1} parent=1 // pred_fallthru
      _
    %10141 = vsyncpa [#allocation5], 1

</llo_original>
